<compile_context>
chip_gen: v7x
topology: tpu7x:2x2x1
jax: 0.10.0
libtpu: 0.0.40
codegen_flags: <defaults>
</compile_context>

<pallas_src>
import functools

import jax
import jax.numpy as jnp
from jax.experimental import pallas as pl
from jax.experimental.pallas import tpu as pltpu


_VMEM_LIMIT = 32 * 1024 * 1024  # explicit scoped-VMEM budget (safe on v5e/v6e/v7x)


# --------------------------------------------------------------------------- #
# Kernel 1: M-tiled fused matmul + (folded-BN affine) + (ReLU)
# --------------------------------------------------------------------------- #
def _matmul_affine_kernel(use_scale, apply_relu):
    def kernel(a_ref, w_ref, s_ref, b_ref, o_ref):
        # bf16 operands on the MXU, f32 accumulation + epilogue
        acc = jnp.dot(a_ref[...], w_ref[...], preferred_element_type=jnp.float32)
        if use_scale:
            acc = acc * s_ref[...]
        acc = acc + b_ref[...]
        if apply_relu:
            acc = jnp.maximum(acc, 0.0)
        o_ref[...] = acc.astype(o_ref.dtype)
    return kernel


def matmul_affine(a, w, shift, scale=None, *, apply_relu=False,
                  out_dtype=jnp.float32, tm=512):
    """out = (a @ w) [* scale] + shift, optional ReLU.  a:(M,K), w:(K,N).

    The M axis is tiled into `tm`-row blocks (parallel grid axis) so the HBM->VMEM
    DMAs pipeline against the MXU and both TensorCores are used on v7x.  The
    weight / scale / shift blocks stay resident across grid steps.
    """
    M, K = a.shape
    Kw, N = w.shape
    assert K == Kw
    a = a.astype(jnp.bfloat16)
    w = w.astype(jnp.bfloat16)
    use_scale = scale is not None
    if scale is None:
        scale = jnp.ones((N,), jnp.float32)
    scale = jnp.asarray(scale, jnp.float32).reshape(1, N)
    shift = jnp.asarray(shift, jnp.float32).reshape(1, N)

    if M <= tm:
        tm = M
        m_pad = M
    else:
        m_pad = ((M + tm - 1) // tm) * tm
        if m_pad != M:
            a = jnp.pad(a, ((0, m_pad - M), (0, 0)))

    out = pl.pallas_call(
        _matmul_affine_kernel(use_scale, apply_relu),
        out_shape=jax.ShapeDtypeStruct((m_pad, N), out_dtype),
        grid=(m_pad // tm,),
        in_specs=[
            pl.BlockSpec((tm, K), lambda i: (i, 0)),
            pl.BlockSpec((K, N), lambda i: (0, 0)),
            pl.BlockSpec((1, N), lambda i: (0, 0)),
            pl.BlockSpec((1, N), lambda i: (0, 0)),
        ],
        out_specs=pl.BlockSpec((tm, N), lambda i: (i, 0)),
        compiler_params=pltpu.CompilerParams(
            dimension_semantics=("parallel",),
            vmem_limit_bytes=_VMEM_LIMIT),
    )(a, w, scale, shift)
    return out[:M] if m_pad != M else out


# --------------------------------------------------------------------------- #
# Kernel 2: lane-dense 2x2 max pool (stride 2)
# --------------------------------------------------------------------------- #
def _maxpool_kernel(x_ref, o_ref):
    x = x_ref[0]                                       # (OH, 2, OW, 2C)
    c = o_ref.shape[-1]
    v = jnp.maximum(x[:, 0, :, :], x[:, 1, :, :])      # vertical pair  -> (OH, OW, 2C)
    o_ref[0] = jnp.maximum(v[..., :c], v[..., c:]).astype(o_ref.dtype)  # horizontal pair


def maxpool2x2(x):
    """2x2 max pooling, stride 2.  x: (N, H, W, C) NHWC, H and W even."""
    n, h, w, c = x.shape
    assert h % 2 == 0 and w % 2 == 0, "maxpool2x2 requires even spatial dims"
    oh, ow = h // 2, w // 2
    # Row-major-compatible reshape (free): W-parity folded into the lane axis so the
    # kernel is 3 dense VPU maxes with no strided access and full 128-lane vregs.
    xr = x.reshape(n, oh, 2, ow, 2 * c)
    return pl.pallas_call(
        _maxpool_kernel,
        out_shape=jax.ShapeDtypeStruct((n, oh, ow, c), x.dtype),
        grid=(n,),
        in_specs=[pl.BlockSpec((1, oh, 2, ow, 2 * c),
                               lambda b: (b, 0, 0, 0, 0))],
        out_specs=pl.BlockSpec((1, oh, ow, c), lambda b: (b, 0, 0, 0)),
        compiler_params=pltpu.CompilerParams(
            dimension_semantics=("parallel",),
            vmem_limit_bytes=_VMEM_LIMIT),
    )(xr)


# --------------------------------------------------------------------------- #
# Kernel 3: conv2 (direct, no im2col) + BN affine + ReLU + 2x2 maxpool, per image
# --------------------------------------------------------------------------- #
def _conv2_fused_kernel(x_ref, w_ref, s_ref, b_ref, o_ref, y_ref, *, hin, k):
    # x_ref: (1, HIN*HIN padded, Cin) bf16, flattened rows p = h*hin + w
    # w_ref: (k*k, Cin, Cout) bf16      s_ref/b_ref: (1, Cout) f32
    # o_ref: (1, P, P, Cout)            y_ref: VMEM scratch (hout*hin, Cout) f32
    hout = hin - k + 1          # 10
    pout = hout // 2            # 5
    nrow = hout * hin           # 140 accumulator rows, row q = oh*hin + ow (ow<hout valid)
    cout = w_ref.shape[-1]

    acc = jnp.zeros((nrow, cout), jnp.float32)
    for kh in range(k):
        for kw in range(k):
            start = kh * hin + kw
            xs = x_ref[0, start:start + nrow, :]               # shifted window rows
            acc = acc + jnp.dot(xs, w_ref[kh * k + kw],
                                preferred_element_type=jnp.float32)

    y = acc * s_ref[...] + b_ref[...]                          # folded BN (f32)
    y_ref[...] = jnp.maximum(y, 0.0)                           # ReLU -> scratch

    # fused 2x2 max pool: out[po, pw] = max over rows {(2po+i)*hin + 2pw+j}
    for po in range(pout):
        top = y_ref[(2 * po) * hin:(2 * po) * hin + hout, :]       # oh = 2po,   ow 0..hout-1
        bot = y_ref[(2 * po + 1) * hin:(2 * po + 1) * hin + hout, :]
        vm = jnp.maximum(top, bot)                                  # (hout, Cout)
        for pw in range(pout):
            o_ref[0, po, pw:pw + 1, :] = jnp.maximum(
                vm[2 * pw:2 * pw + 1, :],
                vm[2 * pw + 1:2 * pw + 2, :]).astype(o_ref.dtype)


def conv2_bn_relu_pool(x, w_khkw, scale, shift):
    """Direct 5x5 valid conv + folded-BN + ReLU + 2x2 maxpool.  x: (N, 14, 14, C)."""
    n, hin, win, cin = x.shape
    assert hin == win
    k = 5
    hout = hin - k + 1
    assert hout % 2 == 0
    pout = hout // 2
    cout = w_khkw.shape[-1]

    # flatten spatial (row-major, free) and zero-pad rows so every shifted window
    # slice [start, start+hout*hin) stays in bounds.
    need = (k - 1) * hin + (k - 1) + hout * hin
    nrow_pad = ((need + 7) // 8) * 8
    xf = x.reshape(n, hin * win, cin)
    xf = jnp.pad(xf, ((0, 0), (0, nrow_pad - hin * win), (0, 0))).astype(jnp.bfloat16)

    kernel = functools.partial(_conv2_fused_kernel, hin=hin, k=k)
    return pl.pallas_call(
        kernel,
        out_shape=jax.ShapeDtypeStruct((n, pout, pout, cout), jnp.bfloat16),
        grid=(n,),
        in_specs=[
            pl.BlockSpec((1, nrow_pad, cin), lambda b: (b, 0, 0)),
            pl.BlockSpec((k * k, cin, cout), lambda b: (0, 0, 0)),
            pl.BlockSpec((1, cout), lambda b: (0, 0)),
            pl.BlockSpec((1, cout), lambda b: (0, 0)),
        ],
        out_specs=pl.BlockSpec((1, pout, pout, cout), lambda b: (b, 0, 0, 0)),
        scratch_shapes=[pltpu.VMEM((hout * hin, cout), jnp.float32)],
        compiler_params=pltpu.CompilerParams(
            dimension_semantics=("parallel",),
            vmem_limit_bytes=_VMEM_LIMIT),
    )(xf, w_khkw.astype(jnp.bfloat16),
      jnp.asarray(scale, jnp.float32).reshape(1, cout),
      jnp.asarray(shift, jnp.float32).reshape(1, cout))


# --------------------------------------------------------------------------- #
# Glue: im2col (conv1 only), parameter setup, BN folding
# --------------------------------------------------------------------------- #
def im2col(x, k):
    """x: (N, H, W, C) -> (N*OH*OW, k*k*C), patch element order (kh, kw, c)."""
    n, h, w, c = x.shape
    oh, ow = h - k + 1, w - k + 1
    patches = []
    for kh in range(k):
        for kw in range(k):
            patches.append(x[:, kh:kh + oh, kw:kw + ow, :])   # (N, OH, OW, C)
    p = jnp.stack(patches, axis=3)                            # (N, OH, OW, k*k, C)
    return p.reshape(n * oh * ow, k * k * c), (n, oh, ow)


def conv_weight_to_matrix(w_oihw):
    """torch (O, Cin, KH, KW) -> (KH*KW*Cin, O), matching im2col column order."""
    o, cin, kh, kw = w_oihw.shape
    return jnp.transpose(w_oihw, (2, 3, 1, 0)).reshape(kh * kw * cin, o)


def bn_fold_eval(gamma, beta, running_mean, running_var, conv_bias, eps=1e-5):
    """Fold eval-mode BN (running stats) + conv bias into per-channel scale/shift."""
    scale = gamma / jnp.sqrt(running_var + eps)
    shift = beta + (conv_bias - running_mean) * scale
    return scale, shift


def init_params(key, channels):
    ks = jax.random.split(key, 6)
    f32 = jnp.float32
    p = {}
    # conv1: Conv2d(channels, 128, 5)
    p["conv1_w"] = 0.05 * jax.random.normal(ks[0], (128, channels, 5, 5), f32)
    p["conv1_b"] = 0.05 * jax.random.normal(ks[1], (128,), f32)
    # conv2: Conv2d(128, 128, 5)
    p["conv2_w"] = 0.02 * jax.random.normal(ks[2], (128, 128, 5, 5), f32)
    p["conv2_b"] = 0.02 * jax.random.normal(ks[3], (128,), f32)
    # custom BatchNorm2d buffers/params, exactly as in the module's __init__
    for tag in ("bn1", "bn2"):
        p[f"{tag}_gamma"] = jnp.ones((128,), f32)
        p[f"{tag}_beta"] = jnp.zeros((128,), f32)
        p[f"{tag}_mean"] = jnp.ones((128,), f32)    # running_mean = ones
        p[f"{tag}_var"] = jnp.zeros((128,), f32)    # running_var  = zeros
    # fc: Linear(128*5*5, 10)
    p["fc_w"] = 0.01 * jax.random.normal(ks[4], (10, 128 * 5 * 5), f32)
    p["fc_b"] = 0.01 * jax.random.normal(ks[5], (10,), f32)
    return p


def model_forward(params, x_nchw):
    """Eval-mode forward; returns (pred, logits) with pred = argmax(logits, 1)."""
    x = jnp.transpose(x_nchw, (0, 2, 3, 1)).astype(jnp.float32)   # NCHW -> NHWC
    n = x.shape[0]

    # conv1 (im2col, K padded to 128) + bn1 + relu, fused in one M-tiled matmul
    a, (_, oh1, ow1) = im2col(x, 5)                               # (n*784, 25*Cin)
    k1 = a.shape[1]
    k1p = ((max(k1, 128) + 127) // 128) * 128
    a = jnp.pad(a, ((0, 0), (0, k1p - k1)))
    w1 = conv_weight_to_matrix(params["conv1_w"])
    w1 = jnp.pad(w1, ((0, k1p - k1), (0, 0)))
    s1, b1 = bn_fold_eval(params["bn1_gamma"], params["bn1_beta"],
                          params["bn1_mean"], params["bn1_var"], params["conv1_b"])
    y = matmul_affine(a, w1, b1, s1, apply_relu=True,
                      out_dtype=jnp.bfloat16, tm=392)
    y = y.reshape(n, oh1, ow1, 128)

    # maxpool1 (dropout1 = identity in eval)
    y = maxpool2x2(y)                                             # (n, 14, 14, 128)

    # conv2 + bn2 + relu + maxpool2, fused per image (no im2col expansion)
    s2, b2 = bn_fold_eval(params["bn2_gamma"], params["bn2_beta"],
                          params["bn2_mean"], params["bn2_var"], params["conv2_b"])
    w2 = jnp.transpose(params["conv2_w"], (2, 3, 1, 0)).reshape(25, 128, 128)
    y = conv2_bn_relu_pool(y, w2, s2, b2)                         # (n, 5, 5, 128)

    # fc: weights pre-permuted to NHWC flatten order (no transpose of activations),
    # 10 outputs zero-padded to 128 lanes, scale multiply skipped.
    feat = y.reshape(n, 5 * 5 * 128)                              # (h, w, c) order
    w_fc = params["fc_w"].reshape(10, 128, 5, 5)                  # (out, c, h, w)
    w_fc = jnp.transpose(w_fc, (2, 3, 1, 0)).reshape(5 * 5 * 128, 10)
    w_fc = jnp.pad(w_fc, ((0, 0), (0, 128 - 10)))                 # (3200, 128)
    b_fc = jnp.pad(params["fc_b"], (0, 128 - 10))
    logits = matmul_affine(feat, w_fc, b_fc, scale=None,
                           apply_relu=False, out_dtype=jnp.float32, tm=512)
    logits = logits[:, :10]
    pred = jnp.argmax(logits, axis=1)
    return pred, logits


if __name__ == "__main__":
    key = jax.random.PRNGKey(0)
    k_param, k_x = jax.random.split(key)

    # H = W = 32 is required by the model (fc expects 128*5*5 features).
    batch, channels, H, W = 2, 3, 32, 32
    x = jax.random.normal(k_x, (batch, channels, H, W), jnp.float32)

    params = init_params(k_param, channels)
    fwd = jax.jit(model_forward)
    pred, logits = fwd(params, x)
    jax.block_until_ready((pred, logits))

    assert pred.shape == (batch,)
    assert logits.shape == (batch, 10)
    print("KERNEL_OK")
</pallas_src>

<mosaic_0001>
module attributes {stable_mosaic.version = 11 : i64} {
  func.func @kernel(%arg0: i32, %arg1: memref<392x128xbf16, #tpu.memory_space<vmem>>, %arg2: memref<128x128xbf16, #tpu.memory_space<vmem>>, %arg3: memref<1x128xf32, #tpu.memory_space<vmem>>, %arg4: memref<1x128xf32, #tpu.memory_space<vmem>>, %arg5: memref<392x128xbf16, #tpu.memory_space<vmem>>) attributes {dimension_semantics = [#tpu.dimension_semantics<parallel>], iteration_bounds = array<i64: 4>, scalar_prefetch = 0 : i64, scratch_operands = 0 : i64, tpu.core_type = #tpu.core_type<tc>, window_params = [{transform_indices = @transform_0, window_bounds = array<i64: 392, 128>}, {pipeline_mode = #tpu.pipeline_mode<synchronous>, transform_indices = @transform_1, window_bounds = array<i64: 128, 128>}, {pipeline_mode = #tpu.pipeline_mode<synchronous>, transform_indices = @transform_2, window_bounds = array<i64: 1, 128>}, {pipeline_mode = #tpu.pipeline_mode<synchronous>, transform_indices = @transform_3, window_bounds = array<i64: 1, 128>}, {transform_indices = @transform_4, window_bounds = array<i64: 392, 128>}]} {
    %c0 = arith.constant 0 : index
    %c0_0 = arith.constant 0 : index
    %0 = vector.load %arg1[%c0, %c0_0] : memref<392x128xbf16, #tpu.memory_space<vmem>>, vector<392x128xbf16>
    %c0_1 = arith.constant 0 : index
    %c0_2 = arith.constant 0 : index
    %1 = vector.load %arg2[%c0_1, %c0_2] : memref<128x128xbf16, #tpu.memory_space<vmem>>, vector<128x128xbf16>
    %cst = arith.constant dense<0.000000e+00> : vector<392x128xf32>
    %2 = tpu.matmul %0, %1, %cst {dimension_numbers = #tpu.dot_dimension_numbers<[1], [0], [0], [1], [0, 0, 1, 1], [], []>} : vector<392x128xbf16>, vector<128x128xbf16>, vector<392x128xf32> -> vector<392x128xf32>
    %c0_3 = arith.constant 0 : index
    %c0_4 = arith.constant 0 : index
    %3 = vector.load %arg3[%c0_3, %c0_4] : memref<1x128xf32, #tpu.memory_space<vmem>>, vector<1x128xf32>
    %4 = vector.broadcast %3 : vector<1x128xf32> to vector<392x128xf32>
    %5 = arith.mulf %2, %4 : vector<392x128xf32>
    %c0_5 = arith.constant 0 : index
    %c0_6 = arith.constant 0 : index
    %6 = vector.load %arg4[%c0_5, %c0_6] : memref<1x128xf32, #tpu.memory_space<vmem>>, vector<1x128xf32>
    %7 = vector.broadcast %6 : vector<1x128xf32> to vector<392x128xf32>
    %8 = arith.addf %5, %7 : vector<392x128xf32>
    %cst_7 = arith.constant 0.000000e+00 : f32
    %9 = vector.broadcast %cst_7 : f32 to vector<392x128xf32>
    %10 = arith.maximumf %8, %9 : vector<392x128xf32>
    %11 = arith.truncf %10 : vector<392x128xf32> to vector<392x128xbf16>
    %c0_8 = arith.constant 0 : index
    %c0_9 = arith.constant 0 : index
    %12 = vector.load %arg5[%c0_8, %c0_9] : memref<392x128xbf16, #tpu.memory_space<vmem>>, vector<392x128xbf16>
    tpu.vector_store %arg5[%c0_8, %c0_9], %11 {strides = array<i32>} : memref<392x128xbf16, #tpu.memory_space<vmem>>, vector<392x128xbf16>,
    return
  }
  func.func @transform_0(%arg0: i32) -> (i32, i32) {
    %c0_i32 = arith.constant 0 : i32
    %c0_i32_0 = arith.constant 0 : i32
    return %arg0, %c0_i32 : i32, i32
  }
  func.func @transform_1(%arg0: i32) -> (i32, i32) {
    %c0_i32 = arith.constant 0 : i32
    %c0_i32_0 = arith.constant 0 : i32
    %c0_i32_1 = arith.constant 0 : i32
    return %c0_i32, %c0_i32_0 : i32, i32
  }
  func.func @transform_2(%arg0: i32) -> (i32, i32) {
    %c0_i32 = arith.constant 0 : i32
    %c0_i32_0 = arith.constant 0 : i32
    %c0_i32_1 = arith.constant 0 : i32
    return %c0_i32, %c0_i32_0 : i32, i32
  }
  func.func @transform_3(%arg0: i32) -> (i32, i32) {
    %c0_i32 = arith.constant 0 : i32
    %c0_i32_0 = arith.constant 0 : i32
    %c0_i32_1 = arith.constant 0 : i32
    return %c0_i32, %c0_i32_0 : i32, i32
  }
  func.func @transform_4(%arg0: i32) -> (i32, i32) {
    %c0_i32 = arith.constant 0 : i32
    %c0_i32_0 = arith.constant 0 : i32
    return %arg0, %c0_i32 : i32, i32
  }
}

module attributes {stable_mosaic.version = 11 : i64} {
  func.func @_maxpool_kernel(%arg0: i32, %arg1: memref<1x14x2x14x256xbf16, #tpu.memory_space<vmem>>, %arg2: memref<1x14x14x128xbf16, #tpu.memory_space<vmem>>) attributes {dimension_semantics = [#tpu.dimension_semantics<parallel>], iteration_bounds = array<i64: 2>, scalar_prefetch = 0 : i64, scratch_operands = 0 : i64, tpu.core_type = #tpu.core_type<tc>, window_params = [{transform_indices = @transform_0, window_bounds = array<i64: 1, 14, 2, 14, 256>}, {transform_indices = @transform_1, window_bounds = array<i64: 1, 14, 14, 128>}]} {
    %c0 = arith.constant 0 : index
    %c0_0 = arith.constant 0 : index
    %c0_1 = arith.constant 0 : index
    %c0_2 = arith.constant 0 : index
    %c0_3 = arith.constant 0 : index
    %0 = vector.load %arg1[%c0, %c0_0, %c0_1, %c0_2, %c0_3] : memref<1x14x2x14x256xbf16, #tpu.memory_space<vmem>>, vector<1x14x2x14x256xbf16>
    %1 = vector.shape_cast %0 : vector<1x14x2x14x256xbf16> to vector<14x2x14x256xbf16>
    %2 = vector.extract_strided_slice %1 {offsets = [0, 0, 0, 0], sizes = [14, 1, 14, 256], strides = [1, 1, 1, 1]} : vector<14x2x14x256xbf16> to vector<14x1x14x256xbf16>
    %3 = vector.shape_cast %2 : vector<14x1x14x256xbf16> to vector<14x14x256xbf16>
    %4 = vector.extract_strided_slice %1 {offsets = [0, 1, 0, 0], sizes = [14, 1, 14, 256], strides = [1, 1, 1, 1]} : vector<14x2x14x256xbf16> to vector<14x1x14x256xbf16>
    %5 = vector.shape_cast %4 : vector<14x1x14x256xbf16> to vector<14x14x256xbf16>
    %6 = arith.maximumf %3, %5 : vector<14x14x256xbf16>
    %7 = vector.extract_strided_slice %6 {offsets = [0, 0, 0], sizes = [14, 14, 128], strides = [1, 1, 1]} : vector<14x14x256xbf16> to vector<14x14x128xbf16>
    %8 = vector.extract_strided_slice %6 {offsets = [0, 0, 128], sizes = [14, 14, 128], strides = [1, 1, 1]} : vector<14x14x256xbf16> to vector<14x14x128xbf16>
    %9 = arith.maximumf %7, %8 : vector<14x14x128xbf16>
    %c0_4 = arith.constant 0 : index
    %c0_5 = arith.constant 0 : index
    %c0_6 = arith.constant 0 : index
    %c0_7 = arith.constant 0 : index
    %10 = vector.load %arg2[%c0_4, %c0_5, %c0_6, %c0_7] : memref<1x14x14x128xbf16, #tpu.memory_space<vmem>>, vector<1x14x14x128xbf16>
    %11 = vector.shape_cast %10 : vector<1x14x14x128xbf16> to vector<14x14x128xbf16>
    %12 = vector.shape_cast %9 : vector<14x14x128xbf16> to vector<1x14x14x128xbf16>
    tpu.vector_store %arg2[%c0_4, %c0_5, %c0_6, %c0_7], %12 {strides = array<i32>} : memref<1x14x14x128xbf16, #tpu.memory_space<vmem>>, vector<1x14x14x128xbf16>,
    return
  }
  func.func @transform_0(%arg0: i32) -> (i32, i32, i32, i32, i32) {
    %c0_i32 = arith.constant 0 : i32
    %c0_i32_0 = arith.constant 0 : i32
    %c0_i32_1 = arith.constant 0 : i32
    %c0_i32_2 = arith.constant 0 : i32
    %c0_i32_3 = arith.constant 0 : i32
    return %arg0, %c0_i32, %c0_i32_0, %c0_i32_1, %c0_i32_2 : i32, i32, i32, i32, i32
  }
  func.func @transform_1(%arg0: i32) -> (i32, i32, i32, i32) {
    %c0_i32 = arith.constant 0 : i32
    %c0_i32_0 = arith.constant 0 : i32
    %c0_i32_1 = arith.constant 0 : i32
    %c0_i32_2 = arith.constant 0 : i32
    return %arg0, %c0_i32, %c0_i32_0, %c0_i32_1 : i32, i32, i32, i32
  }
}

module attributes {stable_mosaic.version = 11 : i64} {
  func.func @_conv2_fused_kernel(%arg0: i32, %arg1: memref<1x200x128xbf16, #tpu.memory_space<vmem>>, %arg2: memref<25x128x128xbf16, #tpu.memory_space<vmem>>, %arg3: memref<1x128xf32, #tpu.memory_space<vmem>>, %arg4: memref<1x128xf32, #tpu.memory_space<vmem>>, %arg5: memref<1x5x5x128xbf16, #tpu.memory_space<vmem>>, %arg6: memref<140x128xf32, #tpu.memory_space<vmem>>) attributes {dimension_semantics = [#tpu.dimension_semantics<parallel>], iteration_bounds = array<i64: 2>, scalar_prefetch = 0 : i64, scratch_operands = 1 : i64, tpu.core_type = #tpu.core_type<tc>, window_params = [{transform_indices = @transform_0, window_bounds = array<i64: 1, 200, 128>}, {pipeline_mode = #tpu.pipeline_mode<synchronous>, transform_indices = @transform_1, window_bounds = array<i64: 25, 128, 128>}, {pipeline_mode = #tpu.pipeline_mode<synchronous>, transform_indices = @transform_2, window_bounds = array<i64: 1, 128>}, {pipeline_mode = #tpu.pipeline_mode<synchronous>, transform_indices = @transform_3, window_bounds = array<i64: 1, 128>}, {transform_indices = @transform_4, window_bounds = array<i64: 1, 5, 5, 128>}]} {
    %cst = arith.constant 0.000000e+00 : f32
    %0 = vector.broadcast %cst : f32 to vector<140x128xf32>
    %c0 = arith.constant 0 : index
    %c0_0 = arith.constant 0 : index
    %c0_1 = arith.constant 0 : index
    %1 = vector.load %arg1[%c0, %c0_0, %c0_1] : memref<1x200x128xbf16, #tpu.memory_space<vmem>>, vector<1x140x128xbf16>
    %2 = vector.shape_cast %1 : vector<1x140x128xbf16> to vector<140x128xbf16>
    %c0_2 = arith.constant 0 : index
    %c0_3 = arith.constant 0 : index
    %c0_4 = arith.constant 0 : index
    %3 = vector.load %arg2[%c0_2, %c0_3, %c0_4] : memref<25x128x128xbf16, #tpu.memory_space<vmem>>, vector<1x128x128xbf16>
    %4 = vector.shape_cast %3 : vector<1x128x128xbf16> to vector<128x128xbf16>
    %cst_5 = arith.constant dense<0.000000e+00> : vector<140x128xf32>
    %5 = tpu.matmul %2, %4, %cst_5 {dimension_numbers = #tpu.dot_dimension_numbers<[1], [0], [0], [1], [0, 0, 1, 1], [], []>} : vector<140x128xbf16>, vector<128x128xbf16>, vector<140x128xf32> -> vector<140x128xf32>
    %6 = arith.addf %0, %5 : vector<140x128xf32>
    %c0_6 = arith.constant 0 : index
    %c1 = arith.constant 1 : index
    %c0_7 = arith.constant 0 : index
    %7 = vector.load %arg1[%c0_6, %c1, %c0_7] : memref<1x200x128xbf16, #tpu.memory_space<vmem>>, vector<1x140x128xbf16>
    %8 = vector.shape_cast %7 : vector<1x140x128xbf16> to vector<140x128xbf16>
    %c1_8 = arith.constant 1 : index
    %c0_9 = arith.constant 0 : index
    %c0_10 = arith.constant 0 : index
    %9 = vector.load %arg2[%c1_8, %c0_9, %c0_10] : memref<25x128x128xbf16, #tpu.memory_space<vmem>>, vector<1x128x128xbf16>
    %10 = vector.shape_cast %9 : vector<1x128x128xbf16> to vector<128x128xbf16>
    %cst_11 = arith.constant dense<0.000000e+00> : vector<140x128xf32>
    %11 = tpu.matmul %8, %10, %cst_11 {dimension_numbers = #tpu.dot_dimension_numbers<[1], [0], [0], [1], [0, 0, 1, 1], [], []>} : vector<140x128xbf16>, vector<128x128xbf16>, vector<140x128xf32> -> vector<140x128xf32>
    %12 = arith.addf %6, %11 : vector<140x128xf32>
    %c0_12 = arith.constant 0 : index
    %c2 = arith.constant 2 : index
    %c0_13 = arith.constant 0 : index
    %13 = vector.load %arg1[%c0_12, %c2, %c0_13] : memref<1x200x128xbf16, #tpu.memory_space<vmem>>, vector<1x140x128xbf16>
    %14 = vector.shape_cast %13 : vector<1x140x128xbf16> to vector<140x128xbf16>
    %c2_14 = arith.constant 2 : index
    %c0_15 = arith.constant 0 : index
    %c0_16 = arith.constant 0 : index
    %15 = vector.load %arg2[%c2_14, %c0_15, %c0_16] : memref<25x128x128xbf16, #tpu.memory_space<vmem>>, vector<1x128x128xbf16>
    %16 = vector.shape_cast %15 : vector<1x128x128xbf16> to vector<128x128xbf16>
    %cst_17 = arith.constant dense<0.000000e+00> : vector<140x128xf32>
    %17 = tpu.matmul %14, %16, %cst_17 {dimension_numbers = #tpu.dot_dimension_numbers<[1], [0], [0], [1], [0, 0, 1, 1], [], []>} : vector<140x128xbf16>, vector<128x128xbf16>, vector<140x128xf32> -> vector<140x128xf32>
    %18 = arith.addf %12, %17 : vector<140x128xf32>
    %c0_18 = arith.constant 0 : index
    %c3 = arith.constant 3 : index
    %c0_19 = arith.constant 0 : index
    %19 = vector.load %arg1[%c0_18, %c3, %c0_19] : memref<1x200x128xbf16, #tpu.memory_space<vmem>>, vector<1x140x128xbf16>
    %20 = vector.shape_cast %19 : vector<1x140x128xbf16> to vector<140x128xbf16>
    %c3_20 = arith.constant 3 : index
    %c0_21 = arith.constant 0 : index
    %c0_22 = arith.constant 0 : index
    %21 = vector.load %arg2[%c3_20, %c0_21, %c0_22] : memref<25x128x128xbf16, #tpu.memory_space<vmem>>, vector<1x128x128xbf16>
    %22 = vector.shape_cast %21 : vector<1x128x128xbf16> to vector<128x128xbf16>
    %cst_23 = arith.constant dense<0.000000e+00> : vector<140x128xf32>
    %23 = tpu.matmul %20, %22, %cst_23 {dimension_numbers = #tpu.dot_dimension_numbers<[1], [0], [0], [1], [0, 0, 1, 1], [], []>} : vector<140x128xbf16>, vector<128x128xbf16>, vector<140x128xf32> -> vector<140x128xf32>
    %24 = arith.addf %18, %23 : vector<140x128xf32>
    %c0_24 = arith.constant 0 : index
    %c4 = arith.constant 4 : index
    %c0_25 = arith.constant 0 : index
    %25 = vector.load %arg1[%c0_24, %c4, %c0_25] : memref<1x200x128xbf16, #tpu.memory_space<vmem>>, vector<1x140x128xbf16>
    %26 = vector.shape_cast %25 : vector<1x140x128xbf16> to vector<140x128xbf16>
    %c4_26 = arith.constant 4 : index
    %c0_27 = arith.constant 0 : index
    %c0_28 = arith.constant 0 : index
    %27 = vector.load %arg2[%c4_26, %c0_27, %c0_28] : memref<25x128x128xbf16, #tpu.memory_space<vmem>>, vector<1x128x128xbf16>
    %28 = vector.shape_cast %27 : vector<1x128x128xbf16> to vector<128x128xbf16>
    %cst_29 = arith.constant dense<0.000000e+00> : vector<140x128xf32>
    %29 = tpu.matmul %26, %28, %cst_29 {dimension_numbers = #tpu.dot_dimension_numbers<[1], [0], [0], [1], [0, 0, 1, 1], [], []>} : vector<140x128xbf16>, vector<128x128xbf16>, vector<140x128xf32> -> vector<140x128xf32>
    %30 = arith.addf %24, %29 : vector<140x128xf32>
    %c0_30 = arith.constant 0 : index
    %c14 = arith.constant 14 : index
    %c0_31 = arith.constant 0 : index
    %31 = vector.load %arg1[%c0_30, %c14, %c0_31] : memref<1x200x128xbf16, #tpu.memory_space<vmem>>, vector<1x140x128xbf16>
    %32 = vector.shape_cast %31 : vector<1x140x128xbf16> to vector<140x128xbf16>
    %c5 = arith.constant 5 : index
    %c0_32 = arith.constant 0 : index
    %c0_33 = arith.constant 0 : index
    %33 = vector.load %arg2[%c5, %c0_32, %c0_33] : memref<25x128x128xbf16, #tpu.memory_space<vmem>>, vector<1x128x128xbf16>
    %34 = vector.shape_cast %33 : vector<1x128x128xbf16> to vector<128x128xbf16>
    %cst_34 = arith.constant dense<0.000000e+00> : vector<140x128xf32>
    %35 = tpu.matmul %32, %34, %cst_34 {dimension_numbers = #tpu.dot_dimension_numbers<[1], [0], [0], [1], [0, 0, 1, 1], [], []>} : vector<140x128xbf16>, vector<128x128xbf16>, vector<140x128xf32> -> vector<140x128xf32>
    %36 = arith.addf %30, %35 : vector<140x128xf32>
    %c0_35 = arith.constant 0 : index
    %c15 = arith.constant 15 : index
    %c0_36 = arith.constant 0 : index
    %37 = vector.load %arg1[%c0_35, %c15, %c0_36] : memref<1x200x128xbf16, #tpu.memory_space<vmem>>, vector<1x140x128xbf16>
    %38 = vector.shape_cast %37 : vector<1x140x128xbf16> to vector<140x128xbf16>
    %c6 = arith.constant 6 : index
    %c0_37 = arith.constant 0 : index
    %c0_38 = arith.constant 0 : index
    %39 = vector.load %arg2[%c6, %c0_37, %c0_38] : memref<25x128x128xbf16, #tpu.memory_space<vmem>>, vector<1x128x128xbf16>
    %40 = vector.shape_cast %39 : vector<1x128x128xbf16> to vector<128x128xbf16>
    %cst_39 = arith.constant dense<0.000000e+00> : vector<140x128xf32>
    %41 = tpu.matmul %38, %40, %cst_39 {dimension_numbers = #tpu.dot_dimension_numbers<[1], [0], [0], [1], [0, 0, 1, 1], [], []>} : vector<140x128xbf16>, vector<128x128xbf16>, vector<140x128xf32> -> vector<140x128xf32>
    %42 = arith.addf %36, %41 : vector<140x128xf32>
    %c0_40 = arith.constant 0 : index
    %c16 = arith.constant 16 : index
    %c0_41 = arith.constant 0 : index
    %43 = vector.load %arg1[%c0_40, %c16, %c0_41] : memref<1x200x128xbf16, #tpu.memory_space<vmem>>, vector<1x140x128xbf16>
    %44 = vector.shape_cast %43 : vector<1x140x128xbf16> to vector<140x128xbf16>
    %c7 = arith.constant 7 : index
    %c0_42 = arith.constant 0 : index
    %c0_43 = arith.constant 0 : index
    %45 = vector.load %arg2[%c7, %c0_42, %c0_43] : memref<25x128x128xbf16, #tpu.memory_space<vmem>>, vector<1x128x128xbf16>
    %46 = vector.shape_cast %45 : vector<1x128x128xbf16> to vector<128x128xbf16>
    %cst_44 = arith.constant dense<0.000000e+00> : vector<140x128xf32>
    %47 = tpu.matmul %44, %46, %cst_44 {dimension_numbers = #tpu.dot_dimension_numbers<[1], [0], [0], [1], [0, 0, 1, 1], [], []>} : vector<140x128xbf16>, vector<128x128xbf16>, vector<140x128xf32> -> vector<140x128xf32>
    %48 = arith.addf %42, %47 : vector<140x128xf32>
    %c0_45 = arith.constant 0 : index
    %c17 = arith.constant 17 : index
    %c0_46 = arith.constant 0 : index
    %49 = vector.load %arg1[%c0_45, %c17, %c0_46] : memref<1x200x128xbf16, #tpu.memory_space<vmem>>, vector<1x140x128xbf16>
    %50 = vector.shape_cast %49 : vector<1x140x128xbf16> to vector<140x128xbf16>
    %c8 = arith.constant 8 : index
    %c0_47 = arith.constant 0 : index
    %c0_48 = arith.constant 0 : index
    %51 = vector.load %arg2[%c8, %c0_47, %c0_48] : memref<25x128x128xbf16, #tpu.memory_space<vmem>>, vector<1x128x128xbf16>
    %52 = vector.shape_cast %51 : vector<1x128x128xbf16> to vector<128x128xbf16>
    %cst_49 = arith.constant dense<0.000000e+00> : vector<140x128xf32>
    %53 = tpu.matmul %50, %52, %cst_49 {dimension_numbers = #tpu.dot_dimension_numbers<[1], [0], [0], [1], [0, 0, 1, 1], [], []>} : vector<140x128xbf16>, vector<128x128xbf16>, vector<140x128xf32> -> vector<140x128xf32>
    %54 = arith.addf %48, %53 : vector<140x128xf32>
    %c0_50 = arith.constant 0 : index
    %c18 = arith.constant 18 : index
    %c0_51 = arith.constant 0 : index
    %55 = vector.load %arg1[%c0_50, %c18, %c0_51] : memref<1x200x128xbf16, #tpu.memory_space<vmem>>, vector<1x140x128xbf16>
    %56 = vector.shape_cast %55 : vector<1x140x128xbf16> to vector<140x128xbf16>
    %c9 = arith.constant 9 : index
    %c0_52 = arith.constant 0 : index
    %c0_53 = arith.constant 0 : index
    %57 = vector.load %arg2[%c9, %c0_52, %c0_53] : memref<25x128x128xbf16, #tpu.memory_space<vmem>>, vector<1x128x128xbf16>
    %58 = vector.shape_cast %57 : vector<1x128x128xbf16> to vector<128x128xbf16>
    %cst_54 = arith.constant dense<0.000000e+00> : vector<140x128xf32>
    %59 = tpu.matmul %56, %58, %cst_54 {dimension_numbers = #tpu.dot_dimension_numbers<[1], [0], [0], [1], [0, 0, 1, 1], [], []>} : vector<140x128xbf16>, vector<128x128xbf16>, vector<140x128xf32> -> vector<140x128xf32>
    %60 = arith.addf %54, %59 : vector<140x128xf32>
    %c0_55 = arith.constant 0 : index
    %c28 = arith.constant 28 : index
    %c0_56 = arith.constant 0 : index
    %61 = vector.load %arg1[%c0_55, %c28, %c0_56] : memref<1x200x128xbf16, #tpu.memory_space<vmem>>, vector<1x140x128xbf16>
    %62 = vector.shape_cast %61 : vector<1x140x128xbf16> to vector<140x128xbf16>
    %c10 = arith.constant 10 : index
    %c0_57 = arith.constant 0 : index
    %c0_58 = arith.constant 0 : index
    %63 = vector.load %arg2[%c10, %c0_57, %c0_58] : memref<25x128x128xbf16, #tpu.memory_space<vmem>>, vector<1x128x128xbf16>
    %64 = vector.shape_cast %63 : vector<1x128x128xbf16> to vector<128x128xbf16>
    %cst_59 = arith.constant dense<0.000000e+00> : vector<140x128xf32>
    %65 = tpu.matmul %62, %64, %cst_59 {dimension_numbers = #tpu.dot_dimension_numbers<[1], [0], [0], [1], [0, 0, 1, 1], [], []>} : vector<140x128xbf16>, vector<128x128xbf16>, vector<140x128xf32> -> vector<140x128xf32>
    %66 = arith.addf %60, %65 : vector<140x128xf32>
    %c0_60 = arith.constant 0 : index
    %c29 = arith.constant 29 : index
    %c0_61 = arith.constant 0 : index
    %67 = vector.load %arg1[%c0_60, %c29, %c0_61] : memref<1x200x128xbf16, #tpu.memory_space<vmem>>, vector<1x140x128xbf16>
    %68 = vector.shape_cast %67 : vector<1x140x128xbf16> to vector<140x128xbf16>
    %c11 = arith.constant 11 : index
    %c0_62 = arith.constant 0 : index
    %c0_63 = arith.constant 0 : index
    %69 = vector.load %arg2[%c11, %c0_62, %c0_63] : memref<25x128x128xbf16, #tpu.memory_space<vmem>>, vector<1x128x128xbf16>
    %70 = vector.shape_cast %69 : vector<1x128x128xbf16> to vector<128x128xbf16>
    %cst_64 = arith.constant dense<0.000000e+00> : vector<140x128xf32>
    %71 = tpu.matmul %68, %70, %cst_64 {dimension_numbers = #tpu.dot_dimension_numbers<[1], [0], [0], [1], [0, 0, 1, 1], [], []>} : vector<140x128xbf16>, vector<128x128xbf16>, vector<140x128xf32> -> vector<140x128xf32>
    %72 = arith.addf %66, %71 : vector<140x128xf32>
    %c0_65 = arith.constant 0 : index
    %c30 = arith.constant 30 : index
    %c0_66 = arith.constant 0 : index
    %73 = vector.load %arg1[%c0_65, %c30, %c0_66] : memref<1x200x128xbf16, #tpu.memory_space<vmem>>, vector<1x140x128xbf16>
    %74 = vector.shape_cast %73 : vector<1x140x128xbf16> to vector<140x128xbf16>
    %c12 = arith.constant 12 : index
    %c0_67 = arith.constant 0 : index
    %c0_68 = arith.constant 0 : index
    %75 = vector.load %arg2[%c12, %c0_67, %c0_68] : memref<25x128x128xbf16, #tpu.memory_space<vmem>>, vector<1x128x128xbf16>
    %76 = vector.shape_cast %75 : vector<1x128x128xbf16> to vector<128x128xbf16>
    %cst_69 = arith.constant dense<0.000000e+00> : vector<140x128xf32>
    %77 = tpu.matmul %74, %76, %cst_69 {dimension_numbers = #tpu.dot_dimension_numbers<[1], [0], [0], [1], [0, 0, 1, 1], [], []>} : vector<140x128xbf16>, vector<128x128xbf16>, vector<140x128xf32> -> vector<140x128xf32>
    %78 = arith.addf %72, %77 : vector<140x128xf32>
    %c0_70 = arith.constant 0 : index
    %c31 = arith.constant 31 : index
    %c0_71 = arith.constant 0 : index
    %79 = vector.load %arg1[%c0_70, %c31, %c0_71] : memref<1x200x128xbf16, #tpu.memory_space<vmem>>, vector<1x140x128xbf16>
    %80 = vector.shape_cast %79 : vector<1x140x128xbf16> to vector<140x128xbf16>
    %c13 = arith.constant 13 : index
    %c0_72 = arith.constant 0 : index
    %c0_73 = arith.constant 0 : index
    %81 = vector.load %arg2[%c13, %c0_72, %c0_73] : memref<25x128x128xbf16, #tpu.memory_space<vmem>>, vector<1x128x128xbf16>
    %82 = vector.shape_cast %81 : vector<1x128x128xbf16> to vector<128x128xbf16>
    %cst_74 = arith.constant dense<0.000000e+00> : vector<140x128xf32>
    %83 = tpu.matmul %80, %82, %cst_74 {dimension_numbers = #tpu.dot_dimension_numbers<[1], [0], [0], [1], [0, 0, 1, 1], [], []>} : vector<140x128xbf16>, vector<128x128xbf16>, vector<140x128xf32> -> vector<140x128xf32>
    %84 = arith.addf %78, %83 : vector<140x128xf32>
    %c0_75 = arith.constant 0 : index
    %c32 = arith.constant 32 : index
    %c0_76 = arith.constant 0 : index
    %85 = vector.load %arg1[%c0_75, %c32, %c0_76] : memref<1x200x128xbf16, #tpu.memory_space<vmem>>, vector<1x140x128xbf16>
    %86 = vector.shape_cast %85 : vector<1x140x128xbf16> to vector<140x128xbf16>
    %c14_77 = arith.constant 14 : index
    %c0_78 = arith.constant 0 : index
    %c0_79 = arith.constant 0 : index
    %87 = vector.load %arg2[%c14_77, %c0_78, %c0_79] : memref<25x128x128xbf16, #tpu.memory_space<vmem>>, vector<1x128x128xbf16>
    %88 = vector.shape_cast %87 : vector<1x128x128xbf16> to vector<128x128xbf16>
    %cst_80 = arith.constant dense<0.000000e+00> : vector<140x128xf32>
    %89 = tpu.matmul %86, %88, %cst_80 {dimension_numbers = #tpu.dot_dimension_numbers<[1], [0], [0], [1], [0, 0, 1, 1], [], []>} : vector<140x128xbf16>, vector<128x128xbf16>, vector<140x128xf32> -> vector<140x128xf32>
    %90 = arith.addf %84, %89 : vector<140x128xf32>
    %c0_81 = arith.constant 0 : index
    %c42 = arith.constant 42 : index
    %c0_82 = arith.constant 0 : index
    %91 = vector.load %arg1[%c0_81, %c42, %c0_82] : memref<1x200x128xbf16, #tpu.memory_space<vmem>>, vector<1x140x128xbf16>
    %92 = vector.shape_cast %91 : vector<1x140x128xbf16> to vector<140x128xbf16>
    %c15_83 = arith.constant 15 : index
    %c0_84 = arith.constant 0 : index
    %c0_85 = arith.constant 0 : index
    %93 = vector.load %arg2[%c15_83, %c0_84, %c0_85] : memref<25x128x128xbf16, #tpu.memory_space<vmem>>, vector<1x128x128xbf16>
    %94 = vector.shape_cast %93 : vector<1x128x128xbf16> to vector<128x128xbf16>
    %cst_86 = arith.constant dense<0.000000e+00> : vector<140x128xf32>
    %95 = tpu.matmul %92, %94, %cst_86 {dimension_numbers = #tpu.dot_dimension_numbers<[1], [0], [0], [1], [0, 0, 1, 1], [], []>} : vector<140x128xbf16>, vector<128x128xbf16>, vector<140x128xf32> -> vector<140x128xf32>
    %96 = arith.addf %90, %95 : vector<140x128xf32>
    %c0_87 = arith.constant 0 : index
    %c43 = arith.constant 43 : index
    %c0_88 = arith.constant 0 : index
    %97 = vector.load %arg1[%c0_87, %c43, %c0_88] : memref<1x200x128xbf16, #tpu.memory_space<vmem>>, vector<1x140x128xbf16>
    %98 = vector.shape_cast %97 : vector<1x140x128xbf16> to vector<140x128xbf16>
    %c16_89 = arith.constant 16 : index
    %c0_90 = arith.constant 0 : index
    %c0_91 = arith.constant 0 : index
    %99 = vector.load %arg2[%c16_89, %c0_90, %c0_91] : memref<25x128x128xbf16, #tpu.memory_space<vmem>>, vector<1x128x128xbf16>
    %100 = vector.shape_cast %99 : vector<1x128x128xbf16> to vector<128x128xbf16>
    %cst_92 = arith.constant dense<0.000000e+00> : vector<140x128xf32>
    %101 = tpu.matmul %98, %100, %cst_92 {dimension_numbers = #tpu.dot_dimension_numbers<[1], [0], [0], [1], [0, 0, 1, 1], [], []>} : vector<140x128xbf16>, vector<128x128xbf16>, vector<140x128xf32> -> vector<140x128xf32>
    %102 = arith.addf %96, %101 : vector<140x128xf32>
    %c0_93 = arith.constant 0 : index
    %c44 = arith.constant 44 : index
    %c0_94 = arith.constant 0 : index
    %103 = vector.load %arg1[%c0_93, %c44, %c0_94] : memref<1x200x128xbf16, #tpu.memory_space<vmem>>, vector<1x140x128xbf16>
    %104 = vector.shape_cast %103 : vector<1x140x128xbf16> to vector<140x128xbf16>
    %c17_95 = arith.constant 17 : index
    %c0_96 = arith.constant 0 : index
    %c0_97 = arith.constant 0 : index
    %105 = vector.load %arg2[%c17_95, %c0_96, %c0_97] : memref<25x128x128xbf16, #tpu.memory_space<vmem>>, vector<1x128x128xbf16>
    %106 = vector.shape_cast %105 : vector<1x128x128xbf16> to vector<128x128xbf16>
    %cst_98 = arith.constant dense<0.000000e+00> : vector<140x128xf32>
    %107 = tpu.matmul %104, %106, %cst_98 {dimension_numbers = #tpu.dot_dimension_numbers<[1], [0], [0], [1], [0, 0, 1, 1], [], []>} : vector<140x128xbf16>, vector<128x128xbf16>, vector<140x128xf32> -> vector<140x128xf32>
    %108 = arith.addf %102, %107 : vector<140x128xf32>
    %c0_99 = arith.constant 0 : index
    %c45 = arith.constant 45 : index
    %c0_100 = arith.constant 0 : index
    %109 = vector.load %arg1[%c0_99, %c45, %c0_100] : memref<1x200x128xbf16, #tpu.memory_space<vmem>>, vector<1x140x128xbf16>
    %110 = vector.shape_cast %109 : vector<1x140x128xbf16> to vector<140x128xbf16>
    %c18_101 = arith.constant 18 : index
    %c0_102 = arith.constant 0 : index
    %c0_103 = arith.constant 0 : index
    %111 = vector.load %arg2[%c18_101, %c0_102, %c0_103] : memref<25x128x128xbf16, #tpu.memory_space<vmem>>, vector<1x128x128xbf16>
    %112 = vector.shape_cast %111 : vector<1x128x128xbf16> to vector<128x128xbf16>
    %cst_104 = arith.constant dense<0.000000e+00> : vector<140x128xf32>
    %113 = tpu.matmul %110, %112, %cst_104 {dimension_numbers = #tpu.dot_dimension_numbers<[1], [0], [0], [1], [0, 0, 1, 1], [], []>} : vector<140x128xbf16>, vector<128x128xbf16>, vector<140x128xf32> -> vector<140x128xf32>
    %114 = arith.addf %108, %113 : vector<140x128xf32>
    %c0_105 = arith.constant 0 : index
    %c46 = arith.constant 46 : index
    %c0_106 = arith.constant 0 : index
    %115 = vector.load %arg1[%c0_105, %c46, %c0_106] : memref<1x200x128xbf16, #tpu.memory_space<vmem>>, vector<1x140x128xbf16>
    %116 = vector.shape_cast %115 : vector<1x140x128xbf16> to vector<140x128xbf16>
    %c19 = arith.constant 19 : index
    %c0_107 = arith.constant 0 : index
    %c0_108 = arith.constant 0 : index
    %117 = vector.load %arg2[%c19, %c0_107, %c0_108] : memref<25x128x128xbf16, #tpu.memory_space<vmem>>, vector<1x128x128xbf16>
    %118 = vector.shape_cast %117 : vector<1x128x128xbf16> to vector<128x128xbf16>
    %cst_109 = arith.constant dense<0.000000e+00> : vector<140x128xf32>
    %119 = tpu.matmul %116, %118, %cst_109 {dimension_numbers = #tpu.dot_dimension_numbers<[1], [0], [0], [1], [0, 0, 1, 1], [], []>} : vector<140x128xbf16>, vector<128x128xbf16>, vector<140x128xf32> -> vector<140x128xf32>
    %120 = arith.addf %114, %119 : vector<140x128xf32>
    %c0_110 = arith.constant 0 : index
    %c56 = arith.constant 56 : index
    %c0_111 = arith.constant 0 : index
    %121 = vector.load %arg1[%c0_110, %c56, %c0_111] : memref<1x200x128xbf16, #tpu.memory_space<vmem>>, vector<1x140x128xbf16>
    %122 = vector.shape_cast %121 : vector<1x140x128xbf16> to vector<140x128xbf16>
    %c20 = arith.constant 20 : index
    %c0_112 = arith.constant 0 : index
    %c0_113 = arith.constant 0 : index
    %123 = vector.load %arg2[%c20, %c0_112, %c0_113] : memref<25x128x128xbf16, #tpu.memory_space<vmem>>, vector<1x128x128xbf16>
    %124 = vector.shape_cast %123 : vector<1x128x128xbf16> to vector<128x128xbf16>
    %cst_114 = arith.constant dense<0.000000e+00> : vector<140x128xf32>
    %125 = tpu.matmul %122, %124, %cst_114 {dimension_numbers = #tpu.dot_dimension_numbers<[1], [0], [0], [1], [0, 0, 1, 1], [], []>} : vector<140x128xbf16>, vector<128x128xbf16>, vector<140x128xf32> -> vector<140x128xf32>
    %126 = arith.addf %120, %125 : vector<140x128xf32>
    %c0_115 = arith.constant 0 : index
    %c57 = arith.constant 57 : index
    %c0_116 = arith.constant 0 : index
    %127 = vector.load %arg1[%c0_115, %c57, %c0_116] : memref<1x200x128xbf16, #tpu.memory_space<vmem>>, vector<1x140x128xbf16>
    %128 = vector.shape_cast %127 : vector<1x140x128xbf16> to vector<140x128xbf16>
    %c21 = arith.constant 21 : index
    %c0_117 = arith.constant 0 : index
    %c0_118 = arith.constant 0 : index
    %129 = vector.load %arg2[%c21, %c0_117, %c0_118] : memref<25x128x128xbf16, #tpu.memory_space<vmem>>, vector<1x128x128xbf16>
    %130 = vector.shape_cast %129 : vector<1x128x128xbf16> to vector<128x128xbf16>
    %cst_119 = arith.constant dense<0.000000e+00> : vector<140x128xf32>
    %131 = tpu.matmul %128, %130, %cst_119 {dimension_numbers = #tpu.dot_dimension_numbers<[1], [0], [0], [1], [0, 0, 1, 1], [], []>} : vector<140x128xbf16>, vector<128x128xbf16>, vector<140x128xf32> -> vector<140x128xf32>
    %132 = arith.addf %126, %131 : vector<140x128xf32>
    %c0_120 = arith.constant 0 : index
    %c58 = arith.constant 58 : index
    %c0_121 = arith.constant 0 : index
    %133 = vector.load %arg1[%c0_120, %c58, %c0_121] : memref<1x200x128xbf16, #tpu.memory_space<vmem>>, vector<1x140x128xbf16>
    %134 = vector.shape_cast %133 : vector<1x140x128xbf16> to vector<140x128xbf16>
    %c22 = arith.constant 22 : index
    %c0_122 = arith.constant 0 : index
    %c0_123 = arith.constant 0 : index
    %135 = vector.load %arg2[%c22, %c0_122, %c0_123] : memref<25x128x128xbf16, #tpu.memory_space<vmem>>, vector<1x128x128xbf16>
    %136 = vector.shape_cast %135 : vector<1x128x128xbf16> to vector<128x128xbf16>
    %cst_124 = arith.constant dense<0.000000e+00> : vector<140x128xf32>
    %137 = tpu.matmul %134, %136, %cst_124 {dimension_numbers = #tpu.dot_dimension_numbers<[1], [0], [0], [1], [0, 0, 1, 1], [], []>} : vector<140x128xbf16>, vector<128x128xbf16>, vector<140x128xf32> -> vector<140x128xf32>
    %138 = arith.addf %132, %137 : vector<140x128xf32>
    %c0_125 = arith.constant 0 : index
    %c59 = arith.constant 59 : index
    %c0_126 = arith.constant 0 : index
    %139 = vector.load %arg1[%c0_125, %c59, %c0_126] : memref<1x200x128xbf16, #tpu.memory_space<vmem>>, vector<1x140x128xbf16>
    %140 = vector.shape_cast %139 : vector<1x140x128xbf16> to vector<140x128xbf16>
    %c23 = arith.constant 23 : index
    %c0_127 = arith.constant 0 : index
    %c0_128 = arith.constant 0 : index
    %141 = vector.load %arg2[%c23, %c0_127, %c0_128] : memref<25x128x128xbf16, #tpu.memory_space<vmem>>, vector<1x128x128xbf16>
    %142 = vector.shape_cast %141 : vector<1x128x128xbf16> to vector<128x128xbf16>
    %cst_129 = arith.constant dense<0.000000e+00> : vector<140x128xf32>
    %143 = tpu.matmul %140, %142, %cst_129 {dimension_numbers = #tpu.dot_dimension_numbers<[1], [0], [0], [1], [0, 0, 1, 1], [], []>} : vector<140x128xbf16>, vector<128x128xbf16>, vector<140x128xf32> -> vector<140x128xf32>
    %144 = arith.addf %138, %143 : vector<140x128xf32>
    %c0_130 = arith.constant 0 : index
    %c60 = arith.constant 60 : index
    %c0_131 = arith.constant 0 : index
    %145 = vector.load %arg1[%c0_130, %c60, %c0_131] : memref<1x200x128xbf16, #tpu.memory_space<vmem>>, vector<1x140x128xbf16>
    %146 = vector.shape_cast %145 : vector<1x140x128xbf16> to vector<140x128xbf16>
    %c24 = arith.constant 24 : index
    %c0_132 = arith.constant 0 : index
    %c0_133 = arith.constant 0 : index
    %147 = vector.load %arg2[%c24, %c0_132, %c0_133] : memref<25x128x128xbf16, #tpu.memory_space<vmem>>, vector<1x128x128xbf16>
    %148 = vector.shape_cast %147 : vector<1x128x128xbf16> to vector<128x128xbf16>
    %cst_134 = arith.constant dense<0.000000e+00> : vector<140x128xf32>
    %149 = tpu.matmul %146, %148, %cst_134 {dimension_numbers = #tpu.dot_dimension_numbers<[1], [0], [0], [1], [0, 0, 1, 1], [], []>} : vector<140x128xbf16>, vector<128x128xbf16>, vector<140x128xf32> -> vector<140x128xf32>
    %150 = arith.addf %144, %149 : vector<140x128xf32>
    %c0_135 = arith.constant 0 : index
    %c0_136 = arith.constant 0 : index
    %151 = vector.load %arg3[%c0_135, %c0_136] : memref<1x128xf32, #tpu.memory_space<vmem>>, vector<1x128xf32>
    %152 = vector.broadcast %151 : vector<1x128xf32> to vector<140x128xf32>
    %153 = arith.mulf %150, %152 : vector<140x128xf32>
    %c0_137 = arith.constant 0 : index
    %c0_138 = arith.constant 0 : index
    %154 = vector.load %arg4[%c0_137, %c0_138] : memref<1x128xf32, #tpu.memory_space<vmem>>, vector<1x128xf32>
    %155 = vector.broadcast %154 : vector<1x128xf32> to vector<140x128xf32>
    %156 = arith.addf %153, %155 : vector<140x128xf32>
    %cst_139 = arith.constant 0.000000e+00 : f32
    %157 = vector.broadcast %cst_139 : f32 to vector<140x128xf32>
    %158 = arith.maximumf %156, %157 : vector<140x128xf32>
    %c0_140 = arith.constant 0 : index
    %c0_141 = arith.constant 0 : index
    %159 = vector.load %arg6[%c0_140, %c0_141] : memref<140x128xf32, #tpu.memory_space<vmem>>, vector<140x128xf32>
    tpu.vector_store %arg6[%c0_140, %c0_141], %158 {strides = array<i32>} : memref<140x128xf32, #tpu.memory_space<vmem>>, vector<140x128xf32>,
    %c0_142 = arith.constant 0 : index
    %c0_143 = arith.constant 0 : index
    %160 = vector.load %arg6[%c0_142, %c0_143] : memref<140x128xf32, #tpu.memory_space<vmem>>, vector<10x128xf32>
    %c14_144 = arith.constant 14 : index
    %c0_145 = arith.constant 0 : index
    %161 = vector.load %arg6[%c14_144, %c0_145] : memref<140x128xf32, #tpu.memory_space<vmem>>, vector<10x128xf32>
    %162 = arith.maximumf %160, %161 : vector<10x128xf32>
    %163 = vector.extract_strided_slice %162 {offsets = [0, 0], sizes = [1, 128], strides = [1, 1]} : vector<10x128xf32> to vector<1x128xf32>
    %164 = vector.extract_strided_slice %162 {offsets = [1, 0], sizes = [1, 128], strides = [1, 1]} : vector<10x128xf32> to vector<1x128xf32>
    %165 = arith.maximumf %163, %164 : vector<1x128xf32>
    %166 = arith.truncf %165 : vector<1x128xf32> to vector<1x128xbf16>
    %c0_146 = arith.constant 0 : index
    %c0_147 = arith.constant 0 : index
    %c0_148 = arith.constant 0 : index
    %c0_149 = arith.constant 0 : index
    %167 = vector.load %arg5[%c0_146, %c0_147, %c0_148, %c0_149] : memref<1x5x5x128xbf16, #tpu.memory_space<vmem>>, vector<1x1x1x128xbf16>
    %168 = vector.shape_cast %167 : vector<1x1x1x128xbf16> to vector<1x128xbf16>
    %169 = vector.shape_cast %166 : vector<1x128xbf16> to vector<1x1x1x128xbf16>
    tpu.vector_store %arg5[%c0_146, %c0_147, %c0_148, %c0_149], %169 {strides = array<i32>} : memref<1x5x5x128xbf16, #tpu.memory_space<vmem>>, vector<1x1x1x128xbf16>,
    %170 = vector.extract_strided_slice %162 {offsets = [2, 0], sizes = [1, 128], strides = [1, 1]} : vector<10x128xf32> to vector<1x128xf32>
    %171 = vector.extract_strided_slice %162 {offsets = [3, 0], sizes = [1, 128], strides = [1, 1]} : vector<10x128xf32> to vector<1x128xf32>
    %172 = arith.maximumf %170, %171 : vector<1x128xf32>
    %173 = arith.truncf %172 : vector<1x128xf32> to vector<1x128xbf16>
    %c0_150 = arith.constant 0 : index
    %c0_151 = arith.constant 0 : index
    %c1_152 = arith.constant 1 : index
    %c0_153 = arith.constant 0 : index
    %174 = vector.load %arg5[%c0_150, %c0_151, %c1_152, %c0_153] : memref<1x5x5x128xbf16, #tpu.memory_space<vmem>>, vector<1x1x1x128xbf16>
    %175 = vector.shape_cast %174 : vector<1x1x1x128xbf16> to vector<1x128xbf16>
    %176 = vector.shape_cast %173 : vector<1x128xbf16> to vector<1x1x1x128xbf16>
    tpu.vector_store %arg5[%c0_150, %c0_151, %c1_152, %c0_153], %176 {strides = array<i32>} : memref<1x5x5x128xbf16, #tpu.memory_space<vmem>>, vector<1x1x1x128xbf16>,
    %177 = vector.extract_strided_slice %162 {offsets = [4, 0], sizes = [1, 128], strides = [1, 1]} : vector<10x128xf32> to vector<1x128xf32>
    %178 = vector.extract_strided_slice %162 {offsets = [5, 0], sizes = [1, 128], strides = [1, 1]} : vector<10x128xf32> to vector<1x128xf32>
    %179 = arith.maximumf %177, %178 : vector<1x128xf32>
    %180 = arith.truncf %179 : vector<1x128xf32> to vector<1x128xbf16>
    %c0_154 = arith.constant 0 : index
    %c0_155 = arith.constant 0 : index
    %c2_156 = arith.constant 2 : index
    %c0_157 = arith.constant 0 : index
    %181 = vector.load %arg5[%c0_154, %c0_155, %c2_156, %c0_157] : memref<1x5x5x128xbf16, #tpu.memory_space<vmem>>, vector<1x1x1x128xbf16>
    %182 = vector.shape_cast %181 : vector<1x1x1x128xbf16> to vector<1x128xbf16>
    %183 = vector.shape_cast %180 : vector<1x128xbf16> to vector<1x1x1x128xbf16>
    tpu.vector_store %arg5[%c0_154, %c0_155, %c2_156, %c0_157], %183 {strides = array<i32>} : memref<1x5x5x128xbf16, #tpu.memory_space<vmem>>, vector<1x1x1x128xbf16>,
    %184 = vector.extract_strided_slice %162 {offsets = [6, 0], sizes = [1, 128], strides = [1, 1]} : vector<10x128xf32> to vector<1x128xf32>
    %185 = vector.extract_strided_slice %162 {offsets = [7, 0], sizes = [1, 128], strides = [1, 1]} : vector<10x128xf32> to vector<1x128xf32>
    %186 = arith.maximumf %184, %185 : vector<1x128xf32>
    %187 = arith.truncf %186 : vector<1x128xf32> to vector<1x128xbf16>
    %c0_158 = arith.constant 0 : index
    %c0_159 = arith.constant 0 : index
    %c3_160 = arith.constant 3 : index
    %c0_161 = arith.constant 0 : index
    %188 = vector.load %arg5[%c0_158, %c0_159, %c3_160, %c0_161] : memref<1x5x5x128xbf16, #tpu.memory_space<vmem>>, vector<1x1x1x128xbf16>
    %189 = vector.shape_cast %188 : vector<1x1x1x128xbf16> to vector<1x128xbf16>
    %190 = vector.shape_cast %187 : vector<1x128xbf16> to vector<1x1x1x128xbf16>
    tpu.vector_store %arg5[%c0_158, %c0_159, %c3_160, %c0_161], %190 {strides = array<i32>} : memref<1x5x5x128xbf16, #tpu.memory_space<vmem>>, vector<1x1x1x128xbf16>,
    %191 = vector.extract_strided_slice %162 {offsets = [8, 0], sizes = [1, 128], strides = [1, 1]} : vector<10x128xf32> to vector<1x128xf32>
    %192 = vector.extract_strided_slice %162 {offsets = [9, 0], sizes = [1, 128], strides = [1, 1]} : vector<10x128xf32> to vector<1x128xf32>
    %193 = arith.maximumf %191, %192 : vector<1x128xf32>
    %194 = arith.truncf %193 : vector<1x128xf32> to vector<1x128xbf16>
    %c0_162 = arith.constant 0 : index
    %c0_163 = arith.constant 0 : index
    %c4_164 = arith.constant 4 : index
    %c0_165 = arith.constant 0 : index
    %195 = vector.load %arg5[%c0_162, %c0_163, %c4_164, %c0_165] : memref<1x5x5x128xbf16, #tpu.memory_space<vmem>>, vector<1x1x1x128xbf16>
    %196 = vector.shape_cast %195 : vector<1x1x1x128xbf16> to vector<1x128xbf16>
    %197 = vector.shape_cast %194 : vector<1x128xbf16> to vector<1x1x1x128xbf16>
    tpu.vector_store %arg5[%c0_162, %c0_163, %c4_164, %c0_165], %197 {strides = array<i32>} : memref<1x5x5x128xbf16, #tpu.memory_space<vmem>>, vector<1x1x1x128xbf16>,
    %c28_166 = arith.constant 28 : index
    %c0_167 = arith.constant 0 : index
    %198 = vector.load %arg6[%c28_166, %c0_167] : memref<140x128xf32, #tpu.memory_space<vmem>>, vector<10x128xf32>
    %c42_168 = arith.constant 42 : index
    %c0_169 = arith.constant 0 : index
    %199 = vector.load %arg6[%c42_168, %c0_169] : memref<140x128xf32, #tpu.memory_space<vmem>>, vector<10x128xf32>
    %200 = arith.maximumf %198, %199 : vector<10x128xf32>
    %201 = vector.extract_strided_slice %200 {offsets = [0, 0], sizes = [1, 128], strides = [1, 1]} : vector<10x128xf32> to vector<1x128xf32>
    %202 = vector.extract_strided_slice %200 {offsets = [1, 0], sizes = [1, 128], strides = [1, 1]} : vector<10x128xf32> to vector<1x128xf32>
    %203 = arith.maximumf %201, %202 : vector<1x128xf32>
    %204 = arith.truncf %203 : vector<1x128xf32> to vector<1x128xbf16>
    %c0_170 = arith.constant 0 : index
    %c1_171 = arith.constant 1 : index
    %c0_172 = arith.constant 0 : index
    %c0_173 = arith.constant 0 : index
    %205 = vector.load %arg5[%c0_170, %c1_171, %c0_172, %c0_173] : memref<1x5x5x128xbf16, #tpu.memory_space<vmem>>, vector<1x1x1x128xbf16>
    %206 = vector.shape_cast %205 : vector<1x1x1x128xbf16> to vector<1x128xbf16>
    %207 = vector.shape_cast %204 : vector<1x128xbf16> to vector<1x1x1x128xbf16>
    tpu.vector_store %arg5[%c0_170, %c1_171, %c0_172, %c0_173], %207 {strides = array<i32>} : memref<1x5x5x128xbf16, #tpu.memory_space<vmem>>, vector<1x1x1x128xbf16>,
    %208 = vector.extract_strided_slice %200 {offsets = [2, 0], sizes = [1, 128], strides = [1, 1]} : vector<10x128xf32> to vector<1x128xf32>
    %209 = vector.extract_strided_slice %200 {offsets = [3, 0], sizes = [1, 128], strides = [1, 1]} : vector<10x128xf32> to vector<1x128xf32>
    %210 = arith.maximumf %208, %209 : vector<1x128xf32>
    %211 = arith.truncf %210 : vector<1x128xf32> to vector<1x128xbf16>
    %c0_174 = arith.constant 0 : index
    %c1_175 = arith.constant 1 : index
    %c1_176 = arith.constant 1 : index
    %c0_177 = arith.constant 0 : index
    %212 = vector.load %arg5[%c0_174, %c1_175, %c1_176, %c0_177] : memref<1x5x5x128xbf16, #tpu.memory_space<vmem>>, vector<1x1x1x128xbf16>
    %213 = vector.shape_cast %212 : vector<1x1x1x128xbf16> to vector<1x128xbf16>
    %214 = vector.shape_cast %211 : vector<1x128xbf16> to vector<1x1x1x128xbf16>
    tpu.vector_store %arg5[%c0_174, %c1_175, %c1_176, %c0_177], %214 {strides = array<i32>} : memref<1x5x5x128xbf16, #tpu.memory_space<vmem>>, vector<1x1x1x128xbf16>,
    %215 = vector.extract_strided_slice %200 {offsets = [4, 0], sizes = [1, 128], strides = [1, 1]} : vector<10x128xf32> to vector<1x128xf32>
    %216 = vector.extract_strided_slice %200 {offsets = [5, 0], sizes = [1, 128], strides = [1, 1]} : vector<10x128xf32> to vector<1x128xf32>
    %217 = arith.maximumf %215, %216 : vector<1x128xf32>
    %218 = arith.truncf %217 : vector<1x128xf32> to vector<1x128xbf16>
    %c0_178 = arith.constant 0 : index
    %c1_179 = arith.constant 1 : index
    %c2_180 = arith.constant 2 : index
    %c0_181 = arith.constant 0 : index
    %219 = vector.load %arg5[%c0_178, %c1_179, %c2_180, %c0_181] : memref<1x5x5x128xbf16, #tpu.memory_space<vmem>>, vector<1x1x1x128xbf16>
    %220 = vector.shape_cast %219 : vector<1x1x1x128xbf16> to vector<1x128xbf16>
    %221 = vector.shape_cast %218 : vector<1x128xbf16> to vector<1x1x1x128xbf16>
    tpu.vector_store %arg5[%c0_178, %c1_179, %c2_180, %c0_181], %221 {strides = array<i32>} : memref<1x5x5x128xbf16, #tpu.memory_space<vmem>>, vector<1x1x1x128xbf16>,
    %222 = vector.extract_strided_slice %200 {offsets = [6, 0], sizes = [1, 128], strides = [1, 1]} : vector<10x128xf32> to vector<1x128xf32>
    %223 = vector.extract_strided_slice %200 {offsets = [7, 0], sizes = [1, 128], strides = [1, 1]} : vector<10x128xf32> to vector<1x128xf32>
    %224 = arith.maximumf %222, %223 : vector<1x128xf32>
    %225 = arith.truncf %224 : vector<1x128xf32> to vector<1x128xbf16>
    %c0_182 = arith.constant 0 : index
    %c1_183 = arith.constant 1 : index
    %c3_184 = arith.constant 3 : index
    %c0_185 = arith.constant 0 : index
    %226 = vector.load %arg5[%c0_182, %c1_183, %c3_184, %c0_185] : memref<1x5x5x128xbf16, #tpu.memory_space<vmem>>, vector<1x1x1x128xbf16>
    %227 = vector.shape_cast %226 : vector<1x1x1x128xbf16> to vector<1x128xbf16>
    %228 = vector.shape_cast %225 : vector<1x128xbf16> to vector<1x1x1x128xbf16>
    tpu.vector_store %arg5[%c0_182, %c1_183, %c3_184, %c0_185], %228 {strides = array<i32>} : memref<1x5x5x128xbf16, #tpu.memory_space<vmem>>, vector<1x1x1x128xbf16>,
    %229 = vector.extract_strided_slice %200 {offsets = [8, 0], sizes = [1, 128], strides = [1, 1]} : vector<10x128xf32> to vector<1x128xf32>
    %230 = vector.extract_strided_slice %200 {offsets = [9, 0], sizes = [1, 128], strides = [1, 1]} : vector<10x128xf32> to vector<1x128xf32>
    %231 = arith.maximumf %229, %230 : vector<1x128xf32>
    %232 = arith.truncf %231 : vector<1x128xf32> to vector<1x128xbf16>
    %c0_186 = arith.constant 0 : index
    %c1_187 = arith.constant 1 : index
    %c4_188 = arith.constant 4 : index
    %c0_189 = arith.constant 0 : index
    %233 = vector.load %arg5[%c0_186, %c1_187, %c4_188, %c0_189] : memref<1x5x5x128xbf16, #tpu.memory_space<vmem>>, vector<1x1x1x128xbf16>
    %234 = vector.shape_cast %233 : vector<1x1x1x128xbf16> to vector<1x128xbf16>
    %235 = vector.shape_cast %232 : vector<1x128xbf16> to vector<1x1x1x128xbf16>
    tpu.vector_store %arg5[%c0_186, %c1_187, %c4_188, %c0_189], %235 {strides = array<i32>} : memref<1x5x5x128xbf16, #tpu.memory_space<vmem>>, vector<1x1x1x128xbf16>,
    %c56_190 = arith.constant 56 : index
    %c0_191 = arith.constant 0 : index
    %236 = vector.load %arg6[%c56_190, %c0_191] : memref<140x128xf32, #tpu.memory_space<vmem>>, vector<10x128xf32>
    %c70 = arith.constant 70 : index
    %c0_192 = arith.constant 0 : index
    %237 = vector.load %arg6[%c70, %c0_192] : memref<140x128xf32, #tpu.memory_space<vmem>>, vector<10x128xf32>
    %238 = arith.maximumf %236, %237 : vector<10x128xf32>
    %239 = vector.extract_strided_slice %238 {offsets = [0, 0], sizes = [1, 128], strides = [1, 1]} : vector<10x128xf32> to vector<1x128xf32>
    %240 = vector.extract_strided_slice %238 {offsets = [1, 0], sizes = [1, 128], strides = [1, 1]} : vector<10x128xf32> to vector<1x128xf32>
    %241 = arith.maximumf %239, %240 : vector<1x128xf32>
    %242 = arith.truncf %241 : vector<1x128xf32> to vector<1x128xbf16>
    %c0_193 = arith.constant 0 : index
    %c2_194 = arith.constant 2 : index
    %c0_195 = arith.constant 0 : index
    %c0_196 = arith.constant 0 : index
    %243 = vector.load %arg5[%c0_193, %c2_194, %c0_195, %c0_196] : memref<1x5x5x128xbf16, #tpu.memory_space<vmem>>, vector<1x1x1x128xbf16>
    %244 = vector.shape_cast %243 : vector<1x1x1x128xbf16> to vector<1x128xbf16>
    %245 = vector.shape_cast %242 : vector<1x128xbf16> to vector<1x1x1x128xbf16>
    tpu.vector_store %arg5[%c0_193, %c2_194, %c0_195, %c0_196], %245 {strides = array<i32>} : memref<1x5x5x128xbf16, #tpu.memory_space<vmem>>, vector<1x1x1x128xbf16>,
    %246 = vector.extract_strided_slice %238 {offsets = [2, 0], sizes = [1, 128], strides = [1, 1]} : vector<10x128xf32> to vector<1x128xf32>
    %247 = vector.extract_strided_slice %238 {offsets = [3, 0], sizes = [1, 128], strides = [1, 1]} : vector<10x128xf32> to vector<1x128xf32>
    %248 = arith.maximumf %246, %247 : vector<1x128xf32>
    %249 = arith.truncf %248 : vector<1x128xf32> to vector<1x128xbf16>
    %c0_197 = arith.constant 0 : index
    %c2_198 = arith.constant 2 : index
    %c1_199 = arith.constant 1 : index
    %c0_200 = arith.constant 0 : index
    %250 = vector.load %arg5[%c0_197, %c2_198, %c1_199, %c0_200] : memref<1x5x5x128xbf16, #tpu.memory_space<vmem>>, vector<1x1x1x128xbf16>
    %251 = vector.shape_cast %250 : vector<1x1x1x128xbf16> to vector<1x128xbf16>
    %252 = vector.shape_cast %249 : vector<1x128xbf16> to vector<1x1x1x128xbf16>
    tpu.vector_store %arg5[%c0_197, %c2_198, %c1_199, %c0_200], %252 {strides = array<i32>} : memref<1x5x5x128xbf16, #tpu.memory_space<vmem>>, vector<1x1x1x128xbf16>,
    %253 = vector.extract_strided_slice %238 {offsets = [4, 0], sizes = [1, 128], strides = [1, 1]} : vector<10x128xf32> to vector<1x128xf32>
    %254 = vector.extract_strided_slice %238 {offsets = [5, 0], sizes = [1, 128], strides = [1, 1]} : vector<10x128xf32> to vector<1x128xf32>
    %255 = arith.maximumf %253, %254 : vector<1x128xf32>
    %256 = arith.truncf %255 : vector<1x128xf32> to vector<1x128xbf16>
    %c0_201 = arith.constant 0 : index
    %c2_202 = arith.constant 2 : index
    %c2_203 = arith.constant 2 : index
    %c0_204 = arith.constant 0 : index
    %257 = vector.load %arg5[%c0_201, %c2_202, %c2_203, %c0_204] : memref<1x5x5x128xbf16, #tpu.memory_space<vmem>>, vector<1x1x1x128xbf16>
    %258 = vector.shape_cast %257 : vector<1x1x1x128xbf16> to vector<1x128xbf16>
    %259 = vector.shape_cast %256 : vector<1x128xbf16> to vector<1x1x1x128xbf16>
    tpu.vector_store %arg5[%c0_201, %c2_202, %c2_203, %c0_204], %259 {strides = array<i32>} : memref<1x5x5x128xbf16, #tpu.memory_space<vmem>>, vector<1x1x1x128xbf16>,
    %260 = vector.extract_strided_slice %238 {offsets = [6, 0], sizes = [1, 128], strides = [1, 1]} : vector<10x128xf32> to vector<1x128xf32>
    %261 = vector.extract_strided_slice %238 {offsets = [7, 0], sizes = [1, 128], strides = [1, 1]} : vector<10x128xf32> to vector<1x128xf32>
    %262 = arith.maximumf %260, %261 : vector<1x128xf32>
    %263 = arith.truncf %262 : vector<1x128xf32> to vector<1x128xbf16>
    %c0_205 = arith.constant 0 : index
    %c2_206 = arith.constant 2 : index
    %c3_207 = arith.constant 3 : index
    %c0_208 = arith.constant 0 : index
    %264 = vector.load %arg5[%c0_205, %c2_206, %c3_207, %c0_208] : memref<1x5x5x128xbf16, #tpu.memory_space<vmem>>, vector<1x1x1x128xbf16>
    %265 = vector.shape_cast %264 : vector<1x1x1x128xbf16> to vector<1x128xbf16>
    %266 = vector.shape_cast %263 : vector<1x128xbf16> to vector<1x1x1x128xbf16>
    tpu.vector_store %arg5[%c0_205, %c2_206, %c3_207, %c0_208], %266 {strides = array<i32>} : memref<1x5x5x128xbf16, #tpu.memory_space<vmem>>, vector<1x1x1x128xbf16>,
    %267 = vector.extract_strided_slice %238 {offsets = [8, 0], sizes = [1, 128], strides = [1, 1]} : vector<10x128xf32> to vector<1x128xf32>
    %268 = vector.extract_strided_slice %238 {offsets = [9, 0], sizes = [1, 128], strides = [1, 1]} : vector<10x128xf32> to vector<1x128xf32>
    %269 = arith.maximumf %267, %268 : vector<1x128xf32>
    %270 = arith.truncf %269 : vector<1x128xf32> to vector<1x128xbf16>
    %c0_209 = arith.constant 0 : index
    %c2_210 = arith.constant 2 : index
    %c4_211 = arith.constant 4 : index
    %c0_212 = arith.constant 0 : index
    %271 = vector.load %arg5[%c0_209, %c2_210, %c4_211, %c0_212] : memref<1x5x5x128xbf16, #tpu.memory_space<vmem>>, vector<1x1x1x128xbf16>
    %272 = vector.shape_cast %271 : vector<1x1x1x128xbf16> to vector<1x128xbf16>
    %273 = vector.shape_cast %270 : vector<1x128xbf16> to vector<1x1x1x128xbf16>
    tpu.vector_store %arg5[%c0_209, %c2_210, %c4_211, %c0_212], %273 {strides = array<i32>} : memref<1x5x5x128xbf16, #tpu.memory_space<vmem>>, vector<1x1x1x128xbf16>,
    %c84 = arith.constant 84 : index
    %c0_213 = arith.constant 0 : index
    %274 = vector.load %arg6[%c84, %c0_213] : memref<140x128xf32, #tpu.memory_space<vmem>>, vector<10x128xf32>
    %c98 = arith.constant 98 : index
    %c0_214 = arith.constant 0 : index
    %275 = vector.load %arg6[%c98, %c0_214] : memref<140x128xf32, #tpu.memory_space<vmem>>, vector<10x128xf32>
    %276 = arith.maximumf %274, %275 : vector<10x128xf32>
    %277 = vector.extract_strided_slice %276 {offsets = [0, 0], sizes = [1, 128], strides = [1, 1]} : vector<10x128xf32> to vector<1x128xf32>
    %278 = vector.extract_strided_slice %276 {offsets = [1, 0], sizes = [1, 128], strides = [1, 1]} : vector<10x128xf32> to vector<1x128xf32>
    %279 = arith.maximumf %277, %278 : vector<1x128xf32>
    %280 = arith.truncf %279 : vector<1x128xf32> to vector<1x128xbf16>
    %c0_215 = arith.constant 0 : index
    %c3_216 = arith.constant 3 : index
    %c0_217 = arith.constant 0 : index
    %c0_218 = arith.constant 0 : index
    %281 = vector.load %arg5[%c0_215, %c3_216, %c0_217, %c0_218] : memref<1x5x5x128xbf16, #tpu.memory_space<vmem>>, vector<1x1x1x128xbf16>
    %282 = vector.shape_cast %281 : vector<1x1x1x128xbf16> to vector<1x128xbf16>
    %283 = vector.shape_cast %280 : vector<1x128xbf16> to vector<1x1x1x128xbf16>
    tpu.vector_store %arg5[%c0_215, %c3_216, %c0_217, %c0_218], %283 {strides = array<i32>} : memref<1x5x5x128xbf16, #tpu.memory_space<vmem>>, vector<1x1x1x128xbf16>,
    %284 = vector.extract_strided_slice %276 {offsets = [2, 0], sizes = [1, 128], strides = [1, 1]} : vector<10x128xf32> to vector<1x128xf32>
    %285 = vector.extract_strided_slice %276 {offsets = [3, 0], sizes = [1, 128], strides = [1, 1]} : vector<10x128xf32> to vector<1x128xf32>
    %286 = arith.maximumf %284, %285 : vector<1x128xf32>
    %287 = arith.truncf %286 : vector<1x128xf32> to vector<1x128xbf16>
    %c0_219 = arith.constant 0 : index
    %c3_220 = arith.constant 3 : index
    %c1_221 = arith.constant 1 : index
    %c0_222 = arith.constant 0 : index
    %288 = vector.load %arg5[%c0_219, %c3_220, %c1_221, %c0_222] : memref<1x5x5x128xbf16, #tpu.memory_space<vmem>>, vector<1x1x1x128xbf16>
    %289 = vector.shape_cast %288 : vector<1x1x1x128xbf16> to vector<1x128xbf16>
    %290 = vector.shape_cast %287 : vector<1x128xbf16> to vector<1x1x1x128xbf16>
    tpu.vector_store %arg5[%c0_219, %c3_220, %c1_221, %c0_222], %290 {strides = array<i32>} : memref<1x5x5x128xbf16, #tpu.memory_space<vmem>>, vector<1x1x1x128xbf16>,
    %291 = vector.extract_strided_slice %276 {offsets = [4, 0], sizes = [1, 128], strides = [1, 1]} : vector<10x128xf32> to vector<1x128xf32>
    %292 = vector.extract_strided_slice %276 {offsets = [5, 0], sizes = [1, 128], strides = [1, 1]} : vector<10x128xf32> to vector<1x128xf32>
    %293 = arith.maximumf %291, %292 : vector<1x128xf32>
    %294 = arith.truncf %293 : vector<1x128xf32> to vector<1x128xbf16>
    %c0_223 = arith.constant 0 : index
    %c3_224 = arith.constant 3 : index
    %c2_225 = arith.constant 2 : index
    %c0_226 = arith.constant 0 : index
    %295 = vector.load %arg5[%c0_223, %c3_224, %c2_225, %c0_226] : memref<1x5x5x128xbf16, #tpu.memory_space<vmem>>, vector<1x1x1x128xbf16>
    %296 = vector.shape_cast %295 : vector<1x1x1x128xbf16> to vector<1x128xbf16>
    %297 = vector.shape_cast %294 : vector<1x128xbf16> to vector<1x1x1x128xbf16>
    tpu.vector_store %arg5[%c0_223, %c3_224, %c2_225, %c0_226], %297 {strides = array<i32>} : memref<1x5x5x128xbf16, #tpu.memory_space<vmem>>, vector<1x1x1x128xbf16>,
    %298 = vector.extract_strided_slice %276 {offsets = [6, 0], sizes = [1, 128], strides = [1, 1]} : vector<10x128xf32> to vector<1x128xf32>
    %299 = vector.extract_strided_slice %276 {offsets = [7, 0], sizes = [1, 128], strides = [1, 1]} : vector<10x128xf32> to vector<1x128xf32>
    %300 = arith.maximumf %298, %299 : vector<1x128xf32>
    %301 = arith.truncf %300 : vector<1x128xf32> to vector<1x128xbf16>
    %c0_227 = arith.constant 0 : index
    %c3_228 = arith.constant 3 : index
    %c3_229 = arith.constant 3 : index
    %c0_230 = arith.constant 0 : index
    %302 = vector.load %arg5[%c0_227, %c3_228, %c3_229, %c0_230] : memref<1x5x5x128xbf16, #tpu.memory_space<vmem>>, vector<1x1x1x128xbf16>
    %303 = vector.shape_cast %302 : vector<1x1x1x128xbf16> to vector<1x128xbf16>
    %304 = vector.shape_cast %301 : vector<1x128xbf16> to vector<1x1x1x128xbf16>
    tpu.vector_store %arg5[%c0_227, %c3_228, %c3_229, %c0_230], %304 {strides = array<i32>} : memref<1x5x5x128xbf16, #tpu.memory_space<vmem>>, vector<1x1x1x128xbf16>,
    %305 = vector.extract_strided_slice %276 {offsets = [8, 0], sizes = [1, 128], strides = [1, 1]} : vector<10x128xf32> to vector<1x128xf32>
    %306 = vector.extract_strided_slice %276 {offsets = [9, 0], sizes = [1, 128], strides = [1, 1]} : vector<10x128xf32> to vector<1x128xf32>
    %307 = arith.maximumf %305, %306 : vector<1x128xf32>
    %308 = arith.truncf %307 : vector<1x128xf32> to vector<1x128xbf16>
    %c0_231 = arith.constant 0 : index
    %c3_232 = arith.constant 3 : index
    %c4_233 = arith.constant 4 : index
    %c0_234 = arith.constant 0 : index
    %309 = vector.load %arg5[%c0_231, %c3_232, %c4_233, %c0_234] : memref<1x5x5x128xbf16, #tpu.memory_space<vmem>>, vector<1x1x1x128xbf16>
    %310 = vector.shape_cast %309 : vector<1x1x1x128xbf16> to vector<1x128xbf16>
    %311 = vector.shape_cast %308 : vector<1x128xbf16> to vector<1x1x1x128xbf16>
    tpu.vector_store %arg5[%c0_231, %c3_232, %c4_233, %c0_234], %311 {strides = array<i32>} : memref<1x5x5x128xbf16, #tpu.memory_space<vmem>>, vector<1x1x1x128xbf16>,
    %c112 = arith.constant 112 : index
    %c0_235 = arith.constant 0 : index
    %312 = vector.load %arg6[%c112, %c0_235] : memref<140x128xf32, #tpu.memory_space<vmem>>, vector<10x128xf32>
    %c126 = arith.constant 126 : index
    %c0_236 = arith.constant 0 : index
    %313 = vector.load %arg6[%c126, %c0_236] : memref<140x128xf32, #tpu.memory_space<vmem>>, vector<10x128xf32>
    %314 = arith.maximumf %312, %313 : vector<10x128xf32>
    %315 = vector.extract_strided_slice %314 {offsets = [0, 0], sizes = [1, 128], strides = [1, 1]} : vector<10x128xf32> to vector<1x128xf32>
    %316 = vector.extract_strided_slice %314 {offsets = [1, 0], sizes = [1, 128], strides = [1, 1]} : vector<10x128xf32> to vector<1x128xf32>
    %317 = arith.maximumf %315, %316 : vector<1x128xf32>
    %318 = arith.truncf %317 : vector<1x128xf32> to vector<1x128xbf16>
    %c0_237 = arith.constant 0 : index
    %c4_238 = arith.constant 4 : index
    %c0_239 = arith.constant 0 : index
    %c0_240 = arith.constant 0 : index
    %319 = vector.load %arg5[%c0_237, %c4_238, %c0_239, %c0_240] : memref<1x5x5x128xbf16, #tpu.memory_space<vmem>>, vector<1x1x1x128xbf16>
    %320 = vector.shape_cast %319 : vector<1x1x1x128xbf16> to vector<1x128xbf16>
    %321 = vector.shape_cast %318 : vector<1x128xbf16> to vector<1x1x1x128xbf16>
    tpu.vector_store %arg5[%c0_237, %c4_238, %c0_239, %c0_240], %321 {strides = array<i32>} : memref<1x5x5x128xbf16, #tpu.memory_space<vmem>>, vector<1x1x1x128xbf16>,
    %322 = vector.extract_strided_slice %314 {offsets = [2, 0], sizes = [1, 128], strides = [1, 1]} : vector<10x128xf32> to vector<1x128xf32>
    %323 = vector.extract_strided_slice %314 {offsets = [3, 0], sizes = [1, 128], strides = [1, 1]} : vector<10x128xf32> to vector<1x128xf32>
    %324 = arith.maximumf %322, %323 : vector<1x128xf32>
    %325 = arith.truncf %324 : vector<1x128xf32> to vector<1x128xbf16>
    %c0_241 = arith.constant 0 : index
    %c4_242 = arith.constant 4 : index
    %c1_243 = arith.constant 1 : index
    %c0_244 = arith.constant 0 : index
    %326 = vector.load %arg5[%c0_241, %c4_242, %c1_243, %c0_244] : memref<1x5x5x128xbf16, #tpu.memory_space<vmem>>, vector<1x1x1x128xbf16>
    %327 = vector.shape_cast %326 : vector<1x1x1x128xbf16> to vector<1x128xbf16>
    %328 = vector.shape_cast %325 : vector<1x128xbf16> to vector<1x1x1x128xbf16>
    tpu.vector_store %arg5[%c0_241, %c4_242, %c1_243, %c0_244], %328 {strides = array<i32>} : memref<1x5x5x128xbf16, #tpu.memory_space<vmem>>, vector<1x1x1x128xbf16>,
    %329 = vector.extract_strided_slice %314 {offsets = [4, 0], sizes = [1, 128], strides = [1, 1]} : vector<10x128xf32> to vector<1x128xf32>
    %330 = vector.extract_strided_slice %314 {offsets = [5, 0], sizes = [1, 128], strides = [1, 1]} : vector<10x128xf32> to vector<1x128xf32>
    %331 = arith.maximumf %329, %330 : vector<1x128xf32>
    %332 = arith.truncf %331 : vector<1x128xf32> to vector<1x128xbf16>
    %c0_245 = arith.constant 0 : index
    %c4_246 = arith.constant 4 : index
    %c2_247 = arith.constant 2 : index
    %c0_248 = arith.constant 0 : index
    %333 = vector.load %arg5[%c0_245, %c4_246, %c2_247, %c0_248] : memref<1x5x5x128xbf16, #tpu.memory_space<vmem>>, vector<1x1x1x128xbf16>
    %334 = vector.shape_cast %333 : vector<1x1x1x128xbf16> to vector<1x128xbf16>
    %335 = vector.shape_cast %332 : vector<1x128xbf16> to vector<1x1x1x128xbf16>
    tpu.vector_store %arg5[%c0_245, %c4_246, %c2_247, %c0_248], %335 {strides = array<i32>} : memref<1x5x5x128xbf16, #tpu.memory_space<vmem>>, vector<1x1x1x128xbf16>,
    %336 = vector.extract_strided_slice %314 {offsets = [6, 0], sizes = [1, 128], strides = [1, 1]} : vector<10x128xf32> to vector<1x128xf32>
    %337 = vector.extract_strided_slice %314 {offsets = [7, 0], sizes = [1, 128], strides = [1, 1]} : vector<10x128xf32> to vector<1x128xf32>
    %338 = arith.maximumf %336, %337 : vector<1x128xf32>
    %339 = arith.truncf %338 : vector<1x128xf32> to vector<1x128xbf16>
    %c0_249 = arith.constant 0 : index
    %c4_250 = arith.constant 4 : index
    %c3_251 = arith.constant 3 : index
    %c0_252 = arith.constant 0 : index
    %340 = vector.load %arg5[%c0_249, %c4_250, %c3_251, %c0_252] : memref<1x5x5x128xbf16, #tpu.memory_space<vmem>>, vector<1x1x1x128xbf16>
    %341 = vector.shape_cast %340 : vector<1x1x1x128xbf16> to vector<1x128xbf16>
    %342 = vector.shape_cast %339 : vector<1x128xbf16> to vector<1x1x1x128xbf16>
    tpu.vector_store %arg5[%c0_249, %c4_250, %c3_251, %c0_252], %342 {strides = array<i32>} : memref<1x5x5x128xbf16, #tpu.memory_space<vmem>>, vector<1x1x1x128xbf16>,
    %343 = vector.extract_strided_slice %314 {offsets = [8, 0], sizes = [1, 128], strides = [1, 1]} : vector<10x128xf32> to vector<1x128xf32>
    %344 = vector.extract_strided_slice %314 {offsets = [9, 0], sizes = [1, 128], strides = [1, 1]} : vector<10x128xf32> to vector<1x128xf32>
    %345 = arith.maximumf %343, %344 : vector<1x128xf32>
    %346 = arith.truncf %345 : vector<1x128xf32> to vector<1x128xbf16>
    %c0_253 = arith.constant 0 : index
    %c4_254 = arith.constant 4 : index
    %c4_255 = arith.constant 4 : index
    %c0_256 = arith.constant 0 : index
    %347 = vector.load %arg5[%c0_253, %c4_254, %c4_255, %c0_256] : memref<1x5x5x128xbf16, #tpu.memory_space<vmem>>, vector<1x1x1x128xbf16>
    %348 = vector.shape_cast %347 : vector<1x1x1x128xbf16> to vector<1x128xbf16>
    %349 = vector.shape_cast %346 : vector<1x128xbf16> to vector<1x1x1x128xbf16>
    tpu.vector_store %arg5[%c0_253, %c4_254, %c4_255, %c0_256], %349 {strides = array<i32>} : memref<1x5x5x128xbf16, #tpu.memory_space<vmem>>, vector<1x1x1x128xbf16>,
    return
  }
  func.func @transform_0(%arg0: i32) -> (i32, i32, i32) {
    %c0_i32 = arith.constant 0 : i32
    %c0_i32_0 = arith.constant 0 : i32
    %c0_i32_1 = arith.constant 0 : i32
    return %arg0, %c0_i32, %c0_i32_0 : i32, i32, i32
  }
  func.func @transform_1(%arg0: i32) -> (i32, i32, i32) {
    %c0_i32 = arith.constant 0 : i32
    %c0_i32_0 = arith.constant 0 : i32
    %c0_i32_1 = arith.constant 0 : i32
    %c0_i32_2 = arith.constant 0 : i32
    return %c0_i32, %c0_i32_0, %c0_i32_1 : i32, i32, i32
  }
  func.func @transform_2(%arg0: i32) -> (i32, i32) {
    %c0_i32 = arith.constant 0 : i32
    %c0_i32_0 = arith.constant 0 : i32
    %c0_i32_1 = arith.constant 0 : i32
    return %c0_i32, %c0_i32_0 : i32, i32
  }
  func.func @transform_3(%arg0: i32) -> (i32, i32) {
    %c0_i32 = arith.constant 0 : i32
    %c0_i32_0 = arith.constant 0 : i32
    %c0_i32_1 = arith.constant 0 : i32
    return %c0_i32, %c0_i32_0 : i32, i32
  }
  func.func @transform_4(%arg0: i32) -> (i32, i32, i32, i32) {
    %c0_i32 = arith.constant 0 : i32
    %c0_i32_0 = arith.constant 0 : i32
    %c0_i32_1 = arith.constant 0 : i32
    %c0_i32_2 = arith.constant 0 : i32
    return %arg0, %c0_i32, %c0_i32_0, %c0_i32_1 : i32, i32, i32, i32
  }
}

module attributes {stable_mosaic.version = 11 : i64} {
  func.func @kernel(%arg0: i32, %arg1: memref<2x3200xbf16, #tpu.memory_space<vmem>>, %arg2: memref<3200x128xbf16, #tpu.memory_space<vmem>>, %arg3: memref<1x128xf32, #tpu.memory_space<vmem>>, %arg4: memref<1x128xf32, #tpu.memory_space<vmem>>, %arg5: memref<2x128xf32, #tpu.memory_space<vmem>>) attributes {dimension_semantics = [#tpu.dimension_semantics<parallel>], iteration_bounds = array<i64: 1>, scalar_prefetch = 0 : i64, scratch_operands = 0 : i64, tpu.core_type = #tpu.core_type<tc>, window_params = [{transform_indices = @transform_0, window_bounds = array<i64: 2, 3200>}, {pipeline_mode = #tpu.pipeline_mode<synchronous>, transform_indices = @transform_1, window_bounds = array<i64: 3200, 128>}, {pipeline_mode = #tpu.pipeline_mode<synchronous>, transform_indices = @transform_2, window_bounds = array<i64: 1, 128>}, {pipeline_mode = #tpu.pipeline_mode<synchronous>, transform_indices = @transform_3, window_bounds = array<i64: 1, 128>}, {transform_indices = @transform_4, window_bounds = array<i64: 2, 128>}]} {
    %c0 = arith.constant 0 : index
    %c0_0 = arith.constant 0 : index
    %0 = vector.load %arg1[%c0, %c0_0] : memref<2x3200xbf16, #tpu.memory_space<vmem>>, vector<2x3200xbf16>
    %c0_1 = arith.constant 0 : index
    %c0_2 = arith.constant 0 : index
    %1 = vector.load %arg2[%c0_1, %c0_2] : memref<3200x128xbf16, #tpu.memory_space<vmem>>, vector<3200x128xbf16>
    %cst = arith.constant dense<0.000000e+00> : vector<2x128xf32>
    %2 = tpu.matmul %0, %1, %cst {dimension_numbers = #tpu.dot_dimension_numbers<[1], [0], [0], [1], [0, 0, 1, 1], [], []>} : vector<2x3200xbf16>, vector<3200x128xbf16>, vector<2x128xf32> -> vector<2x128xf32>
    %c0_3 = arith.constant 0 : index
    %c0_4 = arith.constant 0 : index
    %3 = vector.load %arg4[%c0_3, %c0_4] : memref<1x128xf32, #tpu.memory_space<vmem>>, vector<1x128xf32>
    %4 = vector.broadcast %3 : vector<1x128xf32> to vector<2x128xf32>
    %5 = arith.addf %2, %4 : vector<2x128xf32>
    %c0_5 = arith.constant 0 : index
    %c0_6 = arith.constant 0 : index
    %6 = vector.load %arg5[%c0_5, %c0_6] : memref<2x128xf32, #tpu.memory_space<vmem>>, vector<2x128xf32>
    tpu.vector_store %arg5[%c0_5, %c0_6], %5 {strides = array<i32>} : memref<2x128xf32, #tpu.memory_space<vmem>>, vector<2x128xf32>,
    return
  }
  func.func @transform_0(%arg0: i32) -> (i32, i32) {
    %c0_i32 = arith.constant 0 : i32
    %c0_i32_0 = arith.constant 0 : i32
    return %arg0, %c0_i32 : i32, i32
  }
  func.func @transform_1(%arg0: i32) -> (i32, i32) {
    %c0_i32 = arith.constant 0 : i32
    %c0_i32_0 = arith.constant 0 : i32
    %c0_i32_1 = arith.constant 0 : i32
    return %c0_i32, %c0_i32_0 : i32, i32
  }
  func.func @transform_2(%arg0: i32) -> (i32, i32) {
    %c0_i32 = arith.constant 0 : i32
    %c0_i32_0 = arith.constant 0 : i32
    %c0_i32_1 = arith.constant 0 : i32
    return %c0_i32, %c0_i32_0 : i32, i32
  }
  func.func @transform_3(%arg0: i32) -> (i32, i32) {
    %c0_i32 = arith.constant 0 : i32
    %c0_i32_0 = arith.constant 0 : i32
    %c0_i32_1 = arith.constant 0 : i32
    return %c0_i32, %c0_i32_0 : i32, i32
  }
  func.func @transform_4(%arg0: i32) -> (i32, i32) {
    %c0_i32 = arith.constant 0 : i32
    %c0_i32_0 = arith.constant 0 : i32
    return %arg0, %c0_i32 : i32, i32
  }
}

</mosaic_0001>

<llo_original>
// kernel: model_forward.5
$region0: #{model_forward.5}
  #allocation0 [shape = 'u32[]', space=smem, size = 0x4, offset = 0x4, fixed_abs, tag = 'smem constant byte address 0x4 - core index']
  #allocation1 [shape = 'u32[144,128]{1,0:T(1,128)}', space=vmem, size = 0x12000, scoped, tag = 'internal scratch']
  %s0 = inlined_call_operand.vmem [shape: bf16[2,14,2,14,256], index: 0, kind: input, shape index: {}]
  %s1 = inlined_call_operand.vmem [shape: bf16[2,14,14,128], index: 1, kind: output, shape index: {}]
  %s2 = sld [smem:[#allocation0]]
  $region37: #{model_forward.5} parent=0
    _
  %s4 = ssub.s32 1, %s2
  %s5 = scalar_select 0, %s4, %s2
  loop: start=0, step=1, limit=4
  $region2: #{model_forward.5} parent=0 // loop_pre_header
    _
  $region3: #{model_forward.5} parent=0 // loop_header
    %s7 = sphi 0, %s11
    %p8 = scmp.ge.s32.totalorder %s7, 4
    %s17 = sphi 0, %s19
    %s20 = sphi 0, %s17
    %s21 = sphi 0, %s20
    %s37 = sphi 0, %s21
    %s43 = sphi 0, %s45
    %s46 = sphi 0, %s43
    %s47 = sphi 0, %s46
    %s63 = sphi 0, %s47
  $region4: #{model_forward.5} parent=0 // loop_header_branch
    %10 = sbr.rel (%p8) target = $region8
  $region5: #{model_forward.5} parent=0 // loop_body
    %s12 = ssub.s32 %s7, 1
    %s13 = ssub.s32 %s7, 2
    %s14 = sadd.s32 %s7, 1
    %s15 = ssub.s32 %s7, %s14
    %p16 = scmp.eq.s32.totalorder %s15, 0
    %s18 = sadd.s32 %s17, 1
    %s19 = scalar_select %p16, %s17, %s18
    %p22 = pneg %p16
    %p23 = scmp.eq.s32.totalorder %s7, 1
    %p24 = por %p22, %p23
    %p25 = scmp.ne.s32.totalorder %s17, %s20
    %p26 = scmp.eq.s32.totalorder %s7, 0
    %p27 = por %p25, %p26
    %p28 = scmp.ne.s32.totalorder %s17, %s20
    %p29 = scmp.eq.s32.totalorder %s12, 1
    %p30 = por %p28, %p29
    %p31 = scmp.ne.s32.totalorder %s20, %s21
    %p32 = scmp.eq.s32.totalorder %s12, 0
    %p33 = por %p31, %p32
    %p34 = scmp.ne.s32.totalorder %s20, %s21
    %p35 = scmp.eq.s32.totalorder %s13, 1
    %p36 = por %p34, %p35
    %p38 = scmp.ne.s32.totalorder %s21, %s37
    %p39 = scmp.eq.s32.totalorder %s13, 0
    %p40 = por %p38, %p39
    %s41 = ssub.s32 %s7, %s14
    %p42 = scmp.eq.s32.totalorder %s41, 0
    %s44 = sadd.s32 %s43, 1
    %s45 = scalar_select %p42, %s43, %s44
    %p48 = pneg %p42
    %p49 = scmp.eq.s32.totalorder %s7, 1
    %p50 = por %p48, %p49
    %p51 = scmp.ne.s32.totalorder %s43, %s46
    %p52 = scmp.eq.s32.totalorder %s7, 0
    %p53 = por %p51, %p52
    %p54 = scmp.ne.s32.totalorder %s43, %s46
    %p55 = scmp.eq.s32.totalorder %s12, 1
    %p56 = por %p54, %p55
    %p57 = scmp.ne.s32.totalorder %s46, %s47
    %p58 = scmp.eq.s32.totalorder %s12, 0
    %p59 = por %p57, %p58
    %p60 = scmp.ne.s32.totalorder %s46, %s47
    %p61 = scmp.eq.s32.totalorder %s13, 1
    %p62 = por %p60, %p61
    %p64 = scmp.ne.s32.totalorder %s47, %s63
    %p65 = scmp.eq.s32.totalorder %s13, 0
    %p66 = por %p64, %p65
    %p67 = scmp.le.s32.totalorder 1, %s7
    %p68 = scmp.lt.s32.totalorder %s7, 3
    %p69 = pnand %p67, %p68
    %p70 = pneg %p69
    // Predicated region
    $region9: #{model_forward.5} parent=5 // pred_check
      _
    $region10: #{model_forward.5} parent=5 // pred_check_branch
      %72 = sbr.rel (%p69) target = $region12
    $region11: #{model_forward.5} parent=5 // pred_region
      %s73 = ssub.s32 %s7, 1
    $region12: #{model_forward.5} parent=5 // pred_fallthru
      _
    %p74 = scmp.lt.s32.totalorder %s7, 2
    // Predicated region
    $region13: #{model_forward.5} parent=5 // pred_check
      %p75 = pneg %p74
    $region14: #{model_forward.5} parent=5 // pred_check_branch
      %77 = sbr.rel (%p75) target = $region16
    $region15: #{model_forward.5} parent=5 // pred_region
      // Predicated region
      $region17: #{model_forward.5} parent=15 // pred_check
        %p78 = pneg %p27
      $region18: #{model_forward.5} parent=15 // pred_check_branch
        %80 = sbr.rel (%p78) target = $region20
      $region19: #{model_forward.5} parent=15 // pred_region
        %p81 = scmp.lt.s32.totalorder %s7, 1
        %s82 = scalar_select %p81, %s7, 1
        %s83 = smul.addr %s82, 112
        %s84 = smul.addr %s83, 4
        %s85 = scalar_lea.vmem %s0, %s84
      $region20: #{model_forward.5} parent=15 // pred_fallthru
        _
    $region16: #{model_forward.5} parent=5 // pred_fallthru
      _
    %p86 = scmp.le.s32.totalorder 1, %s7
    %p87 = scmp.lt.s32.totalorder %s7, 3
    %p88 = pnand %p86, %p87
    %p89 = pneg %p88
    // Predicated region
    $region21: #{model_forward.5} parent=5 // pred_check
      _
    $region22: #{model_forward.5} parent=5 // pred_check_branch
      %91 = sbr.rel (%p88) target = $region24
    $region23: #{model_forward.5} parent=5 // pred_region
      %s92 = ssub.s32 %s7, 1
      %p93 = scmp.lt.s32.totalorder %s12, 1
      %s94 = scalar_select %p93, %s12, 1
      %s95 = smul.addr %s94, 112
      %s96 = smul.addr %s95, 4
      %s97 = scalar_lea.vmem %s0, %s96
      %p98 = pneg %p33
      %p99 = pneg %p30
      %p100 = pneg %p59
      %p101 = pneg %p56
      %p102 = scmp.lt.s32.totalorder %s12, 1
      %s103 = scalar_select %p102, %s12, 1
      %s104 = smul.addr %s103, 28
      %s105 = smul.addr %s104, 4
      %s106 = scalar_lea.vmem %s1, %s105
      %p107 = scmp.lt.s32.totalorder %s12, 1
      %s108 = scalar_select %p107, %s12, 1
      %s109 = smul.addr %s108, 112
      %s110 = smul.addr %s109, 4
      %s111 = scalar_lea.vmem %s0, %s110
      %p112 = scmp.lt.s32.totalorder %s12, 1
      %s113 = scalar_select %p112, %s12, 1
      %s114 = smul.addr %s113, 28
      %s115 = smul.addr %s114, 4
      %s116 = scalar_lea.vmem %s1, %s115
      %v117 = vld [vmem:[%s111] sm:$0xff]
      %v118 = vld [vmem:[%s111 + $0x8] sm:$0x77]
      %v119 = vld [vmem:[%s111 + $0x10] sm:$0xff]
      %v120 = vld [vmem:[%s111 + $0x18] sm:$0x77]
      %v121 = vld [vmem:[%s111 + $0x20] sm:$0xff]
      %v122 = vld [vmem:[%s111 + $0x28] sm:$0x77]
      %v123 = vld [vmem:[%s111 + $0x30] sm:$0xff]
      %v124 = vld [vmem:[%s111 + $0x38] sm:$0x77]
      %v125 = vld [vmem:[%s111 + $0x40] sm:$0xff]
      %v126 = vld [vmem:[%s111 + $0x48] sm:$0x77]
      %v127 = vld [vmem:[%s111 + $0x50] sm:$0xff]
      %v128 = vld [vmem:[%s111 + $0x58] sm:$0x77]
      %v129 = vld [vmem:[%s111 + $0x60] sm:$0xff]
      %v130 = vld [vmem:[%s111 + $0x68] sm:$0x77]
      %v131 = vld [vmem:[%s111 + $0x70] sm:$0xff]
      %v132 = vld [vmem:[%s111 + $0x78] sm:$0x77]
      %v133 = vld [vmem:[%s111 + $0x80] sm:$0xff]
      %v134 = vld [vmem:[%s111 + $0x88] sm:$0x77]
      %v135 = vld [vmem:[%s111 + $0x90] sm:$0xff]
      %v136 = vld [vmem:[%s111 + $0x98] sm:$0x77]
      %v137 = vld [vmem:[%s111 + $0xa0] sm:$0xff]
      %v138 = vld [vmem:[%s111 + $0xa8] sm:$0x77]
      %v139 = vld [vmem:[%s111 + $0xb0] sm:$0xff]
      %v140 = vld [vmem:[%s111 + $0xb8] sm:$0x77]
      %v141 = vld [vmem:[%s111 + $0xc0] sm:$0xff]
      %v142 = vld [vmem:[%s111 + $0xc8] sm:$0x77]
      %v143 = vld [vmem:[%s111 + $0xd0] sm:$0xff]
      %v144 = vld [vmem:[%s111 + $0xd8] sm:$0x77]
      %v145 = vld [vmem:[%s111 + $0xe0] sm:$0xff]
      %v146 = vld [vmem:[%s111 + $0xe8] sm:$0x77]
      %v147 = vld [vmem:[%s111 + $0xf0] sm:$0xff]
      %v148 = vld [vmem:[%s111 + $0xf8] sm:$0x77]
      %v149 = vld [vmem:[%s111 + $0x100] sm:$0xff]
      %v150 = vld [vmem:[%s111 + $0x108] sm:$0x77]
      %v151 = vld [vmem:[%s111 + $0x110] sm:$0xff]
      %v152 = vld [vmem:[%s111 + $0x118] sm:$0x77]
      %v153 = vld [vmem:[%s111 + $0x120] sm:$0xff]
      %v154 = vld [vmem:[%s111 + $0x128] sm:$0x77]
      %v155 = vld [vmem:[%s111 + $0x130] sm:$0xff]
      %v156 = vld [vmem:[%s111 + $0x138] sm:$0x77]
      %v157 = vld [vmem:[%s111 + $0x140] sm:$0xff]
      %v158 = vld [vmem:[%s111 + $0x148] sm:$0x77]
      %v159 = vld [vmem:[%s111 + $0x150] sm:$0xff]
      %v160 = vld [vmem:[%s111 + $0x158] sm:$0x77]
      %v161 = vld [vmem:[%s111 + $0x160] sm:$0xff]
      %v162 = vld [vmem:[%s111 + $0x168] sm:$0x77]
      %v163 = vld [vmem:[%s111 + $0x170] sm:$0xff]
      %v164 = vld [vmem:[%s111 + $0x178] sm:$0x77]
      %v165 = vld [vmem:[%s111 + $0x180] sm:$0xff]
      %v166 = vld [vmem:[%s111 + $0x188] sm:$0x77]
      %v167 = vld [vmem:[%s111 + $0x190] sm:$0xff]
      %v168 = vld [vmem:[%s111 + $0x198] sm:$0x77]
      %v169 = vld [vmem:[%s111 + $0x1a0] sm:$0xff]
      %v170 = vld [vmem:[%s111 + $0x1a8] sm:$0x77]
      %v171 = vld [vmem:[%s111 + $0x1b0] sm:$0xff]
      %v172 = vld [vmem:[%s111 + $0x1b8] sm:$0x77]
      %v173 = vmax.bf16 %v117, %v119
      %v174 = vmax.bf16 %v118, %v120
      %v175 = vmax.bf16 %v121, %v123
      %v176 = vmax.bf16 %v122, %v124
      %v177 = vmax.bf16 %v125, %v127
      %v178 = vmax.bf16 %v126, %v128
      %v179 = vmax.bf16 %v129, %v131
      %v180 = vmax.bf16 %v130, %v132
      %v181 = vmax.bf16 %v133, %v135
      %v182 = vmax.bf16 %v134, %v136
      %v183 = vmax.bf16 %v137, %v139
      %v184 = vmax.bf16 %v138, %v140
      %v185 = vmax.bf16 %v141, %v143
      %v186 = vmax.bf16 %v142, %v144
      %v187 = vmax.bf16 %v145, %v147
      %v188 = vmax.bf16 %v146, %v148
      %v189 = vmax.bf16 %v149, %v151
      %v190 = vmax.bf16 %v150, %v152
      %v191 = vmax.bf16 %v153, %v155
      %v192 = vmax.bf16 %v154, %v156
      %v193 = vmax.bf16 %v157, %v159
      %v194 = vmax.bf16 %v158, %v160
      %v195 = vmax.bf16 %v161, %v163
      %v196 = vmax.bf16 %v162, %v164
      %v197 = vmax.bf16 %v165, %v167
      %v198 = vmax.bf16 %v166, %v168
      %v199 = vmax.bf16 %v169, %v171
      %v200 = vmax.bf16 %v170, %v172
      %v229 = vrot.slane %v173, 4
      %v230 = vrot.slane %v174, 4
      %v231 = vrot.slane %v175, 4
      %v232 = vrot.slane %v176, 4
      %v233 = vrot.slane %v177, 4
      %v234 = vrot.slane %v178, 4
      %v235 = vrot.slane %v179, 4
      %v236 = vrot.slane %v180, 4
      %v237 = vrot.slane %v181, 4
      %v238 = vrot.slane %v182, 4
      %v239 = vrot.slane %v183, 4
      %v240 = vrot.slane %v184, 4
      %v241 = vrot.slane %v185, 4
      %v242 = vrot.slane %v186, 4
      %v243 = vrot.slane %v187, 4
      %v244 = vrot.slane %v188, 4
      %v245 = vrot.slane %v189, 4
      %v246 = vrot.slane %v190, 4
      %v247 = vrot.slane %v191, 4
      %v248 = vrot.slane %v192, 4
      %v249 = vrot.slane %v193, 4
      %v250 = vrot.slane %v194, 4
      %v251 = vrot.slane %v195, 4
      %v252 = vrot.slane %v196, 4
      %v253 = vrot.slane %v197, 4
      %v254 = vrot.slane %v198, 4
      %v255 = vrot.slane %v199, 4
      %v256 = vrot.slane %v200, 4
      %v285 = vmax.bf16 %v173, %v229
      %v286 = vmax.bf16 %v174, %v230
      %v287 = vmax.bf16 %v175, %v231
      %v288 = vmax.bf16 %v176, %v232
      %v289 = vmax.bf16 %v177, %v233
      %v290 = vmax.bf16 %v178, %v234
      %v291 = vmax.bf16 %v179, %v235
      %v292 = vmax.bf16 %v180, %v236
      %v293 = vmax.bf16 %v181, %v237
      %v294 = vmax.bf16 %v182, %v238
      %v295 = vmax.bf16 %v183, %v239
      %v296 = vmax.bf16 %v184, %v240
      %v297 = vmax.bf16 %v185, %v241
      %v298 = vmax.bf16 %v186, %v242
      %v299 = vmax.bf16 %v187, %v243
      %v300 = vmax.bf16 %v188, %v244
      %v301 = vmax.bf16 %v189, %v245
      %v302 = vmax.bf16 %v190, %v246
      %v303 = vmax.bf16 %v191, %v247
      %v304 = vmax.bf16 %v192, %v248
      %v305 = vmax.bf16 %v193, %v249
      %v306 = vmax.bf16 %v194, %v250
      %v307 = vmax.bf16 %v195, %v251
      %v308 = vmax.bf16 %v196, %v252
      %v309 = vmax.bf16 %v197, %v253
      %v310 = vmax.bf16 %v198, %v254
      %v311 = vmax.bf16 %v199, %v255
      %v312 = vmax.bf16 %v200, %v256
      %313 = vst [vmem:[%s116] sm:$0xf] %v285
      %314 = vst [vmem:[%s116 + $0x4] sm:$0x7] %v286
      %315 = vst [vmem:[%s116 + $0x8] sm:$0xf] %v287
      %316 = vst [vmem:[%s116 + $0xc] sm:$0x7] %v288
      %317 = vst [vmem:[%s116 + $0x10] sm:$0xf] %v289
      %318 = vst [vmem:[%s116 + $0x14] sm:$0x7] %v290
      %319 = vst [vmem:[%s116 + $0x18] sm:$0xf] %v291
      %320 = vst [vmem:[%s116 + $0x1c] sm:$0x7] %v292
      %321 = vst [vmem:[%s116 + $0x20] sm:$0xf] %v293
      %322 = vst [vmem:[%s116 + $0x24] sm:$0x7] %v294
      %323 = vst [vmem:[%s116 + $0x28] sm:$0xf] %v295
      %324 = vst [vmem:[%s116 + $0x2c] sm:$0x7] %v296
      %325 = vst [vmem:[%s116 + $0x30] sm:$0xf] %v297
      %326 = vst [vmem:[%s116 + $0x34] sm:$0x7] %v298
      %327 = vst [vmem:[%s116 + $0x38] sm:$0xf] %v299
      %328 = vst [vmem:[%s116 + $0x3c] sm:$0x7] %v300
      %329 = vst [vmem:[%s116 + $0x40] sm:$0xf] %v301
      %330 = vst [vmem:[%s116 + $0x44] sm:$0x7] %v302
      %331 = vst [vmem:[%s116 + $0x48] sm:$0xf] %v303
      %332 = vst [vmem:[%s116 + $0x4c] sm:$0x7] %v304
      %333 = vst [vmem:[%s116 + $0x50] sm:$0xf] %v305
      %334 = vst [vmem:[%s116 + $0x54] sm:$0x7] %v306
      %335 = vst [vmem:[%s116 + $0x58] sm:$0xf] %v307
      %336 = vst [vmem:[%s116 + $0x5c] sm:$0x7] %v308
      %337 = vst [vmem:[%s116 + $0x60] sm:$0xf] %v309
      %338 = vst [vmem:[%s116 + $0x64] sm:$0x7] %v310
      %339 = vst [vmem:[%s116 + $0x68] sm:$0xf] %v311
      %340 = vst [vmem:[%s116 + $0x6c] sm:$0x7] %v312
      %p341 = scmp.lt.s32.totalorder %s12, 1
      %s342 = scalar_select %p341, %s12, 1
      %s343 = smul.addr %s342, 28
      %s344 = smul.addr %s343, 4
      %s345 = scalar_lea.vmem %s1, %s344
      // Predicated region
      $region25: #{model_forward.5} parent=23 // pred_check
        %p346 = pneg %p56
      $region26: #{model_forward.5} parent=23 // pred_check_branch
        %348 = sbr.rel (%p346) target = $region28
      $region27: #{model_forward.5} parent=23 // pred_region
        _
      $region28: #{model_forward.5} parent=23 // pred_fallthru
        _
    $region24: #{model_forward.5} parent=5 // pred_fallthru
      _
    %p349 = scmp.le.s32.totalorder 2, %s7
    // Predicated region
    $region29: #{model_forward.5} parent=5 // pred_check
      %p350 = pneg %p349
    $region30: #{model_forward.5} parent=5 // pred_check_branch
      %352 = sbr.rel (%p350) target = $region32
    $region31: #{model_forward.5} parent=5 // pred_region
      %s353 = ssub.s32 %s7, 2
      // Predicated region
      $region33: #{model_forward.5} parent=31 // pred_check
        %p354 = pneg %p62
      $region34: #{model_forward.5} parent=31 // pred_check_branch
        %356 = sbr.rel (%p354) target = $region36
      $region35: #{model_forward.5} parent=31 // pred_region
        %p357 = scmp.lt.s32.totalorder %s13, 1
        %s358 = scalar_select %p357, %s13, 1
        %s359 = smul.addr %s358, 28
        %s360 = smul.addr %s359, 4
        %s361 = scalar_lea.vmem %s1, %s360
      $region36: #{model_forward.5} parent=31 // pred_fallthru
        _
    $region32: #{model_forward.5} parent=5 // pred_fallthru
      _
  $region6: #{model_forward.5} parent=0 // loop_footer
    %s11 = sadd.s32 1, %s7
  $region7: #{model_forward.5} parent=0 // loop_footer_branch
    %6 = sbr.rel target = $region3
  $region8: #{model_forward.5} parent=0 // loop_exit
    _

// kernel: model_forward.4
$region0: #{model_forward.4}
  #allocation0 [shape = 'u32[]', space=smem, size = 0x4, offset = 0x4, fixed_abs, tag = 'smem constant byte address 0x4 - core index']
  #allocation1 [shape = 'u32[144,128]{1,0:T(1,128)}', space=vmem, size = 0x12000, scoped, tag = 'internal scratch']
  %s0 = inlined_call_operand.vmem [shape: bf16[1568,128], index: 0, kind: input, shape index: {}]
  %s1 = inlined_call_operand.vmem [shape: bf16[128,128], index: 1, kind: input, shape index: {}]
  %s2 = inlined_call_operand.vmem [shape: f32[1,128], index: 2, kind: input, shape index: {}]
  %s3 = inlined_call_operand.vmem [shape: f32[1,128], index: 3, kind: input, shape index: {}]
  %s4 = inlined_call_operand.vmem [shape: bf16[1568,128], index: 4, kind: output, shape index: {}]
  %s5 = sld [smem:[#allocation0]]
  $region49: #{model_forward.4} parent=0
    _
  %s7 = ssub.s32 1, %s5
  %s8 = scalar_select 0, %s7, %s5
  loop: start=0, step=1, limit=6
  $region2: #{model_forward.4} parent=0 // loop_pre_header
    _
  $region3: #{model_forward.4} parent=0 // loop_header
    %s10 = sphi 0, %s14
    %p11 = scmp.ge.s32.totalorder %s10, 6
    %s20 = sphi 0, %s22
    %s23 = sphi 0, %s20
    %s24 = sphi 0, %s23
    %s40 = sphi 0, %s24
    %s44 = sphi 0, %s44
    %s46 = sphi 0, %s44
    %s47 = sphi 0, %s46
    %s61 = sphi 0, %s47
    %s65 = sphi 0, %s65
    %s67 = sphi 0, %s65
    %s68 = sphi 0, %s67
    %s82 = sphi 0, %s68
    %s86 = sphi 0, %s86
    %s88 = sphi 0, %s86
    %s89 = sphi 0, %s88
    %s103 = sphi 0, %s89
    %s109 = sphi 0, %s111
    %s112 = sphi 0, %s109
    %s113 = sphi 0, %s112
    %s129 = sphi 0, %s113
  $region4: #{model_forward.4} parent=0 // loop_header_branch
    %13 = sbr.rel (%p11) target = $region8
  $region5: #{model_forward.4} parent=0 // loop_body
    %s15 = ssub.s32 %s10, 1
    %s16 = ssub.s32 %s10, 2
    %s17 = sadd.s32 %s10, 1
    %s18 = ssub.s32 %s10, %s17
    %p19 = scmp.eq.s32.totalorder %s18, 0
    %s21 = sadd.s32 %s20, 1
    %s22 = scalar_select %p19, %s20, %s21
    %p25 = pneg %p19
    %p26 = scmp.eq.s32.totalorder %s10, 3
    %p27 = por %p25, %p26
    %p28 = scmp.ne.s32.totalorder %s20, %s23
    %p29 = scmp.eq.s32.totalorder %s10, 0
    %p30 = por %p28, %p29
    %p31 = scmp.ne.s32.totalorder %s20, %s23
    %p32 = scmp.eq.s32.totalorder %s15, 3
    %p33 = por %p31, %p32
    %p34 = scmp.ne.s32.totalorder %s23, %s24
    %p35 = scmp.eq.s32.totalorder %s15, 0
    %p36 = por %p34, %p35
    %p37 = scmp.ne.s32.totalorder %s23, %s24
    %p38 = scmp.eq.s32.totalorder %s16, 3
    %p39 = por %p37, %p38
    %p41 = scmp.ne.s32.totalorder %s24, %s40
    %p42 = scmp.eq.s32.totalorder %s16, 0
    %p43 = por %p41, %p42
    %s45 = sadd.s32 %s44, 1
    %p48 = scmp.eq.s32.totalorder %s10, 3
    %p49 = scmp.ne.s32.totalorder %s44, %s46
    %p50 = scmp.eq.s32.totalorder %s10, 0
    %p51 = por %p49, %p50
    %p52 = scmp.ne.s32.totalorder %s44, %s46
    %p53 = scmp.eq.s32.totalorder %s15, 3
    %p54 = por %p52, %p53
    %p55 = scmp.ne.s32.totalorder %s46, %s47
    %p56 = scmp.eq.s32.totalorder %s15, 0
    %p57 = por %p55, %p56
    %p58 = scmp.ne.s32.totalorder %s46, %s47
    %p59 = scmp.eq.s32.totalorder %s16, 3
    %p60 = por %p58, %p59
    %p62 = scmp.ne.s32.totalorder %s47, %s61
    %p63 = scmp.eq.s32.totalorder %s16, 0
    %p64 = por %p62, %p63
    %s66 = sadd.s32 %s65, 1
    %p69 = scmp.eq.s32.totalorder %s10, 3
    %p70 = scmp.ne.s32.totalorder %s65, %s67
    %p71 = scmp.eq.s32.totalorder %s10, 0
    %p72 = por %p70, %p71
    %p73 = scmp.ne.s32.totalorder %s65, %s67
    %p74 = scmp.eq.s32.totalorder %s15, 3
    %p75 = por %p73, %p74
    %p76 = scmp.ne.s32.totalorder %s67, %s68
    %p77 = scmp.eq.s32.totalorder %s15, 0
    %p78 = por %p76, %p77
    %p79 = scmp.ne.s32.totalorder %s67, %s68
    %p80 = scmp.eq.s32.totalorder %s16, 3
    %p81 = por %p79, %p80
    %p83 = scmp.ne.s32.totalorder %s68, %s82
    %p84 = scmp.eq.s32.totalorder %s16, 0
    %p85 = por %p83, %p84
    %s87 = sadd.s32 %s86, 1
    %p90 = scmp.eq.s32.totalorder %s10, 3
    %p91 = scmp.ne.s32.totalorder %s86, %s88
    %p92 = scmp.eq.s32.totalorder %s10, 0
    %p93 = por %p91, %p92
    %p94 = scmp.ne.s32.totalorder %s86, %s88
    %p95 = scmp.eq.s32.totalorder %s15, 3
    %p96 = por %p94, %p95
    %p97 = scmp.ne.s32.totalorder %s88, %s89
    %p98 = scmp.eq.s32.totalorder %s15, 0
    %p99 = por %p97, %p98
    %p100 = scmp.ne.s32.totalorder %s88, %s89
    %p101 = scmp.eq.s32.totalorder %s16, 3
    %p102 = por %p100, %p101
    %p104 = scmp.ne.s32.totalorder %s89, %s103
    %p105 = scmp.eq.s32.totalorder %s16, 0
    %p106 = por %p104, %p105
    %s107 = ssub.s32 %s10, %s17
    %p108 = scmp.eq.s32.totalorder %s107, 0
    %s110 = sadd.s32 %s109, 1
    %s111 = scalar_select %p108, %s109, %s110
    %p114 = pneg %p108
    %p115 = scmp.eq.s32.totalorder %s10, 3
    %p116 = por %p114, %p115
    %p117 = scmp.ne.s32.totalorder %s109, %s112
    %p118 = scmp.eq.s32.totalorder %s10, 0
    %p119 = por %p117, %p118
    %p120 = scmp.ne.s32.totalorder %s109, %s112
    %p121 = scmp.eq.s32.totalorder %s15, 3
    %p122 = por %p120, %p121
    %p123 = scmp.ne.s32.totalorder %s112, %s113
    %p124 = scmp.eq.s32.totalorder %s15, 0
    %p125 = por %p123, %p124
    %p126 = scmp.ne.s32.totalorder %s112, %s113
    %p127 = scmp.eq.s32.totalorder %s16, 3
    %p128 = por %p126, %p127
    %p130 = scmp.ne.s32.totalorder %s113, %s129
    %p131 = scmp.eq.s32.totalorder %s16, 0
    %p132 = por %p130, %p131
    %p133 = scmp.le.s32.totalorder 1, %s10
    %p134 = scmp.lt.s32.totalorder %s10, 5
    %p135 = pnand %p133, %p134
    %p136 = pneg %p135
    // Predicated region
    $region9: #{model_forward.4} parent=5 // pred_check
      _
    $region10: #{model_forward.4} parent=5 // pred_check_branch
      %138 = sbr.rel (%p135) target = $region12
    $region11: #{model_forward.4} parent=5 // pred_region
      %s139 = ssub.s32 %s10, 1
      // Predicated region
      $region13: #{model_forward.4} parent=11 // pred_check
        %p140 = pneg %p57
      $region14: #{model_forward.4} parent=11 // pred_check_branch
        %142 = sbr.rel (%p140) target = $region16
      $region15: #{model_forward.4} parent=11 // pred_region
        _
      $region16: #{model_forward.4} parent=11 // pred_fallthru
        _
      // Predicated region
      $region17: #{model_forward.4} parent=11 // pred_check
        %p143 = pneg %p78
      $region18: #{model_forward.4} parent=11 // pred_check_branch
        %145 = sbr.rel (%p143) target = $region20
      $region19: #{model_forward.4} parent=11 // pred_region
        _
      $region20: #{model_forward.4} parent=11 // pred_fallthru
        _
      // Predicated region
      $region21: #{model_forward.4} parent=11 // pred_check
        %p146 = pneg %p99
      $region22: #{model_forward.4} parent=11 // pred_check_branch
        %148 = sbr.rel (%p146) target = $region24
      $region23: #{model_forward.4} parent=11 // pred_region
        _
      $region24: #{model_forward.4} parent=11 // pred_fallthru
        _
    $region12: #{model_forward.4} parent=5 // pred_fallthru
      _
    %p149 = scmp.lt.s32.totalorder %s10, 4
    // Predicated region
    $region25: #{model_forward.4} parent=5 // pred_check
      %p150 = pneg %p149
    $region26: #{model_forward.4} parent=5 // pred_check_branch
      %152 = sbr.rel (%p150) target = $region28
    $region27: #{model_forward.4} parent=5 // pred_region
      // Predicated region
      $region29: #{model_forward.4} parent=27 // pred_check
        %p153 = pneg %p30
      $region30: #{model_forward.4} parent=27 // pred_check_branch
        %155 = sbr.rel (%p153) target = $region32
      $region31: #{model_forward.4} parent=27 // pred_region
        %s156 = smul.u32 49, %s10
        %p157 = scmp.lt.s32.totalorder %s156, 195
        %s158 = scalar_select %p157, %s156, 195
        %s159 = smul.addr %s158, 4
        %s160 = scalar_lea.vmem %s0, %s159
        %s161 = smul.u32 49, %s10
      $region32: #{model_forward.4} parent=27 // pred_fallthru
        _
    $region28: #{model_forward.4} parent=5 // pred_fallthru
      _
    %p162 = scmp.le.s32.totalorder 1, %s10
    %p163 = scmp.lt.s32.totalorder %s10, 5
    %p164 = pnand %p162, %p163
    %p165 = pneg %p164
    // Predicated region
    $region33: #{model_forward.4} parent=5 // pred_check
      _
    $region34: #{model_forward.4} parent=5 // pred_check_branch
      %167 = sbr.rel (%p164) target = $region36
    $region35: #{model_forward.4} parent=5 // pred_region
      %s168 = ssub.s32 %s10, 1
      %s169 = smul.u32 49, %s15
      %p170 = scmp.lt.s32.totalorder %s169, 195
      %s171 = scalar_select %p170, %s169, 195
      %s172 = smul.addr %s171, 4
      %s173 = scalar_lea.vmem %s0, %s172
      %p174 = pneg %p36
      %p175 = pneg %p33
      %p176 = pneg %p57
      %p177 = pneg %p54
      %p178 = pneg %p78
      %p179 = pneg %p75
      %p180 = pneg %p99
      %p181 = pneg %p96
      %p182 = pneg %p125
      %p183 = pneg %p122
      %s184 = smul.u32 49, %s15
      %p185 = scmp.lt.s32.totalorder %s184, 195
      %s186 = scalar_select %p185, %s184, 195
      %s187 = smul.addr %s186, 4
      %s188 = scalar_lea.vmem %s4, %s187
      %s189 = smul.u32 49, %s15
      %p190 = scmp.lt.s32.totalorder %s189, 195
      %s191 = scalar_select %p190, %s189, 195
      %s192 = smul.addr %s191, 4
      %s193 = scalar_lea.vmem %s0, %s192
      %s194 = smul.u32 49, %s15
      %s195 = smul.u32 49, %s15
      %p196 = scmp.lt.s32.totalorder %s195, 195
      %s197 = scalar_select %p196, %s195, 195
      %s198 = smul.addr %s197, 4
      %s199 = scalar_lea.vmem %s4, %s198
      %s200 = smul.u32 49, %s15
      %v202 = vld [vmem:[%s193] sm:$0xf]
      %v203 = vld [vmem:[%s193 + $0x4] sm:$0xf]
      %v204 = vld [vmem:[%s193 + $0x8] sm:$0xf]
      %v205 = vld [vmem:[%s193 + $0xc] sm:$0xf]
      %v206 = vld [vmem:[%s193 + $0x10] sm:$0xf]
      %v207 = vld [vmem:[%s193 + $0x14] sm:$0xf]
      %v208 = vld [vmem:[%s193 + $0x18] sm:$0xf]
      %v209 = vld [vmem:[%s193 + $0x1c] sm:$0xf]
      %v210 = vld [vmem:[%s193 + $0x20] sm:$0xf]
      %v211 = vld [vmem:[%s193 + $0x24] sm:$0xf]
      %v212 = vld [vmem:[%s193 + $0x28] sm:$0xf]
      %v213 = vld [vmem:[%s193 + $0x2c] sm:$0xf]
      %v214 = vld [vmem:[%s193 + $0x30] sm:$0xf]
      %v215 = vld [vmem:[%s193 + $0x34] sm:$0xf]
      %v216 = vld [vmem:[%s193 + $0x38] sm:$0xf]
      %v217 = vld [vmem:[%s193 + $0x3c] sm:$0xf]
      %v218 = vld [vmem:[%s193 + $0x40] sm:$0xf]
      %v219 = vld [vmem:[%s193 + $0x44] sm:$0xf]
      %v220 = vld [vmem:[%s193 + $0x48] sm:$0xf]
      %v221 = vld [vmem:[%s193 + $0x4c] sm:$0xf]
      %v222 = vld [vmem:[%s193 + $0x50] sm:$0xf]
      %v223 = vld [vmem:[%s193 + $0x54] sm:$0xf]
      %v224 = vld [vmem:[%s193 + $0x58] sm:$0xf]
      %v225 = vld [vmem:[%s193 + $0x5c] sm:$0xf]
      %v226 = vld [vmem:[%s193 + $0x60] sm:$0xf]
      %v227 = vld [vmem:[%s193 + $0x64] sm:$0xf]
      %v228 = vld [vmem:[%s193 + $0x68] sm:$0xf]
      %v229 = vld [vmem:[%s193 + $0x6c] sm:$0xf]
      %v230 = vld [vmem:[%s193 + $0x70] sm:$0xf]
      %v231 = vld [vmem:[%s193 + $0x74] sm:$0xf]
      %v232 = vld [vmem:[%s193 + $0x78] sm:$0xf]
      %v233 = vld [vmem:[%s193 + $0x7c] sm:$0xf]
      %v234 = vld [vmem:[%s193 + $0x80] sm:$0xf]
      %v235 = vld [vmem:[%s193 + $0x84] sm:$0xf]
      %v236 = vld [vmem:[%s193 + $0x88] sm:$0xf]
      %v237 = vld [vmem:[%s193 + $0x8c] sm:$0xf]
      %v238 = vld [vmem:[%s193 + $0x90] sm:$0xf]
      %v239 = vld [vmem:[%s193 + $0x94] sm:$0xf]
      %v240 = vld [vmem:[%s193 + $0x98] sm:$0xf]
      %v241 = vld [vmem:[%s193 + $0x9c] sm:$0xf]
      %v242 = vld [vmem:[%s193 + $0xa0] sm:$0xf]
      %v243 = vld [vmem:[%s193 + $0xa4] sm:$0xf]
      %v244 = vld [vmem:[%s193 + $0xa8] sm:$0xf]
      %v245 = vld [vmem:[%s193 + $0xac] sm:$0xf]
      %v246 = vld [vmem:[%s193 + $0xb0] sm:$0xf]
      %v247 = vld [vmem:[%s193 + $0xb4] sm:$0xf]
      %v248 = vld [vmem:[%s193 + $0xb8] sm:$0xf]
      %v249 = vld [vmem:[%s193 + $0xbc] sm:$0xf]
      %v250 = vld [vmem:[%s193 + $0xc0] sm:$0xf]
      %v251 = vld [vmem:[%s1] sm:$0xf]
      %v252 = vld [vmem:[%s1 + $0x4] sm:$0xf]
      %v253 = vld [vmem:[%s1 + $0x8] sm:$0xf]
      %v254 = vld [vmem:[%s1 + $0xc] sm:$0xf]
      %v255 = vld [vmem:[%s1 + $0x10] sm:$0xf]
      %v256 = vld [vmem:[%s1 + $0x14] sm:$0xf]
      %v257 = vld [vmem:[%s1 + $0x18] sm:$0xf]
      %v258 = vld [vmem:[%s1 + $0x1c] sm:$0xf]
      %v259 = vld [vmem:[%s1 + $0x20] sm:$0xf]
      %v260 = vld [vmem:[%s1 + $0x24] sm:$0xf]
      %v261 = vld [vmem:[%s1 + $0x28] sm:$0xf]
      %v262 = vld [vmem:[%s1 + $0x2c] sm:$0xf]
      %v263 = vld [vmem:[%s1 + $0x30] sm:$0xf]
      %v264 = vld [vmem:[%s1 + $0x34] sm:$0xf]
      %v265 = vld [vmem:[%s1 + $0x38] sm:$0xf]
      %v266 = vld [vmem:[%s1 + $0x3c] sm:$0xf]
      %v316 = vunpack.c.l.b16 %v202
      %v317 = vunpack.c.l.b16 %v203
      %v318 = vunpack.c.l.b16 %v204
      %v319 = vunpack.c.l.b16 %v205
      %v320 = vunpack.c.l.b16 %v206
      %v321 = vunpack.c.l.b16 %v207
      %v322 = vunpack.c.l.b16 %v208
      %v323 = vunpack.c.l.b16 %v209
      %v324 = vunpack.c.l.b16 %v210
      %v325 = vunpack.c.l.b16 %v211
      %v326 = vunpack.c.l.b16 %v212
      %v327 = vunpack.c.l.b16 %v213
      %v328 = vunpack.c.l.b16 %v214
      %v329 = vunpack.c.l.b16 %v215
      %v330 = vunpack.c.l.b16 %v216
      %v331 = vunpack.c.l.b16 %v217
      %v332 = vunpack.c.l.b16 %v218
      %v333 = vunpack.c.l.b16 %v219
      %v334 = vunpack.c.l.b16 %v220
      %v335 = vunpack.c.l.b16 %v221
      %v336 = vunpack.c.l.b16 %v222
      %v337 = vunpack.c.l.b16 %v223
      %v338 = vunpack.c.l.b16 %v224
      %v339 = vunpack.c.l.b16 %v225
      %v340 = vunpack.c.l.b16 %v226
      %v341 = vunpack.c.l.b16 %v227
      %v342 = vunpack.c.l.b16 %v228
      %v343 = vunpack.c.l.b16 %v229
      %v344 = vunpack.c.l.b16 %v230
      %v345 = vunpack.c.l.b16 %v231
      %v346 = vunpack.c.l.b16 %v232
      %v347 = vunpack.c.l.b16 %v233
      %v348 = vunpack.c.l.b16 %v234
      %v349 = vunpack.c.l.b16 %v235
      %v350 = vunpack.c.l.b16 %v236
      %v351 = vunpack.c.l.b16 %v237
      %v352 = vunpack.c.l.b16 %v238
      %v353 = vunpack.c.l.b16 %v239
      %v354 = vunpack.c.l.b16 %v240
      %v355 = vunpack.c.l.b16 %v241
      %v356 = vunpack.c.l.b16 %v242
      %v357 = vunpack.c.l.b16 %v243
      %v358 = vunpack.c.l.b16 %v244
      %v359 = vunpack.c.l.b16 %v245
      %v360 = vunpack.c.l.b16 %v246
      %v361 = vunpack.c.l.b16 %v247
      %v362 = vunpack.c.l.b16 %v248
      %v363 = vunpack.c.l.b16 %v249
      %v364 = vunpack.c.l.b16 %v250
      %v365 = vpack.c.b16 %v317, %v316
      %v366 = vpack.c.b16 %v319, %v318
      %v367 = vpack.c.b16 %v321, %v320
      %v368 = vpack.c.b16 %v323, %v322
      %v369 = vpack.c.b16 %v325, %v324
      %v370 = vpack.c.b16 %v327, %v326
      %v371 = vpack.c.b16 %v329, %v328
      %v372 = vpack.c.b16 %v331, %v330
      %v373 = vpack.c.b16 %v333, %v332
      %v374 = vpack.c.b16 %v335, %v334
      %v375 = vpack.c.b16 %v337, %v336
      %v376 = vpack.c.b16 %v339, %v338
      %v377 = vpack.c.b16 %v341, %v340
      %v378 = vpack.c.b16 %v343, %v342
      %v379 = vpack.c.b16 %v345, %v344
      %v380 = vpack.c.b16 %v347, %v346
      %v381 = vpack.c.b16 %v349, %v348
      %v382 = vpack.c.b16 %v351, %v350
      %v383 = vpack.c.b16 %v353, %v352
      %v384 = vpack.c.b16 %v355, %v354
      %v385 = vpack.c.b16 %v357, %v356
      %v386 = vpack.c.b16 %v359, %v358
      %v387 = vpack.c.b16 %v361, %v360
      %v388 = vpack.c.b16 %v363, %v362
      %v389 = vpack.c.b16 %v364, %v364
      %v431 = vunpack.c.l.b16 %v251
      %v432 = vunpack.c.l.b16 %v252
      %v433 = vunpack.c.l.b16 %v253
      %v434 = vunpack.c.l.b16 %v254
      %v435 = vunpack.c.l.b16 %v255
      %v436 = vunpack.c.l.b16 %v256
      %v437 = vunpack.c.l.b16 %v257
      %v438 = vunpack.c.l.b16 %v258
      %v439 = vunpack.c.l.b16 %v259
      %v440 = vunpack.c.l.b16 %v260
      %v441 = vunpack.c.l.b16 %v261
      %v442 = vunpack.c.l.b16 %v262
      %v443 = vunpack.c.l.b16 %v263
      %v444 = vunpack.c.l.b16 %v264
      %v445 = vunpack.c.l.b16 %v265
      %v446 = vunpack.c.l.b16 %v266
      %v447 = vpack.c.b16 %v432, %v431
      %v448 = vpack.c.b16 %v434, %v433
      %v449 = vpack.c.b16 %v436, %v435
      %v450 = vpack.c.b16 %v438, %v437
      %v451 = vpack.c.b16 %v440, %v439
      %v452 = vpack.c.b16 %v442, %v441
      %v453 = vpack.c.b16 %v444, %v443
      %v454 = vpack.c.b16 %v446, %v445
      %463 = vmatprep.subr.bf16.mxu0 0
      %464 = vmatpush1.bf16.msra.mxu0 %v447
      %465 = vmatprep.subr.bf16.mxu0 0
      %466 = vmatpush1.bf16.msra.mxu0 %v448
      %467 = vmatprep.subr.bf16.mxu0 0
      %468 = vmatpush1.bf16.msra.mxu0 %v449
      %469 = vmatprep.subr.bf16.mxu0 0
      %470 = vmatpush1.bf16.msra.mxu0 %v450
      %471 = vmatprep.subr.bf16.mxu0 0
      %472 = vmatpush1.bf16.msra.mxu0 %v451
      %473 = vmatprep.subr.bf16.mxu0 0
      %474 = vmatpush1.bf16.msra.mxu0 %v452
      %475 = vmatprep.subr.bf16.mxu0 0
      %476 = vmatpush1.bf16.msra.mxu0 %v453
      %477 = vmatprep.subr.bf16.mxu0 0
      %478 = vmatpush1.bf16.msra.mxu0 %v454
      %479 = vmatprep.subr.bf16.mxu0 0
      %480 = vmatpush1.bf16.msra.mxu0 0
      %481 = vmatprep.subr.bf16.mxu0 0
      %482 = vmatpush1.bf16.msra.mxu0 0
      %483 = vmatprep.subr.bf16.mxu0 0
      %484 = vmatpush1.bf16.msra.mxu0 0
      %485 = vmatprep.subr.bf16.mxu0 0
      %486 = vmatpush1.bf16.msra.mxu0 0
      %487 = vmatprep.subr.bf16.mxu0 0
      %488 = vmatpush1.bf16.msra.mxu0 0
      %489 = vmatprep.subr.bf16.mxu0 0
      %490 = vmatpush1.bf16.msra.mxu0 0
      %491 = vmatprep.subr.bf16.mxu0 0
      %492 = vmatpush1.bf16.msra.mxu0 0
      %493 = vmatprep.subr.bf16.mxu0 0
      %494 = vmatpush1.bf16.msra.mxu0 0
      %495 = vmatprep.mubr.bf16.mxu0 0
      %496 = vmatmul.mubr.bf16.gmra.mrb[0].mxu0 %v365
      %v497 = vpop.f32.mrb[0].mxu0
      %v498 = vadd.f32 0.0, %v497
      %v499 = vpop.f32.mrb[0].mxu0
      %v500 = vpop.f32.mrb[0].mxu0
      %v501 = vadd.f32 0.0, %v500
      %v502 = vpop.f32.mrb[0].mxu0
      %503 = vmatprep.mubr.bf16.mxu0 0
      %504 = vmatmul.mubr.bf16.gmra.mrb[0].mxu0 %v366
      %v505 = vpop.f32.mrb[0].mxu0
      %v506 = vadd.f32 0.0, %v505
      %v507 = vpop.f32.mrb[0].mxu0
      %v508 = vpop.f32.mrb[0].mxu0
      %v509 = vadd.f32 0.0, %v508
      %v510 = vpop.f32.mrb[0].mxu0
      %511 = vmatprep.mubr.bf16.mxu0 0
      %512 = vmatmul.mubr.bf16.gmra.mrb[0].mxu0 %v367
      %v513 = vpop.f32.mrb[0].mxu0
      %v514 = vadd.f32 0.0, %v513
      %v515 = vpop.f32.mrb[0].mxu0
      %v516 = vpop.f32.mrb[0].mxu0
      %v517 = vadd.f32 0.0, %v516
      %v518 = vpop.f32.mrb[0].mxu0
      %519 = vmatprep.mubr.bf16.mxu0 0
      %520 = vmatmul.mubr.bf16.gmra.mrb[0].mxu0 %v368
      %v521 = vpop.f32.mrb[0].mxu0
      %v522 = vadd.f32 0.0, %v521
      %v523 = vpop.f32.mrb[0].mxu0
      %v524 = vpop.f32.mrb[0].mxu0
      %v525 = vadd.f32 0.0, %v524
      %v526 = vpop.f32.mrb[0].mxu0
      %527 = vmatprep.mubr.bf16.mxu0 0
      %528 = vmatmul.mubr.bf16.gmra.mrb[0].mxu0 %v369
      %v529 = vpop.f32.mrb[0].mxu0
      %v530 = vadd.f32 0.0, %v529
      %v531 = vpop.f32.mrb[0].mxu0
      %v532 = vpop.f32.mrb[0].mxu0
      %v533 = vadd.f32 0.0, %v532
      %v534 = vpop.f32.mrb[0].mxu0
      %535 = vmatprep.mubr.bf16.mxu0 0
      %536 = vmatmul.mubr.bf16.gmra.mrb[0].mxu0 %v370
      %v537 = vpop.f32.mrb[0].mxu0
      %v538 = vadd.f32 0.0, %v537
      %v539 = vpop.f32.mrb[0].mxu0
      %v540 = vpop.f32.mrb[0].mxu0
      %v541 = vadd.f32 0.0, %v540
      %v542 = vpop.f32.mrb[0].mxu0
      %543 = vmatprep.mubr.bf16.mxu0 0
      %544 = vmatmul.mubr.bf16.gmra.mrb[0].mxu0 %v371
      %v545 = vpop.f32.mrb[0].mxu0
      %v546 = vadd.f32 0.0, %v545
      %v547 = vpop.f32.mrb[0].mxu0
      %v548 = vpop.f32.mrb[0].mxu0
      %v549 = vadd.f32 0.0, %v548
      %v550 = vpop.f32.mrb[0].mxu0
      %551 = vmatprep.mubr.bf16.mxu0 0
      %552 = vmatmul.mubr.bf16.gmra.mrb[0].mxu0 %v372
      %v553 = vpop.f32.mrb[0].mxu0
      %v554 = vadd.f32 0.0, %v553
      %v555 = vpop.f32.mrb[0].mxu0
      %v556 = vpop.f32.mrb[0].mxu0
      %v557 = vadd.f32 0.0, %v556
      %v558 = vpop.f32.mrb[0].mxu0
      %559 = vmatprep.mubr.bf16.mxu0 0
      %560 = vmatmul.mubr.bf16.gmra.mrb[0].mxu0 %v373
      %v561 = vpop.f32.mrb[0].mxu0
      %v562 = vadd.f32 0.0, %v561
      %v563 = vpop.f32.mrb[0].mxu0
      %v564 = vpop.f32.mrb[0].mxu0
      %v565 = vadd.f32 0.0, %v564
      %v566 = vpop.f32.mrb[0].mxu0
      %567 = vmatprep.mubr.bf16.mxu0 0
      %568 = vmatmul.mubr.bf16.gmra.mrb[0].mxu0 %v374
      %v569 = vpop.f32.mrb[0].mxu0
      %v570 = vadd.f32 0.0, %v569
      %v571 = vpop.f32.mrb[0].mxu0
      %v572 = vpop.f32.mrb[0].mxu0
      %v573 = vadd.f32 0.0, %v572
      %v574 = vpop.f32.mrb[0].mxu0
      %575 = vmatprep.mubr.bf16.mxu0 0
      %576 = vmatmul.mubr.bf16.gmra.mrb[0].mxu0 %v375
      %v577 = vpop.f32.mrb[0].mxu0
      %v578 = vadd.f32 0.0, %v577
      %v579 = vpop.f32.mrb[0].mxu0
      %v580 = vpop.f32.mrb[0].mxu0
      %v581 = vadd.f32 0.0, %v580
      %v582 = vpop.f32.mrb[0].mxu0
      %583 = vmatprep.mubr.bf16.mxu0 0
      %584 = vmatmul.mubr.bf16.gmra.mrb[0].mxu0 %v376
      %v585 = vpop.f32.mrb[0].mxu0
      %v586 = vadd.f32 0.0, %v585
      %v587 = vpop.f32.mrb[0].mxu0
      %v588 = vpop.f32.mrb[0].mxu0
      %v589 = vadd.f32 0.0, %v588
      %v590 = vpop.f32.mrb[0].mxu0
      %591 = vmatprep.mubr.bf16.mxu0 0
      %592 = vmatmul.mubr.bf16.gmra.mrb[0].mxu0 %v377
      %v593 = vpop.f32.mrb[0].mxu0
      %v594 = vadd.f32 0.0, %v593
      %v595 = vpop.f32.mrb[0].mxu0
      %v596 = vpop.f32.mrb[0].mxu0
      %v597 = vadd.f32 0.0, %v596
      %v598 = vpop.f32.mrb[0].mxu0
      %599 = vmatprep.mubr.bf16.mxu0 0
      %600 = vmatmul.mubr.bf16.gmra.mrb[0].mxu0 %v378
      %v601 = vpop.f32.mrb[0].mxu0
      %v602 = vadd.f32 0.0, %v601
      %v603 = vpop.f32.mrb[0].mxu0
      %v604 = vpop.f32.mrb[0].mxu0
      %v605 = vadd.f32 0.0, %v604
      %v606 = vpop.f32.mrb[0].mxu0
      %607 = vmatprep.mubr.bf16.mxu0 0
      %608 = vmatmul.mubr.bf16.gmra.mrb[0].mxu0 %v379
      %v609 = vpop.f32.mrb[0].mxu0
      %v610 = vadd.f32 0.0, %v609
      %v611 = vpop.f32.mrb[0].mxu0
      %v612 = vpop.f32.mrb[0].mxu0
      %v613 = vadd.f32 0.0, %v612
      %v614 = vpop.f32.mrb[0].mxu0
      %615 = vmatprep.mubr.bf16.mxu0 0
      %616 = vmatmul.mubr.bf16.gmra.mrb[0].mxu0 %v380
      %v617 = vpop.f32.mrb[0].mxu0
      %v618 = vadd.f32 0.0, %v617
      %v619 = vpop.f32.mrb[0].mxu0
      %v620 = vpop.f32.mrb[0].mxu0
      %v621 = vadd.f32 0.0, %v620
      %v622 = vpop.f32.mrb[0].mxu0
      %623 = vmatprep.mubr.bf16.mxu0 0
      %624 = vmatmul.mubr.bf16.gmra.mrb[0].mxu0 %v381
      %v625 = vpop.f32.mrb[0].mxu0
      %v626 = vadd.f32 0.0, %v625
      %v627 = vpop.f32.mrb[0].mxu0
      %v628 = vpop.f32.mrb[0].mxu0
      %v629 = vadd.f32 0.0, %v628
      %v630 = vpop.f32.mrb[0].mxu0
      %631 = vmatprep.mubr.bf16.mxu0 0
      %632 = vmatmul.mubr.bf16.gmra.mrb[0].mxu0 %v382
      %v633 = vpop.f32.mrb[0].mxu0
      %v634 = vadd.f32 0.0, %v633
      %v635 = vpop.f32.mrb[0].mxu0
      %v636 = vpop.f32.mrb[0].mxu0
      %v637 = vadd.f32 0.0, %v636
      %v638 = vpop.f32.mrb[0].mxu0
      %639 = vmatprep.mubr.bf16.mxu0 0
      %640 = vmatmul.mubr.bf16.gmra.mrb[0].mxu0 %v383
      %v641 = vpop.f32.mrb[0].mxu0
      %v642 = vadd.f32 0.0, %v641
      %v643 = vpop.f32.mrb[0].mxu0
      %v644 = vpop.f32.mrb[0].mxu0
      %v645 = vadd.f32 0.0, %v644
      %v646 = vpop.f32.mrb[0].mxu0
      %647 = vmatprep.mubr.bf16.mxu0 0
      %648 = vmatmul.mubr.bf16.gmra.mrb[0].mxu0 %v384
      %v649 = vpop.f32.mrb[0].mxu0
      %v650 = vadd.f32 0.0, %v649
      %v651 = vpop.f32.mrb[0].mxu0
      %v652 = vpop.f32.mrb[0].mxu0
      %v653 = vadd.f32 0.0, %v652
      %v654 = vpop.f32.mrb[0].mxu0
      %655 = vmatprep.mubr.bf16.mxu0 0
      %656 = vmatmul.mubr.bf16.gmra.mrb[0].mxu0 %v385
      %v657 = vpop.f32.mrb[0].mxu0
      %v658 = vadd.f32 0.0, %v657
      %v659 = vpop.f32.mrb[0].mxu0
      %v660 = vpop.f32.mrb[0].mxu0
      %v661 = vadd.f32 0.0, %v660
      %v662 = vpop.f32.mrb[0].mxu0
      %663 = vmatprep.mubr.bf16.mxu0 0
      %664 = vmatmul.mubr.bf16.gmra.mrb[0].mxu0 %v386
      %v665 = vpop.f32.mrb[0].mxu0
      %v666 = vadd.f32 0.0, %v665
      %v667 = vpop.f32.mrb[0].mxu0
      %v668 = vpop.f32.mrb[0].mxu0
      %v669 = vadd.f32 0.0, %v668
      %v670 = vpop.f32.mrb[0].mxu0
      %671 = vmatprep.mubr.bf16.mxu0 0
      %672 = vmatmul.mubr.bf16.gmra.mrb[0].mxu0 %v387
      %v673 = vpop.f32.mrb[0].mxu0
      %v674 = vadd.f32 0.0, %v673
      %v675 = vpop.f32.mrb[0].mxu0
      %v676 = vpop.f32.mrb[0].mxu0
      %v677 = vadd.f32 0.0, %v676
      %v678 = vpop.f32.mrb[0].mxu0
      %679 = vmatprep.mubr.bf16.mxu0 0
      %680 = vmatmul.mubr.bf16.gmra.mrb[0].mxu0 %v388
      %v681 = vpop.f32.mrb[0].mxu0
      %v682 = vadd.f32 0.0, %v681
      %v683 = vpop.f32.mrb[0].mxu0
      %v684 = vpop.f32.mrb[0].mxu0
      %v685 = vadd.f32 0.0, %v684
      %v686 = vpop.f32.mrb[0].mxu0
      %687 = vmatprep.mubr.bf16.mxu0 0
      %688 = vmatmul.mubr.bf16.gmra.mrb[0].mxu0 %v389
      %v689 = vpop.f32.mrb[0].mxu0
      %v690 = vadd.f32 0.0, %v689
      %v691 = vpop.f32.mrb[0].mxu0
      %v692 = vpop.f32.mrb[0].mxu0
      %v693 = vpop.f32.mrb[0].mxu0
      %694 = vdwg.mxu0
      %v695 = vld [vmem:[%s2] sm:$0x1]
      %v697 = vlaneseq
      %v698 = vshrl.u32 %v697, 7
      %v699 = vsub.s32 0, %v698
      %v700 = vrot.slane %v695, %v699
      %v702 = vmul.f32 %v498, %v700
      %v703 = vmul.f32 %v501, %v700
      %v704 = vmul.f32 %v506, %v700
      %v705 = vmul.f32 %v509, %v700
      %v706 = vmul.f32 %v514, %v700
      %v707 = vmul.f32 %v517, %v700
      %v708 = vmul.f32 %v522, %v700
      %v709 = vmul.f32 %v525, %v700
      %v710 = vmul.f32 %v530, %v700
      %v711 = vmul.f32 %v533, %v700
      %v712 = vmul.f32 %v538, %v700
      %v713 = vmul.f32 %v541, %v700
      %v714 = vmul.f32 %v546, %v700
      %v715 = vmul.f32 %v549, %v700
      %v716 = vmul.f32 %v554, %v700
      %v717 = vmul.f32 %v557, %v700
      %v718 = vmul.f32 %v562, %v700
      %v719 = vmul.f32 %v565, %v700
      %v720 = vmul.f32 %v570, %v700
      %v721 = vmul.f32 %v573, %v700
      %v722 = vmul.f32 %v578, %v700
      %v723 = vmul.f32 %v581, %v700
      %v724 = vmul.f32 %v586, %v700
      %v725 = vmul.f32 %v589, %v700
      %v726 = vmul.f32 %v594, %v700
      %v727 = vmul.f32 %v597, %v700
      %v728 = vmul.f32 %v602, %v700
      %v729 = vmul.f32 %v605, %v700
      %v730 = vmul.f32 %v610, %v700
      %v731 = vmul.f32 %v613, %v700
      %v732 = vmul.f32 %v618, %v700
      %v733 = vmul.f32 %v621, %v700
      %v734 = vmul.f32 %v626, %v700
      %v735 = vmul.f32 %v629, %v700
      %v736 = vmul.f32 %v634, %v700
      %v737 = vmul.f32 %v637, %v700
      %v738 = vmul.f32 %v642, %v700
      %v739 = vmul.f32 %v645, %v700
      %v740 = vmul.f32 %v650, %v700
      %v741 = vmul.f32 %v653, %v700
      %v742 = vmul.f32 %v658, %v700
      %v743 = vmul.f32 %v661, %v700
      %v744 = vmul.f32 %v666, %v700
      %v745 = vmul.f32 %v669, %v700
      %v746 = vmul.f32 %v674, %v700
      %v747 = vmul.f32 %v677, %v700
      %v748 = vmul.f32 %v682, %v700
      %v749 = vmul.f32 %v685, %v700
      %v750 = vmul.f32 %v690, %v700
      %v751 = vld [vmem:[%s3] sm:$0x1]
      %v753 = vlaneseq
      %v754 = vshrl.u32 %v753, 7
      %v755 = vsub.s32 0, %v754
      %v756 = vrot.slane %v751, %v755
      %v758 = vadd.f32 %v702, %v756
      %v759 = vadd.f32 %v703, %v756
      %v760 = vadd.f32 %v704, %v756
      %v761 = vadd.f32 %v705, %v756
      %v762 = vadd.f32 %v706, %v756
      %v763 = vadd.f32 %v707, %v756
      %v764 = vadd.f32 %v708, %v756
      %v765 = vadd.f32 %v709, %v756
      %v766 = vadd.f32 %v710, %v756
      %v767 = vadd.f32 %v711, %v756
      %v768 = vadd.f32 %v712, %v756
      %v769 = vadd.f32 %v713, %v756
      %v770 = vadd.f32 %v714, %v756
      %v771 = vadd.f32 %v715, %v756
      %v772 = vadd.f32 %v716, %v756
      %v773 = vadd.f32 %v717, %v756
      %v774 = vadd.f32 %v718, %v756
      %v775 = vadd.f32 %v719, %v756
      %v776 = vadd.f32 %v720, %v756
      %v777 = vadd.f32 %v721, %v756
      %v778 = vadd.f32 %v722, %v756
      %v779 = vadd.f32 %v723, %v756
      %v780 = vadd.f32 %v724, %v756
      %v781 = vadd.f32 %v725, %v756
      %v782 = vadd.f32 %v726, %v756
      %v783 = vadd.f32 %v727, %v756
      %v784 = vadd.f32 %v728, %v756
      %v785 = vadd.f32 %v729, %v756
      %v786 = vadd.f32 %v730, %v756
      %v787 = vadd.f32 %v731, %v756
      %v788 = vadd.f32 %v732, %v756
      %v789 = vadd.f32 %v733, %v756
      %v790 = vadd.f32 %v734, %v756
      %v791 = vadd.f32 %v735, %v756
      %v792 = vadd.f32 %v736, %v756
      %v793 = vadd.f32 %v737, %v756
      %v794 = vadd.f32 %v738, %v756
      %v795 = vadd.f32 %v739, %v756
      %v796 = vadd.f32 %v740, %v756
      %v797 = vadd.f32 %v741, %v756
      %v798 = vadd.f32 %v742, %v756
      %v799 = vadd.f32 %v743, %v756
      %v800 = vadd.f32 %v744, %v756
      %v801 = vadd.f32 %v745, %v756
      %v802 = vadd.f32 %v746, %v756
      %v803 = vadd.f32 %v747, %v756
      %v804 = vadd.f32 %v748, %v756
      %v805 = vadd.f32 %v749, %v756
      %v806 = vadd.f32 %v750, %v756
      %v807 = vmax.f32 %v758, 0.0
      %v808 = vmax.f32 %v759, 0.0
      %v809 = vmax.f32 %v760, 0.0
      %v810 = vmax.f32 %v761, 0.0
      %v811 = vmax.f32 %v762, 0.0
      %v812 = vmax.f32 %v763, 0.0
      %v813 = vmax.f32 %v764, 0.0
      %v814 = vmax.f32 %v765, 0.0
      %v815 = vmax.f32 %v766, 0.0
      %v816 = vmax.f32 %v767, 0.0
      %v817 = vmax.f32 %v768, 0.0
      %v818 = vmax.f32 %v769, 0.0
      %v819 = vmax.f32 %v770, 0.0
      %v820 = vmax.f32 %v771, 0.0
      %v821 = vmax.f32 %v772, 0.0
      %v822 = vmax.f32 %v773, 0.0
      %v823 = vmax.f32 %v774, 0.0
      %v824 = vmax.f32 %v775, 0.0
      %v825 = vmax.f32 %v776, 0.0
      %v826 = vmax.f32 %v777, 0.0
      %v827 = vmax.f32 %v778, 0.0
      %v828 = vmax.f32 %v779, 0.0
      %v829 = vmax.f32 %v780, 0.0
      %v830 = vmax.f32 %v781, 0.0
      %v831 = vmax.f32 %v782, 0.0
      %v832 = vmax.f32 %v783, 0.0
      %v833 = vmax.f32 %v784, 0.0
      %v834 = vmax.f32 %v785, 0.0
      %v835 = vmax.f32 %v786, 0.0
      %v836 = vmax.f32 %v787, 0.0
      %v837 = vmax.f32 %v788, 0.0
      %v838 = vmax.f32 %v789, 0.0
      %v839 = vmax.f32 %v790, 0.0
      %v840 = vmax.f32 %v791, 0.0
      %v841 = vmax.f32 %v792, 0.0
      %v842 = vmax.f32 %v793, 0.0
      %v843 = vmax.f32 %v794, 0.0
      %v844 = vmax.f32 %v795, 0.0
      %v845 = vmax.f32 %v796, 0.0
      %v846 = vmax.f32 %v797, 0.0
      %v847 = vmax.f32 %v798, 0.0
      %v848 = vmax.f32 %v799, 0.0
      %v849 = vmax.f32 %v800, 0.0
      %v850 = vmax.f32 %v801, 0.0
      %v851 = vmax.f32 %v802, 0.0
      %v852 = vmax.f32 %v803, 0.0
      %v853 = vmax.f32 %v804, 0.0
      %v854 = vmax.f32 %v805, 0.0
      %v855 = vmax.f32 %v806, 0.0
      %v856 = vpack.c.bf16 %v808, %v807
      %v857 = vpack.c.bf16 %v810, %v809
      %v858 = vpack.c.bf16 %v812, %v811
      %v859 = vpack.c.bf16 %v814, %v813
      %v860 = vpack.c.bf16 %v816, %v815
      %v861 = vpack.c.bf16 %v818, %v817
      %v862 = vpack.c.bf16 %v820, %v819
      %v863 = vpack.c.bf16 %v822, %v821
      %v864 = vpack.c.bf16 %v824, %v823
      %v865 = vpack.c.bf16 %v826, %v825
      %v866 = vpack.c.bf16 %v828, %v827
      %v867 = vpack.c.bf16 %v830, %v829
      %v868 = vpack.c.bf16 %v832, %v831
      %v869 = vpack.c.bf16 %v834, %v833
      %v870 = vpack.c.bf16 %v836, %v835
      %v871 = vpack.c.bf16 %v838, %v837
      %v872 = vpack.c.bf16 %v840, %v839
      %v873 = vpack.c.bf16 %v842, %v841
      %v874 = vpack.c.bf16 %v844, %v843
      %v875 = vpack.c.bf16 %v846, %v845
      %v876 = vpack.c.bf16 %v848, %v847
      %v877 = vpack.c.bf16 %v850, %v849
      %v878 = vpack.c.bf16 %v852, %v851
      %v879 = vpack.c.bf16 %v854, %v853
      %v880 = vpack.c.bf16 %v855, %v855
      %v906 = vunpack.c.l.b16 %v856
      %v907 = vunpack.c.h.b16 %v856
      %v908 = vunpack.c.l.b16 %v857
      %v909 = vunpack.c.h.b16 %v857
      %v910 = vunpack.c.l.b16 %v858
      %v911 = vunpack.c.h.b16 %v858
      %v912 = vunpack.c.l.b16 %v859
      %v913 = vunpack.c.h.b16 %v859
      %v914 = vunpack.c.l.b16 %v860
      %v915 = vunpack.c.h.b16 %v860
      %v916 = vunpack.c.l.b16 %v861
      %v917 = vunpack.c.h.b16 %v861
      %v918 = vunpack.c.l.b16 %v862
      %v919 = vunpack.c.h.b16 %v862
      %v920 = vunpack.c.l.b16 %v863
      %v921 = vunpack.c.h.b16 %v863
      %v922 = vunpack.c.l.b16 %v864
      %v923 = vunpack.c.h.b16 %v864
      %v924 = vunpack.c.l.b16 %v865
      %v925 = vunpack.c.h.b16 %v865
      %v926 = vunpack.c.l.b16 %v866
      %v927 = vunpack.c.h.b16 %v866
      %v928 = vunpack.c.l.b16 %v867
      %v929 = vunpack.c.h.b16 %v867
      %v930 = vunpack.c.l.b16 %v868
      %v931 = vunpack.c.h.b16 %v868
      %v932 = vunpack.c.l.b16 %v869
      %v933 = vunpack.c.h.b16 %v869
      %v934 = vunpack.c.l.b16 %v870
      %v935 = vunpack.c.h.b16 %v870
      %v936 = vunpack.c.l.b16 %v871
      %v937 = vunpack.c.h.b16 %v871
      %v938 = vunpack.c.l.b16 %v872
      %v939 = vunpack.c.h.b16 %v872
      %v940 = vunpack.c.l.b16 %v873
      %v941 = vunpack.c.h.b16 %v873
      %v942 = vunpack.c.l.b16 %v874
      %v943 = vunpack.c.h.b16 %v874
      %v944 = vunpack.c.l.b16 %v875
      %v945 = vunpack.c.h.b16 %v875
      %v946 = vunpack.c.l.b16 %v876
      %v947 = vunpack.c.h.b16 %v876
      %v948 = vunpack.c.l.b16 %v877
      %v949 = vunpack.c.h.b16 %v877
      %v950 = vunpack.c.l.b16 %v878
      %v951 = vunpack.c.h.b16 %v878
      %v952 = vunpack.c.l.b16 %v879
      %v953 = vunpack.c.h.b16 %v879
      %v954 = vunpack.c.l.b16 %v880
      %v955 = vpack.c.b16 %v906, %v906
      %v956 = vpack.c.b16 %v907, %v907
      %v957 = vpack.c.b16 %v908, %v908
      %v958 = vpack.c.b16 %v909, %v909
      %v959 = vpack.c.b16 %v910, %v910
      %v960 = vpack.c.b16 %v911, %v911
      %v961 = vpack.c.b16 %v912, %v912
      %v962 = vpack.c.b16 %v913, %v913
      %v963 = vpack.c.b16 %v914, %v914
      %v964 = vpack.c.b16 %v915, %v915
      %v965 = vpack.c.b16 %v916, %v916
      %v966 = vpack.c.b16 %v917, %v917
      %v967 = vpack.c.b16 %v918, %v918
      %v968 = vpack.c.b16 %v919, %v919
      %v969 = vpack.c.b16 %v920, %v920
      %v970 = vpack.c.b16 %v921, %v921
      %v971 = vpack.c.b16 %v922, %v922
      %v972 = vpack.c.b16 %v923, %v923
      %v973 = vpack.c.b16 %v924, %v924
      %v974 = vpack.c.b16 %v925, %v925
      %v975 = vpack.c.b16 %v926, %v926
      %v976 = vpack.c.b16 %v927, %v927
      %v977 = vpack.c.b16 %v928, %v928
      %v978 = vpack.c.b16 %v929, %v929
      %v979 = vpack.c.b16 %v930, %v930
      %v980 = vpack.c.b16 %v931, %v931
      %v981 = vpack.c.b16 %v932, %v932
      %v982 = vpack.c.b16 %v933, %v933
      %v983 = vpack.c.b16 %v934, %v934
      %v984 = vpack.c.b16 %v935, %v935
      %v985 = vpack.c.b16 %v936, %v936
      %v986 = vpack.c.b16 %v937, %v937
      %v987 = vpack.c.b16 %v938, %v938
      %v988 = vpack.c.b16 %v939, %v939
      %v989 = vpack.c.b16 %v940, %v940
      %v990 = vpack.c.b16 %v941, %v941
      %v991 = vpack.c.b16 %v942, %v942
      %v992 = vpack.c.b16 %v943, %v943
      %v993 = vpack.c.b16 %v944, %v944
      %v994 = vpack.c.b16 %v945, %v945
      %v995 = vpack.c.b16 %v946, %v946
      %v996 = vpack.c.b16 %v947, %v947
      %v997 = vpack.c.b16 %v948, %v948
      %v998 = vpack.c.b16 %v949, %v949
      %v999 = vpack.c.b16 %v950, %v950
      %v1000 = vpack.c.b16 %v951, %v951
      %v1001 = vpack.c.b16 %v952, %v952
      %v1002 = vpack.c.b16 %v953, %v953
      %v1003 = vpack.c.b16 %v954, %v954
      %1053 = vst [vmem:[%s199] sm:$0xf] %v955
      %1054 = vst [vmem:[%s199 + $0x4] sm:$0xf] %v956
      %1055 = vst [vmem:[%s199 + $0x8] sm:$0xf] %v957
      %1056 = vst [vmem:[%s199 + $0xc] sm:$0xf] %v958
      %1057 = vst [vmem:[%s199 + $0x10] sm:$0xf] %v959
      %1058 = vst [vmem:[%s199 + $0x14] sm:$0xf] %v960
      %1059 = vst [vmem:[%s199 + $0x18] sm:$0xf] %v961
      %1060 = vst [vmem:[%s199 + $0x1c] sm:$0xf] %v962
      %1061 = vst [vmem:[%s199 + $0x20] sm:$0xf] %v963
      %1062 = vst [vmem:[%s199 + $0x24] sm:$0xf] %v964
      %1063 = vst [vmem:[%s199 + $0x28] sm:$0xf] %v965
      %1064 = vst [vmem:[%s199 + $0x2c] sm:$0xf] %v966
      %1065 = vst [vmem:[%s199 + $0x30] sm:$0xf] %v967
      %1066 = vst [vmem:[%s199 + $0x34] sm:$0xf] %v968
      %1067 = vst [vmem:[%s199 + $0x38] sm:$0xf] %v969
      %1068 = vst [vmem:[%s199 + $0x3c] sm:$0xf] %v970
      %1069 = vst [vmem:[%s199 + $0x40] sm:$0xf] %v971
      %1070 = vst [vmem:[%s199 + $0x44] sm:$0xf] %v972
      %1071 = vst [vmem:[%s199 + $0x48] sm:$0xf] %v973
      %1072 = vst [vmem:[%s199 + $0x4c] sm:$0xf] %v974
      %1073 = vst [vmem:[%s199 + $0x50] sm:$0xf] %v975
      %1074 = vst [vmem:[%s199 + $0x54] sm:$0xf] %v976
      %1075 = vst [vmem:[%s199 + $0x58] sm:$0xf] %v977
      %1076 = vst [vmem:[%s199 + $0x5c] sm:$0xf] %v978
      %1077 = vst [vmem:[%s199 + $0x60] sm:$0xf] %v979
      %1078 = vst [vmem:[%s199 + $0x64] sm:$0xf] %v980
      %1079 = vst [vmem:[%s199 + $0x68] sm:$0xf] %v981
      %1080 = vst [vmem:[%s199 + $0x6c] sm:$0xf] %v982
      %1081 = vst [vmem:[%s199 + $0x70] sm:$0xf] %v983
      %1082 = vst [vmem:[%s199 + $0x74] sm:$0xf] %v984
      %1083 = vst [vmem:[%s199 + $0x78] sm:$0xf] %v985
      %1084 = vst [vmem:[%s199 + $0x7c] sm:$0xf] %v986
      %1085 = vst [vmem:[%s199 + $0x80] sm:$0xf] %v987
      %1086 = vst [vmem:[%s199 + $0x84] sm:$0xf] %v988
      %1087 = vst [vmem:[%s199 + $0x88] sm:$0xf] %v989
      %1088 = vst [vmem:[%s199 + $0x8c] sm:$0xf] %v990
      %1089 = vst [vmem:[%s199 + $0x90] sm:$0xf] %v991
      %1090 = vst [vmem:[%s199 + $0x94] sm:$0xf] %v992
      %1091 = vst [vmem:[%s199 + $0x98] sm:$0xf] %v993
      %1092 = vst [vmem:[%s199 + $0x9c] sm:$0xf] %v994
      %1093 = vst [vmem:[%s199 + $0xa0] sm:$0xf] %v995
      %1094 = vst [vmem:[%s199 + $0xa4] sm:$0xf] %v996
      %1095 = vst [vmem:[%s199 + $0xa8] sm:$0xf] %v997
      %1096 = vst [vmem:[%s199 + $0xac] sm:$0xf] %v998
      %1097 = vst [vmem:[%s199 + $0xb0] sm:$0xf] %v999
      %1098 = vst [vmem:[%s199 + $0xb4] sm:$0xf] %v1000
      %1099 = vst [vmem:[%s199 + $0xb8] sm:$0xf] %v1001
      %1100 = vst [vmem:[%s199 + $0xbc] sm:$0xf] %v1002
      %1101 = vst [vmem:[%s199 + $0xc0] sm:$0xf] %v1003
      %s1102 = smul.u32 49, %s15
      %p1103 = scmp.lt.s32.totalorder %s1102, 195
      %s1104 = scalar_select %p1103, %s1102, 195
      %s1105 = smul.addr %s1104, 4
      %s1106 = scalar_lea.vmem %s4, %s1105
      // Predicated region
      $region37: #{model_forward.4} parent=35 // pred_check
        %p1107 = pneg %p122
      $region38: #{model_forward.4} parent=35 // pred_check_branch
        %1109 = sbr.rel (%p1107) target = $region40
      $region39: #{model_forward.4} parent=35 // pred_region
        %s1110 = smul.u32 49, %s15
      $region40: #{model_forward.4} parent=35 // pred_fallthru
        _
    $region36: #{model_forward.4} parent=5 // pred_fallthru
      _
    %p1111 = scmp.le.s32.totalorder 2, %s10
    // Predicated region
    $region41: #{model_forward.4} parent=5 // pred_check
      %p1112 = pneg %p1111
    $region42: #{model_forward.4} parent=5 // pred_check_branch
      %1114 = sbr.rel (%p1112) target = $region44
    $region43: #{model_forward.4} parent=5 // pred_region
      %s1115 = ssub.s32 %s10, 2
      // Predicated region
      $region45: #{model_forward.4} parent=43 // pred_check
        %p1116 = pneg %p128
      $region46: #{model_forward.4} parent=43 // pred_check_branch
        %1118 = sbr.rel (%p1116) target = $region48
      $region47: #{model_forward.4} parent=43 // pred_region
        %s1119 = smul.u32 49, %s16
        %p1120 = scmp.lt.s32.totalorder %s1119, 195
        %s1121 = scalar_select %p1120, %s1119, 195
        %s1122 = smul.addr %s1121, 4
        %s1123 = scalar_lea.vmem %s4, %s1122
      $region48: #{model_forward.4} parent=43 // pred_fallthru
        _
    $region44: #{model_forward.4} parent=5 // pred_fallthru
      _
  $region6: #{model_forward.4} parent=0 // loop_footer
    %s14 = sadd.s32 1, %s10
  $region7: #{model_forward.4} parent=0 // loop_footer_branch
    %9 = sbr.rel target = $region3
  $region8: #{model_forward.4} parent=0 // loop_exit
    _

// kernel: model_forward.7
$region0: #{model_forward.7}
  #allocation0 [shape = 'u32[]', space=smem, size = 0x4, offset = 0x4, fixed_abs, tag = 'smem constant byte address 0x4 - core index']
  #allocation1 [shape = 'u32[144,128]{1,0:T(1,128)}', space=vmem, size = 0x12000, scoped, tag = 'internal scratch']
  %s0 = inlined_call_operand.vmem [shape: bf16[2,3200], index: 0, kind: input, shape index: {}]
  %s1 = inlined_call_operand.vmem [shape: bf16[3200,128], index: 1, kind: input, shape index: {}]
  %s2 = inlined_call_operand.vmem [shape: f32[1,128], index: 2, kind: input, shape index: {}]
  %s3 = inlined_call_operand.vmem [shape: f32[1,128], index: 3, kind: input, shape index: {}]
  %s4 = inlined_call_operand.vmem [shape: f32[2,128], index: 4, kind: output, shape index: {}]
  %s5 = sld [smem:[#allocation0]]
  $region26: #{model_forward.7} parent=0
    _
  %s7 = ssub.s32 1, %s5
  %s8 = scalar_select 0, %s7, %s5
  // Predicated region
  $region2: #{model_forward.7} parent=0 // pred_check
    _
  $region3: #{model_forward.7} parent=0 // pred_check_branch
    %10 = sbr.rel (0) target = $region5
  $region4: #{model_forward.7} parent=0 // pred_region
    _
  $region5: #{model_forward.7} parent=0 // pred_fallthru
    _
  // Predicated region
  $region6: #{model_forward.7} parent=0 // pred_check
    _
  $region7: #{model_forward.7} parent=0 // pred_check_branch
    %12 = sbr.rel (0) target = $region9
  $region8: #{model_forward.7} parent=0 // pred_region
    _
  $region9: #{model_forward.7} parent=0 // pred_fallthru
    _
  // Predicated region
  $region10: #{model_forward.7} parent=0 // pred_check
    _
  $region11: #{model_forward.7} parent=0 // pred_check_branch
    %14 = sbr.rel (0) target = $region13
  $region12: #{model_forward.7} parent=0 // pred_region
    _
  $region13: #{model_forward.7} parent=0 // pred_fallthru
    _
  // Predicated region
  $region14: #{model_forward.7} parent=0 // pred_check
    _
  $region15: #{model_forward.7} parent=0 // pred_check_branch
    %16 = sbr.rel (0) target = $region17
  $region16: #{model_forward.7} parent=0 // pred_region
    _
  $region17: #{model_forward.7} parent=0 // pred_fallthru
    _
  %v18 = vld [vmem:[%s0] sm:$0xff]
  %v19 = vld [vmem:[%s0 + $0x8] sm:$0xff]
  %v20 = vld [vmem:[%s0 + $0x10] sm:$0xff]
  %v21 = vld [vmem:[%s0 + $0x18] sm:$0x1]
  %v22 = vld [vmem:[%s1] sm:$0xf]
  %v23 = vld [vmem:[%s1 + $0x4] sm:$0xf]
  %v24 = vld [vmem:[%s1 + $0x8] sm:$0xf]
  %v25 = vld [vmem:[%s1 + $0xc] sm:$0xf]
  %v26 = vld [vmem:[%s1 + $0x10] sm:$0xf]
  %v27 = vld [vmem:[%s1 + $0x14] sm:$0xf]
  %v28 = vld [vmem:[%s1 + $0x18] sm:$0xf]
  %v29 = vld [vmem:[%s1 + $0x1c] sm:$0xf]
  %v30 = vld [vmem:[%s1 + $0x20] sm:$0xf]
  %v31 = vld [vmem:[%s1 + $0x24] sm:$0xf]
  %v32 = vld [vmem:[%s1 + $0x28] sm:$0xf]
  %v33 = vld [vmem:[%s1 + $0x2c] sm:$0xf]
  %v34 = vld [vmem:[%s1 + $0x30] sm:$0xf]
  %v35 = vld [vmem:[%s1 + $0x34] sm:$0xf]
  %v36 = vld [vmem:[%s1 + $0x38] sm:$0xf]
  %v37 = vld [vmem:[%s1 + $0x3c] sm:$0xf]
  %v38 = vld [vmem:[%s1 + $0x40] sm:$0xf]
  %v39 = vld [vmem:[%s1 + $0x44] sm:$0xf]
  %v40 = vld [vmem:[%s1 + $0x48] sm:$0xf]
  %v41 = vld [vmem:[%s1 + $0x4c] sm:$0xf]
  %v42 = vld [vmem:[%s1 + $0x50] sm:$0xf]
  %v43 = vld [vmem:[%s1 + $0x54] sm:$0xf]
  %v44 = vld [vmem:[%s1 + $0x58] sm:$0xf]
  %v45 = vld [vmem:[%s1 + $0x5c] sm:$0xf]
  %v46 = vld [vmem:[%s1 + $0x60] sm:$0xf]
  %v47 = vld [vmem:[%s1 + $0x64] sm:$0xf]
  %v48 = vld [vmem:[%s1 + $0x68] sm:$0xf]
  %v49 = vld [vmem:[%s1 + $0x6c] sm:$0xf]
  %v50 = vld [vmem:[%s1 + $0x70] sm:$0xf]
  %v51 = vld [vmem:[%s1 + $0x74] sm:$0xf]
  %v52 = vld [vmem:[%s1 + $0x78] sm:$0xf]
  %v53 = vld [vmem:[%s1 + $0x7c] sm:$0xf]
  %v54 = vld [vmem:[%s1 + $0x80] sm:$0xf]
  %v55 = vld [vmem:[%s1 + $0x84] sm:$0xf]
  %v56 = vld [vmem:[%s1 + $0x88] sm:$0xf]
  %v57 = vld [vmem:[%s1 + $0x8c] sm:$0xf]
  %v58 = vld [vmem:[%s1 + $0x90] sm:$0xf]
  %v59 = vld [vmem:[%s1 + $0x94] sm:$0xf]
  %v60 = vld [vmem:[%s1 + $0x98] sm:$0xf]
  %v61 = vld [vmem:[%s1 + $0x9c] sm:$0xf]
  %v62 = vld [vmem:[%s1 + $0xa0] sm:$0xf]
  %v63 = vld [vmem:[%s1 + $0xa4] sm:$0xf]
  %v64 = vld [vmem:[%s1 + $0xa8] sm:$0xf]
  %v65 = vld [vmem:[%s1 + $0xac] sm:$0xf]
  %v66 = vld [vmem:[%s1 + $0xb0] sm:$0xf]
  %v67 = vld [vmem:[%s1 + $0xb4] sm:$0xf]
  %v68 = vld [vmem:[%s1 + $0xb8] sm:$0xf]
  %v69 = vld [vmem:[%s1 + $0xbc] sm:$0xf]
  %v70 = vld [vmem:[%s1 + $0xc0] sm:$0xf]
  %v71 = vld [vmem:[%s1 + $0xc4] sm:$0xf]
  %v72 = vld [vmem:[%s1 + $0xc8] sm:$0xf]
  %v73 = vld [vmem:[%s1 + $0xcc] sm:$0xf]
  %v74 = vld [vmem:[%s1 + $0xd0] sm:$0xf]
  %v75 = vld [vmem:[%s1 + $0xd4] sm:$0xf]
  %v76 = vld [vmem:[%s1 + $0xd8] sm:$0xf]
  %v77 = vld [vmem:[%s1 + $0xdc] sm:$0xf]
  %v78 = vld [vmem:[%s1 + $0xe0] sm:$0xf]
  %v79 = vld [vmem:[%s1 + $0xe4] sm:$0xf]
  %v80 = vld [vmem:[%s1 + $0xe8] sm:$0xf]
  %v81 = vld [vmem:[%s1 + $0xec] sm:$0xf]
  %v82 = vld [vmem:[%s1 + $0xf0] sm:$0xf]
  %v83 = vld [vmem:[%s1 + $0xf4] sm:$0xf]
  %v84 = vld [vmem:[%s1 + $0xf8] sm:$0xf]
  %v85 = vld [vmem:[%s1 + $0xfc] sm:$0xf]
  %v86 = vld [vmem:[%s1 + $0x100] sm:$0xf]
  %v87 = vld [vmem:[%s1 + $0x104] sm:$0xf]
  %v88 = vld [vmem:[%s1 + $0x108] sm:$0xf]
  %v89 = vld [vmem:[%s1 + $0x10c] sm:$0xf]
  %v90 = vld [vmem:[%s1 + $0x110] sm:$0xf]
  %v91 = vld [vmem:[%s1 + $0x114] sm:$0xf]
  %v92 = vld [vmem:[%s1 + $0x118] sm:$0xf]
  %v93 = vld [vmem:[%s1 + $0x11c] sm:$0xf]
  %v94 = vld [vmem:[%s1 + $0x120] sm:$0xf]
  %v95 = vld [vmem:[%s1 + $0x124] sm:$0xf]
  %v96 = vld [vmem:[%s1 + $0x128] sm:$0xf]
  %v97 = vld [vmem:[%s1 + $0x12c] sm:$0xf]
  %v98 = vld [vmem:[%s1 + $0x130] sm:$0xf]
  %v99 = vld [vmem:[%s1 + $0x134] sm:$0xf]
  %v100 = vld [vmem:[%s1 + $0x138] sm:$0xf]
  %v101 = vld [vmem:[%s1 + $0x13c] sm:$0xf]
  %v102 = vld [vmem:[%s1 + $0x140] sm:$0xf]
  %v103 = vld [vmem:[%s1 + $0x144] sm:$0xf]
  %v104 = vld [vmem:[%s1 + $0x148] sm:$0xf]
  %v105 = vld [vmem:[%s1 + $0x14c] sm:$0xf]
  %v106 = vld [vmem:[%s1 + $0x150] sm:$0xf]
  %v107 = vld [vmem:[%s1 + $0x154] sm:$0xf]
  %v108 = vld [vmem:[%s1 + $0x158] sm:$0xf]
  %v109 = vld [vmem:[%s1 + $0x15c] sm:$0xf]
  %v110 = vld [vmem:[%s1 + $0x160] sm:$0xf]
  %v111 = vld [vmem:[%s1 + $0x164] sm:$0xf]
  %v112 = vld [vmem:[%s1 + $0x168] sm:$0xf]
  %v113 = vld [vmem:[%s1 + $0x16c] sm:$0xf]
  %v114 = vld [vmem:[%s1 + $0x170] sm:$0xf]
  %v115 = vld [vmem:[%s1 + $0x174] sm:$0xf]
  %v116 = vld [vmem:[%s1 + $0x178] sm:$0xf]
  %v117 = vld [vmem:[%s1 + $0x17c] sm:$0xf]
  %v118 = vld [vmem:[%s1 + $0x180] sm:$0xf]
  %v119 = vld [vmem:[%s1 + $0x184] sm:$0xf]
  %v120 = vld [vmem:[%s1 + $0x188] sm:$0xf]
  %v121 = vld [vmem:[%s1 + $0x18c] sm:$0xf]
  %v122 = vld [vmem:[%s1 + $0x190] sm:$0xf]
  %v123 = vld [vmem:[%s1 + $0x194] sm:$0xf]
  %v124 = vld [vmem:[%s1 + $0x198] sm:$0xf]
  %v125 = vld [vmem:[%s1 + $0x19c] sm:$0xf]
  %v126 = vld [vmem:[%s1 + $0x1a0] sm:$0xf]
  %v127 = vld [vmem:[%s1 + $0x1a4] sm:$0xf]
  %v128 = vld [vmem:[%s1 + $0x1a8] sm:$0xf]
  %v129 = vld [vmem:[%s1 + $0x1ac] sm:$0xf]
  %v130 = vld [vmem:[%s1 + $0x1b0] sm:$0xf]
  %v131 = vld [vmem:[%s1 + $0x1b4] sm:$0xf]
  %v132 = vld [vmem:[%s1 + $0x1b8] sm:$0xf]
  %v133 = vld [vmem:[%s1 + $0x1bc] sm:$0xf]
  %v134 = vld [vmem:[%s1 + $0x1c0] sm:$0xf]
  %v135 = vld [vmem:[%s1 + $0x1c4] sm:$0xf]
  %v136 = vld [vmem:[%s1 + $0x1c8] sm:$0xf]
  %v137 = vld [vmem:[%s1 + $0x1cc] sm:$0xf]
  %v138 = vld [vmem:[%s1 + $0x1d0] sm:$0xf]
  %v139 = vld [vmem:[%s1 + $0x1d4] sm:$0xf]
  %v140 = vld [vmem:[%s1 + $0x1d8] sm:$0xf]
  %v141 = vld [vmem:[%s1 + $0x1dc] sm:$0xf]
  %v142 = vld [vmem:[%s1 + $0x1e0] sm:$0xf]
  %v143 = vld [vmem:[%s1 + $0x1e4] sm:$0xf]
  %v144 = vld [vmem:[%s1 + $0x1e8] sm:$0xf]
  %v145 = vld [vmem:[%s1 + $0x1ec] sm:$0xf]
  %v146 = vld [vmem:[%s1 + $0x1f0] sm:$0xf]
  %v147 = vld [vmem:[%s1 + $0x1f4] sm:$0xf]
  %v148 = vld [vmem:[%s1 + $0x1f8] sm:$0xf]
  %v149 = vld [vmem:[%s1 + $0x1fc] sm:$0xf]
  %v150 = vld [vmem:[%s1 + $0x200] sm:$0xf]
  %v151 = vld [vmem:[%s1 + $0x204] sm:$0xf]
  %v152 = vld [vmem:[%s1 + $0x208] sm:$0xf]
  %v153 = vld [vmem:[%s1 + $0x20c] sm:$0xf]
  %v154 = vld [vmem:[%s1 + $0x210] sm:$0xf]
  %v155 = vld [vmem:[%s1 + $0x214] sm:$0xf]
  %v156 = vld [vmem:[%s1 + $0x218] sm:$0xf]
  %v157 = vld [vmem:[%s1 + $0x21c] sm:$0xf]
  %v158 = vld [vmem:[%s1 + $0x220] sm:$0xf]
  %v159 = vld [vmem:[%s1 + $0x224] sm:$0xf]
  %v160 = vld [vmem:[%s1 + $0x228] sm:$0xf]
  %v161 = vld [vmem:[%s1 + $0x22c] sm:$0xf]
  %v162 = vld [vmem:[%s1 + $0x230] sm:$0xf]
  %v163 = vld [vmem:[%s1 + $0x234] sm:$0xf]
  %v164 = vld [vmem:[%s1 + $0x238] sm:$0xf]
  %v165 = vld [vmem:[%s1 + $0x23c] sm:$0xf]
  %v166 = vld [vmem:[%s1 + $0x240] sm:$0xf]
  %v167 = vld [vmem:[%s1 + $0x244] sm:$0xf]
  %v168 = vld [vmem:[%s1 + $0x248] sm:$0xf]
  %v169 = vld [vmem:[%s1 + $0x24c] sm:$0xf]
  %v170 = vld [vmem:[%s1 + $0x250] sm:$0xf]
  %v171 = vld [vmem:[%s1 + $0x254] sm:$0xf]
  %v172 = vld [vmem:[%s1 + $0x258] sm:$0xf]
  %v173 = vld [vmem:[%s1 + $0x25c] sm:$0xf]
  %v174 = vld [vmem:[%s1 + $0x260] sm:$0xf]
  %v175 = vld [vmem:[%s1 + $0x264] sm:$0xf]
  %v176 = vld [vmem:[%s1 + $0x268] sm:$0xf]
  %v177 = vld [vmem:[%s1 + $0x26c] sm:$0xf]
  %v178 = vld [vmem:[%s1 + $0x270] sm:$0xf]
  %v179 = vld [vmem:[%s1 + $0x274] sm:$0xf]
  %v180 = vld [vmem:[%s1 + $0x278] sm:$0xf]
  %v181 = vld [vmem:[%s1 + $0x27c] sm:$0xf]
  %v182 = vld [vmem:[%s1 + $0x280] sm:$0xf]
  %v183 = vld [vmem:[%s1 + $0x284] sm:$0xf]
  %v184 = vld [vmem:[%s1 + $0x288] sm:$0xf]
  %v185 = vld [vmem:[%s1 + $0x28c] sm:$0xf]
  %v186 = vld [vmem:[%s1 + $0x290] sm:$0xf]
  %v187 = vld [vmem:[%s1 + $0x294] sm:$0xf]
  %v188 = vld [vmem:[%s1 + $0x298] sm:$0xf]
  %v189 = vld [vmem:[%s1 + $0x29c] sm:$0xf]
  %v190 = vld [vmem:[%s1 + $0x2a0] sm:$0xf]
  %v191 = vld [vmem:[%s1 + $0x2a4] sm:$0xf]
  %v192 = vld [vmem:[%s1 + $0x2a8] sm:$0xf]
  %v193 = vld [vmem:[%s1 + $0x2ac] sm:$0xf]
  %v194 = vld [vmem:[%s1 + $0x2b0] sm:$0xf]
  %v195 = vld [vmem:[%s1 + $0x2b4] sm:$0xf]
  %v196 = vld [vmem:[%s1 + $0x2b8] sm:$0xf]
  %v197 = vld [vmem:[%s1 + $0x2bc] sm:$0xf]
  %v198 = vld [vmem:[%s1 + $0x2c0] sm:$0xf]
  %v199 = vld [vmem:[%s1 + $0x2c4] sm:$0xf]
  %v200 = vld [vmem:[%s1 + $0x2c8] sm:$0xf]
  %v201 = vld [vmem:[%s1 + $0x2cc] sm:$0xf]
  %v202 = vld [vmem:[%s1 + $0x2d0] sm:$0xf]
  %v203 = vld [vmem:[%s1 + $0x2d4] sm:$0xf]
  %v204 = vld [vmem:[%s1 + $0x2d8] sm:$0xf]
  %v205 = vld [vmem:[%s1 + $0x2dc] sm:$0xf]
  %v206 = vld [vmem:[%s1 + $0x2e0] sm:$0xf]
  %v207 = vld [vmem:[%s1 + $0x2e4] sm:$0xf]
  %v208 = vld [vmem:[%s1 + $0x2e8] sm:$0xf]
  %v209 = vld [vmem:[%s1 + $0x2ec] sm:$0xf]
  %v210 = vld [vmem:[%s1 + $0x2f0] sm:$0xf]
  %v211 = vld [vmem:[%s1 + $0x2f4] sm:$0xf]
  %v212 = vld [vmem:[%s1 + $0x2f8] sm:$0xf]
  %v213 = vld [vmem:[%s1 + $0x2fc] sm:$0xf]
  %v214 = vld [vmem:[%s1 + $0x300] sm:$0xf]
  %v215 = vld [vmem:[%s1 + $0x304] sm:$0xf]
  %v216 = vld [vmem:[%s1 + $0x308] sm:$0xf]
  %v217 = vld [vmem:[%s1 + $0x30c] sm:$0xf]
  %v218 = vld [vmem:[%s1 + $0x310] sm:$0xf]
  %v219 = vld [vmem:[%s1 + $0x314] sm:$0xf]
  %v220 = vld [vmem:[%s1 + $0x318] sm:$0xf]
  %v221 = vld [vmem:[%s1 + $0x31c] sm:$0xf]
  %v222 = vld [vmem:[%s1 + $0x320] sm:$0xf]
  %v223 = vld [vmem:[%s1 + $0x324] sm:$0xf]
  %v224 = vld [vmem:[%s1 + $0x328] sm:$0xf]
  %v225 = vld [vmem:[%s1 + $0x32c] sm:$0xf]
  %v226 = vld [vmem:[%s1 + $0x330] sm:$0xf]
  %v227 = vld [vmem:[%s1 + $0x334] sm:$0xf]
  %v228 = vld [vmem:[%s1 + $0x338] sm:$0xf]
  %v229 = vld [vmem:[%s1 + $0x33c] sm:$0xf]
  %v230 = vld [vmem:[%s1 + $0x340] sm:$0xf]
  %v231 = vld [vmem:[%s1 + $0x344] sm:$0xf]
  %v232 = vld [vmem:[%s1 + $0x348] sm:$0xf]
  %v233 = vld [vmem:[%s1 + $0x34c] sm:$0xf]
  %v234 = vld [vmem:[%s1 + $0x350] sm:$0xf]
  %v235 = vld [vmem:[%s1 + $0x354] sm:$0xf]
  %v236 = vld [vmem:[%s1 + $0x358] sm:$0xf]
  %v237 = vld [vmem:[%s1 + $0x35c] sm:$0xf]
  %v238 = vld [vmem:[%s1 + $0x360] sm:$0xf]
  %v239 = vld [vmem:[%s1 + $0x364] sm:$0xf]
  %v240 = vld [vmem:[%s1 + $0x368] sm:$0xf]
  %v241 = vld [vmem:[%s1 + $0x36c] sm:$0xf]
  %v242 = vld [vmem:[%s1 + $0x370] sm:$0xf]
  %v243 = vld [vmem:[%s1 + $0x374] sm:$0xf]
  %v244 = vld [vmem:[%s1 + $0x378] sm:$0xf]
  %v245 = vld [vmem:[%s1 + $0x37c] sm:$0xf]
  %v246 = vld [vmem:[%s1 + $0x380] sm:$0xf]
  %v247 = vld [vmem:[%s1 + $0x384] sm:$0xf]
  %v248 = vld [vmem:[%s1 + $0x388] sm:$0xf]
  %v249 = vld [vmem:[%s1 + $0x38c] sm:$0xf]
  %v250 = vld [vmem:[%s1 + $0x390] sm:$0xf]
  %v251 = vld [vmem:[%s1 + $0x394] sm:$0xf]
  %v252 = vld [vmem:[%s1 + $0x398] sm:$0xf]
  %v253 = vld [vmem:[%s1 + $0x39c] sm:$0xf]
  %v254 = vld [vmem:[%s1 + $0x3a0] sm:$0xf]
  %v255 = vld [vmem:[%s1 + $0x3a4] sm:$0xf]
  %v256 = vld [vmem:[%s1 + $0x3a8] sm:$0xf]
  %v257 = vld [vmem:[%s1 + $0x3ac] sm:$0xf]
  %v258 = vld [vmem:[%s1 + $0x3b0] sm:$0xf]
  %v259 = vld [vmem:[%s1 + $0x3b4] sm:$0xf]
  %v260 = vld [vmem:[%s1 + $0x3b8] sm:$0xf]
  %v261 = vld [vmem:[%s1 + $0x3bc] sm:$0xf]
  %v262 = vld [vmem:[%s1 + $0x3c0] sm:$0xf]
  %v263 = vld [vmem:[%s1 + $0x3c4] sm:$0xf]
  %v264 = vld [vmem:[%s1 + $0x3c8] sm:$0xf]
  %v265 = vld [vmem:[%s1 + $0x3cc] sm:$0xf]
  %v266 = vld [vmem:[%s1 + $0x3d0] sm:$0xf]
  %v267 = vld [vmem:[%s1 + $0x3d4] sm:$0xf]
  %v268 = vld [vmem:[%s1 + $0x3d8] sm:$0xf]
  %v269 = vld [vmem:[%s1 + $0x3dc] sm:$0xf]
  %v270 = vld [vmem:[%s1 + $0x3e0] sm:$0xf]
  %v271 = vld [vmem:[%s1 + $0x3e4] sm:$0xf]
  %v272 = vld [vmem:[%s1 + $0x3e8] sm:$0xf]
  %v273 = vld [vmem:[%s1 + $0x3ec] sm:$0xf]
  %v274 = vld [vmem:[%s1 + $0x3f0] sm:$0xf]
  %v275 = vld [vmem:[%s1 + $0x3f4] sm:$0xf]
  %v276 = vld [vmem:[%s1 + $0x3f8] sm:$0xf]
  %v277 = vld [vmem:[%s1 + $0x3fc] sm:$0xf]
  %v278 = vld [vmem:[%s1 + $0x400] sm:$0xf]
  %v279 = vld [vmem:[%s1 + $0x404] sm:$0xf]
  %v280 = vld [vmem:[%s1 + $0x408] sm:$0xf]
  %v281 = vld [vmem:[%s1 + $0x40c] sm:$0xf]
  %v282 = vld [vmem:[%s1 + $0x410] sm:$0xf]
  %v283 = vld [vmem:[%s1 + $0x414] sm:$0xf]
  %v284 = vld [vmem:[%s1 + $0x418] sm:$0xf]
  %v285 = vld [vmem:[%s1 + $0x41c] sm:$0xf]
  %v286 = vld [vmem:[%s1 + $0x420] sm:$0xf]
  %v287 = vld [vmem:[%s1 + $0x424] sm:$0xf]
  %v288 = vld [vmem:[%s1 + $0x428] sm:$0xf]
  %v289 = vld [vmem:[%s1 + $0x42c] sm:$0xf]
  %v290 = vld [vmem:[%s1 + $0x430] sm:$0xf]
  %v291 = vld [vmem:[%s1 + $0x434] sm:$0xf]
  %v292 = vld [vmem:[%s1 + $0x438] sm:$0xf]
  %v293 = vld [vmem:[%s1 + $0x43c] sm:$0xf]
  %v294 = vld [vmem:[%s1 + $0x440] sm:$0xf]
  %v295 = vld [vmem:[%s1 + $0x444] sm:$0xf]
  %v296 = vld [vmem:[%s1 + $0x448] sm:$0xf]
  %v297 = vld [vmem:[%s1 + $0x44c] sm:$0xf]
  %v298 = vld [vmem:[%s1 + $0x450] sm:$0xf]
  %v299 = vld [vmem:[%s1 + $0x454] sm:$0xf]
  %v300 = vld [vmem:[%s1 + $0x458] sm:$0xf]
  %v301 = vld [vmem:[%s1 + $0x45c] sm:$0xf]
  %v302 = vld [vmem:[%s1 + $0x460] sm:$0xf]
  %v303 = vld [vmem:[%s1 + $0x464] sm:$0xf]
  %v304 = vld [vmem:[%s1 + $0x468] sm:$0xf]
  %v305 = vld [vmem:[%s1 + $0x46c] sm:$0xf]
  %v306 = vld [vmem:[%s1 + $0x470] sm:$0xf]
  %v307 = vld [vmem:[%s1 + $0x474] sm:$0xf]
  %v308 = vld [vmem:[%s1 + $0x478] sm:$0xf]
  %v309 = vld [vmem:[%s1 + $0x47c] sm:$0xf]
  %v310 = vld [vmem:[%s1 + $0x480] sm:$0xf]
  %v311 = vld [vmem:[%s1 + $0x484] sm:$0xf]
  %v312 = vld [vmem:[%s1 + $0x488] sm:$0xf]
  %v313 = vld [vmem:[%s1 + $0x48c] sm:$0xf]
  %v314 = vld [vmem:[%s1 + $0x490] sm:$0xf]
  %v315 = vld [vmem:[%s1 + $0x494] sm:$0xf]
  %v316 = vld [vmem:[%s1 + $0x498] sm:$0xf]
  %v317 = vld [vmem:[%s1 + $0x49c] sm:$0xf]
  %v318 = vld [vmem:[%s1 + $0x4a0] sm:$0xf]
  %v319 = vld [vmem:[%s1 + $0x4a4] sm:$0xf]
  %v320 = vld [vmem:[%s1 + $0x4a8] sm:$0xf]
  %v321 = vld [vmem:[%s1 + $0x4ac] sm:$0xf]
  %v322 = vld [vmem:[%s1 + $0x4b0] sm:$0xf]
  %v323 = vld [vmem:[%s1 + $0x4b4] sm:$0xf]
  %v324 = vld [vmem:[%s1 + $0x4b8] sm:$0xf]
  %v325 = vld [vmem:[%s1 + $0x4bc] sm:$0xf]
  %v326 = vld [vmem:[%s1 + $0x4c0] sm:$0xf]
  %v327 = vld [vmem:[%s1 + $0x4c4] sm:$0xf]
  %v328 = vld [vmem:[%s1 + $0x4c8] sm:$0xf]
  %v329 = vld [vmem:[%s1 + $0x4cc] sm:$0xf]
  %v330 = vld [vmem:[%s1 + $0x4d0] sm:$0xf]
  %v331 = vld [vmem:[%s1 + $0x4d4] sm:$0xf]
  %v332 = vld [vmem:[%s1 + $0x4d8] sm:$0xf]
  %v333 = vld [vmem:[%s1 + $0x4dc] sm:$0xf]
  %v334 = vld [vmem:[%s1 + $0x4e0] sm:$0xf]
  %v335 = vld [vmem:[%s1 + $0x4e4] sm:$0xf]
  %v336 = vld [vmem:[%s1 + $0x4e8] sm:$0xf]
  %v337 = vld [vmem:[%s1 + $0x4ec] sm:$0xf]
  %v338 = vld [vmem:[%s1 + $0x4f0] sm:$0xf]
  %v339 = vld [vmem:[%s1 + $0x4f4] sm:$0xf]
  %v340 = vld [vmem:[%s1 + $0x4f8] sm:$0xf]
  %v341 = vld [vmem:[%s1 + $0x4fc] sm:$0xf]
  %v342 = vld [vmem:[%s1 + $0x500] sm:$0xf]
  %v343 = vld [vmem:[%s1 + $0x504] sm:$0xf]
  %v344 = vld [vmem:[%s1 + $0x508] sm:$0xf]
  %v345 = vld [vmem:[%s1 + $0x50c] sm:$0xf]
  %v346 = vld [vmem:[%s1 + $0x510] sm:$0xf]
  %v347 = vld [vmem:[%s1 + $0x514] sm:$0xf]
  %v348 = vld [vmem:[%s1 + $0x518] sm:$0xf]
  %v349 = vld [vmem:[%s1 + $0x51c] sm:$0xf]
  %v350 = vld [vmem:[%s1 + $0x520] sm:$0xf]
  %v351 = vld [vmem:[%s1 + $0x524] sm:$0xf]
  %v352 = vld [vmem:[%s1 + $0x528] sm:$0xf]
  %v353 = vld [vmem:[%s1 + $0x52c] sm:$0xf]
  %v354 = vld [vmem:[%s1 + $0x530] sm:$0xf]
  %v355 = vld [vmem:[%s1 + $0x534] sm:$0xf]
  %v356 = vld [vmem:[%s1 + $0x538] sm:$0xf]
  %v357 = vld [vmem:[%s1 + $0x53c] sm:$0xf]
  %v358 = vld [vmem:[%s1 + $0x540] sm:$0xf]
  %v359 = vld [vmem:[%s1 + $0x544] sm:$0xf]
  %v360 = vld [vmem:[%s1 + $0x548] sm:$0xf]
  %v361 = vld [vmem:[%s1 + $0x54c] sm:$0xf]
  %v362 = vld [vmem:[%s1 + $0x550] sm:$0xf]
  %v363 = vld [vmem:[%s1 + $0x554] sm:$0xf]
  %v364 = vld [vmem:[%s1 + $0x558] sm:$0xf]
  %v365 = vld [vmem:[%s1 + $0x55c] sm:$0xf]
  %v366 = vld [vmem:[%s1 + $0x560] sm:$0xf]
  %v367 = vld [vmem:[%s1 + $0x564] sm:$0xf]
  %v368 = vld [vmem:[%s1 + $0x568] sm:$0xf]
  %v369 = vld [vmem:[%s1 + $0x56c] sm:$0xf]
  %v370 = vld [vmem:[%s1 + $0x570] sm:$0xf]
  %v371 = vld [vmem:[%s1 + $0x574] sm:$0xf]
  %v372 = vld [vmem:[%s1 + $0x578] sm:$0xf]
  %v373 = vld [vmem:[%s1 + $0x57c] sm:$0xf]
  %v374 = vld [vmem:[%s1 + $0x580] sm:$0xf]
  %v375 = vld [vmem:[%s1 + $0x584] sm:$0xf]
  %v376 = vld [vmem:[%s1 + $0x588] sm:$0xf]
  %v377 = vld [vmem:[%s1 + $0x58c] sm:$0xf]
  %v378 = vld [vmem:[%s1 + $0x590] sm:$0xf]
  %v379 = vld [vmem:[%s1 + $0x594] sm:$0xf]
  %v380 = vld [vmem:[%s1 + $0x598] sm:$0xf]
  %v381 = vld [vmem:[%s1 + $0x59c] sm:$0xf]
  %v382 = vld [vmem:[%s1 + $0x5a0] sm:$0xf]
  %v383 = vld [vmem:[%s1 + $0x5a4] sm:$0xf]
  %v384 = vld [vmem:[%s1 + $0x5a8] sm:$0xf]
  %v385 = vld [vmem:[%s1 + $0x5ac] sm:$0xf]
  %v386 = vld [vmem:[%s1 + $0x5b0] sm:$0xf]
  %v387 = vld [vmem:[%s1 + $0x5b4] sm:$0xf]
  %v388 = vld [vmem:[%s1 + $0x5b8] sm:$0xf]
  %v389 = vld [vmem:[%s1 + $0x5bc] sm:$0xf]
  %v390 = vld [vmem:[%s1 + $0x5c0] sm:$0xf]
  %v391 = vld [vmem:[%s1 + $0x5c4] sm:$0xf]
  %v392 = vld [vmem:[%s1 + $0x5c8] sm:$0xf]
  %v393 = vld [vmem:[%s1 + $0x5cc] sm:$0xf]
  %v394 = vld [vmem:[%s1 + $0x5d0] sm:$0xf]
  %v395 = vld [vmem:[%s1 + $0x5d4] sm:$0xf]
  %v396 = vld [vmem:[%s1 + $0x5d8] sm:$0xf]
  %v397 = vld [vmem:[%s1 + $0x5dc] sm:$0xf]
  %v398 = vld [vmem:[%s1 + $0x5e0] sm:$0xf]
  %v399 = vld [vmem:[%s1 + $0x5e4] sm:$0xf]
  %v400 = vld [vmem:[%s1 + $0x5e8] sm:$0xf]
  %v401 = vld [vmem:[%s1 + $0x5ec] sm:$0xf]
  %v402 = vld [vmem:[%s1 + $0x5f0] sm:$0xf]
  %v403 = vld [vmem:[%s1 + $0x5f4] sm:$0xf]
  %v404 = vld [vmem:[%s1 + $0x5f8] sm:$0xf]
  %v405 = vld [vmem:[%s1 + $0x5fc] sm:$0xf]
  %v406 = vld [vmem:[%s1 + $0x600] sm:$0xf]
  %v407 = vld [vmem:[%s1 + $0x604] sm:$0xf]
  %v408 = vld [vmem:[%s1 + $0x608] sm:$0xf]
  %v409 = vld [vmem:[%s1 + $0x60c] sm:$0xf]
  %v410 = vld [vmem:[%s1 + $0x610] sm:$0xf]
  %v411 = vld [vmem:[%s1 + $0x614] sm:$0xf]
  %v412 = vld [vmem:[%s1 + $0x618] sm:$0xf]
  %v413 = vld [vmem:[%s1 + $0x61c] sm:$0xf]
  %v414 = vld [vmem:[%s1 + $0x620] sm:$0xf]
  %v415 = vld [vmem:[%s1 + $0x624] sm:$0xf]
  %v416 = vld [vmem:[%s1 + $0x628] sm:$0xf]
  %v417 = vld [vmem:[%s1 + $0x62c] sm:$0xf]
  %v418 = vld [vmem:[%s1 + $0x630] sm:$0xf]
  %v419 = vld [vmem:[%s1 + $0x634] sm:$0xf]
  %v420 = vld [vmem:[%s1 + $0x638] sm:$0xf]
  %v421 = vld [vmem:[%s1 + $0x63c] sm:$0xf]
  %v422 = vld [vmem:[%s3] sm:$0x1]
  %v424 = vlaneseq
  %v425 = vshrl.u32 %v424, 7
  %v426 = vsub.s32 0, %v425
  %v427 = vrot.slane %v422, %v426
  %v433 = vcombine.high %v18, %v18
  %v435 = vunpack.c.l.s4 1966171168
  %v436 = vunpack.c.0.s8 %v435
  %v437 = vlaneseq
  %v438 = vshrl.u32 %v437, 7
  %v439 = vsub.s32 %v436, %v438
  %v440 = vrot.slane %v18, %v439
  %v442 = vunpack.c.l.s4 1966171168
  %v443 = vunpack.c.0.s8 %v442
  %v444 = vlaneseq
  %v445 = vshrl.u32 %v444, 7
  %v446 = vsub.s32 %v443, %v445
  %v447 = vrot.slane %v433, %v446
  %v448 = vcombine.high %v440, %v440
  %v449 = vcombine.high %v447, %v447
  %v451 = vunpack.c.l.s4 1966171168
  %v452 = vunpack.c.0.s8 %v451
  %v453 = vlaneseq
  %v454 = vshrl.u32 %v453, 7
  %v455 = vsub.s32 %v452, %v454
  %v456 = vrot.slane %v440, %v455
  %v458 = vunpack.c.l.s4 1966171168
  %v459 = vunpack.c.0.s8 %v458
  %v460 = vlaneseq
  %v461 = vshrl.u32 %v460, 7
  %v462 = vsub.s32 %v459, %v461
  %v463 = vrot.slane %v447, %v462
  %v465 = vunpack.c.l.s4 1966171168
  %v466 = vunpack.c.0.s8 %v465
  %v467 = vlaneseq
  %v468 = vshrl.u32 %v467, 7
  %v469 = vsub.s32 %v466, %v468
  %v470 = vrot.slane %v448, %v469
  %v472 = vunpack.c.l.s4 1966171168
  %v473 = vunpack.c.0.s8 %v472
  %v474 = vlaneseq
  %v475 = vshrl.u32 %v474, 7
  %v476 = vsub.s32 %v473, %v475
  %v477 = vrot.slane %v449, %v476
  %v478 = vcombine.high %v456, %v456
  %v479 = vcombine.high %v463, %v463
  %v480 = vcombine.high %v470, %v470
  %v481 = vcombine.high %v477, %v477
  %v482 = vcombine.high %v19, %v19
  %v484 = vunpack.c.l.s4 1966171168
  %v485 = vunpack.c.0.s8 %v484
  %v486 = vlaneseq
  %v487 = vshrl.u32 %v486, 7
  %v488 = vsub.s32 %v485, %v487
  %v489 = vrot.slane %v19, %v488
  %v491 = vunpack.c.l.s4 1966171168
  %v492 = vunpack.c.0.s8 %v491
  %v493 = vlaneseq
  %v494 = vshrl.u32 %v493, 7
  %v495 = vsub.s32 %v492, %v494
  %v496 = vrot.slane %v482, %v495
  %v497 = vcombine.high %v489, %v489
  %v498 = vcombine.high %v496, %v496
  %v500 = vunpack.c.l.s4 1966171168
  %v501 = vunpack.c.0.s8 %v500
  %v502 = vlaneseq
  %v503 = vshrl.u32 %v502, 7
  %v504 = vsub.s32 %v501, %v503
  %v505 = vrot.slane %v489, %v504
  %v507 = vunpack.c.l.s4 1966171168
  %v508 = vunpack.c.0.s8 %v507
  %v509 = vlaneseq
  %v510 = vshrl.u32 %v509, 7
  %v511 = vsub.s32 %v508, %v510
  %v512 = vrot.slane %v496, %v511
  %v514 = vunpack.c.l.s4 1966171168
  %v515 = vunpack.c.0.s8 %v514
  %v516 = vlaneseq
  %v517 = vshrl.u32 %v516, 7
  %v518 = vsub.s32 %v515, %v517
  %v519 = vrot.slane %v497, %v518
  %v521 = vunpack.c.l.s4 1966171168
  %v522 = vunpack.c.0.s8 %v521
  %v523 = vlaneseq
  %v524 = vshrl.u32 %v523, 7
  %v525 = vsub.s32 %v522, %v524
  %v526 = vrot.slane %v498, %v525
  %v527 = vcombine.high %v505, %v505
  %v528 = vcombine.high %v512, %v512
  %v529 = vcombine.high %v519, %v519
  %v530 = vcombine.high %v526, %v526
  %v531 = vcombine.high %v20, %v20
  %v533 = vunpack.c.l.s4 1966171168
  %v534 = vunpack.c.0.s8 %v533
  %v535 = vlaneseq
  %v536 = vshrl.u32 %v535, 7
  %v537 = vsub.s32 %v534, %v536
  %v538 = vrot.slane %v20, %v537
  %v540 = vunpack.c.l.s4 1966171168
  %v541 = vunpack.c.0.s8 %v540
  %v542 = vlaneseq
  %v543 = vshrl.u32 %v542, 7
  %v544 = vsub.s32 %v541, %v543
  %v545 = vrot.slane %v531, %v544
  %v546 = vcombine.high %v538, %v538
  %v547 = vcombine.high %v545, %v545
  %v549 = vunpack.c.l.s4 1966171168
  %v550 = vunpack.c.0.s8 %v549
  %v551 = vlaneseq
  %v552 = vshrl.u32 %v551, 7
  %v553 = vsub.s32 %v550, %v552
  %v554 = vrot.slane %v538, %v553
  %v556 = vunpack.c.l.s4 1966171168
  %v557 = vunpack.c.0.s8 %v556
  %v558 = vlaneseq
  %v559 = vshrl.u32 %v558, 7
  %v560 = vsub.s32 %v557, %v559
  %v561 = vrot.slane %v545, %v560
  %v563 = vunpack.c.l.s4 1966171168
  %v564 = vunpack.c.0.s8 %v563
  %v565 = vlaneseq
  %v566 = vshrl.u32 %v565, 7
  %v567 = vsub.s32 %v564, %v566
  %v568 = vrot.slane %v546, %v567
  %v570 = vunpack.c.l.s4 1966171168
  %v571 = vunpack.c.0.s8 %v570
  %v572 = vlaneseq
  %v573 = vshrl.u32 %v572, 7
  %v574 = vsub.s32 %v571, %v573
  %v575 = vrot.slane %v547, %v574
  %v576 = vcombine.high %v554, %v554
  %v577 = vcombine.high %v561, %v561
  %v578 = vcombine.high %v568, %v568
  %v579 = vcombine.high %v575, %v575
  %v581 = vunpack.c.l.s4 1966171168
  %v582 = vunpack.c.0.s8 %v581
  %v583 = vlaneseq
  %v584 = vshrl.u32 %v583, 7
  %v585 = vsub.s32 %v582, %v584
  %v586 = vrot.slane %v21, %v585
  %v588 = vunpack.c.l.s4 1966171168
  %v589 = vunpack.c.0.s8 %v588
  %v590 = vlaneseq
  %v591 = vshrl.u32 %v590, 7
  %v592 = vsub.s32 %v589, %v591
  %v593 = vrot.slane %v586, %v592
  %v1019 = vunpack.c.l.b16 %v22
  %v1020 = vunpack.c.l.b16 %v23
  %v1021 = vunpack.c.l.b16 %v24
  %v1022 = vunpack.c.l.b16 %v25
  %v1023 = vunpack.c.l.b16 %v26
  %v1024 = vunpack.c.l.b16 %v27
  %v1025 = vunpack.c.l.b16 %v28
  %v1026 = vunpack.c.l.b16 %v29
  %v1027 = vunpack.c.l.b16 %v30
  %v1028 = vunpack.c.l.b16 %v31
  %v1029 = vunpack.c.l.b16 %v32
  %v1030 = vunpack.c.l.b16 %v33
  %v1031 = vunpack.c.l.b16 %v34
  %v1032 = vunpack.c.l.b16 %v35
  %v1033 = vunpack.c.l.b16 %v36
  %v1034 = vunpack.c.l.b16 %v37
  %v1035 = vunpack.c.l.b16 %v38
  %v1036 = vunpack.c.l.b16 %v39
  %v1037 = vunpack.c.l.b16 %v40
  %v1038 = vunpack.c.l.b16 %v41
  %v1039 = vunpack.c.l.b16 %v42
  %v1040 = vunpack.c.l.b16 %v43
  %v1041 = vunpack.c.l.b16 %v44
  %v1042 = vunpack.c.l.b16 %v45
  %v1043 = vunpack.c.l.b16 %v46
  %v1044 = vunpack.c.l.b16 %v47
  %v1045 = vunpack.c.l.b16 %v48
  %v1046 = vunpack.c.l.b16 %v49
  %v1047 = vunpack.c.l.b16 %v50
  %v1048 = vunpack.c.l.b16 %v51
  %v1049 = vunpack.c.l.b16 %v52
  %v1050 = vunpack.c.l.b16 %v53
  %v1051 = vunpack.c.l.b16 %v54
  %v1052 = vunpack.c.l.b16 %v55
  %v1053 = vunpack.c.l.b16 %v56
  %v1054 = vunpack.c.l.b16 %v57
  %v1055 = vunpack.c.l.b16 %v58
  %v1056 = vunpack.c.l.b16 %v59
  %v1057 = vunpack.c.l.b16 %v60
  %v1058 = vunpack.c.l.b16 %v61
  %v1059 = vunpack.c.l.b16 %v62
  %v1060 = vunpack.c.l.b16 %v63
  %v1061 = vunpack.c.l.b16 %v64
  %v1062 = vunpack.c.l.b16 %v65
  %v1063 = vunpack.c.l.b16 %v66
  %v1064 = vunpack.c.l.b16 %v67
  %v1065 = vunpack.c.l.b16 %v68
  %v1066 = vunpack.c.l.b16 %v69
  %v1067 = vunpack.c.l.b16 %v70
  %v1068 = vunpack.c.l.b16 %v71
  %v1069 = vunpack.c.l.b16 %v72
  %v1070 = vunpack.c.l.b16 %v73
  %v1071 = vunpack.c.l.b16 %v74
  %v1072 = vunpack.c.l.b16 %v75
  %v1073 = vunpack.c.l.b16 %v76
  %v1074 = vunpack.c.l.b16 %v77
  %v1075 = vunpack.c.l.b16 %v78
  %v1076 = vunpack.c.l.b16 %v79
  %v1077 = vunpack.c.l.b16 %v80
  %v1078 = vunpack.c.l.b16 %v81
  %v1079 = vunpack.c.l.b16 %v82
  %v1080 = vunpack.c.l.b16 %v83
  %v1081 = vunpack.c.l.b16 %v84
  %v1082 = vunpack.c.l.b16 %v85
  %v1083 = vunpack.c.l.b16 %v86
  %v1084 = vunpack.c.l.b16 %v87
  %v1085 = vunpack.c.l.b16 %v88
  %v1086 = vunpack.c.l.b16 %v89
  %v1087 = vunpack.c.l.b16 %v90
  %v1088 = vunpack.c.l.b16 %v91
  %v1089 = vunpack.c.l.b16 %v92
  %v1090 = vunpack.c.l.b16 %v93
  %v1091 = vunpack.c.l.b16 %v94
  %v1092 = vunpack.c.l.b16 %v95
  %v1093 = vunpack.c.l.b16 %v96
  %v1094 = vunpack.c.l.b16 %v97
  %v1095 = vunpack.c.l.b16 %v98
  %v1096 = vunpack.c.l.b16 %v99
  %v1097 = vunpack.c.l.b16 %v100
  %v1098 = vunpack.c.l.b16 %v101
  %v1099 = vunpack.c.l.b16 %v102
  %v1100 = vunpack.c.l.b16 %v103
  %v1101 = vunpack.c.l.b16 %v104
  %v1102 = vunpack.c.l.b16 %v105
  %v1103 = vunpack.c.l.b16 %v106
  %v1104 = vunpack.c.l.b16 %v107
  %v1105 = vunpack.c.l.b16 %v108
  %v1106 = vunpack.c.l.b16 %v109
  %v1107 = vunpack.c.l.b16 %v110
  %v1108 = vunpack.c.l.b16 %v111
  %v1109 = vunpack.c.l.b16 %v112
  %v1110 = vunpack.c.l.b16 %v113
  %v1111 = vunpack.c.l.b16 %v114
  %v1112 = vunpack.c.l.b16 %v115
  %v1113 = vunpack.c.l.b16 %v116
  %v1114 = vunpack.c.l.b16 %v117
  %v1115 = vunpack.c.l.b16 %v118
  %v1116 = vunpack.c.l.b16 %v119
  %v1117 = vunpack.c.l.b16 %v120
  %v1118 = vunpack.c.l.b16 %v121
  %v1119 = vunpack.c.l.b16 %v122
  %v1120 = vunpack.c.l.b16 %v123
  %v1121 = vunpack.c.l.b16 %v124
  %v1122 = vunpack.c.l.b16 %v125
  %v1123 = vunpack.c.l.b16 %v126
  %v1124 = vunpack.c.l.b16 %v127
  %v1125 = vunpack.c.l.b16 %v128
  %v1126 = vunpack.c.l.b16 %v129
  %v1127 = vunpack.c.l.b16 %v130
  %v1128 = vunpack.c.l.b16 %v131
  %v1129 = vunpack.c.l.b16 %v132
  %v1130 = vunpack.c.l.b16 %v133
  %v1131 = vunpack.c.l.b16 %v134
  %v1132 = vunpack.c.l.b16 %v135
  %v1133 = vunpack.c.l.b16 %v136
  %v1134 = vunpack.c.l.b16 %v137
  %v1135 = vunpack.c.l.b16 %v138
  %v1136 = vunpack.c.l.b16 %v139
  %v1137 = vunpack.c.l.b16 %v140
  %v1138 = vunpack.c.l.b16 %v141
  %v1139 = vunpack.c.l.b16 %v142
  %v1140 = vunpack.c.l.b16 %v143
  %v1141 = vunpack.c.l.b16 %v144
  %v1142 = vunpack.c.l.b16 %v145
  %v1143 = vunpack.c.l.b16 %v146
  %v1144 = vunpack.c.l.b16 %v147
  %v1145 = vunpack.c.l.b16 %v148
  %v1146 = vunpack.c.l.b16 %v149
  %v1147 = vunpack.c.l.b16 %v150
  %v1148 = vunpack.c.l.b16 %v151
  %v1149 = vunpack.c.l.b16 %v152
  %v1150 = vunpack.c.l.b16 %v153
  %v1151 = vunpack.c.l.b16 %v154
  %v1152 = vunpack.c.l.b16 %v155
  %v1153 = vunpack.c.l.b16 %v156
  %v1154 = vunpack.c.l.b16 %v157
  %v1155 = vunpack.c.l.b16 %v158
  %v1156 = vunpack.c.l.b16 %v159
  %v1157 = vunpack.c.l.b16 %v160
  %v1158 = vunpack.c.l.b16 %v161
  %v1159 = vunpack.c.l.b16 %v162
  %v1160 = vunpack.c.l.b16 %v163
  %v1161 = vunpack.c.l.b16 %v164
  %v1162 = vunpack.c.l.b16 %v165
  %v1163 = vunpack.c.l.b16 %v166
  %v1164 = vunpack.c.l.b16 %v167
  %v1165 = vunpack.c.l.b16 %v168
  %v1166 = vunpack.c.l.b16 %v169
  %v1167 = vunpack.c.l.b16 %v170
  %v1168 = vunpack.c.l.b16 %v171
  %v1169 = vunpack.c.l.b16 %v172
  %v1170 = vunpack.c.l.b16 %v173
  %v1171 = vunpack.c.l.b16 %v174
  %v1172 = vunpack.c.l.b16 %v175
  %v1173 = vunpack.c.l.b16 %v176
  %v1174 = vunpack.c.l.b16 %v177
  %v1175 = vunpack.c.l.b16 %v178
  %v1176 = vunpack.c.l.b16 %v179
  %v1177 = vunpack.c.l.b16 %v180
  %v1178 = vunpack.c.l.b16 %v181
  %v1179 = vunpack.c.l.b16 %v182
  %v1180 = vunpack.c.l.b16 %v183
  %v1181 = vunpack.c.l.b16 %v184
  %v1182 = vunpack.c.l.b16 %v185
  %v1183 = vunpack.c.l.b16 %v186
  %v1184 = vunpack.c.l.b16 %v187
  %v1185 = vunpack.c.l.b16 %v188
  %v1186 = vunpack.c.l.b16 %v189
  %v1187 = vunpack.c.l.b16 %v190
  %v1188 = vunpack.c.l.b16 %v191
  %v1189 = vunpack.c.l.b16 %v192
  %v1190 = vunpack.c.l.b16 %v193
  %v1191 = vunpack.c.l.b16 %v194
  %v1192 = vunpack.c.l.b16 %v195
  %v1193 = vunpack.c.l.b16 %v196
  %v1194 = vunpack.c.l.b16 %v197
  %v1195 = vunpack.c.l.b16 %v198
  %v1196 = vunpack.c.l.b16 %v199
  %v1197 = vunpack.c.l.b16 %v200
  %v1198 = vunpack.c.l.b16 %v201
  %v1199 = vunpack.c.l.b16 %v202
  %v1200 = vunpack.c.l.b16 %v203
  %v1201 = vunpack.c.l.b16 %v204
  %v1202 = vunpack.c.l.b16 %v205
  %v1203 = vunpack.c.l.b16 %v206
  %v1204 = vunpack.c.l.b16 %v207
  %v1205 = vunpack.c.l.b16 %v208
  %v1206 = vunpack.c.l.b16 %v209
  %v1207 = vunpack.c.l.b16 %v210
  %v1208 = vunpack.c.l.b16 %v211
  %v1209 = vunpack.c.l.b16 %v212
  %v1210 = vunpack.c.l.b16 %v213
  %v1211 = vunpack.c.l.b16 %v214
  %v1212 = vunpack.c.l.b16 %v215
  %v1213 = vunpack.c.l.b16 %v216
  %v1214 = vunpack.c.l.b16 %v217
  %v1215 = vunpack.c.l.b16 %v218
  %v1216 = vunpack.c.l.b16 %v219
  %v1217 = vunpack.c.l.b16 %v220
  %v1218 = vunpack.c.l.b16 %v221
  %v1219 = vunpack.c.l.b16 %v222
  %v1220 = vunpack.c.l.b16 %v223
  %v1221 = vunpack.c.l.b16 %v224
  %v1222 = vunpack.c.l.b16 %v225
  %v1223 = vunpack.c.l.b16 %v226
  %v1224 = vunpack.c.l.b16 %v227
  %v1225 = vunpack.c.l.b16 %v228
  %v1226 = vunpack.c.l.b16 %v229
  %v1227 = vunpack.c.l.b16 %v230
  %v1228 = vunpack.c.l.b16 %v231
  %v1229 = vunpack.c.l.b16 %v232
  %v1230 = vunpack.c.l.b16 %v233
  %v1231 = vunpack.c.l.b16 %v234
  %v1232 = vunpack.c.l.b16 %v235
  %v1233 = vunpack.c.l.b16 %v236
  %v1234 = vunpack.c.l.b16 %v237
  %v1235 = vunpack.c.l.b16 %v238
  %v1236 = vunpack.c.l.b16 %v239
  %v1237 = vunpack.c.l.b16 %v240
  %v1238 = vunpack.c.l.b16 %v241
  %v1239 = vunpack.c.l.b16 %v242
  %v1240 = vunpack.c.l.b16 %v243
  %v1241 = vunpack.c.l.b16 %v244
  %v1242 = vunpack.c.l.b16 %v245
  %v1243 = vunpack.c.l.b16 %v246
  %v1244 = vunpack.c.l.b16 %v247
  %v1245 = vunpack.c.l.b16 %v248
  %v1246 = vunpack.c.l.b16 %v249
  %v1247 = vunpack.c.l.b16 %v250
  %v1248 = vunpack.c.l.b16 %v251
  %v1249 = vunpack.c.l.b16 %v252
  %v1250 = vunpack.c.l.b16 %v253
  %v1251 = vunpack.c.l.b16 %v254
  %v1252 = vunpack.c.l.b16 %v255
  %v1253 = vunpack.c.l.b16 %v256
  %v1254 = vunpack.c.l.b16 %v257
  %v1255 = vunpack.c.l.b16 %v258
  %v1256 = vunpack.c.l.b16 %v259
  %v1257 = vunpack.c.l.b16 %v260
  %v1258 = vunpack.c.l.b16 %v261
  %v1259 = vunpack.c.l.b16 %v262
  %v1260 = vunpack.c.l.b16 %v263
  %v1261 = vunpack.c.l.b16 %v264
  %v1262 = vunpack.c.l.b16 %v265
  %v1263 = vunpack.c.l.b16 %v266
  %v1264 = vunpack.c.l.b16 %v267
  %v1265 = vunpack.c.l.b16 %v268
  %v1266 = vunpack.c.l.b16 %v269
  %v1267 = vunpack.c.l.b16 %v270
  %v1268 = vunpack.c.l.b16 %v271
  %v1269 = vunpack.c.l.b16 %v272
  %v1270 = vunpack.c.l.b16 %v273
  %v1271 = vunpack.c.l.b16 %v274
  %v1272 = vunpack.c.l.b16 %v275
  %v1273 = vunpack.c.l.b16 %v276
  %v1274 = vunpack.c.l.b16 %v277
  %v1275 = vunpack.c.l.b16 %v278
  %v1276 = vunpack.c.l.b16 %v279
  %v1277 = vunpack.c.l.b16 %v280
  %v1278 = vunpack.c.l.b16 %v281
  %v1279 = vunpack.c.l.b16 %v282
  %v1280 = vunpack.c.l.b16 %v283
  %v1281 = vunpack.c.l.b16 %v284
  %v1282 = vunpack.c.l.b16 %v285
  %v1283 = vunpack.c.l.b16 %v286
  %v1284 = vunpack.c.l.b16 %v287
  %v1285 = vunpack.c.l.b16 %v288
  %v1286 = vunpack.c.l.b16 %v289
  %v1287 = vunpack.c.l.b16 %v290
  %v1288 = vunpack.c.l.b16 %v291
  %v1289 = vunpack.c.l.b16 %v292
  %v1290 = vunpack.c.l.b16 %v293
  %v1291 = vunpack.c.l.b16 %v294
  %v1292 = vunpack.c.l.b16 %v295
  %v1293 = vunpack.c.l.b16 %v296
  %v1294 = vunpack.c.l.b16 %v297
  %v1295 = vunpack.c.l.b16 %v298
  %v1296 = vunpack.c.l.b16 %v299
  %v1297 = vunpack.c.l.b16 %v300
  %v1298 = vunpack.c.l.b16 %v301
  %v1299 = vunpack.c.l.b16 %v302
  %v1300 = vunpack.c.l.b16 %v303
  %v1301 = vunpack.c.l.b16 %v304
  %v1302 = vunpack.c.l.b16 %v305
  %v1303 = vunpack.c.l.b16 %v306
  %v1304 = vunpack.c.l.b16 %v307
  %v1305 = vunpack.c.l.b16 %v308
  %v1306 = vunpack.c.l.b16 %v309
  %v1307 = vunpack.c.l.b16 %v310
  %v1308 = vunpack.c.l.b16 %v311
  %v1309 = vunpack.c.l.b16 %v312
  %v1310 = vunpack.c.l.b16 %v313
  %v1311 = vunpack.c.l.b16 %v314
  %v1312 = vunpack.c.l.b16 %v315
  %v1313 = vunpack.c.l.b16 %v316
  %v1314 = vunpack.c.l.b16 %v317
  %v1315 = vunpack.c.l.b16 %v318
  %v1316 = vunpack.c.l.b16 %v319
  %v1317 = vunpack.c.l.b16 %v320
  %v1318 = vunpack.c.l.b16 %v321
  %v1319 = vunpack.c.l.b16 %v322
  %v1320 = vunpack.c.l.b16 %v323
  %v1321 = vunpack.c.l.b16 %v324
  %v1322 = vunpack.c.l.b16 %v325
  %v1323 = vunpack.c.l.b16 %v326
  %v1324 = vunpack.c.l.b16 %v327
  %v1325 = vunpack.c.l.b16 %v328
  %v1326 = vunpack.c.l.b16 %v329
  %v1327 = vunpack.c.l.b16 %v330
  %v1328 = vunpack.c.l.b16 %v331
  %v1329 = vunpack.c.l.b16 %v332
  %v1330 = vunpack.c.l.b16 %v333
  %v1331 = vunpack.c.l.b16 %v334
  %v1332 = vunpack.c.l.b16 %v335
  %v1333 = vunpack.c.l.b16 %v336
  %v1334 = vunpack.c.l.b16 %v337
  %v1335 = vunpack.c.l.b16 %v338
  %v1336 = vunpack.c.l.b16 %v339
  %v1337 = vunpack.c.l.b16 %v340
  %v1338 = vunpack.c.l.b16 %v341
  %v1339 = vunpack.c.l.b16 %v342
  %v1340 = vunpack.c.l.b16 %v343
  %v1341 = vunpack.c.l.b16 %v344
  %v1342 = vunpack.c.l.b16 %v345
  %v1343 = vunpack.c.l.b16 %v346
  %v1344 = vunpack.c.l.b16 %v347
  %v1345 = vunpack.c.l.b16 %v348
  %v1346 = vunpack.c.l.b16 %v349
  %v1347 = vunpack.c.l.b16 %v350
  %v1348 = vunpack.c.l.b16 %v351
  %v1349 = vunpack.c.l.b16 %v352
  %v1350 = vunpack.c.l.b16 %v353
  %v1351 = vunpack.c.l.b16 %v354
  %v1352 = vunpack.c.l.b16 %v355
  %v1353 = vunpack.c.l.b16 %v356
  %v1354 = vunpack.c.l.b16 %v357
  %v1355 = vunpack.c.l.b16 %v358
  %v1356 = vunpack.c.l.b16 %v359
  %v1357 = vunpack.c.l.b16 %v360
  %v1358 = vunpack.c.l.b16 %v361
  %v1359 = vunpack.c.l.b16 %v362
  %v1360 = vunpack.c.l.b16 %v363
  %v1361 = vunpack.c.l.b16 %v364
  %v1362 = vunpack.c.l.b16 %v365
  %v1363 = vunpack.c.l.b16 %v366
  %v1364 = vunpack.c.l.b16 %v367
  %v1365 = vunpack.c.l.b16 %v368
  %v1366 = vunpack.c.l.b16 %v369
  %v1367 = vunpack.c.l.b16 %v370
  %v1368 = vunpack.c.l.b16 %v371
  %v1369 = vunpack.c.l.b16 %v372
  %v1370 = vunpack.c.l.b16 %v373
  %v1371 = vunpack.c.l.b16 %v374
  %v1372 = vunpack.c.l.b16 %v375
  %v1373 = vunpack.c.l.b16 %v376
  %v1374 = vunpack.c.l.b16 %v377
  %v1375 = vunpack.c.l.b16 %v378
  %v1376 = vunpack.c.l.b16 %v379
  %v1377 = vunpack.c.l.b16 %v380
  %v1378 = vunpack.c.l.b16 %v381
  %v1379 = vunpack.c.l.b16 %v382
  %v1380 = vunpack.c.l.b16 %v383
  %v1381 = vunpack.c.l.b16 %v384
  %v1382 = vunpack.c.l.b16 %v385
  %v1383 = vunpack.c.l.b16 %v386
  %v1384 = vunpack.c.l.b16 %v387
  %v1385 = vunpack.c.l.b16 %v388
  %v1386 = vunpack.c.l.b16 %v389
  %v1387 = vunpack.c.l.b16 %v390
  %v1388 = vunpack.c.l.b16 %v391
  %v1389 = vunpack.c.l.b16 %v392
  %v1390 = vunpack.c.l.b16 %v393
  %v1391 = vunpack.c.l.b16 %v394
  %v1392 = vunpack.c.l.b16 %v395
  %v1393 = vunpack.c.l.b16 %v396
  %v1394 = vunpack.c.l.b16 %v397
  %v1395 = vunpack.c.l.b16 %v398
  %v1396 = vunpack.c.l.b16 %v399
  %v1397 = vunpack.c.l.b16 %v400
  %v1398 = vunpack.c.l.b16 %v401
  %v1399 = vunpack.c.l.b16 %v402
  %v1400 = vunpack.c.l.b16 %v403
  %v1401 = vunpack.c.l.b16 %v404
  %v1402 = vunpack.c.l.b16 %v405
  %v1403 = vunpack.c.l.b16 %v406
  %v1404 = vunpack.c.l.b16 %v407
  %v1405 = vunpack.c.l.b16 %v408
  %v1406 = vunpack.c.l.b16 %v409
  %v1407 = vunpack.c.l.b16 %v410
  %v1408 = vunpack.c.l.b16 %v411
  %v1409 = vunpack.c.l.b16 %v412
  %v1410 = vunpack.c.l.b16 %v413
  %v1411 = vunpack.c.l.b16 %v414
  %v1412 = vunpack.c.l.b16 %v415
  %v1413 = vunpack.c.l.b16 %v416
  %v1414 = vunpack.c.l.b16 %v417
  %v1415 = vunpack.c.l.b16 %v418
  %v1416 = vunpack.c.l.b16 %v419
  %v1417 = vunpack.c.l.b16 %v420
  %v1418 = vunpack.c.l.b16 %v421
  %v1419 = vpack.c.b16 %v1020, %v1019
  %v1420 = vpack.c.b16 %v1022, %v1021
  %v1421 = vpack.c.b16 %v1024, %v1023
  %v1422 = vpack.c.b16 %v1026, %v1025
  %v1423 = vpack.c.b16 %v1028, %v1027
  %v1424 = vpack.c.b16 %v1030, %v1029
  %v1425 = vpack.c.b16 %v1032, %v1031
  %v1426 = vpack.c.b16 %v1034, %v1033
  %v1427 = vpack.c.b16 %v1036, %v1035
  %v1428 = vpack.c.b16 %v1038, %v1037
  %v1429 = vpack.c.b16 %v1040, %v1039
  %v1430 = vpack.c.b16 %v1042, %v1041
  %v1431 = vpack.c.b16 %v1044, %v1043
  %v1432 = vpack.c.b16 %v1046, %v1045
  %v1433 = vpack.c.b16 %v1048, %v1047
  %v1434 = vpack.c.b16 %v1050, %v1049
  %v1435 = vpack.c.b16 %v1052, %v1051
  %v1436 = vpack.c.b16 %v1054, %v1053
  %v1437 = vpack.c.b16 %v1056, %v1055
  %v1438 = vpack.c.b16 %v1058, %v1057
  %v1439 = vpack.c.b16 %v1060, %v1059
  %v1440 = vpack.c.b16 %v1062, %v1061
  %v1441 = vpack.c.b16 %v1064, %v1063
  %v1442 = vpack.c.b16 %v1066, %v1065
  %v1443 = vpack.c.b16 %v1068, %v1067
  %v1444 = vpack.c.b16 %v1070, %v1069
  %v1445 = vpack.c.b16 %v1072, %v1071
  %v1446 = vpack.c.b16 %v1074, %v1073
  %v1447 = vpack.c.b16 %v1076, %v1075
  %v1448 = vpack.c.b16 %v1078, %v1077
  %v1449 = vpack.c.b16 %v1080, %v1079
  %v1450 = vpack.c.b16 %v1082, %v1081
  %v1451 = vpack.c.b16 %v1084, %v1083
  %v1452 = vpack.c.b16 %v1086, %v1085
  %v1453 = vpack.c.b16 %v1088, %v1087
  %v1454 = vpack.c.b16 %v1090, %v1089
  %v1455 = vpack.c.b16 %v1092, %v1091
  %v1456 = vpack.c.b16 %v1094, %v1093
  %v1457 = vpack.c.b16 %v1096, %v1095
  %v1458 = vpack.c.b16 %v1098, %v1097
  %v1459 = vpack.c.b16 %v1100, %v1099
  %v1460 = vpack.c.b16 %v1102, %v1101
  %v1461 = vpack.c.b16 %v1104, %v1103
  %v1462 = vpack.c.b16 %v1106, %v1105
  %v1463 = vpack.c.b16 %v1108, %v1107
  %v1464 = vpack.c.b16 %v1110, %v1109
  %v1465 = vpack.c.b16 %v1112, %v1111
  %v1466 = vpack.c.b16 %v1114, %v1113
  %v1467 = vpack.c.b16 %v1116, %v1115
  %v1468 = vpack.c.b16 %v1118, %v1117
  %v1469 = vpack.c.b16 %v1120, %v1119
  %v1470 = vpack.c.b16 %v1122, %v1121
  %v1471 = vpack.c.b16 %v1124, %v1123
  %v1472 = vpack.c.b16 %v1126, %v1125
  %v1473 = vpack.c.b16 %v1128, %v1127
  %v1474 = vpack.c.b16 %v1130, %v1129
  %v1475 = vpack.c.b16 %v1132, %v1131
  %v1476 = vpack.c.b16 %v1134, %v1133
  %v1477 = vpack.c.b16 %v1136, %v1135
  %v1478 = vpack.c.b16 %v1138, %v1137
  %v1479 = vpack.c.b16 %v1140, %v1139
  %v1480 = vpack.c.b16 %v1142, %v1141
  %v1481 = vpack.c.b16 %v1144, %v1143
  %v1482 = vpack.c.b16 %v1146, %v1145
  %v1483 = vpack.c.b16 %v1148, %v1147
  %v1484 = vpack.c.b16 %v1150, %v1149
  %v1485 = vpack.c.b16 %v1152, %v1151
  %v1486 = vpack.c.b16 %v1154, %v1153
  %v1487 = vpack.c.b16 %v1156, %v1155
  %v1488 = vpack.c.b16 %v1158, %v1157
  %v1489 = vpack.c.b16 %v1160, %v1159
  %v1490 = vpack.c.b16 %v1162, %v1161
  %v1491 = vpack.c.b16 %v1164, %v1163
  %v1492 = vpack.c.b16 %v1166, %v1165
  %v1493 = vpack.c.b16 %v1168, %v1167
  %v1494 = vpack.c.b16 %v1170, %v1169
  %v1495 = vpack.c.b16 %v1172, %v1171
  %v1496 = vpack.c.b16 %v1174, %v1173
  %v1497 = vpack.c.b16 %v1176, %v1175
  %v1498 = vpack.c.b16 %v1178, %v1177
  %v1499 = vpack.c.b16 %v1180, %v1179
  %v1500 = vpack.c.b16 %v1182, %v1181
  %v1501 = vpack.c.b16 %v1184, %v1183
  %v1502 = vpack.c.b16 %v1186, %v1185
  %v1503 = vpack.c.b16 %v1188, %v1187
  %v1504 = vpack.c.b16 %v1190, %v1189
  %v1505 = vpack.c.b16 %v1192, %v1191
  %v1506 = vpack.c.b16 %v1194, %v1193
  %v1507 = vpack.c.b16 %v1196, %v1195
  %v1508 = vpack.c.b16 %v1198, %v1197
  %v1509 = vpack.c.b16 %v1200, %v1199
  %v1510 = vpack.c.b16 %v1202, %v1201
  %v1511 = vpack.c.b16 %v1204, %v1203
  %v1512 = vpack.c.b16 %v1206, %v1205
  %v1513 = vpack.c.b16 %v1208, %v1207
  %v1514 = vpack.c.b16 %v1210, %v1209
  %v1515 = vpack.c.b16 %v1212, %v1211
  %v1516 = vpack.c.b16 %v1214, %v1213
  %v1517 = vpack.c.b16 %v1216, %v1215
  %v1518 = vpack.c.b16 %v1218, %v1217
  %v1519 = vpack.c.b16 %v1220, %v1219
  %v1520 = vpack.c.b16 %v1222, %v1221
  %v1521 = vpack.c.b16 %v1224, %v1223
  %v1522 = vpack.c.b16 %v1226, %v1225
  %v1523 = vpack.c.b16 %v1228, %v1227
  %v1524 = vpack.c.b16 %v1230, %v1229
  %v1525 = vpack.c.b16 %v1232, %v1231
  %v1526 = vpack.c.b16 %v1234, %v1233
  %v1527 = vpack.c.b16 %v1236, %v1235
  %v1528 = vpack.c.b16 %v1238, %v1237
  %v1529 = vpack.c.b16 %v1240, %v1239
  %v1530 = vpack.c.b16 %v1242, %v1241
  %v1531 = vpack.c.b16 %v1244, %v1243
  %v1532 = vpack.c.b16 %v1246, %v1245
  %v1533 = vpack.c.b16 %v1248, %v1247
  %v1534 = vpack.c.b16 %v1250, %v1249
  %v1535 = vpack.c.b16 %v1252, %v1251
  %v1536 = vpack.c.b16 %v1254, %v1253
  %v1537 = vpack.c.b16 %v1256, %v1255
  %v1538 = vpack.c.b16 %v1258, %v1257
  %v1539 = vpack.c.b16 %v1260, %v1259
  %v1540 = vpack.c.b16 %v1262, %v1261
  %v1541 = vpack.c.b16 %v1264, %v1263
  %v1542 = vpack.c.b16 %v1266, %v1265
  %v1543 = vpack.c.b16 %v1268, %v1267
  %v1544 = vpack.c.b16 %v1270, %v1269
  %v1545 = vpack.c.b16 %v1272, %v1271
  %v1546 = vpack.c.b16 %v1274, %v1273
  %v1547 = vpack.c.b16 %v1276, %v1275
  %v1548 = vpack.c.b16 %v1278, %v1277
  %v1549 = vpack.c.b16 %v1280, %v1279
  %v1550 = vpack.c.b16 %v1282, %v1281
  %v1551 = vpack.c.b16 %v1284, %v1283
  %v1552 = vpack.c.b16 %v1286, %v1285
  %v1553 = vpack.c.b16 %v1288, %v1287
  %v1554 = vpack.c.b16 %v1290, %v1289
  %v1555 = vpack.c.b16 %v1292, %v1291
  %v1556 = vpack.c.b16 %v1294, %v1293
  %v1557 = vpack.c.b16 %v1296, %v1295
  %v1558 = vpack.c.b16 %v1298, %v1297
  %v1559 = vpack.c.b16 %v1300, %v1299
  %v1560 = vpack.c.b16 %v1302, %v1301
  %v1561 = vpack.c.b16 %v1304, %v1303
  %v1562 = vpack.c.b16 %v1306, %v1305
  %v1563 = vpack.c.b16 %v1308, %v1307
  %v1564 = vpack.c.b16 %v1310, %v1309
  %v1565 = vpack.c.b16 %v1312, %v1311
  %v1566 = vpack.c.b16 %v1314, %v1313
  %v1567 = vpack.c.b16 %v1316, %v1315
  %v1568 = vpack.c.b16 %v1318, %v1317
  %v1569 = vpack.c.b16 %v1320, %v1319
  %v1570 = vpack.c.b16 %v1322, %v1321
  %v1571 = vpack.c.b16 %v1324, %v1323
  %v1572 = vpack.c.b16 %v1326, %v1325
  %v1573 = vpack.c.b16 %v1328, %v1327
  %v1574 = vpack.c.b16 %v1330, %v1329
  %v1575 = vpack.c.b16 %v1332, %v1331
  %v1576 = vpack.c.b16 %v1334, %v1333
  %v1577 = vpack.c.b16 %v1336, %v1335
  %v1578 = vpack.c.b16 %v1338, %v1337
  %v1579 = vpack.c.b16 %v1340, %v1339
  %v1580 = vpack.c.b16 %v1342, %v1341
  %v1581 = vpack.c.b16 %v1344, %v1343
  %v1582 = vpack.c.b16 %v1346, %v1345
  %v1583 = vpack.c.b16 %v1348, %v1347
  %v1584 = vpack.c.b16 %v1350, %v1349
  %v1585 = vpack.c.b16 %v1352, %v1351
  %v1586 = vpack.c.b16 %v1354, %v1353
  %v1587 = vpack.c.b16 %v1356, %v1355
  %v1588 = vpack.c.b16 %v1358, %v1357
  %v1589 = vpack.c.b16 %v1360, %v1359
  %v1590 = vpack.c.b16 %v1362, %v1361
  %v1591 = vpack.c.b16 %v1364, %v1363
  %v1592 = vpack.c.b16 %v1366, %v1365
  %v1593 = vpack.c.b16 %v1368, %v1367
  %v1594 = vpack.c.b16 %v1370, %v1369
  %v1595 = vpack.c.b16 %v1372, %v1371
  %v1596 = vpack.c.b16 %v1374, %v1373
  %v1597 = vpack.c.b16 %v1376, %v1375
  %v1598 = vpack.c.b16 %v1378, %v1377
  %v1599 = vpack.c.b16 %v1380, %v1379
  %v1600 = vpack.c.b16 %v1382, %v1381
  %v1601 = vpack.c.b16 %v1384, %v1383
  %v1602 = vpack.c.b16 %v1386, %v1385
  %v1603 = vpack.c.b16 %v1388, %v1387
  %v1604 = vpack.c.b16 %v1390, %v1389
  %v1605 = vpack.c.b16 %v1392, %v1391
  %v1606 = vpack.c.b16 %v1394, %v1393
  %v1607 = vpack.c.b16 %v1396, %v1395
  %v1608 = vpack.c.b16 %v1398, %v1397
  %v1609 = vpack.c.b16 %v1400, %v1399
  %v1610 = vpack.c.b16 %v1402, %v1401
  %v1611 = vpack.c.b16 %v1404, %v1403
  %v1612 = vpack.c.b16 %v1406, %v1405
  %v1613 = vpack.c.b16 %v1408, %v1407
  %v1614 = vpack.c.b16 %v1410, %v1409
  %v1615 = vpack.c.b16 %v1412, %v1411
  %v1616 = vpack.c.b16 %v1414, %v1413
  %v1617 = vpack.c.b16 %v1416, %v1415
  %v1618 = vpack.c.b16 %v1418, %v1417
  %1819 = vmatprep.subr.bf16.mxu0 0
  %1820 = vmatpush1.bf16.msra.mxu0 %v1419
  %1821 = vmatprep.subr.bf16.mxu0 0
  %1822 = vmatpush1.bf16.msra.mxu0 %v1420
  %1823 = vmatprep.subr.bf16.mxu0 0
  %1824 = vmatpush1.bf16.msra.mxu0 %v1421
  %1825 = vmatprep.subr.bf16.mxu0 0
  %1826 = vmatpush1.bf16.msra.mxu0 %v1422
  %1827 = vmatprep.subr.bf16.mxu0 0
  %1828 = vmatpush1.bf16.msra.mxu0 %v1423
  %1829 = vmatprep.subr.bf16.mxu0 0
  %1830 = vmatpush1.bf16.msra.mxu0 %v1424
  %1831 = vmatprep.subr.bf16.mxu0 0
  %1832 = vmatpush1.bf16.msra.mxu0 %v1425
  %1833 = vmatprep.subr.bf16.mxu0 0
  %1834 = vmatpush1.bf16.msra.mxu0 %v1426
  %1835 = vmatprep.subr.bf16.mxu0 0
  %1836 = vmatpush1.bf16.msra.mxu0 %v1427
  %1837 = vmatprep.subr.bf16.mxu0 0
  %1838 = vmatpush1.bf16.msra.mxu0 %v1428
  %1839 = vmatprep.subr.bf16.mxu0 0
  %1840 = vmatpush1.bf16.msra.mxu0 %v1429
  %1841 = vmatprep.subr.bf16.mxu0 0
  %1842 = vmatpush1.bf16.msra.mxu0 %v1430
  %1843 = vmatprep.subr.bf16.mxu0 0
  %1844 = vmatpush1.bf16.msra.mxu0 %v1431
  %1845 = vmatprep.subr.bf16.mxu0 0
  %1846 = vmatpush1.bf16.msra.mxu0 %v1432
  %1847 = vmatprep.subr.bf16.mxu0 0
  %1848 = vmatpush1.bf16.msra.mxu0 %v1433
  %1849 = vmatprep.subr.bf16.mxu0 0
  %1850 = vmatpush1.bf16.msra.mxu0 %v1434
  %1851 = vmatprep.mubr.bf16.mxu0 %v470
  %1852 = vmatmul.mubr.bf16.gmra.mrb[0].mxu0 %v456
  %v1853 = vpop.f32.mrb[0].mxu0
  %v1854 = vadd.f32 %v427, %v1853
  %v1855 = vpop.f32.mrb[0].mxu0
  %v1856 = vpop.f32.mrb[0].mxu0
  %v1857 = vpop.f32.mrb[0].mxu0
  %1858 = vdwg.mxu0
  %1859 = vmatprep.subr.bf16.mxu0 0
  %1860 = vmatpush1.bf16.msra.mxu0 %v1435
  %1861 = vmatprep.subr.bf16.mxu0 0
  %1862 = vmatpush1.bf16.msra.mxu0 %v1436
  %1863 = vmatprep.subr.bf16.mxu0 0
  %1864 = vmatpush1.bf16.msra.mxu0 %v1437
  %1865 = vmatprep.subr.bf16.mxu0 0
  %1866 = vmatpush1.bf16.msra.mxu0 %v1438
  %1867 = vmatprep.subr.bf16.mxu0 0
  %1868 = vmatpush1.bf16.msra.mxu0 %v1439
  %1869 = vmatprep.subr.bf16.mxu0 0
  %1870 = vmatpush1.bf16.msra.mxu0 %v1440
  %1871 = vmatprep.subr.bf16.mxu0 0
  %1872 = vmatpush1.bf16.msra.mxu0 %v1441
  %1873 = vmatprep.subr.bf16.mxu0 0
  %1874 = vmatpush1.bf16.msra.mxu0 %v1442
  %1875 = vmatprep.subr.bf16.mxu0 0
  %1876 = vmatpush1.bf16.msra.mxu0 %v1443
  %1877 = vmatprep.subr.bf16.mxu0 0
  %1878 = vmatpush1.bf16.msra.mxu0 %v1444
  %1879 = vmatprep.subr.bf16.mxu0 0
  %1880 = vmatpush1.bf16.msra.mxu0 %v1445
  %1881 = vmatprep.subr.bf16.mxu0 0
  %1882 = vmatpush1.bf16.msra.mxu0 %v1446
  %1883 = vmatprep.subr.bf16.mxu0 0
  %1884 = vmatpush1.bf16.msra.mxu0 %v1447
  %1885 = vmatprep.subr.bf16.mxu0 0
  %1886 = vmatpush1.bf16.msra.mxu0 %v1448
  %1887 = vmatprep.subr.bf16.mxu0 0
  %1888 = vmatpush1.bf16.msra.mxu0 %v1449
  %1889 = vmatprep.subr.bf16.mxu0 0
  %1890 = vmatpush1.bf16.msra.mxu0 %v1450
  %1891 = vmatprep.mubr.bf16.mxu0 %v480
  %1892 = vmatmul.mubr.bf16.gmra.mrb[0].mxu0 %v478
  %v1893 = vpop.f32.mrb[0].mxu0
  %v1894 = vadd.f32 %v1854, %v1893
  %v1895 = vpop.f32.mrb[0].mxu0
  %v1896 = vpop.f32.mrb[0].mxu0
  %v1897 = vpop.f32.mrb[0].mxu0
  %1898 = vdwg.mxu0
  %1899 = vmatprep.subr.bf16.mxu0 0
  %1900 = vmatpush1.bf16.msra.mxu0 %v1451
  %1901 = vmatprep.subr.bf16.mxu0 0
  %1902 = vmatpush1.bf16.msra.mxu0 %v1452
  %1903 = vmatprep.subr.bf16.mxu0 0
  %1904 = vmatpush1.bf16.msra.mxu0 %v1453
  %1905 = vmatprep.subr.bf16.mxu0 0
  %1906 = vmatpush1.bf16.msra.mxu0 %v1454
  %1907 = vmatprep.subr.bf16.mxu0 0
  %1908 = vmatpush1.bf16.msra.mxu0 %v1455
  %1909 = vmatprep.subr.bf16.mxu0 0
  %1910 = vmatpush1.bf16.msra.mxu0 %v1456
  %1911 = vmatprep.subr.bf16.mxu0 0
  %1912 = vmatpush1.bf16.msra.mxu0 %v1457
  %1913 = vmatprep.subr.bf16.mxu0 0
  %1914 = vmatpush1.bf16.msra.mxu0 %v1458
  %1915 = vmatprep.subr.bf16.mxu0 0
  %1916 = vmatpush1.bf16.msra.mxu0 %v1459
  %1917 = vmatprep.subr.bf16.mxu0 0
  %1918 = vmatpush1.bf16.msra.mxu0 %v1460
  %1919 = vmatprep.subr.bf16.mxu0 0
  %1920 = vmatpush1.bf16.msra.mxu0 %v1461
  %1921 = vmatprep.subr.bf16.mxu0 0
  %1922 = vmatpush1.bf16.msra.mxu0 %v1462
  %1923 = vmatprep.subr.bf16.mxu0 0
  %1924 = vmatpush1.bf16.msra.mxu0 %v1463
  %1925 = vmatprep.subr.bf16.mxu0 0
  %1926 = vmatpush1.bf16.msra.mxu0 %v1464
  %1927 = vmatprep.subr.bf16.mxu0 0
  %1928 = vmatpush1.bf16.msra.mxu0 %v1465
  %1929 = vmatprep.subr.bf16.mxu0 0
  %1930 = vmatpush1.bf16.msra.mxu0 %v1466
  %1931 = vmatprep.mubr.bf16.mxu0 %v477
  %1932 = vmatmul.mubr.bf16.gmra.mrb[0].mxu0 %v463
  %v1933 = vpop.f32.mrb[0].mxu0
  %v1934 = vadd.f32 %v1894, %v1933
  %v1935 = vpop.f32.mrb[0].mxu0
  %v1936 = vpop.f32.mrb[0].mxu0
  %v1937 = vpop.f32.mrb[0].mxu0
  %1938 = vdwg.mxu0
  %1939 = vmatprep.subr.bf16.mxu0 0
  %1940 = vmatpush1.bf16.msra.mxu0 %v1467
  %1941 = vmatprep.subr.bf16.mxu0 0
  %1942 = vmatpush1.bf16.msra.mxu0 %v1468
  %1943 = vmatprep.subr.bf16.mxu0 0
  %1944 = vmatpush1.bf16.msra.mxu0 %v1469
  %1945 = vmatprep.subr.bf16.mxu0 0
  %1946 = vmatpush1.bf16.msra.mxu0 %v1470
  %1947 = vmatprep.subr.bf16.mxu0 0
  %1948 = vmatpush1.bf16.msra.mxu0 %v1471
  %1949 = vmatprep.subr.bf16.mxu0 0
  %1950 = vmatpush1.bf16.msra.mxu0 %v1472
  %1951 = vmatprep.subr.bf16.mxu0 0
  %1952 = vmatpush1.bf16.msra.mxu0 %v1473
  %1953 = vmatprep.subr.bf16.mxu0 0
  %1954 = vmatpush1.bf16.msra.mxu0 %v1474
  %1955 = vmatprep.subr.bf16.mxu0 0
  %1956 = vmatpush1.bf16.msra.mxu0 %v1475
  %1957 = vmatprep.subr.bf16.mxu0 0
  %1958 = vmatpush1.bf16.msra.mxu0 %v1476
  %1959 = vmatprep.subr.bf16.mxu0 0
  %1960 = vmatpush1.bf16.msra.mxu0 %v1477
  %1961 = vmatprep.subr.bf16.mxu0 0
  %1962 = vmatpush1.bf16.msra.mxu0 %v1478
  %1963 = vmatprep.subr.bf16.mxu0 0
  %1964 = vmatpush1.bf16.msra.mxu0 %v1479
  %1965 = vmatprep.subr.bf16.mxu0 0
  %1966 = vmatpush1.bf16.msra.mxu0 %v1480
  %1967 = vmatprep.subr.bf16.mxu0 0
  %1968 = vmatpush1.bf16.msra.mxu0 %v1481
  %1969 = vmatprep.subr.bf16.mxu0 0
  %1970 = vmatpush1.bf16.msra.mxu0 %v1482
  %1971 = vmatprep.mubr.bf16.mxu0 %v481
  %1972 = vmatmul.mubr.bf16.gmra.mrb[0].mxu0 %v479
  %v1973 = vpop.f32.mrb[0].mxu0
  %v1974 = vadd.f32 %v1934, %v1973
  %v1975 = vpop.f32.mrb[0].mxu0
  %v1976 = vpop.f32.mrb[0].mxu0
  %v1977 = vpop.f32.mrb[0].mxu0
  %1978 = vdwg.mxu0
  %1979 = vmatprep.subr.bf16.mxu0 0
  %1980 = vmatpush1.bf16.msra.mxu0 %v1483
  %1981 = vmatprep.subr.bf16.mxu0 0
  %1982 = vmatpush1.bf16.msra.mxu0 %v1484
  %1983 = vmatprep.subr.bf16.mxu0 0
  %1984 = vmatpush1.bf16.msra.mxu0 %v1485
  %1985 = vmatprep.subr.bf16.mxu0 0
  %1986 = vmatpush1.bf16.msra.mxu0 %v1486
  %1987 = vmatprep.subr.bf16.mxu0 0
  %1988 = vmatpush1.bf16.msra.mxu0 %v1487
  %1989 = vmatprep.subr.bf16.mxu0 0
  %1990 = vmatpush1.bf16.msra.mxu0 %v1488
  %1991 = vmatprep.subr.bf16.mxu0 0
  %1992 = vmatpush1.bf16.msra.mxu0 %v1489
  %1993 = vmatprep.subr.bf16.mxu0 0
  %1994 = vmatpush1.bf16.msra.mxu0 %v1490
  %1995 = vmatprep.subr.bf16.mxu0 0
  %1996 = vmatpush1.bf16.msra.mxu0 %v1491
  %1997 = vmatprep.subr.bf16.mxu0 0
  %1998 = vmatpush1.bf16.msra.mxu0 %v1492
  %1999 = vmatprep.subr.bf16.mxu0 0
  %2000 = vmatpush1.bf16.msra.mxu0 %v1493
  %2001 = vmatprep.subr.bf16.mxu0 0
  %2002 = vmatpush1.bf16.msra.mxu0 %v1494
  %2003 = vmatprep.subr.bf16.mxu0 0
  %2004 = vmatpush1.bf16.msra.mxu0 %v1495
  %2005 = vmatprep.subr.bf16.mxu0 0
  %2006 = vmatpush1.bf16.msra.mxu0 %v1496
  %2007 = vmatprep.subr.bf16.mxu0 0
  %2008 = vmatpush1.bf16.msra.mxu0 %v1497
  %2009 = vmatprep.subr.bf16.mxu0 0
  %2010 = vmatpush1.bf16.msra.mxu0 %v1498
  %2011 = vmatprep.mubr.bf16.mxu0 %v519
  %2012 = vmatmul.mubr.bf16.gmra.mrb[0].mxu0 %v505
  %v2013 = vpop.f32.mrb[0].mxu0
  %v2014 = vadd.f32 %v1974, %v2013
  %v2015 = vpop.f32.mrb[0].mxu0
  %v2016 = vpop.f32.mrb[0].mxu0
  %v2017 = vpop.f32.mrb[0].mxu0
  %2018 = vdwg.mxu0
  %2019 = vmatprep.subr.bf16.mxu0 0
  %2020 = vmatpush1.bf16.msra.mxu0 %v1499
  %2021 = vmatprep.subr.bf16.mxu0 0
  %2022 = vmatpush1.bf16.msra.mxu0 %v1500
  %2023 = vmatprep.subr.bf16.mxu0 0
  %2024 = vmatpush1.bf16.msra.mxu0 %v1501
  %2025 = vmatprep.subr.bf16.mxu0 0
  %2026 = vmatpush1.bf16.msra.mxu0 %v1502
  %2027 = vmatprep.subr.bf16.mxu0 0
  %2028 = vmatpush1.bf16.msra.mxu0 %v1503
  %2029 = vmatprep.subr.bf16.mxu0 0
  %2030 = vmatpush1.bf16.msra.mxu0 %v1504
  %2031 = vmatprep.subr.bf16.mxu0 0
  %2032 = vmatpush1.bf16.msra.mxu0 %v1505
  %2033 = vmatprep.subr.bf16.mxu0 0
  %2034 = vmatpush1.bf16.msra.mxu0 %v1506
  %2035 = vmatprep.subr.bf16.mxu0 0
  %2036 = vmatpush1.bf16.msra.mxu0 %v1507
  %2037 = vmatprep.subr.bf16.mxu0 0
  %2038 = vmatpush1.bf16.msra.mxu0 %v1508
  %2039 = vmatprep.subr.bf16.mxu0 0
  %2040 = vmatpush1.bf16.msra.mxu0 %v1509
  %2041 = vmatprep.subr.bf16.mxu0 0
  %2042 = vmatpush1.bf16.msra.mxu0 %v1510
  %2043 = vmatprep.subr.bf16.mxu0 0
  %2044 = vmatpush1.bf16.msra.mxu0 %v1511
  %2045 = vmatprep.subr.bf16.mxu0 0
  %2046 = vmatpush1.bf16.msra.mxu0 %v1512
  %2047 = vmatprep.subr.bf16.mxu0 0
  %2048 = vmatpush1.bf16.msra.mxu0 %v1513
  %2049 = vmatprep.subr.bf16.mxu0 0
  %2050 = vmatpush1.bf16.msra.mxu0 %v1514
  %2051 = vmatprep.mubr.bf16.mxu0 %v529
  %2052 = vmatmul.mubr.bf16.gmra.mrb[0].mxu0 %v527
  %v2053 = vpop.f32.mrb[0].mxu0
  %v2054 = vadd.f32 %v2014, %v2053
  %v2055 = vpop.f32.mrb[0].mxu0
  %v2056 = vpop.f32.mrb[0].mxu0
  %v2057 = vpop.f32.mrb[0].mxu0
  %2058 = vdwg.mxu0
  %2059 = vmatprep.subr.bf16.mxu0 0
  %2060 = vmatpush1.bf16.msra.mxu0 %v1515
  %2061 = vmatprep.subr.bf16.mxu0 0
  %2062 = vmatpush1.bf16.msra.mxu0 %v1516
  %2063 = vmatprep.subr.bf16.mxu0 0
  %2064 = vmatpush1.bf16.msra.mxu0 %v1517
  %2065 = vmatprep.subr.bf16.mxu0 0
  %2066 = vmatpush1.bf16.msra.mxu0 %v1518
  %2067 = vmatprep.subr.bf16.mxu0 0
  %2068 = vmatpush1.bf16.msra.mxu0 %v1519
  %2069 = vmatprep.subr.bf16.mxu0 0
  %2070 = vmatpush1.bf16.msra.mxu0 %v1520
  %2071 = vmatprep.subr.bf16.mxu0 0
  %2072 = vmatpush1.bf16.msra.mxu0 %v1521
  %2073 = vmatprep.subr.bf16.mxu0 0
  %2074 = vmatpush1.bf16.msra.mxu0 %v1522
  %2075 = vmatprep.subr.bf16.mxu0 0
  %2076 = vmatpush1.bf16.msra.mxu0 %v1523
  %2077 = vmatprep.subr.bf16.mxu0 0
  %2078 = vmatpush1.bf16.msra.mxu0 %v1524
  %2079 = vmatprep.subr.bf16.mxu0 0
  %2080 = vmatpush1.bf16.msra.mxu0 %v1525
  %2081 = vmatprep.subr.bf16.mxu0 0
  %2082 = vmatpush1.bf16.msra.mxu0 %v1526
  %2083 = vmatprep.subr.bf16.mxu0 0
  %2084 = vmatpush1.bf16.msra.mxu0 %v1527
  %2085 = vmatprep.subr.bf16.mxu0 0
  %2086 = vmatpush1.bf16.msra.mxu0 %v1528
  %2087 = vmatprep.subr.bf16.mxu0 0
  %2088 = vmatpush1.bf16.msra.mxu0 %v1529
  %2089 = vmatprep.subr.bf16.mxu0 0
  %2090 = vmatpush1.bf16.msra.mxu0 %v1530
  %2091 = vmatprep.mubr.bf16.mxu0 %v526
  %2092 = vmatmul.mubr.bf16.gmra.mrb[0].mxu0 %v512
  %v2093 = vpop.f32.mrb[0].mxu0
  %v2094 = vadd.f32 %v2054, %v2093
  %v2095 = vpop.f32.mrb[0].mxu0
  %v2096 = vpop.f32.mrb[0].mxu0
  %v2097 = vpop.f32.mrb[0].mxu0
  %2098 = vdwg.mxu0
  %2099 = vmatprep.subr.bf16.mxu0 0
  %2100 = vmatpush1.bf16.msra.mxu0 %v1531
  %2101 = vmatprep.subr.bf16.mxu0 0
  %2102 = vmatpush1.bf16.msra.mxu0 %v1532
  %2103 = vmatprep.subr.bf16.mxu0 0
  %2104 = vmatpush1.bf16.msra.mxu0 %v1533
  %2105 = vmatprep.subr.bf16.mxu0 0
  %2106 = vmatpush1.bf16.msra.mxu0 %v1534
  %2107 = vmatprep.subr.bf16.mxu0 0
  %2108 = vmatpush1.bf16.msra.mxu0 %v1535
  %2109 = vmatprep.subr.bf16.mxu0 0
  %2110 = vmatpush1.bf16.msra.mxu0 %v1536
  %2111 = vmatprep.subr.bf16.mxu0 0
  %2112 = vmatpush1.bf16.msra.mxu0 %v1537
  %2113 = vmatprep.subr.bf16.mxu0 0
  %2114 = vmatpush1.bf16.msra.mxu0 %v1538
  %2115 = vmatprep.subr.bf16.mxu0 0
  %2116 = vmatpush1.bf16.msra.mxu0 %v1539
  %2117 = vmatprep.subr.bf16.mxu0 0
  %2118 = vmatpush1.bf16.msra.mxu0 %v1540
  %2119 = vmatprep.subr.bf16.mxu0 0
  %2120 = vmatpush1.bf16.msra.mxu0 %v1541
  %2121 = vmatprep.subr.bf16.mxu0 0
  %2122 = vmatpush1.bf16.msra.mxu0 %v1542
  %2123 = vmatprep.subr.bf16.mxu0 0
  %2124 = vmatpush1.bf16.msra.mxu0 %v1543
  %2125 = vmatprep.subr.bf16.mxu0 0
  %2126 = vmatpush1.bf16.msra.mxu0 %v1544
  %2127 = vmatprep.subr.bf16.mxu0 0
  %2128 = vmatpush1.bf16.msra.mxu0 %v1545
  %2129 = vmatprep.subr.bf16.mxu0 0
  %2130 = vmatpush1.bf16.msra.mxu0 %v1546
  %2131 = vmatprep.mubr.bf16.mxu0 %v530
  %2132 = vmatmul.mubr.bf16.gmra.mrb[0].mxu0 %v528
  %v2133 = vpop.f32.mrb[0].mxu0
  %v2134 = vadd.f32 %v2094, %v2133
  %v2135 = vpop.f32.mrb[0].mxu0
  %v2136 = vpop.f32.mrb[0].mxu0
  %v2137 = vpop.f32.mrb[0].mxu0
  %2138 = vdwg.mxu0
  %2139 = vmatprep.subr.bf16.mxu0 0
  %2140 = vmatpush1.bf16.msra.mxu0 %v1547
  %2141 = vmatprep.subr.bf16.mxu0 0
  %2142 = vmatpush1.bf16.msra.mxu0 %v1548
  %2143 = vmatprep.subr.bf16.mxu0 0
  %2144 = vmatpush1.bf16.msra.mxu0 %v1549
  %2145 = vmatprep.subr.bf16.mxu0 0
  %2146 = vmatpush1.bf16.msra.mxu0 %v1550
  %2147 = vmatprep.subr.bf16.mxu0 0
  %2148 = vmatpush1.bf16.msra.mxu0 %v1551
  %2149 = vmatprep.subr.bf16.mxu0 0
  %2150 = vmatpush1.bf16.msra.mxu0 %v1552
  %2151 = vmatprep.subr.bf16.mxu0 0
  %2152 = vmatpush1.bf16.msra.mxu0 %v1553
  %2153 = vmatprep.subr.bf16.mxu0 0
  %2154 = vmatpush1.bf16.msra.mxu0 %v1554
  %2155 = vmatprep.subr.bf16.mxu0 0
  %2156 = vmatpush1.bf16.msra.mxu0 %v1555
  %2157 = vmatprep.subr.bf16.mxu0 0
  %2158 = vmatpush1.bf16.msra.mxu0 %v1556
  %2159 = vmatprep.subr.bf16.mxu0 0
  %2160 = vmatpush1.bf16.msra.mxu0 %v1557
  %2161 = vmatprep.subr.bf16.mxu0 0
  %2162 = vmatpush1.bf16.msra.mxu0 %v1558
  %2163 = vmatprep.subr.bf16.mxu0 0
  %2164 = vmatpush1.bf16.msra.mxu0 %v1559
  %2165 = vmatprep.subr.bf16.mxu0 0
  %2166 = vmatpush1.bf16.msra.mxu0 %v1560
  %2167 = vmatprep.subr.bf16.mxu0 0
  %2168 = vmatpush1.bf16.msra.mxu0 %v1561
  %2169 = vmatprep.subr.bf16.mxu0 0
  %2170 = vmatpush1.bf16.msra.mxu0 %v1562
  %2171 = vmatprep.mubr.bf16.mxu0 %v568
  %2172 = vmatmul.mubr.bf16.gmra.mrb[0].mxu0 %v554
  %v2173 = vpop.f32.mrb[0].mxu0
  %v2174 = vadd.f32 %v2134, %v2173
  %v2175 = vpop.f32.mrb[0].mxu0
  %v2176 = vpop.f32.mrb[0].mxu0
  %v2177 = vpop.f32.mrb[0].mxu0
  %2178 = vdwg.mxu0
  %2179 = vmatprep.subr.bf16.mxu0 0
  %2180 = vmatpush1.bf16.msra.mxu0 %v1563
  %2181 = vmatprep.subr.bf16.mxu0 0
  %2182 = vmatpush1.bf16.msra.mxu0 %v1564
  %2183 = vmatprep.subr.bf16.mxu0 0
  %2184 = vmatpush1.bf16.msra.mxu0 %v1565
  %2185 = vmatprep.subr.bf16.mxu0 0
  %2186 = vmatpush1.bf16.msra.mxu0 %v1566
  %2187 = vmatprep.subr.bf16.mxu0 0
  %2188 = vmatpush1.bf16.msra.mxu0 %v1567
  %2189 = vmatprep.subr.bf16.mxu0 0
  %2190 = vmatpush1.bf16.msra.mxu0 %v1568
  %2191 = vmatprep.subr.bf16.mxu0 0
  %2192 = vmatpush1.bf16.msra.mxu0 %v1569
  %2193 = vmatprep.subr.bf16.mxu0 0
  %2194 = vmatpush1.bf16.msra.mxu0 %v1570
  %2195 = vmatprep.subr.bf16.mxu0 0
  %2196 = vmatpush1.bf16.msra.mxu0 %v1571
  %2197 = vmatprep.subr.bf16.mxu0 0
  %2198 = vmatpush1.bf16.msra.mxu0 %v1572
  %2199 = vmatprep.subr.bf16.mxu0 0
  %2200 = vmatpush1.bf16.msra.mxu0 %v1573
  %2201 = vmatprep.subr.bf16.mxu0 0
  %2202 = vmatpush1.bf16.msra.mxu0 %v1574
  %2203 = vmatprep.subr.bf16.mxu0 0
  %2204 = vmatpush1.bf16.msra.mxu0 %v1575
  %2205 = vmatprep.subr.bf16.mxu0 0
  %2206 = vmatpush1.bf16.msra.mxu0 %v1576
  %2207 = vmatprep.subr.bf16.mxu0 0
  %2208 = vmatpush1.bf16.msra.mxu0 %v1577
  %2209 = vmatprep.subr.bf16.mxu0 0
  %2210 = vmatpush1.bf16.msra.mxu0 %v1578
  %2211 = vmatprep.mubr.bf16.mxu0 %v578
  %2212 = vmatmul.mubr.bf16.gmra.mrb[0].mxu0 %v576
  %v2213 = vpop.f32.mrb[0].mxu0
  %v2214 = vadd.f32 %v2174, %v2213
  %v2215 = vpop.f32.mrb[0].mxu0
  %v2216 = vpop.f32.mrb[0].mxu0
  %v2217 = vpop.f32.mrb[0].mxu0
  %2218 = vdwg.mxu0
  %2219 = vmatprep.subr.bf16.mxu0 0
  %2220 = vmatpush1.bf16.msra.mxu0 %v1579
  %2221 = vmatprep.subr.bf16.mxu0 0
  %2222 = vmatpush1.bf16.msra.mxu0 %v1580
  %2223 = vmatprep.subr.bf16.mxu0 0
  %2224 = vmatpush1.bf16.msra.mxu0 %v1581
  %2225 = vmatprep.subr.bf16.mxu0 0
  %2226 = vmatpush1.bf16.msra.mxu0 %v1582
  %2227 = vmatprep.subr.bf16.mxu0 0
  %2228 = vmatpush1.bf16.msra.mxu0 %v1583
  %2229 = vmatprep.subr.bf16.mxu0 0
  %2230 = vmatpush1.bf16.msra.mxu0 %v1584
  %2231 = vmatprep.subr.bf16.mxu0 0
  %2232 = vmatpush1.bf16.msra.mxu0 %v1585
  %2233 = vmatprep.subr.bf16.mxu0 0
  %2234 = vmatpush1.bf16.msra.mxu0 %v1586
  %2235 = vmatprep.subr.bf16.mxu0 0
  %2236 = vmatpush1.bf16.msra.mxu0 %v1587
  %2237 = vmatprep.subr.bf16.mxu0 0
  %2238 = vmatpush1.bf16.msra.mxu0 %v1588
  %2239 = vmatprep.subr.bf16.mxu0 0
  %2240 = vmatpush1.bf16.msra.mxu0 %v1589
  %2241 = vmatprep.subr.bf16.mxu0 0
  %2242 = vmatpush1.bf16.msra.mxu0 %v1590
  %2243 = vmatprep.subr.bf16.mxu0 0
  %2244 = vmatpush1.bf16.msra.mxu0 %v1591
  %2245 = vmatprep.subr.bf16.mxu0 0
  %2246 = vmatpush1.bf16.msra.mxu0 %v1592
  %2247 = vmatprep.subr.bf16.mxu0 0
  %2248 = vmatpush1.bf16.msra.mxu0 %v1593
  %2249 = vmatprep.subr.bf16.mxu0 0
  %2250 = vmatpush1.bf16.msra.mxu0 %v1594
  %2251 = vmatprep.mubr.bf16.mxu0 %v575
  %2252 = vmatmul.mubr.bf16.gmra.mrb[0].mxu0 %v561
  %v2253 = vpop.f32.mrb[0].mxu0
  %v2254 = vadd.f32 %v2214, %v2253
  %v2255 = vpop.f32.mrb[0].mxu0
  %v2256 = vpop.f32.mrb[0].mxu0
  %v2257 = vpop.f32.mrb[0].mxu0
  %2258 = vdwg.mxu0
  %2259 = vmatprep.subr.bf16.mxu0 0
  %2260 = vmatpush1.bf16.msra.mxu0 %v1595
  %2261 = vmatprep.subr.bf16.mxu0 0
  %2262 = vmatpush1.bf16.msra.mxu0 %v1596
  %2263 = vmatprep.subr.bf16.mxu0 0
  %2264 = vmatpush1.bf16.msra.mxu0 %v1597
  %2265 = vmatprep.subr.bf16.mxu0 0
  %2266 = vmatpush1.bf16.msra.mxu0 %v1598
  %2267 = vmatprep.subr.bf16.mxu0 0
  %2268 = vmatpush1.bf16.msra.mxu0 %v1599
  %2269 = vmatprep.subr.bf16.mxu0 0
  %2270 = vmatpush1.bf16.msra.mxu0 %v1600
  %2271 = vmatprep.subr.bf16.mxu0 0
  %2272 = vmatpush1.bf16.msra.mxu0 %v1601
  %2273 = vmatprep.subr.bf16.mxu0 0
  %2274 = vmatpush1.bf16.msra.mxu0 %v1602
  %2275 = vmatprep.subr.bf16.mxu0 0
  %2276 = vmatpush1.bf16.msra.mxu0 %v1603
  %2277 = vmatprep.subr.bf16.mxu0 0
  %2278 = vmatpush1.bf16.msra.mxu0 %v1604
  %2279 = vmatprep.subr.bf16.mxu0 0
  %2280 = vmatpush1.bf16.msra.mxu0 %v1605
  %2281 = vmatprep.subr.bf16.mxu0 0
  %2282 = vmatpush1.bf16.msra.mxu0 %v1606
  %2283 = vmatprep.subr.bf16.mxu0 0
  %2284 = vmatpush1.bf16.msra.mxu0 %v1607
  %2285 = vmatprep.subr.bf16.mxu0 0
  %2286 = vmatpush1.bf16.msra.mxu0 %v1608
  %2287 = vmatprep.subr.bf16.mxu0 0
  %2288 = vmatpush1.bf16.msra.mxu0 %v1609
  %2289 = vmatprep.subr.bf16.mxu0 0
  %2290 = vmatpush1.bf16.msra.mxu0 %v1610
  %2291 = vmatprep.mubr.bf16.mxu0 %v579
  %2292 = vmatmul.mubr.bf16.gmra.mrb[0].mxu0 %v577
  %v2293 = vpop.f32.mrb[0].mxu0
  %v2294 = vadd.f32 %v2254, %v2293
  %v2295 = vpop.f32.mrb[0].mxu0
  %v2296 = vpop.f32.mrb[0].mxu0
  %v2297 = vpop.f32.mrb[0].mxu0
  %2298 = vdwg.mxu0
  %2299 = vmatprep.subr.bf16.mxu0 0
  %2300 = vmatpush1.bf16.msra.mxu0 %v1611
  %2301 = vmatprep.subr.bf16.mxu0 0
  %2302 = vmatpush1.bf16.msra.mxu0 %v1612
  %2303 = vmatprep.subr.bf16.mxu0 0
  %2304 = vmatpush1.bf16.msra.mxu0 %v1613
  %2305 = vmatprep.subr.bf16.mxu0 0
  %2306 = vmatpush1.bf16.msra.mxu0 %v1614
  %2307 = vmatprep.subr.bf16.mxu0 0
  %2308 = vmatpush1.bf16.msra.mxu0 %v1615
  %2309 = vmatprep.subr.bf16.mxu0 0
  %2310 = vmatpush1.bf16.msra.mxu0 %v1616
  %2311 = vmatprep.subr.bf16.mxu0 0
  %2312 = vmatpush1.bf16.msra.mxu0 %v1617
  %2313 = vmatprep.subr.bf16.mxu0 0
  %2314 = vmatpush1.bf16.msra.mxu0 %v1618
  %2315 = vmatprep.subr.bf16.mxu0 0
  %2316 = vmatpush1.bf16.msra.mxu0 0
  %2317 = vmatprep.subr.bf16.mxu0 0
  %2318 = vmatpush1.bf16.msra.mxu0 0
  %2319 = vmatprep.subr.bf16.mxu0 0
  %2320 = vmatpush1.bf16.msra.mxu0 0
  %2321 = vmatprep.subr.bf16.mxu0 0
  %2322 = vmatpush1.bf16.msra.mxu0 0
  %2323 = vmatprep.subr.bf16.mxu0 0
  %2324 = vmatpush1.bf16.msra.mxu0 0
  %2325 = vmatprep.subr.bf16.mxu0 0
  %2326 = vmatpush1.bf16.msra.mxu0 0
  %2327 = vmatprep.subr.bf16.mxu0 0
  %2328 = vmatpush1.bf16.msra.mxu0 0
  %2329 = vmatprep.subr.bf16.mxu0 0
  %2330 = vmatpush1.bf16.msra.mxu0 0
  %2331 = vmatprep.mubr.bf16.mxu0 0
  %2332 = vmatmul.mubr.bf16.gmra.mrb[0].mxu0 %v593
  %v2333 = vpop.f32.mrb[0].mxu0
  %v2334 = vadd.f32 %v2294, %v2333
  %v2335 = vpop.f32.mrb[0].mxu0
  %v2336 = vpop.f32.mrb[0].mxu0
  %v2337 = vpop.f32.mrb[0].mxu0
  %2338 = vdwg.mxu0
  %2339 = vst [vmem:[%s4] sm:$0x3] %v2334
  // Predicated region
  $region18: #{model_forward.7} parent=0 // pred_check
    _
  $region19: #{model_forward.7} parent=0 // pred_check_branch
    %2341 = sbr.rel (0) target = $region21
  $region20: #{model_forward.7} parent=0 // pred_region
    _
  $region21: #{model_forward.7} parent=0 // pred_fallthru
    _
  // Predicated region
  $region22: #{model_forward.7} parent=0 // pred_check
    _
  $region23: #{model_forward.7} parent=0 // pred_check_branch
    %2343 = sbr.rel (0) target = $region25
  $region24: #{model_forward.7} parent=0 // pred_region
    _
  $region25: #{model_forward.7} parent=0 // pred_fallthru
    _

// kernel: model_forward.6
$region0: #{model_forward.6}
  #allocation0 [shape = 'u32[]', space=smem, size = 0x4, offset = 0x4, fixed_abs, tag = 'smem constant byte address 0x4 - core index']
  #allocation1 [shape = 'u32[144,128]{1,0:T(1,128)}', space=vmem, size = 0x12000, scoped, tag = 'internal scratch']
  #allocation2 [shape = 'f32[140,128]{1,0:T(8,128)}', space=vmem, size = 0x12000, scoped, tag = 'scratch operand']
  %s0 = inlined_call_operand.vmem [shape: bf16[2,200,128], index: 0, kind: input, shape index: {}]
  %s1 = inlined_call_operand.vmem [shape: bf16[25,128,128], index: 1, kind: input, shape index: {}]
  %s2 = inlined_call_operand.vmem [shape: f32[1,128], index: 2, kind: input, shape index: {}]
  %s3 = inlined_call_operand.vmem [shape: f32[1,128], index: 3, kind: input, shape index: {}]
  %s4 = inlined_call_operand.vmem [shape: bf16[2,5,5,128], index: 4, kind: output, shape index: {}]
  %s5 = sld [smem:[#allocation0]]
  $region49: #{model_forward.6} parent=0
    _
  %s7 = ssub.s32 1, %s5
  %s8 = scalar_select 0, %s7, %s5
  loop: start=0, step=1, limit=4
  $region2: #{model_forward.6} parent=0 // loop_pre_header
    _
  $region3: #{model_forward.6} parent=0 // loop_header
    %s10 = sphi 0, %s14
    %p11 = scmp.ge.s32.totalorder %s10, 4
    %s20 = sphi 0, %s22
    %s23 = sphi 0, %s20
    %s24 = sphi 0, %s23
    %s40 = sphi 0, %s24
    %s44 = sphi 0, %s44
    %s46 = sphi 0, %s44
    %s47 = sphi 0, %s46
    %s61 = sphi 0, %s47
    %s65 = sphi 0, %s65
    %s67 = sphi 0, %s65
    %s68 = sphi 0, %s67
    %s82 = sphi 0, %s68
    %s86 = sphi 0, %s86
    %s88 = sphi 0, %s86
    %s89 = sphi 0, %s88
    %s103 = sphi 0, %s89
    %s109 = sphi 0, %s111
    %s112 = sphi 0, %s109
    %s113 = sphi 0, %s112
    %s129 = sphi 0, %s113
  $region4: #{model_forward.6} parent=0 // loop_header_branch
    %13 = sbr.rel (%p11) target = $region8
  $region5: #{model_forward.6} parent=0 // loop_body
    %s15 = ssub.s32 %s10, 1
    %s16 = ssub.s32 %s10, 2
    %s17 = sadd.s32 %s10, 1
    %s18 = ssub.s32 %s10, %s17
    %p19 = scmp.eq.s32.totalorder %s18, 0
    %s21 = sadd.s32 %s20, 1
    %s22 = scalar_select %p19, %s20, %s21
    %p25 = pneg %p19
    %p26 = scmp.eq.s32.totalorder %s10, 1
    %p27 = por %p25, %p26
    %p28 = scmp.ne.s32.totalorder %s20, %s23
    %p29 = scmp.eq.s32.totalorder %s10, 0
    %p30 = por %p28, %p29
    %p31 = scmp.ne.s32.totalorder %s20, %s23
    %p32 = scmp.eq.s32.totalorder %s15, 1
    %p33 = por %p31, %p32
    %p34 = scmp.ne.s32.totalorder %s23, %s24
    %p35 = scmp.eq.s32.totalorder %s15, 0
    %p36 = por %p34, %p35
    %p37 = scmp.ne.s32.totalorder %s23, %s24
    %p38 = scmp.eq.s32.totalorder %s16, 1
    %p39 = por %p37, %p38
    %p41 = scmp.ne.s32.totalorder %s24, %s40
    %p42 = scmp.eq.s32.totalorder %s16, 0
    %p43 = por %p41, %p42
    %s45 = sadd.s32 %s44, 1
    %p48 = scmp.eq.s32.totalorder %s10, 1
    %p49 = scmp.ne.s32.totalorder %s44, %s46
    %p50 = scmp.eq.s32.totalorder %s10, 0
    %p51 = por %p49, %p50
    %p52 = scmp.ne.s32.totalorder %s44, %s46
    %p53 = scmp.eq.s32.totalorder %s15, 1
    %p54 = por %p52, %p53
    %p55 = scmp.ne.s32.totalorder %s46, %s47
    %p56 = scmp.eq.s32.totalorder %s15, 0
    %p57 = por %p55, %p56
    %p58 = scmp.ne.s32.totalorder %s46, %s47
    %p59 = scmp.eq.s32.totalorder %s16, 1
    %p60 = por %p58, %p59
    %p62 = scmp.ne.s32.totalorder %s47, %s61
    %p63 = scmp.eq.s32.totalorder %s16, 0
    %p64 = por %p62, %p63
    %s66 = sadd.s32 %s65, 1
    %p69 = scmp.eq.s32.totalorder %s10, 1
    %p70 = scmp.ne.s32.totalorder %s65, %s67
    %p71 = scmp.eq.s32.totalorder %s10, 0
    %p72 = por %p70, %p71
    %p73 = scmp.ne.s32.totalorder %s65, %s67
    %p74 = scmp.eq.s32.totalorder %s15, 1
    %p75 = por %p73, %p74
    %p76 = scmp.ne.s32.totalorder %s67, %s68
    %p77 = scmp.eq.s32.totalorder %s15, 0
    %p78 = por %p76, %p77
    %p79 = scmp.ne.s32.totalorder %s67, %s68
    %p80 = scmp.eq.s32.totalorder %s16, 1
    %p81 = por %p79, %p80
    %p83 = scmp.ne.s32.totalorder %s68, %s82
    %p84 = scmp.eq.s32.totalorder %s16, 0
    %p85 = por %p83, %p84
    %s87 = sadd.s32 %s86, 1
    %p90 = scmp.eq.s32.totalorder %s10, 1
    %p91 = scmp.ne.s32.totalorder %s86, %s88
    %p92 = scmp.eq.s32.totalorder %s10, 0
    %p93 = por %p91, %p92
    %p94 = scmp.ne.s32.totalorder %s86, %s88
    %p95 = scmp.eq.s32.totalorder %s15, 1
    %p96 = por %p94, %p95
    %p97 = scmp.ne.s32.totalorder %s88, %s89
    %p98 = scmp.eq.s32.totalorder %s15, 0
    %p99 = por %p97, %p98
    %p100 = scmp.ne.s32.totalorder %s88, %s89
    %p101 = scmp.eq.s32.totalorder %s16, 1
    %p102 = por %p100, %p101
    %p104 = scmp.ne.s32.totalorder %s89, %s103
    %p105 = scmp.eq.s32.totalorder %s16, 0
    %p106 = por %p104, %p105
    %s107 = ssub.s32 %s10, %s17
    %p108 = scmp.eq.s32.totalorder %s107, 0
    %s110 = sadd.s32 %s109, 1
    %s111 = scalar_select %p108, %s109, %s110
    %p114 = pneg %p108
    %p115 = scmp.eq.s32.totalorder %s10, 1
    %p116 = por %p114, %p115
    %p117 = scmp.ne.s32.totalorder %s109, %s112
    %p118 = scmp.eq.s32.totalorder %s10, 0
    %p119 = por %p117, %p118
    %p120 = scmp.ne.s32.totalorder %s109, %s112
    %p121 = scmp.eq.s32.totalorder %s15, 1
    %p122 = por %p120, %p121
    %p123 = scmp.ne.s32.totalorder %s112, %s113
    %p124 = scmp.eq.s32.totalorder %s15, 0
    %p125 = por %p123, %p124
    %p126 = scmp.ne.s32.totalorder %s112, %s113
    %p127 = scmp.eq.s32.totalorder %s16, 1
    %p128 = por %p126, %p127
    %p130 = scmp.ne.s32.totalorder %s113, %s129
    %p131 = scmp.eq.s32.totalorder %s16, 0
    %p132 = por %p130, %p131
    %p133 = scmp.le.s32.totalorder 1, %s10
    %p134 = scmp.lt.s32.totalorder %s10, 3
    %p135 = pnand %p133, %p134
    %p136 = pneg %p135
    // Predicated region
    $region9: #{model_forward.6} parent=5 // pred_check
      _
    $region10: #{model_forward.6} parent=5 // pred_check_branch
      %138 = sbr.rel (%p135) target = $region12
    $region11: #{model_forward.6} parent=5 // pred_region
      %s139 = ssub.s32 %s10, 1
      // Predicated region
      $region13: #{model_forward.6} parent=11 // pred_check
        %p140 = pneg %p57
      $region14: #{model_forward.6} parent=11 // pred_check_branch
        %142 = sbr.rel (%p140) target = $region16
      $region15: #{model_forward.6} parent=11 // pred_region
        _
      $region16: #{model_forward.6} parent=11 // pred_fallthru
        _
      // Predicated region
      $region17: #{model_forward.6} parent=11 // pred_check
        %p143 = pneg %p78
      $region18: #{model_forward.6} parent=11 // pred_check_branch
        %145 = sbr.rel (%p143) target = $region20
      $region19: #{model_forward.6} parent=11 // pred_region
        _
      $region20: #{model_forward.6} parent=11 // pred_fallthru
        _
      // Predicated region
      $region21: #{model_forward.6} parent=11 // pred_check
        %p146 = pneg %p99
      $region22: #{model_forward.6} parent=11 // pred_check_branch
        %148 = sbr.rel (%p146) target = $region24
      $region23: #{model_forward.6} parent=11 // pred_region
        _
      $region24: #{model_forward.6} parent=11 // pred_fallthru
        _
    $region12: #{model_forward.6} parent=5 // pred_fallthru
      _
    %p149 = scmp.lt.s32.totalorder %s10, 2
    // Predicated region
    $region25: #{model_forward.6} parent=5 // pred_check
      %p150 = pneg %p149
    $region26: #{model_forward.6} parent=5 // pred_check_branch
      %152 = sbr.rel (%p150) target = $region28
    $region27: #{model_forward.6} parent=5 // pred_region
      // Predicated region
      $region29: #{model_forward.6} parent=27 // pred_check
        %p153 = pneg %p30
      $region30: #{model_forward.6} parent=27 // pred_check_branch
        %155 = sbr.rel (%p153) target = $region32
      $region31: #{model_forward.6} parent=27 // pred_region
        %p156 = scmp.lt.s32.totalorder %s10, 1
        %s157 = scalar_select %p156, %s10, 1
        %s158 = smul.addr %s157, 25
        %s159 = smul.addr %s158, 4
        %s160 = scalar_lea.vmem %s0, %s159
      $region32: #{model_forward.6} parent=27 // pred_fallthru
        _
    $region28: #{model_forward.6} parent=5 // pred_fallthru
      _
    %p161 = scmp.le.s32.totalorder 1, %s10
    %p162 = scmp.lt.s32.totalorder %s10, 3
    %p163 = pnand %p161, %p162
    %p164 = pneg %p163
    // Predicated region
    $region33: #{model_forward.6} parent=5 // pred_check
      _
    $region34: #{model_forward.6} parent=5 // pred_check_branch
      %166 = sbr.rel (%p163) target = $region36
    $region35: #{model_forward.6} parent=5 // pred_region
      %s167 = ssub.s32 %s10, 1
      %p168 = scmp.lt.s32.totalorder %s15, 1
      %s169 = scalar_select %p168, %s15, 1
      %s170 = smul.addr %s169, 25
      %s171 = smul.addr %s170, 4
      %s172 = scalar_lea.vmem %s0, %s171
      %p173 = pneg %p36
      %p174 = pneg %p33
      %p175 = pneg %p57
      %p176 = pneg %p54
      %p177 = pneg %p78
      %p178 = pneg %p75
      %p179 = pneg %p99
      %p180 = pneg %p96
      %p181 = pneg %p125
      %p182 = pneg %p122
      %p183 = scmp.lt.s32.totalorder %s15, 1
      %s184 = scalar_select %p183, %s15, 1
      %s185 = smul.addr %s184, 5
      %s186 = smul.addr %s185, 4
      %s187 = scalar_lea.vmem %s4, %s186
      %p188 = scmp.lt.s32.totalorder %s15, 1
      %s189 = scalar_select %p188, %s15, 1
      %s190 = smul.addr %s189, 25
      %s191 = smul.addr %s190, 4
      %s192 = scalar_lea.vmem %s0, %s191
      %p193 = scmp.lt.s32.totalorder %s15, 1
      %s194 = scalar_select %p193, %s15, 1
      %s195 = smul.addr %s194, 5
      %s196 = smul.addr %s195, 4
      %s197 = scalar_lea.vmem %s4, %s196
      %v199 = vld [vmem:[%s192] sm:$0xf]
      %v200 = vld [vmem:[%s192 + $0x4] sm:$0xf]
      %v201 = vld [vmem:[%s192 + $0x8] sm:$0xf]
      %v202 = vld [vmem:[%s192 + $0xc] sm:$0xf]
      %v203 = vld [vmem:[%s192 + $0x10] sm:$0xf]
      %v204 = vld [vmem:[%s192 + $0x14] sm:$0xf]
      %v205 = vld [vmem:[%s192 + $0x18] sm:$0xf]
      %v206 = vld [vmem:[%s192 + $0x1c] sm:$0xf]
      %v207 = vld [vmem:[%s192 + $0x20] sm:$0xf]
      %v208 = vld [vmem:[%s192 + $0x24] sm:$0xf]
      %v209 = vld [vmem:[%s192 + $0x28] sm:$0xf]
      %v210 = vld [vmem:[%s192 + $0x2c] sm:$0xf]
      %v211 = vld [vmem:[%s192 + $0x30] sm:$0xf]
      %v212 = vld [vmem:[%s192 + $0x34] sm:$0xf]
      %v213 = vld [vmem:[%s192 + $0x38] sm:$0xf]
      %v214 = vld [vmem:[%s192 + $0x3c] sm:$0xf]
      %v215 = vld [vmem:[%s192 + $0x40] sm:$0xf]
      %v216 = vld [vmem:[%s192 + $0x44] sm:$0x3]
      %v217 = vld [vmem:[%s1] sm:$0xf]
      %v218 = vld [vmem:[%s1 + $0x4] sm:$0xf]
      %v219 = vld [vmem:[%s1 + $0x8] sm:$0xf]
      %v220 = vld [vmem:[%s1 + $0xc] sm:$0xf]
      %v221 = vld [vmem:[%s1 + $0x10] sm:$0xf]
      %v222 = vld [vmem:[%s1 + $0x14] sm:$0xf]
      %v223 = vld [vmem:[%s1 + $0x18] sm:$0xf]
      %v224 = vld [vmem:[%s1 + $0x1c] sm:$0xf]
      %v225 = vld [vmem:[%s1 + $0x20] sm:$0xf]
      %v226 = vld [vmem:[%s1 + $0x24] sm:$0xf]
      %v227 = vld [vmem:[%s1 + $0x28] sm:$0xf]
      %v228 = vld [vmem:[%s1 + $0x2c] sm:$0xf]
      %v229 = vld [vmem:[%s1 + $0x30] sm:$0xf]
      %v230 = vld [vmem:[%s1 + $0x34] sm:$0xf]
      %v231 = vld [vmem:[%s1 + $0x38] sm:$0xf]
      %v232 = vld [vmem:[%s1 + $0x3c] sm:$0xf]
      %v233 = vld [vmem:[%s192 + $0x44] sm:$0x7]
      %s234 = scalar_lea.vmem %s1, 64
      %v235 = vld [vmem:[%s234] sm:$0xf]
      %v236 = vld [vmem:[%s234 + $0x4] sm:$0xf]
      %v237 = vld [vmem:[%s234 + $0x8] sm:$0xf]
      %v238 = vld [vmem:[%s234 + $0xc] sm:$0xf]
      %v239 = vld [vmem:[%s234 + $0x10] sm:$0xf]
      %v240 = vld [vmem:[%s234 + $0x14] sm:$0xf]
      %v241 = vld [vmem:[%s234 + $0x18] sm:$0xf]
      %v242 = vld [vmem:[%s234 + $0x1c] sm:$0xf]
      %v243 = vld [vmem:[%s234 + $0x20] sm:$0xf]
      %v244 = vld [vmem:[%s234 + $0x24] sm:$0xf]
      %v245 = vld [vmem:[%s234 + $0x28] sm:$0xf]
      %v246 = vld [vmem:[%s234 + $0x2c] sm:$0xf]
      %v247 = vld [vmem:[%s234 + $0x30] sm:$0xf]
      %v248 = vld [vmem:[%s234 + $0x34] sm:$0xf]
      %v249 = vld [vmem:[%s234 + $0x38] sm:$0xf]
      %v250 = vld [vmem:[%s234 + $0x3c] sm:$0xf]
      %v269 = vunpack.c.l.b16 %v199
      %v270 = vunpack.c.l.b16 %v200
      %v271 = vunpack.c.l.b16 %v201
      %v272 = vunpack.c.l.b16 %v202
      %v273 = vunpack.c.l.b16 %v203
      %v274 = vunpack.c.l.b16 %v204
      %v275 = vunpack.c.l.b16 %v205
      %v276 = vunpack.c.l.b16 %v206
      %v277 = vunpack.c.l.b16 %v207
      %v278 = vunpack.c.l.b16 %v208
      %v279 = vunpack.c.l.b16 %v209
      %v280 = vunpack.c.l.b16 %v210
      %v281 = vunpack.c.l.b16 %v211
      %v282 = vunpack.c.l.b16 %v212
      %v283 = vunpack.c.l.b16 %v213
      %v284 = vunpack.c.l.b16 %v214
      %v285 = vunpack.c.l.b16 %v215
      %v286 = vunpack.c.l.b16 %v233
      %v287 = vpack.c.b16 %v270, %v269
      %v288 = vpack.c.b16 %v272, %v271
      %v289 = vpack.c.b16 %v274, %v273
      %v290 = vpack.c.b16 %v276, %v275
      %v291 = vpack.c.b16 %v278, %v277
      %v292 = vpack.c.b16 %v280, %v279
      %v293 = vpack.c.b16 %v282, %v281
      %v294 = vpack.c.b16 %v284, %v283
      %v295 = vpack.c.b16 %v286, %v285
      %vm296 = vsmask.f32 7424
      %v298 = vshrl.u32 %v287, 16
      %v300 = vshll.u32 %v287, 16
      %v302 = vrot.slane %v300, 1
      %v303 = vor.u32 %v298, %v302
      %v305 = vshll.u32 %v288, 16
      %v307 = vrot.slane %v305, 1
      %v308 = vsel %vm296, %v303, %v307
      %v309 = vshrl.u32 %v288, 16
      %v311 = vor.u32 %v309, %v307
      %v313 = vshll.u32 %v289, 16
      %v315 = vrot.slane %v313, 1
      %v316 = vsel %vm296, %v311, %v315
      %v317 = vshrl.u32 %v289, 16
      %v319 = vor.u32 %v317, %v315
      %v321 = vshll.u32 %v290, 16
      %v323 = vrot.slane %v321, 1
      %v324 = vsel %vm296, %v319, %v323
      %v325 = vshrl.u32 %v290, 16
      %v327 = vor.u32 %v325, %v323
      %v329 = vshll.u32 %v291, 16
      %v331 = vrot.slane %v329, 1
      %v332 = vsel %vm296, %v327, %v331
      %v333 = vshrl.u32 %v291, 16
      %v335 = vor.u32 %v333, %v331
      %v337 = vshll.u32 %v292, 16
      %v339 = vrot.slane %v337, 1
      %v340 = vsel %vm296, %v335, %v339
      %v341 = vshrl.u32 %v292, 16
      %v343 = vor.u32 %v341, %v339
      %v345 = vshll.u32 %v293, 16
      %v347 = vrot.slane %v345, 1
      %v348 = vsel %vm296, %v343, %v347
      %v349 = vshrl.u32 %v293, 16
      %v351 = vor.u32 %v349, %v347
      %v353 = vshll.u32 %v294, 16
      %v355 = vrot.slane %v353, 1
      %v356 = vsel %vm296, %v351, %v355
      %v357 = vshrl.u32 %v294, 16
      %v359 = vor.u32 %v357, %v355
      %v361 = vshll.u32 %v295, 16
      %v363 = vrot.slane %v361, 1
      %v364 = vsel %vm296, %v359, %v363
      %v365 = vshrl.u32 %v295, 16
      %v367 = vor.u32 %v365, %v363
      %v393 = vunpack.c.l.b16 %v235
      %v394 = vunpack.c.l.b16 %v236
      %v395 = vunpack.c.l.b16 %v237
      %v396 = vunpack.c.l.b16 %v238
      %v397 = vunpack.c.l.b16 %v239
      %v398 = vunpack.c.l.b16 %v240
      %v399 = vunpack.c.l.b16 %v241
      %v400 = vunpack.c.l.b16 %v242
      %v401 = vunpack.c.l.b16 %v243
      %v402 = vunpack.c.l.b16 %v244
      %v403 = vunpack.c.l.b16 %v245
      %v404 = vunpack.c.l.b16 %v246
      %v405 = vunpack.c.l.b16 %v247
      %v406 = vunpack.c.l.b16 %v248
      %v407 = vunpack.c.l.b16 %v249
      %v408 = vunpack.c.l.b16 %v250
      %v409 = vpack.c.b16 %v394, %v393
      %v410 = vpack.c.b16 %v396, %v395
      %v411 = vpack.c.b16 %v398, %v397
      %v412 = vpack.c.b16 %v400, %v399
      %v413 = vpack.c.b16 %v402, %v401
      %v414 = vpack.c.b16 %v404, %v403
      %v415 = vpack.c.b16 %v406, %v405
      %v416 = vpack.c.b16 %v408, %v407
      %425 = vmatprep.subr.bf16.mxu0 0
      %426 = vmatpush1.bf16.msra.mxu0 %v409
      %427 = vmatprep.subr.bf16.mxu0 0
      %428 = vmatpush1.bf16.msra.mxu0 %v410
      %429 = vmatprep.subr.bf16.mxu0 0
      %430 = vmatpush1.bf16.msra.mxu0 %v411
      %431 = vmatprep.subr.bf16.mxu0 0
      %432 = vmatpush1.bf16.msra.mxu0 %v412
      %433 = vmatprep.subr.bf16.mxu0 0
      %434 = vmatpush1.bf16.msra.mxu0 %v413
      %435 = vmatprep.subr.bf16.mxu0 0
      %436 = vmatpush1.bf16.msra.mxu0 %v414
      %437 = vmatprep.subr.bf16.mxu0 0
      %438 = vmatpush1.bf16.msra.mxu0 %v415
      %439 = vmatprep.subr.bf16.mxu0 0
      %440 = vmatpush1.bf16.msra.mxu0 %v416
      %441 = vmatprep.subr.bf16.mxu0 0
      %442 = vmatpush1.bf16.msra.mxu0 0
      %443 = vmatprep.subr.bf16.mxu0 0
      %444 = vmatpush1.bf16.msra.mxu0 0
      %445 = vmatprep.subr.bf16.mxu0 0
      %446 = vmatpush1.bf16.msra.mxu0 0
      %447 = vmatprep.subr.bf16.mxu0 0
      %448 = vmatpush1.bf16.msra.mxu0 0
      %449 = vmatprep.subr.bf16.mxu0 0
      %450 = vmatpush1.bf16.msra.mxu0 0
      %451 = vmatprep.subr.bf16.mxu0 0
      %452 = vmatpush1.bf16.msra.mxu0 0
      %453 = vmatprep.subr.bf16.mxu0 0
      %454 = vmatpush1.bf16.msra.mxu0 0
      %455 = vmatprep.subr.bf16.mxu0 0
      %456 = vmatpush1.bf16.msra.mxu0 0
      %457 = vmatprep.mubr.bf16.mxu0 0
      %458 = vmatmul.mubr.bf16.gmra.mrb[0].mxu0 %v308
      %v459 = vpop.f32.mrb[0].mxu0
      %v460 = vadd.f32 0.0, %v459
      %v461 = vpop.f32.mrb[0].mxu0
      %v462 = vpop.f32.mrb[0].mxu0
      %v463 = vadd.f32 0.0, %v462
      %v464 = vpop.f32.mrb[0].mxu0
      %465 = vmatprep.mubr.bf16.mxu0 0
      %466 = vmatmul.mubr.bf16.gmra.mrb[0].mxu0 %v316
      %v467 = vpop.f32.mrb[0].mxu0
      %v468 = vadd.f32 0.0, %v467
      %v469 = vpop.f32.mrb[0].mxu0
      %v470 = vpop.f32.mrb[0].mxu0
      %v471 = vadd.f32 0.0, %v470
      %v472 = vpop.f32.mrb[0].mxu0
      %473 = vmatprep.mubr.bf16.mxu0 0
      %474 = vmatmul.mubr.bf16.gmra.mrb[0].mxu0 %v324
      %v475 = vpop.f32.mrb[0].mxu0
      %v476 = vadd.f32 0.0, %v475
      %v477 = vpop.f32.mrb[0].mxu0
      %v478 = vpop.f32.mrb[0].mxu0
      %v479 = vadd.f32 0.0, %v478
      %v480 = vpop.f32.mrb[0].mxu0
      %481 = vmatprep.mubr.bf16.mxu0 0
      %482 = vmatmul.mubr.bf16.gmra.mrb[0].mxu0 %v332
      %v483 = vpop.f32.mrb[0].mxu0
      %v484 = vadd.f32 0.0, %v483
      %v485 = vpop.f32.mrb[0].mxu0
      %v486 = vpop.f32.mrb[0].mxu0
      %v487 = vadd.f32 0.0, %v486
      %v488 = vpop.f32.mrb[0].mxu0
      %489 = vmatprep.mubr.bf16.mxu0 0
      %490 = vmatmul.mubr.bf16.gmra.mrb[0].mxu0 %v340
      %v491 = vpop.f32.mrb[0].mxu0
      %v492 = vadd.f32 0.0, %v491
      %v493 = vpop.f32.mrb[0].mxu0
      %v494 = vpop.f32.mrb[0].mxu0
      %v495 = vadd.f32 0.0, %v494
      %v496 = vpop.f32.mrb[0].mxu0
      %497 = vmatprep.mubr.bf16.mxu0 0
      %498 = vmatmul.mubr.bf16.gmra.mrb[0].mxu0 %v348
      %v499 = vpop.f32.mrb[0].mxu0
      %v500 = vadd.f32 0.0, %v499
      %v501 = vpop.f32.mrb[0].mxu0
      %v502 = vpop.f32.mrb[0].mxu0
      %v503 = vadd.f32 0.0, %v502
      %v504 = vpop.f32.mrb[0].mxu0
      %505 = vmatprep.mubr.bf16.mxu0 0
      %506 = vmatmul.mubr.bf16.gmra.mrb[0].mxu0 %v356
      %v507 = vpop.f32.mrb[0].mxu0
      %v508 = vadd.f32 0.0, %v507
      %v509 = vpop.f32.mrb[0].mxu0
      %v510 = vpop.f32.mrb[0].mxu0
      %v511 = vadd.f32 0.0, %v510
      %v512 = vpop.f32.mrb[0].mxu0
      %513 = vmatprep.mubr.bf16.mxu0 0
      %514 = vmatmul.mubr.bf16.gmra.mrb[0].mxu0 %v364
      %v515 = vpop.f32.mrb[0].mxu0
      %v516 = vadd.f32 0.0, %v515
      %v517 = vpop.f32.mrb[0].mxu0
      %v518 = vpop.f32.mrb[0].mxu0
      %v519 = vadd.f32 0.0, %v518
      %v520 = vpop.f32.mrb[0].mxu0
      %521 = vmatprep.mubr.bf16.mxu0 0
      %522 = vmatmul.mubr.bf16.gmra.mrb[0].mxu0 %v367
      %v523 = vpop.f32.mrb[0].mxu0
      %v524 = vadd.f32 0.0, %v523
      %v525 = vpop.f32.mrb[0].mxu0
      %v526 = vpop.f32.mrb[0].mxu0
      %v527 = vadd.f32 0.0, %v526
      %v528 = vpop.f32.mrb[0].mxu0
      %529 = vdwg.mxu0
      %v531 = vunpack.c.l.b16 %v216
      %v532 = vpack.c.b16 %v531, %v285
      %v558 = vunpack.c.l.b16 %v217
      %v559 = vunpack.c.l.b16 %v218
      %v560 = vunpack.c.l.b16 %v219
      %v561 = vunpack.c.l.b16 %v220
      %v562 = vunpack.c.l.b16 %v221
      %v563 = vunpack.c.l.b16 %v222
      %v564 = vunpack.c.l.b16 %v223
      %v565 = vunpack.c.l.b16 %v224
      %v566 = vunpack.c.l.b16 %v225
      %v567 = vunpack.c.l.b16 %v226
      %v568 = vunpack.c.l.b16 %v227
      %v569 = vunpack.c.l.b16 %v228
      %v570 = vunpack.c.l.b16 %v229
      %v571 = vunpack.c.l.b16 %v230
      %v572 = vunpack.c.l.b16 %v231
      %v573 = vunpack.c.l.b16 %v232
      %v574 = vpack.c.b16 %v559, %v558
      %v575 = vpack.c.b16 %v561, %v560
      %v576 = vpack.c.b16 %v563, %v562
      %v577 = vpack.c.b16 %v565, %v564
      %v578 = vpack.c.b16 %v567, %v566
      %v579 = vpack.c.b16 %v569, %v568
      %v580 = vpack.c.b16 %v571, %v570
      %v581 = vpack.c.b16 %v573, %v572
      %590 = vmatprep.subr.bf16.mxu0 0
      %591 = vmatpush1.bf16.msra.mxu0 %v574
      %592 = vmatprep.subr.bf16.mxu0 0
      %593 = vmatpush1.bf16.msra.mxu0 %v575
      %594 = vmatprep.subr.bf16.mxu0 0
      %595 = vmatpush1.bf16.msra.mxu0 %v576
      %596 = vmatprep.subr.bf16.mxu0 0
      %597 = vmatpush1.bf16.msra.mxu0 %v577
      %598 = vmatprep.subr.bf16.mxu0 0
      %599 = vmatpush1.bf16.msra.mxu0 %v578
      %600 = vmatprep.subr.bf16.mxu0 0
      %601 = vmatpush1.bf16.msra.mxu0 %v579
      %602 = vmatprep.subr.bf16.mxu0 0
      %603 = vmatpush1.bf16.msra.mxu0 %v580
      %604 = vmatprep.subr.bf16.mxu0 0
      %605 = vmatpush1.bf16.msra.mxu0 %v581
      %606 = vmatprep.subr.bf16.mxu0 0
      %607 = vmatpush1.bf16.msra.mxu0 0
      %608 = vmatprep.subr.bf16.mxu0 0
      %609 = vmatpush1.bf16.msra.mxu0 0
      %610 = vmatprep.subr.bf16.mxu0 0
      %611 = vmatpush1.bf16.msra.mxu0 0
      %612 = vmatprep.subr.bf16.mxu0 0
      %613 = vmatpush1.bf16.msra.mxu0 0
      %614 = vmatprep.subr.bf16.mxu0 0
      %615 = vmatpush1.bf16.msra.mxu0 0
      %616 = vmatprep.subr.bf16.mxu0 0
      %617 = vmatpush1.bf16.msra.mxu0 0
      %618 = vmatprep.subr.bf16.mxu0 0
      %619 = vmatpush1.bf16.msra.mxu0 0
      %620 = vmatprep.subr.bf16.mxu0 0
      %621 = vmatpush1.bf16.msra.mxu0 0
      %622 = vmatprep.mubr.bf16.mxu0 0
      %623 = vmatmul.mubr.bf16.gmra.mrb[0].mxu0 %v287
      %v624 = vpop.f32.mrb[0].mxu0
      %v625 = vadd.f32 %v460, %v624
      %v626 = vpop.f32.mrb[0].mxu0
      %v627 = vpop.f32.mrb[0].mxu0
      %v628 = vadd.f32 %v463, %v627
      %v629 = vpop.f32.mrb[0].mxu0
      %630 = vmatprep.mubr.bf16.mxu0 0
      %631 = vmatmul.mubr.bf16.gmra.mrb[0].mxu0 %v288
      %v632 = vpop.f32.mrb[0].mxu0
      %v633 = vadd.f32 %v468, %v632
      %v634 = vpop.f32.mrb[0].mxu0
      %v635 = vpop.f32.mrb[0].mxu0
      %v636 = vadd.f32 %v471, %v635
      %v637 = vpop.f32.mrb[0].mxu0
      %638 = vmatprep.mubr.bf16.mxu0 0
      %639 = vmatmul.mubr.bf16.gmra.mrb[0].mxu0 %v289
      %v640 = vpop.f32.mrb[0].mxu0
      %v641 = vadd.f32 %v476, %v640
      %v642 = vpop.f32.mrb[0].mxu0
      %v643 = vpop.f32.mrb[0].mxu0
      %v644 = vadd.f32 %v479, %v643
      %v645 = vpop.f32.mrb[0].mxu0
      %646 = vmatprep.mubr.bf16.mxu0 0
      %647 = vmatmul.mubr.bf16.gmra.mrb[0].mxu0 %v290
      %v648 = vpop.f32.mrb[0].mxu0
      %v649 = vadd.f32 %v484, %v648
      %v650 = vpop.f32.mrb[0].mxu0
      %v651 = vpop.f32.mrb[0].mxu0
      %v652 = vadd.f32 %v487, %v651
      %v653 = vpop.f32.mrb[0].mxu0
      %654 = vmatprep.mubr.bf16.mxu0 0
      %655 = vmatmul.mubr.bf16.gmra.mrb[0].mxu0 %v291
      %v656 = vpop.f32.mrb[0].mxu0
      %v657 = vadd.f32 %v492, %v656
      %v658 = vpop.f32.mrb[0].mxu0
      %v659 = vpop.f32.mrb[0].mxu0
      %v660 = vadd.f32 %v495, %v659
      %v661 = vpop.f32.mrb[0].mxu0
      %662 = vmatprep.mubr.bf16.mxu0 0
      %663 = vmatmul.mubr.bf16.gmra.mrb[0].mxu0 %v292
      %v664 = vpop.f32.mrb[0].mxu0
      %v665 = vadd.f32 %v500, %v664
      %v666 = vpop.f32.mrb[0].mxu0
      %v667 = vpop.f32.mrb[0].mxu0
      %v668 = vadd.f32 %v503, %v667
      %v669 = vpop.f32.mrb[0].mxu0
      %670 = vmatprep.mubr.bf16.mxu0 0
      %671 = vmatmul.mubr.bf16.gmra.mrb[0].mxu0 %v293
      %v672 = vpop.f32.mrb[0].mxu0
      %v673 = vadd.f32 %v508, %v672
      %v674 = vpop.f32.mrb[0].mxu0
      %v675 = vpop.f32.mrb[0].mxu0
      %v676 = vadd.f32 %v511, %v675
      %v677 = vpop.f32.mrb[0].mxu0
      %678 = vmatprep.mubr.bf16.mxu0 0
      %679 = vmatmul.mubr.bf16.gmra.mrb[0].mxu0 %v294
      %v680 = vpop.f32.mrb[0].mxu0
      %v681 = vadd.f32 %v516, %v680
      %v682 = vpop.f32.mrb[0].mxu0
      %v683 = vpop.f32.mrb[0].mxu0
      %v684 = vadd.f32 %v519, %v683
      %v685 = vpop.f32.mrb[0].mxu0
      %686 = vmatprep.mubr.bf16.mxu0 0
      %687 = vmatmul.mubr.bf16.gmra.mrb[0].mxu0 %v532
      %v688 = vpop.f32.mrb[0].mxu0
      %v689 = vadd.f32 %v524, %v688
      %v690 = vpop.f32.mrb[0].mxu0
      %v691 = vpop.f32.mrb[0].mxu0
      %v692 = vadd.f32 %v527, %v691
      %v693 = vpop.f32.mrb[0].mxu0
      %694 = vdwg.mxu0
      %v695 = vld [vmem:[%s192] sm:$0xe]
      %s696 = scalar_lea.vmem %s1, 128
      %v697 = vld [vmem:[%s696] sm:$0xf]
      %v698 = vld [vmem:[%s696 + $0x4] sm:$0xf]
      %v699 = vld [vmem:[%s696 + $0x8] sm:$0xf]
      %v700 = vld [vmem:[%s696 + $0xc] sm:$0xf]
      %v701 = vld [vmem:[%s696 + $0x10] sm:$0xf]
      %v702 = vld [vmem:[%s696 + $0x14] sm:$0xf]
      %v703 = vld [vmem:[%s696 + $0x18] sm:$0xf]
      %v704 = vld [vmem:[%s696 + $0x1c] sm:$0xf]
      %v705 = vld [vmem:[%s696 + $0x20] sm:$0xf]
      %v706 = vld [vmem:[%s696 + $0x24] sm:$0xf]
      %v707 = vld [vmem:[%s696 + $0x28] sm:$0xf]
      %v708 = vld [vmem:[%s696 + $0x2c] sm:$0xf]
      %v709 = vld [vmem:[%s696 + $0x30] sm:$0xf]
      %v710 = vld [vmem:[%s696 + $0x34] sm:$0xf]
      %v711 = vld [vmem:[%s696 + $0x38] sm:$0xf]
      %v712 = vld [vmem:[%s696 + $0x3c] sm:$0xf]
      %v714 = vunpack.c.l.b16 %v695
      %v715 = vpack.c.b16 %v270, %v714
      %vm716 = vcmask 1046528
      %v717 = vrot.slane %v715, 1
      %v718 = vrot.slane %v288, 1
      %v719 = vsel %vm716, %v717, %v718
      %v720 = vrot.slane %v289, 1
      %v721 = vsel %vm716, %v718, %v720
      %v722 = vrot.slane %v290, 1
      %v723 = vsel %vm716, %v720, %v722
      %v724 = vrot.slane %v291, 1
      %v725 = vsel %vm716, %v722, %v724
      %v726 = vrot.slane %v292, 1
      %v727 = vsel %vm716, %v724, %v726
      %v728 = vrot.slane %v293, 1
      %v729 = vsel %vm716, %v726, %v728
      %v730 = vrot.slane %v294, 1
      %v731 = vsel %vm716, %v728, %v730
      %v732 = vrot.slane %v295, 1
      %v733 = vsel %vm716, %v730, %v732
      %v759 = vunpack.c.l.b16 %v697
      %v760 = vunpack.c.l.b16 %v698
      %v761 = vunpack.c.l.b16 %v699
      %v762 = vunpack.c.l.b16 %v700
      %v763 = vunpack.c.l.b16 %v701
      %v764 = vunpack.c.l.b16 %v702
      %v765 = vunpack.c.l.b16 %v703
      %v766 = vunpack.c.l.b16 %v704
      %v767 = vunpack.c.l.b16 %v705
      %v768 = vunpack.c.l.b16 %v706
      %v769 = vunpack.c.l.b16 %v707
      %v770 = vunpack.c.l.b16 %v708
      %v771 = vunpack.c.l.b16 %v709
      %v772 = vunpack.c.l.b16 %v710
      %v773 = vunpack.c.l.b16 %v711
      %v774 = vunpack.c.l.b16 %v712
      %v775 = vpack.c.b16 %v760, %v759
      %v776 = vpack.c.b16 %v762, %v761
      %v777 = vpack.c.b16 %v764, %v763
      %v778 = vpack.c.b16 %v766, %v765
      %v779 = vpack.c.b16 %v768, %v767
      %v780 = vpack.c.b16 %v770, %v769
      %v781 = vpack.c.b16 %v772, %v771
      %v782 = vpack.c.b16 %v774, %v773
      %791 = vmatprep.subr.bf16.mxu0 0
      %792 = vmatpush1.bf16.msra.mxu0 %v775
      %793 = vmatprep.subr.bf16.mxu0 0
      %794 = vmatpush1.bf16.msra.mxu0 %v776
      %795 = vmatprep.subr.bf16.mxu0 0
      %796 = vmatpush1.bf16.msra.mxu0 %v777
      %797 = vmatprep.subr.bf16.mxu0 0
      %798 = vmatpush1.bf16.msra.mxu0 %v778
      %799 = vmatprep.subr.bf16.mxu0 0
      %800 = vmatpush1.bf16.msra.mxu0 %v779
      %801 = vmatprep.subr.bf16.mxu0 0
      %802 = vmatpush1.bf16.msra.mxu0 %v780
      %803 = vmatprep.subr.bf16.mxu0 0
      %804 = vmatpush1.bf16.msra.mxu0 %v781
      %805 = vmatprep.subr.bf16.mxu0 0
      %806 = vmatpush1.bf16.msra.mxu0 %v782
      %807 = vmatprep.subr.bf16.mxu0 0
      %808 = vmatpush1.bf16.msra.mxu0 0
      %809 = vmatprep.subr.bf16.mxu0 0
      %810 = vmatpush1.bf16.msra.mxu0 0
      %811 = vmatprep.subr.bf16.mxu0 0
      %812 = vmatpush1.bf16.msra.mxu0 0
      %813 = vmatprep.subr.bf16.mxu0 0
      %814 = vmatpush1.bf16.msra.mxu0 0
      %815 = vmatprep.subr.bf16.mxu0 0
      %816 = vmatpush1.bf16.msra.mxu0 0
      %817 = vmatprep.subr.bf16.mxu0 0
      %818 = vmatpush1.bf16.msra.mxu0 0
      %819 = vmatprep.subr.bf16.mxu0 0
      %820 = vmatpush1.bf16.msra.mxu0 0
      %821 = vmatprep.subr.bf16.mxu0 0
      %822 = vmatpush1.bf16.msra.mxu0 0
      %823 = vmatprep.mubr.bf16.mxu0 0
      %824 = vmatmul.mubr.bf16.gmra.mrb[0].mxu0 %v719
      %v825 = vpop.f32.mrb[0].mxu0
      %v826 = vadd.f32 0.0, %v825
      %v827 = vpop.f32.mrb[0].mxu0
      %v828 = vpop.f32.mrb[0].mxu0
      %v829 = vadd.f32 0.0, %v828
      %v830 = vpop.f32.mrb[0].mxu0
      %831 = vmatprep.mubr.bf16.mxu0 0
      %832 = vmatmul.mubr.bf16.gmra.mrb[0].mxu0 %v721
      %v833 = vpop.f32.mrb[0].mxu0
      %v834 = vadd.f32 0.0, %v833
      %v835 = vpop.f32.mrb[0].mxu0
      %v836 = vpop.f32.mrb[0].mxu0
      %v837 = vadd.f32 0.0, %v836
      %v838 = vpop.f32.mrb[0].mxu0
      %839 = vmatprep.mubr.bf16.mxu0 0
      %840 = vmatmul.mubr.bf16.gmra.mrb[0].mxu0 %v723
      %v841 = vpop.f32.mrb[0].mxu0
      %v842 = vadd.f32 0.0, %v841
      %v843 = vpop.f32.mrb[0].mxu0
      %v844 = vpop.f32.mrb[0].mxu0
      %v845 = vadd.f32 0.0, %v844
      %v846 = vpop.f32.mrb[0].mxu0
      %847 = vmatprep.mubr.bf16.mxu0 0
      %848 = vmatmul.mubr.bf16.gmra.mrb[0].mxu0 %v725
      %v849 = vpop.f32.mrb[0].mxu0
      %v850 = vadd.f32 0.0, %v849
      %v851 = vpop.f32.mrb[0].mxu0
      %v852 = vpop.f32.mrb[0].mxu0
      %v853 = vadd.f32 0.0, %v852
      %v854 = vpop.f32.mrb[0].mxu0
      %855 = vmatprep.mubr.bf16.mxu0 0
      %856 = vmatmul.mubr.bf16.gmra.mrb[0].mxu0 %v727
      %v857 = vpop.f32.mrb[0].mxu0
      %v858 = vadd.f32 0.0, %v857
      %v859 = vpop.f32.mrb[0].mxu0
      %v860 = vpop.f32.mrb[0].mxu0
      %v861 = vadd.f32 0.0, %v860
      %v862 = vpop.f32.mrb[0].mxu0
      %863 = vmatprep.mubr.bf16.mxu0 0
      %864 = vmatmul.mubr.bf16.gmra.mrb[0].mxu0 %v729
      %v865 = vpop.f32.mrb[0].mxu0
      %v866 = vadd.f32 0.0, %v865
      %v867 = vpop.f32.mrb[0].mxu0
      %v868 = vpop.f32.mrb[0].mxu0
      %v869 = vadd.f32 0.0, %v868
      %v870 = vpop.f32.mrb[0].mxu0
      %871 = vmatprep.mubr.bf16.mxu0 0
      %872 = vmatmul.mubr.bf16.gmra.mrb[0].mxu0 %v731
      %v873 = vpop.f32.mrb[0].mxu0
      %v874 = vadd.f32 0.0, %v873
      %v875 = vpop.f32.mrb[0].mxu0
      %v876 = vpop.f32.mrb[0].mxu0
      %v877 = vadd.f32 0.0, %v876
      %v878 = vpop.f32.mrb[0].mxu0
      %879 = vmatprep.mubr.bf16.mxu0 0
      %880 = vmatmul.mubr.bf16.gmra.mrb[0].mxu0 %v733
      %v881 = vpop.f32.mrb[0].mxu0
      %v882 = vadd.f32 0.0, %v881
      %v883 = vpop.f32.mrb[0].mxu0
      %v884 = vpop.f32.mrb[0].mxu0
      %v885 = vadd.f32 0.0, %v884
      %v886 = vpop.f32.mrb[0].mxu0
      %887 = vmatprep.mubr.bf16.mxu0 0
      %888 = vmatmul.mubr.bf16.gmra.mrb[0].mxu0 %v732
      %v889 = vpop.f32.mrb[0].mxu0
      %v890 = vadd.f32 0.0, %v889
      %v891 = vpop.f32.mrb[0].mxu0
      %v892 = vpop.f32.mrb[0].mxu0
      %v893 = vadd.f32 0.0, %v892
      %v894 = vpop.f32.mrb[0].mxu0
      %895 = vdwg.mxu0
      %v896 = vadd.f32 %v625, %v826
      %v897 = vadd.f32 %v628, %v829
      %v898 = vadd.f32 %v633, %v834
      %v899 = vadd.f32 %v636, %v837
      %v900 = vadd.f32 %v641, %v842
      %v901 = vadd.f32 %v644, %v845
      %v902 = vadd.f32 %v649, %v850
      %v903 = vadd.f32 %v652, %v853
      %v904 = vadd.f32 %v657, %v858
      %v905 = vadd.f32 %v660, %v861
      %v906 = vadd.f32 %v665, %v866
      %v907 = vadd.f32 %v668, %v869
      %v908 = vadd.f32 %v673, %v874
      %v909 = vadd.f32 %v676, %v877
      %v910 = vadd.f32 %v681, %v882
      %v911 = vadd.f32 %v684, %v885
      %v912 = vadd.f32 %v689, %v890
      %v913 = vadd.f32 %v692, %v893
      %v914 = vld [vmem:[%s192 + $0x44] sm:$0xf]
      %s915 = scalar_lea.vmem %s1, 192
      %v916 = vld [vmem:[%s915] sm:$0xf]
      %v917 = vld [vmem:[%s915 + $0x4] sm:$0xf]
      %v918 = vld [vmem:[%s915 + $0x8] sm:$0xf]
      %v919 = vld [vmem:[%s915 + $0xc] sm:$0xf]
      %v920 = vld [vmem:[%s915 + $0x10] sm:$0xf]
      %v921 = vld [vmem:[%s915 + $0x14] sm:$0xf]
      %v922 = vld [vmem:[%s915 + $0x18] sm:$0xf]
      %v923 = vld [vmem:[%s915 + $0x1c] sm:$0xf]
      %v924 = vld [vmem:[%s915 + $0x20] sm:$0xf]
      %v925 = vld [vmem:[%s915 + $0x24] sm:$0xf]
      %v926 = vld [vmem:[%s915 + $0x28] sm:$0xf]
      %v927 = vld [vmem:[%s915 + $0x2c] sm:$0xf]
      %v928 = vld [vmem:[%s915 + $0x30] sm:$0xf]
      %v929 = vld [vmem:[%s915 + $0x34] sm:$0xf]
      %v930 = vld [vmem:[%s915 + $0x38] sm:$0xf]
      %v931 = vld [vmem:[%s915 + $0x3c] sm:$0xf]
      %v933 = vunpack.c.l.b16 %v914
      %v934 = vpack.c.b16 %v933, %v285
      %vm935 = vsmask.f32 6400
      %v937 = vshrl.u32 %v715, 16
      %v939 = vrot.slane %v937, 1
      %v940 = vshll.u32 %v715, 16
      %v942 = vrot.slane %v940, 2
      %v943 = vor.u32 %v939, %v942
      %v944 = vrot.slane %v309, 1
      %v945 = vrot.slane %v305, 2
      %v946 = vor.u32 %v944, %v945
      %v947 = vsel %vm935, %v943, %v946
      %v948 = vrot.slane %v317, 1
      %v949 = vrot.slane %v313, 2
      %v950 = vor.u32 %v948, %v949
      %v951 = vsel %vm935, %v946, %v950
      %v952 = vrot.slane %v325, 1
      %v953 = vrot.slane %v321, 2
      %v954 = vor.u32 %v952, %v953
      %v955 = vsel %vm935, %v950, %v954
      %v956 = vrot.slane %v333, 1
      %v957 = vrot.slane %v329, 2
      %v958 = vor.u32 %v956, %v957
      %v959 = vsel %vm935, %v954, %v958
      %v960 = vrot.slane %v341, 1
      %v961 = vrot.slane %v337, 2
      %v962 = vor.u32 %v960, %v961
      %v963 = vsel %vm935, %v958, %v962
      %v964 = vrot.slane %v349, 1
      %v965 = vrot.slane %v345, 2
      %v966 = vor.u32 %v964, %v965
      %v967 = vsel %vm935, %v962, %v966
      %v968 = vrot.slane %v357, 1
      %v969 = vrot.slane %v353, 2
      %v970 = vor.u32 %v968, %v969
      %v971 = vsel %vm935, %v966, %v970
      %v973 = vshrl.u32 %v934, 16
      %v975 = vrot.slane %v973, 1
      %v976 = vshll.u32 %v934, 16
      %v978 = vrot.slane %v976, 2
      %v979 = vor.u32 %v975, %v978
      %v980 = vsel %vm935, %v970, %v979
      %v1006 = vunpack.c.l.b16 %v916
      %v1007 = vunpack.c.l.b16 %v917
      %v1008 = vunpack.c.l.b16 %v918
      %v1009 = vunpack.c.l.b16 %v919
      %v1010 = vunpack.c.l.b16 %v920
      %v1011 = vunpack.c.l.b16 %v921
      %v1012 = vunpack.c.l.b16 %v922
      %v1013 = vunpack.c.l.b16 %v923
      %v1014 = vunpack.c.l.b16 %v924
      %v1015 = vunpack.c.l.b16 %v925
      %v1016 = vunpack.c.l.b16 %v926
      %v1017 = vunpack.c.l.b16 %v927
      %v1018 = vunpack.c.l.b16 %v928
      %v1019 = vunpack.c.l.b16 %v929
      %v1020 = vunpack.c.l.b16 %v930
      %v1021 = vunpack.c.l.b16 %v931
      %v1022 = vpack.c.b16 %v1007, %v1006
      %v1023 = vpack.c.b16 %v1009, %v1008
      %v1024 = vpack.c.b16 %v1011, %v1010
      %v1025 = vpack.c.b16 %v1013, %v1012
      %v1026 = vpack.c.b16 %v1015, %v1014
      %v1027 = vpack.c.b16 %v1017, %v1016
      %v1028 = vpack.c.b16 %v1019, %v1018
      %v1029 = vpack.c.b16 %v1021, %v1020
      %1038 = vmatprep.subr.bf16.mxu0 0
      %1039 = vmatpush1.bf16.msra.mxu0 %v1022
      %1040 = vmatprep.subr.bf16.mxu0 0
      %1041 = vmatpush1.bf16.msra.mxu0 %v1023
      %1042 = vmatprep.subr.bf16.mxu0 0
      %1043 = vmatpush1.bf16.msra.mxu0 %v1024
      %1044 = vmatprep.subr.bf16.mxu0 0
      %1045 = vmatpush1.bf16.msra.mxu0 %v1025
      %1046 = vmatprep.subr.bf16.mxu0 0
      %1047 = vmatpush1.bf16.msra.mxu0 %v1026
      %1048 = vmatprep.subr.bf16.mxu0 0
      %1049 = vmatpush1.bf16.msra.mxu0 %v1027
      %1050 = vmatprep.subr.bf16.mxu0 0
      %1051 = vmatpush1.bf16.msra.mxu0 %v1028
      %1052 = vmatprep.subr.bf16.mxu0 0
      %1053 = vmatpush1.bf16.msra.mxu0 %v1029
      %1054 = vmatprep.subr.bf16.mxu0 0
      %1055 = vmatpush1.bf16.msra.mxu0 0
      %1056 = vmatprep.subr.bf16.mxu0 0
      %1057 = vmatpush1.bf16.msra.mxu0 0
      %1058 = vmatprep.subr.bf16.mxu0 0
      %1059 = vmatpush1.bf16.msra.mxu0 0
      %1060 = vmatprep.subr.bf16.mxu0 0
      %1061 = vmatpush1.bf16.msra.mxu0 0
      %1062 = vmatprep.subr.bf16.mxu0 0
      %1063 = vmatpush1.bf16.msra.mxu0 0
      %1064 = vmatprep.subr.bf16.mxu0 0
      %1065 = vmatpush1.bf16.msra.mxu0 0
      %1066 = vmatprep.subr.bf16.mxu0 0
      %1067 = vmatpush1.bf16.msra.mxu0 0
      %1068 = vmatprep.subr.bf16.mxu0 0
      %1069 = vmatpush1.bf16.msra.mxu0 0
      %1070 = vmatprep.mubr.bf16.mxu0 0
      %1071 = vmatmul.mubr.bf16.gmra.mrb[0].mxu0 %v947
      %v1072 = vpop.f32.mrb[0].mxu0
      %v1073 = vadd.f32 0.0, %v1072
      %v1074 = vpop.f32.mrb[0].mxu0
      %v1075 = vpop.f32.mrb[0].mxu0
      %v1076 = vadd.f32 0.0, %v1075
      %v1077 = vpop.f32.mrb[0].mxu0
      %1078 = vmatprep.mubr.bf16.mxu0 0
      %1079 = vmatmul.mubr.bf16.gmra.mrb[0].mxu0 %v951
      %v1080 = vpop.f32.mrb[0].mxu0
      %v1081 = vadd.f32 0.0, %v1080
      %v1082 = vpop.f32.mrb[0].mxu0
      %v1083 = vpop.f32.mrb[0].mxu0
      %v1084 = vadd.f32 0.0, %v1083
      %v1085 = vpop.f32.mrb[0].mxu0
      %1086 = vmatprep.mubr.bf16.mxu0 0
      %1087 = vmatmul.mubr.bf16.gmra.mrb[0].mxu0 %v955
      %v1088 = vpop.f32.mrb[0].mxu0
      %v1089 = vadd.f32 0.0, %v1088
      %v1090 = vpop.f32.mrb[0].mxu0
      %v1091 = vpop.f32.mrb[0].mxu0
      %v1092 = vadd.f32 0.0, %v1091
      %v1093 = vpop.f32.mrb[0].mxu0
      %1094 = vmatprep.mubr.bf16.mxu0 0
      %1095 = vmatmul.mubr.bf16.gmra.mrb[0].mxu0 %v959
      %v1096 = vpop.f32.mrb[0].mxu0
      %v1097 = vadd.f32 0.0, %v1096
      %v1098 = vpop.f32.mrb[0].mxu0
      %v1099 = vpop.f32.mrb[0].mxu0
      %v1100 = vadd.f32 0.0, %v1099
      %v1101 = vpop.f32.mrb[0].mxu0
      %1102 = vmatprep.mubr.bf16.mxu0 0
      %1103 = vmatmul.mubr.bf16.gmra.mrb[0].mxu0 %v963
      %v1104 = vpop.f32.mrb[0].mxu0
      %v1105 = vadd.f32 0.0, %v1104
      %v1106 = vpop.f32.mrb[0].mxu0
      %v1107 = vpop.f32.mrb[0].mxu0
      %v1108 = vadd.f32 0.0, %v1107
      %v1109 = vpop.f32.mrb[0].mxu0
      %1110 = vmatprep.mubr.bf16.mxu0 0
      %1111 = vmatmul.mubr.bf16.gmra.mrb[0].mxu0 %v967
      %v1112 = vpop.f32.mrb[0].mxu0
      %v1113 = vadd.f32 0.0, %v1112
      %v1114 = vpop.f32.mrb[0].mxu0
      %v1115 = vpop.f32.mrb[0].mxu0
      %v1116 = vadd.f32 0.0, %v1115
      %v1117 = vpop.f32.mrb[0].mxu0
      %1118 = vmatprep.mubr.bf16.mxu0 0
      %1119 = vmatmul.mubr.bf16.gmra.mrb[0].mxu0 %v971
      %v1120 = vpop.f32.mrb[0].mxu0
      %v1121 = vadd.f32 0.0, %v1120
      %v1122 = vpop.f32.mrb[0].mxu0
      %v1123 = vpop.f32.mrb[0].mxu0
      %v1124 = vadd.f32 0.0, %v1123
      %v1125 = vpop.f32.mrb[0].mxu0
      %1126 = vmatprep.mubr.bf16.mxu0 0
      %1127 = vmatmul.mubr.bf16.gmra.mrb[0].mxu0 %v980
      %v1128 = vpop.f32.mrb[0].mxu0
      %v1129 = vadd.f32 0.0, %v1128
      %v1130 = vpop.f32.mrb[0].mxu0
      %v1131 = vpop.f32.mrb[0].mxu0
      %v1132 = vadd.f32 0.0, %v1131
      %v1133 = vpop.f32.mrb[0].mxu0
      %1134 = vmatprep.mubr.bf16.mxu0 0
      %1135 = vmatmul.mubr.bf16.gmra.mrb[0].mxu0 %v979
      %v1136 = vpop.f32.mrb[0].mxu0
      %v1137 = vadd.f32 0.0, %v1136
      %v1138 = vpop.f32.mrb[0].mxu0
      %v1139 = vpop.f32.mrb[0].mxu0
      %v1140 = vadd.f32 0.0, %v1139
      %v1141 = vpop.f32.mrb[0].mxu0
      %1142 = vdwg.mxu0
      %v1143 = vadd.f32 %v896, %v1073
      %v1144 = vadd.f32 %v897, %v1076
      %v1145 = vadd.f32 %v898, %v1081
      %v1146 = vadd.f32 %v899, %v1084
      %v1147 = vadd.f32 %v900, %v1089
      %v1148 = vadd.f32 %v901, %v1092
      %v1149 = vadd.f32 %v902, %v1097
      %v1150 = vadd.f32 %v903, %v1100
      %v1151 = vadd.f32 %v904, %v1105
      %v1152 = vadd.f32 %v905, %v1108
      %v1153 = vadd.f32 %v906, %v1113
      %v1154 = vadd.f32 %v907, %v1116
      %v1155 = vadd.f32 %v908, %v1121
      %v1156 = vadd.f32 %v909, %v1124
      %v1157 = vadd.f32 %v910, %v1129
      %v1158 = vadd.f32 %v911, %v1132
      %v1159 = vadd.f32 %v912, %v1137
      %v1160 = vadd.f32 %v913, %v1140
      %v1161 = vld [vmem:[%s192] sm:$0xc]
      %s1162 = scalar_lea.vmem %s1, 256
      %v1163 = vld [vmem:[%s1162] sm:$0xf]
      %v1164 = vld [vmem:[%s1162 + $0x4] sm:$0xf]
      %v1165 = vld [vmem:[%s1162 + $0x8] sm:$0xf]
      %v1166 = vld [vmem:[%s1162 + $0xc] sm:$0xf]
      %v1167 = vld [vmem:[%s1162 + $0x10] sm:$0xf]
      %v1168 = vld [vmem:[%s1162 + $0x14] sm:$0xf]
      %v1169 = vld [vmem:[%s1162 + $0x18] sm:$0xf]
      %v1170 = vld [vmem:[%s1162 + $0x1c] sm:$0xf]
      %v1171 = vld [vmem:[%s1162 + $0x20] sm:$0xf]
      %v1172 = vld [vmem:[%s1162 + $0x24] sm:$0xf]
      %v1173 = vld [vmem:[%s1162 + $0x28] sm:$0xf]
      %v1174 = vld [vmem:[%s1162 + $0x2c] sm:$0xf]
      %v1175 = vld [vmem:[%s1162 + $0x30] sm:$0xf]
      %v1176 = vld [vmem:[%s1162 + $0x34] sm:$0xf]
      %v1177 = vld [vmem:[%s1162 + $0x38] sm:$0xf]
      %v1178 = vld [vmem:[%s1162 + $0x3c] sm:$0xf]
      %v1180 = vunpack.c.l.b16 %v1161
      %v1181 = vpack.c.b16 %v270, %v1180
      %vm1182 = vcmask 1045504
      %v1183 = vrot.slane %v1181, 2
      %v1184 = vrot.slane %v288, 2
      %v1185 = vsel %vm1182, %v1183, %v1184
      %v1186 = vrot.slane %v289, 2
      %v1187 = vsel %vm1182, %v1184, %v1186
      %v1188 = vrot.slane %v290, 2
      %v1189 = vsel %vm1182, %v1186, %v1188
      %v1190 = vrot.slane %v291, 2
      %v1191 = vsel %vm1182, %v1188, %v1190
      %v1192 = vrot.slane %v292, 2
      %v1193 = vsel %vm1182, %v1190, %v1192
      %v1194 = vrot.slane %v293, 2
      %v1195 = vsel %vm1182, %v1192, %v1194
      %v1196 = vrot.slane %v294, 2
      %v1197 = vsel %vm1182, %v1194, %v1196
      %v1198 = vrot.slane %v934, 2
      %v1199 = vsel %vm1182, %v1196, %v1198
      %v1225 = vunpack.c.l.b16 %v1163
      %v1226 = vunpack.c.l.b16 %v1164
      %v1227 = vunpack.c.l.b16 %v1165
      %v1228 = vunpack.c.l.b16 %v1166
      %v1229 = vunpack.c.l.b16 %v1167
      %v1230 = vunpack.c.l.b16 %v1168
      %v1231 = vunpack.c.l.b16 %v1169
      %v1232 = vunpack.c.l.b16 %v1170
      %v1233 = vunpack.c.l.b16 %v1171
      %v1234 = vunpack.c.l.b16 %v1172
      %v1235 = vunpack.c.l.b16 %v1173
      %v1236 = vunpack.c.l.b16 %v1174
      %v1237 = vunpack.c.l.b16 %v1175
      %v1238 = vunpack.c.l.b16 %v1176
      %v1239 = vunpack.c.l.b16 %v1177
      %v1240 = vunpack.c.l.b16 %v1178
      %v1241 = vpack.c.b16 %v1226, %v1225
      %v1242 = vpack.c.b16 %v1228, %v1227
      %v1243 = vpack.c.b16 %v1230, %v1229
      %v1244 = vpack.c.b16 %v1232, %v1231
      %v1245 = vpack.c.b16 %v1234, %v1233
      %v1246 = vpack.c.b16 %v1236, %v1235
      %v1247 = vpack.c.b16 %v1238, %v1237
      %v1248 = vpack.c.b16 %v1240, %v1239
      %1257 = vmatprep.subr.bf16.mxu0 0
      %1258 = vmatpush1.bf16.msra.mxu0 %v1241
      %1259 = vmatprep.subr.bf16.mxu0 0
      %1260 = vmatpush1.bf16.msra.mxu0 %v1242
      %1261 = vmatprep.subr.bf16.mxu0 0
      %1262 = vmatpush1.bf16.msra.mxu0 %v1243
      %1263 = vmatprep.subr.bf16.mxu0 0
      %1264 = vmatpush1.bf16.msra.mxu0 %v1244
      %1265 = vmatprep.subr.bf16.mxu0 0
      %1266 = vmatpush1.bf16.msra.mxu0 %v1245
      %1267 = vmatprep.subr.bf16.mxu0 0
      %1268 = vmatpush1.bf16.msra.mxu0 %v1246
      %1269 = vmatprep.subr.bf16.mxu0 0
      %1270 = vmatpush1.bf16.msra.mxu0 %v1247
      %1271 = vmatprep.subr.bf16.mxu0 0
      %1272 = vmatpush1.bf16.msra.mxu0 %v1248
      %1273 = vmatprep.subr.bf16.mxu0 0
      %1274 = vmatpush1.bf16.msra.mxu0 0
      %1275 = vmatprep.subr.bf16.mxu0 0
      %1276 = vmatpush1.bf16.msra.mxu0 0
      %1277 = vmatprep.subr.bf16.mxu0 0
      %1278 = vmatpush1.bf16.msra.mxu0 0
      %1279 = vmatprep.subr.bf16.mxu0 0
      %1280 = vmatpush1.bf16.msra.mxu0 0
      %1281 = vmatprep.subr.bf16.mxu0 0
      %1282 = vmatpush1.bf16.msra.mxu0 0
      %1283 = vmatprep.subr.bf16.mxu0 0
      %1284 = vmatpush1.bf16.msra.mxu0 0
      %1285 = vmatprep.subr.bf16.mxu0 0
      %1286 = vmatpush1.bf16.msra.mxu0 0
      %1287 = vmatprep.subr.bf16.mxu0 0
      %1288 = vmatpush1.bf16.msra.mxu0 0
      %1289 = vmatprep.mubr.bf16.mxu0 0
      %1290 = vmatmul.mubr.bf16.gmra.mrb[0].mxu0 %v1185
      %v1291 = vpop.f32.mrb[0].mxu0
      %v1292 = vadd.f32 0.0, %v1291
      %v1293 = vpop.f32.mrb[0].mxu0
      %v1294 = vpop.f32.mrb[0].mxu0
      %v1295 = vadd.f32 0.0, %v1294
      %v1296 = vpop.f32.mrb[0].mxu0
      %1297 = vmatprep.mubr.bf16.mxu0 0
      %1298 = vmatmul.mubr.bf16.gmra.mrb[0].mxu0 %v1187
      %v1299 = vpop.f32.mrb[0].mxu0
      %v1300 = vadd.f32 0.0, %v1299
      %v1301 = vpop.f32.mrb[0].mxu0
      %v1302 = vpop.f32.mrb[0].mxu0
      %v1303 = vadd.f32 0.0, %v1302
      %v1304 = vpop.f32.mrb[0].mxu0
      %1305 = vmatprep.mubr.bf16.mxu0 0
      %1306 = vmatmul.mubr.bf16.gmra.mrb[0].mxu0 %v1189
      %v1307 = vpop.f32.mrb[0].mxu0
      %v1308 = vadd.f32 0.0, %v1307
      %v1309 = vpop.f32.mrb[0].mxu0
      %v1310 = vpop.f32.mrb[0].mxu0
      %v1311 = vadd.f32 0.0, %v1310
      %v1312 = vpop.f32.mrb[0].mxu0
      %1313 = vmatprep.mubr.bf16.mxu0 0
      %1314 = vmatmul.mubr.bf16.gmra.mrb[0].mxu0 %v1191
      %v1315 = vpop.f32.mrb[0].mxu0
      %v1316 = vadd.f32 0.0, %v1315
      %v1317 = vpop.f32.mrb[0].mxu0
      %v1318 = vpop.f32.mrb[0].mxu0
      %v1319 = vadd.f32 0.0, %v1318
      %v1320 = vpop.f32.mrb[0].mxu0
      %1321 = vmatprep.mubr.bf16.mxu0 0
      %1322 = vmatmul.mubr.bf16.gmra.mrb[0].mxu0 %v1193
      %v1323 = vpop.f32.mrb[0].mxu0
      %v1324 = vadd.f32 0.0, %v1323
      %v1325 = vpop.f32.mrb[0].mxu0
      %v1326 = vpop.f32.mrb[0].mxu0
      %v1327 = vadd.f32 0.0, %v1326
      %v1328 = vpop.f32.mrb[0].mxu0
      %1329 = vmatprep.mubr.bf16.mxu0 0
      %1330 = vmatmul.mubr.bf16.gmra.mrb[0].mxu0 %v1195
      %v1331 = vpop.f32.mrb[0].mxu0
      %v1332 = vadd.f32 0.0, %v1331
      %v1333 = vpop.f32.mrb[0].mxu0
      %v1334 = vpop.f32.mrb[0].mxu0
      %v1335 = vadd.f32 0.0, %v1334
      %v1336 = vpop.f32.mrb[0].mxu0
      %1337 = vmatprep.mubr.bf16.mxu0 0
      %1338 = vmatmul.mubr.bf16.gmra.mrb[0].mxu0 %v1197
      %v1339 = vpop.f32.mrb[0].mxu0
      %v1340 = vadd.f32 0.0, %v1339
      %v1341 = vpop.f32.mrb[0].mxu0
      %v1342 = vpop.f32.mrb[0].mxu0
      %v1343 = vadd.f32 0.0, %v1342
      %v1344 = vpop.f32.mrb[0].mxu0
      %1345 = vmatprep.mubr.bf16.mxu0 0
      %1346 = vmatmul.mubr.bf16.gmra.mrb[0].mxu0 %v1199
      %v1347 = vpop.f32.mrb[0].mxu0
      %v1348 = vadd.f32 0.0, %v1347
      %v1349 = vpop.f32.mrb[0].mxu0
      %v1350 = vpop.f32.mrb[0].mxu0
      %v1351 = vadd.f32 0.0, %v1350
      %v1352 = vpop.f32.mrb[0].mxu0
      %1353 = vmatprep.mubr.bf16.mxu0 0
      %1354 = vmatmul.mubr.bf16.gmra.mrb[0].mxu0 %v1198
      %v1355 = vpop.f32.mrb[0].mxu0
      %v1356 = vadd.f32 0.0, %v1355
      %v1357 = vpop.f32.mrb[0].mxu0
      %v1358 = vpop.f32.mrb[0].mxu0
      %v1359 = vadd.f32 0.0, %v1358
      %v1360 = vpop.f32.mrb[0].mxu0
      %1361 = vdwg.mxu0
      %v1362 = vadd.f32 %v1143, %v1292
      %v1363 = vadd.f32 %v1144, %v1295
      %v1364 = vadd.f32 %v1145, %v1300
      %v1365 = vadd.f32 %v1146, %v1303
      %v1366 = vadd.f32 %v1147, %v1308
      %v1367 = vadd.f32 %v1148, %v1311
      %v1368 = vadd.f32 %v1149, %v1316
      %v1369 = vadd.f32 %v1150, %v1319
      %v1370 = vadd.f32 %v1151, %v1324
      %v1371 = vadd.f32 %v1152, %v1327
      %v1372 = vadd.f32 %v1153, %v1332
      %v1373 = vadd.f32 %v1154, %v1335
      %v1374 = vadd.f32 %v1155, %v1340
      %v1375 = vadd.f32 %v1156, %v1343
      %v1376 = vadd.f32 %v1157, %v1348
      %v1377 = vadd.f32 %v1158, %v1351
      %v1378 = vadd.f32 %v1159, %v1356
      %v1379 = vadd.f32 %v1160, %v1359
      %v1380 = vld [vmem:[%s192 + $0x4] sm:$0x8]
      %v1381 = vld [vmem:[%s192 + $0x8] sm:$0xf]
      %v1382 = vld [vmem:[%s192 + $0xc] sm:$0xf]
      %v1383 = vld [vmem:[%s192 + $0x10] sm:$0xf]
      %v1384 = vld [vmem:[%s192 + $0x14] sm:$0xf]
      %v1385 = vld [vmem:[%s192 + $0x18] sm:$0xf]
      %v1386 = vld [vmem:[%s192 + $0x1c] sm:$0xf]
      %v1387 = vld [vmem:[%s192 + $0x20] sm:$0xf]
      %v1388 = vld [vmem:[%s192 + $0x24] sm:$0xf]
      %v1389 = vld [vmem:[%s192 + $0x28] sm:$0xf]
      %v1390 = vld [vmem:[%s192 + $0x2c] sm:$0xf]
      %v1391 = vld [vmem:[%s192 + $0x30] sm:$0xf]
      %v1392 = vld [vmem:[%s192 + $0x34] sm:$0xf]
      %v1393 = vld [vmem:[%s192 + $0x38] sm:$0xf]
      %v1394 = vld [vmem:[%s192 + $0x3c] sm:$0xf]
      %v1395 = vld [vmem:[%s192 + $0x40] sm:$0xf]
      %v1396 = vld [vmem:[%s192 + $0x44] sm:$0xf]
      %v1397 = vld [vmem:[%s192 + $0x48] sm:$0xf]
      %v1398 = vld [vmem:[%s192 + $0x4c] sm:$0x1]
      %s1399 = scalar_lea.vmem %s1, 320
      %v1400 = vld [vmem:[%s1399] sm:$0xf]
      %v1401 = vld [vmem:[%s1399 + $0x4] sm:$0xf]
      %v1402 = vld [vmem:[%s1399 + $0x8] sm:$0xf]
      %v1403 = vld [vmem:[%s1399 + $0xc] sm:$0xf]
      %v1404 = vld [vmem:[%s1399 + $0x10] sm:$0xf]
      %v1405 = vld [vmem:[%s1399 + $0x14] sm:$0xf]
      %v1406 = vld [vmem:[%s1399 + $0x18] sm:$0xf]
      %v1407 = vld [vmem:[%s1399 + $0x1c] sm:$0xf]
      %v1408 = vld [vmem:[%s1399 + $0x20] sm:$0xf]
      %v1409 = vld [vmem:[%s1399 + $0x24] sm:$0xf]
      %v1410 = vld [vmem:[%s1399 + $0x28] sm:$0xf]
      %v1411 = vld [vmem:[%s1399 + $0x2c] sm:$0xf]
      %v1412 = vld [vmem:[%s1399 + $0x30] sm:$0xf]
      %v1413 = vld [vmem:[%s1399 + $0x34] sm:$0xf]
      %v1414 = vld [vmem:[%s1399 + $0x38] sm:$0xf]
      %v1415 = vld [vmem:[%s1399 + $0x3c] sm:$0xf]
      %v1435 = vunpack.c.l.b16 %v1380
      %v1436 = vunpack.c.l.b16 %v1381
      %v1437 = vunpack.c.l.b16 %v1382
      %v1438 = vunpack.c.l.b16 %v1383
      %v1439 = vunpack.c.l.b16 %v1384
      %v1440 = vunpack.c.l.b16 %v1385
      %v1441 = vunpack.c.l.b16 %v1386
      %v1442 = vunpack.c.l.b16 %v1387
      %v1443 = vunpack.c.l.b16 %v1388
      %v1444 = vunpack.c.l.b16 %v1389
      %v1445 = vunpack.c.l.b16 %v1390
      %v1446 = vunpack.c.l.b16 %v1391
      %v1447 = vunpack.c.l.b16 %v1392
      %v1448 = vunpack.c.l.b16 %v1393
      %v1449 = vunpack.c.l.b16 %v1394
      %v1450 = vunpack.c.l.b16 %v1395
      %v1451 = vunpack.c.l.b16 %v1396
      %v1452 = vunpack.c.l.b16 %v1397
      %v1453 = vunpack.c.l.b16 %v1398
      %v1454 = vpack.c.b16 %v1436, %v1435
      %v1455 = vpack.c.b16 %v1438, %v1437
      %v1456 = vpack.c.b16 %v1440, %v1439
      %v1457 = vpack.c.b16 %v1442, %v1441
      %v1458 = vpack.c.b16 %v1444, %v1443
      %v1459 = vpack.c.b16 %v1446, %v1445
      %v1460 = vpack.c.b16 %v1448, %v1447
      %v1461 = vpack.c.b16 %v1450, %v1449
      %v1462 = vpack.c.b16 %v1452, %v1451
      %v1463 = vpack.c.b16 %v1453, %v1453
      %vm1464 = vcmask 1044480
      %v1465 = vrot.slane %v1454, 3
      %v1466 = vrot.slane %v1455, 3
      %v1467 = vsel %vm1464, %v1465, %v1466
      %v1468 = vrot.slane %v1456, 3
      %v1469 = vsel %vm1464, %v1466, %v1468
      %v1470 = vrot.slane %v1457, 3
      %v1471 = vsel %vm1464, %v1468, %v1470
      %v1472 = vrot.slane %v1458, 3
      %v1473 = vsel %vm1464, %v1470, %v1472
      %v1474 = vrot.slane %v1459, 3
      %v1475 = vsel %vm1464, %v1472, %v1474
      %v1476 = vrot.slane %v1460, 3
      %v1477 = vsel %vm1464, %v1474, %v1476
      %v1478 = vrot.slane %v1461, 3
      %v1479 = vsel %vm1464, %v1476, %v1478
      %v1480 = vrot.slane %v1462, 3
      %v1481 = vsel %vm1464, %v1478, %v1480
      %v1482 = vrot.slane %v1463, 3
      %v1483 = vsel %vm1464, %v1480, %v1482
      %v1509 = vunpack.c.l.b16 %v1400
      %v1510 = vunpack.c.l.b16 %v1401
      %v1511 = vunpack.c.l.b16 %v1402
      %v1512 = vunpack.c.l.b16 %v1403
      %v1513 = vunpack.c.l.b16 %v1404
      %v1514 = vunpack.c.l.b16 %v1405
      %v1515 = vunpack.c.l.b16 %v1406
      %v1516 = vunpack.c.l.b16 %v1407
      %v1517 = vunpack.c.l.b16 %v1408
      %v1518 = vunpack.c.l.b16 %v1409
      %v1519 = vunpack.c.l.b16 %v1410
      %v1520 = vunpack.c.l.b16 %v1411
      %v1521 = vunpack.c.l.b16 %v1412
      %v1522 = vunpack.c.l.b16 %v1413
      %v1523 = vunpack.c.l.b16 %v1414
      %v1524 = vunpack.c.l.b16 %v1415
      %v1525 = vpack.c.b16 %v1510, %v1509
      %v1526 = vpack.c.b16 %v1512, %v1511
      %v1527 = vpack.c.b16 %v1514, %v1513
      %v1528 = vpack.c.b16 %v1516, %v1515
      %v1529 = vpack.c.b16 %v1518, %v1517
      %v1530 = vpack.c.b16 %v1520, %v1519
      %v1531 = vpack.c.b16 %v1522, %v1521
      %v1532 = vpack.c.b16 %v1524, %v1523
      %1541 = vmatprep.subr.bf16.mxu0 0
      %1542 = vmatpush1.bf16.msra.mxu0 %v1525
      %1543 = vmatprep.subr.bf16.mxu0 0
      %1544 = vmatpush1.bf16.msra.mxu0 %v1526
      %1545 = vmatprep.subr.bf16.mxu0 0
      %1546 = vmatpush1.bf16.msra.mxu0 %v1527
      %1547 = vmatprep.subr.bf16.mxu0 0
      %1548 = vmatpush1.bf16.msra.mxu0 %v1528
      %1549 = vmatprep.subr.bf16.mxu0 0
      %1550 = vmatpush1.bf16.msra.mxu0 %v1529
      %1551 = vmatprep.subr.bf16.mxu0 0
      %1552 = vmatpush1.bf16.msra.mxu0 %v1530
      %1553 = vmatprep.subr.bf16.mxu0 0
      %1554 = vmatpush1.bf16.msra.mxu0 %v1531
      %1555 = vmatprep.subr.bf16.mxu0 0
      %1556 = vmatpush1.bf16.msra.mxu0 %v1532
      %1557 = vmatprep.subr.bf16.mxu0 0
      %1558 = vmatpush1.bf16.msra.mxu0 0
      %1559 = vmatprep.subr.bf16.mxu0 0
      %1560 = vmatpush1.bf16.msra.mxu0 0
      %1561 = vmatprep.subr.bf16.mxu0 0
      %1562 = vmatpush1.bf16.msra.mxu0 0
      %1563 = vmatprep.subr.bf16.mxu0 0
      %1564 = vmatpush1.bf16.msra.mxu0 0
      %1565 = vmatprep.subr.bf16.mxu0 0
      %1566 = vmatpush1.bf16.msra.mxu0 0
      %1567 = vmatprep.subr.bf16.mxu0 0
      %1568 = vmatpush1.bf16.msra.mxu0 0
      %1569 = vmatprep.subr.bf16.mxu0 0
      %1570 = vmatpush1.bf16.msra.mxu0 0
      %1571 = vmatprep.subr.bf16.mxu0 0
      %1572 = vmatpush1.bf16.msra.mxu0 0
      %1573 = vmatprep.mubr.bf16.mxu0 0
      %1574 = vmatmul.mubr.bf16.gmra.mrb[0].mxu0 %v1467
      %v1575 = vpop.f32.mrb[0].mxu0
      %v1576 = vadd.f32 0.0, %v1575
      %v1577 = vpop.f32.mrb[0].mxu0
      %v1578 = vpop.f32.mrb[0].mxu0
      %v1579 = vadd.f32 0.0, %v1578
      %v1580 = vpop.f32.mrb[0].mxu0
      %1581 = vmatprep.mubr.bf16.mxu0 0
      %1582 = vmatmul.mubr.bf16.gmra.mrb[0].mxu0 %v1469
      %v1583 = vpop.f32.mrb[0].mxu0
      %v1584 = vadd.f32 0.0, %v1583
      %v1585 = vpop.f32.mrb[0].mxu0
      %v1586 = vpop.f32.mrb[0].mxu0
      %v1587 = vadd.f32 0.0, %v1586
      %v1588 = vpop.f32.mrb[0].mxu0
      %1589 = vmatprep.mubr.bf16.mxu0 0
      %1590 = vmatmul.mubr.bf16.gmra.mrb[0].mxu0 %v1471
      %v1591 = vpop.f32.mrb[0].mxu0
      %v1592 = vadd.f32 0.0, %v1591
      %v1593 = vpop.f32.mrb[0].mxu0
      %v1594 = vpop.f32.mrb[0].mxu0
      %v1595 = vadd.f32 0.0, %v1594
      %v1596 = vpop.f32.mrb[0].mxu0
      %1597 = vmatprep.mubr.bf16.mxu0 0
      %1598 = vmatmul.mubr.bf16.gmra.mrb[0].mxu0 %v1473
      %v1599 = vpop.f32.mrb[0].mxu0
      %v1600 = vadd.f32 0.0, %v1599
      %v1601 = vpop.f32.mrb[0].mxu0
      %v1602 = vpop.f32.mrb[0].mxu0
      %v1603 = vadd.f32 0.0, %v1602
      %v1604 = vpop.f32.mrb[0].mxu0
      %1605 = vmatprep.mubr.bf16.mxu0 0
      %1606 = vmatmul.mubr.bf16.gmra.mrb[0].mxu0 %v1475
      %v1607 = vpop.f32.mrb[0].mxu0
      %v1608 = vadd.f32 0.0, %v1607
      %v1609 = vpop.f32.mrb[0].mxu0
      %v1610 = vpop.f32.mrb[0].mxu0
      %v1611 = vadd.f32 0.0, %v1610
      %v1612 = vpop.f32.mrb[0].mxu0
      %1613 = vmatprep.mubr.bf16.mxu0 0
      %1614 = vmatmul.mubr.bf16.gmra.mrb[0].mxu0 %v1477
      %v1615 = vpop.f32.mrb[0].mxu0
      %v1616 = vadd.f32 0.0, %v1615
      %v1617 = vpop.f32.mrb[0].mxu0
      %v1618 = vpop.f32.mrb[0].mxu0
      %v1619 = vadd.f32 0.0, %v1618
      %v1620 = vpop.f32.mrb[0].mxu0
      %1621 = vmatprep.mubr.bf16.mxu0 0
      %1622 = vmatmul.mubr.bf16.gmra.mrb[0].mxu0 %v1479
      %v1623 = vpop.f32.mrb[0].mxu0
      %v1624 = vadd.f32 0.0, %v1623
      %v1625 = vpop.f32.mrb[0].mxu0
      %v1626 = vpop.f32.mrb[0].mxu0
      %v1627 = vadd.f32 0.0, %v1626
      %v1628 = vpop.f32.mrb[0].mxu0
      %1629 = vmatprep.mubr.bf16.mxu0 0
      %1630 = vmatmul.mubr.bf16.gmra.mrb[0].mxu0 %v1481
      %v1631 = vpop.f32.mrb[0].mxu0
      %v1632 = vadd.f32 0.0, %v1631
      %v1633 = vpop.f32.mrb[0].mxu0
      %v1634 = vpop.f32.mrb[0].mxu0
      %v1635 = vadd.f32 0.0, %v1634
      %v1636 = vpop.f32.mrb[0].mxu0
      %1637 = vmatprep.mubr.bf16.mxu0 0
      %1638 = vmatmul.mubr.bf16.gmra.mrb[0].mxu0 %v1483
      %v1639 = vpop.f32.mrb[0].mxu0
      %v1640 = vadd.f32 0.0, %v1639
      %v1641 = vpop.f32.mrb[0].mxu0
      %v1642 = vpop.f32.mrb[0].mxu0
      %v1643 = vadd.f32 0.0, %v1642
      %v1644 = vpop.f32.mrb[0].mxu0
      %1645 = vdwg.mxu0
      %v1646 = vadd.f32 %v1362, %v1576
      %v1647 = vadd.f32 %v1363, %v1579
      %v1648 = vadd.f32 %v1364, %v1584
      %v1649 = vadd.f32 %v1365, %v1587
      %v1650 = vadd.f32 %v1366, %v1592
      %v1651 = vadd.f32 %v1367, %v1595
      %v1652 = vadd.f32 %v1368, %v1600
      %v1653 = vadd.f32 %v1369, %v1603
      %v1654 = vadd.f32 %v1370, %v1608
      %v1655 = vadd.f32 %v1371, %v1611
      %v1656 = vadd.f32 %v1372, %v1616
      %v1657 = vadd.f32 %v1373, %v1619
      %v1658 = vadd.f32 %v1374, %v1624
      %v1659 = vadd.f32 %v1375, %v1627
      %v1660 = vadd.f32 %v1376, %v1632
      %v1661 = vadd.f32 %v1377, %v1635
      %v1662 = vadd.f32 %v1378, %v1640
      %v1663 = vadd.f32 %v1379, %v1643
      %v1664 = vld [vmem:[%s192 + $0x4c] sm:$0x3]
      %s1665 = scalar_lea.vmem %s1, 384
      %v1666 = vld [vmem:[%s1665] sm:$0xf]
      %v1667 = vld [vmem:[%s1665 + $0x4] sm:$0xf]
      %v1668 = vld [vmem:[%s1665 + $0x8] sm:$0xf]
      %v1669 = vld [vmem:[%s1665 + $0xc] sm:$0xf]
      %v1670 = vld [vmem:[%s1665 + $0x10] sm:$0xf]
      %v1671 = vld [vmem:[%s1665 + $0x14] sm:$0xf]
      %v1672 = vld [vmem:[%s1665 + $0x18] sm:$0xf]
      %v1673 = vld [vmem:[%s1665 + $0x1c] sm:$0xf]
      %v1674 = vld [vmem:[%s1665 + $0x20] sm:$0xf]
      %v1675 = vld [vmem:[%s1665 + $0x24] sm:$0xf]
      %v1676 = vld [vmem:[%s1665 + $0x28] sm:$0xf]
      %v1677 = vld [vmem:[%s1665 + $0x2c] sm:$0xf]
      %v1678 = vld [vmem:[%s1665 + $0x30] sm:$0xf]
      %v1679 = vld [vmem:[%s1665 + $0x34] sm:$0xf]
      %v1680 = vld [vmem:[%s1665 + $0x38] sm:$0xf]
      %v1681 = vld [vmem:[%s1665 + $0x3c] sm:$0xf]
      %v1683 = vunpack.c.l.b16 %v1664
      %v1684 = vpack.c.b16 %v1683, %v1683
      %vm1685 = vsmask.f32 4352
      %v1687 = vshrl.u32 %v1454, 16
      %v1689 = vrot.slane %v1687, 3
      %v1690 = vshll.u32 %v1454, 16
      %v1692 = vrot.slane %v1690, 4
      %v1693 = vor.u32 %v1689, %v1692
      %v1695 = vshrl.u32 %v1455, 16
      %v1697 = vrot.slane %v1695, 3
      %v1698 = vshll.u32 %v1455, 16
      %v1700 = vrot.slane %v1698, 4
      %v1701 = vor.u32 %v1697, %v1700
      %v1702 = vsel %vm1685, %v1693, %v1701
      %v1704 = vshrl.u32 %v1456, 16
      %v1706 = vrot.slane %v1704, 3
      %v1707 = vshll.u32 %v1456, 16
      %v1709 = vrot.slane %v1707, 4
      %v1710 = vor.u32 %v1706, %v1709
      %v1711 = vsel %vm1685, %v1701, %v1710
      %v1713 = vshrl.u32 %v1457, 16
      %v1715 = vrot.slane %v1713, 3
      %v1716 = vshll.u32 %v1457, 16
      %v1718 = vrot.slane %v1716, 4
      %v1719 = vor.u32 %v1715, %v1718
      %v1720 = vsel %vm1685, %v1710, %v1719
      %v1722 = vshrl.u32 %v1458, 16
      %v1724 = vrot.slane %v1722, 3
      %v1725 = vshll.u32 %v1458, 16
      %v1727 = vrot.slane %v1725, 4
      %v1728 = vor.u32 %v1724, %v1727
      %v1729 = vsel %vm1685, %v1719, %v1728
      %v1731 = vshrl.u32 %v1459, 16
      %v1733 = vrot.slane %v1731, 3
      %v1734 = vshll.u32 %v1459, 16
      %v1736 = vrot.slane %v1734, 4
      %v1737 = vor.u32 %v1733, %v1736
      %v1738 = vsel %vm1685, %v1728, %v1737
      %v1740 = vshrl.u32 %v1460, 16
      %v1742 = vrot.slane %v1740, 3
      %v1743 = vshll.u32 %v1460, 16
      %v1745 = vrot.slane %v1743, 4
      %v1746 = vor.u32 %v1742, %v1745
      %v1747 = vsel %vm1685, %v1737, %v1746
      %v1749 = vshrl.u32 %v1461, 16
      %v1751 = vrot.slane %v1749, 3
      %v1752 = vshll.u32 %v1461, 16
      %v1754 = vrot.slane %v1752, 4
      %v1755 = vor.u32 %v1751, %v1754
      %v1756 = vsel %vm1685, %v1746, %v1755
      %v1758 = vshrl.u32 %v1462, 16
      %v1760 = vrot.slane %v1758, 3
      %v1761 = vshll.u32 %v1462, 16
      %v1763 = vrot.slane %v1761, 4
      %v1764 = vor.u32 %v1760, %v1763
      %v1765 = vsel %vm1685, %v1755, %v1764
      %v1767 = vshrl.u32 %v1684, 16
      %v1769 = vrot.slane %v1767, 3
      %v1770 = vshll.u32 %v1684, 16
      %v1772 = vrot.slane %v1770, 4
      %v1773 = vor.u32 %v1769, %v1772
      %v1774 = vsel %vm1685, %v1764, %v1773
      %v1800 = vunpack.c.l.b16 %v1666
      %v1801 = vunpack.c.l.b16 %v1667
      %v1802 = vunpack.c.l.b16 %v1668
      %v1803 = vunpack.c.l.b16 %v1669
      %v1804 = vunpack.c.l.b16 %v1670
      %v1805 = vunpack.c.l.b16 %v1671
      %v1806 = vunpack.c.l.b16 %v1672
      %v1807 = vunpack.c.l.b16 %v1673
      %v1808 = vunpack.c.l.b16 %v1674
      %v1809 = vunpack.c.l.b16 %v1675
      %v1810 = vunpack.c.l.b16 %v1676
      %v1811 = vunpack.c.l.b16 %v1677
      %v1812 = vunpack.c.l.b16 %v1678
      %v1813 = vunpack.c.l.b16 %v1679
      %v1814 = vunpack.c.l.b16 %v1680
      %v1815 = vunpack.c.l.b16 %v1681
      %v1816 = vpack.c.b16 %v1801, %v1800
      %v1817 = vpack.c.b16 %v1803, %v1802
      %v1818 = vpack.c.b16 %v1805, %v1804
      %v1819 = vpack.c.b16 %v1807, %v1806
      %v1820 = vpack.c.b16 %v1809, %v1808
      %v1821 = vpack.c.b16 %v1811, %v1810
      %v1822 = vpack.c.b16 %v1813, %v1812
      %v1823 = vpack.c.b16 %v1815, %v1814
      %1832 = vmatprep.subr.bf16.mxu0 0
      %1833 = vmatpush1.bf16.msra.mxu0 %v1816
      %1834 = vmatprep.subr.bf16.mxu0 0
      %1835 = vmatpush1.bf16.msra.mxu0 %v1817
      %1836 = vmatprep.subr.bf16.mxu0 0
      %1837 = vmatpush1.bf16.msra.mxu0 %v1818
      %1838 = vmatprep.subr.bf16.mxu0 0
      %1839 = vmatpush1.bf16.msra.mxu0 %v1819
      %1840 = vmatprep.subr.bf16.mxu0 0
      %1841 = vmatpush1.bf16.msra.mxu0 %v1820
      %1842 = vmatprep.subr.bf16.mxu0 0
      %1843 = vmatpush1.bf16.msra.mxu0 %v1821
      %1844 = vmatprep.subr.bf16.mxu0 0
      %1845 = vmatpush1.bf16.msra.mxu0 %v1822
      %1846 = vmatprep.subr.bf16.mxu0 0
      %1847 = vmatpush1.bf16.msra.mxu0 %v1823
      %1848 = vmatprep.subr.bf16.mxu0 0
      %1849 = vmatpush1.bf16.msra.mxu0 0
      %1850 = vmatprep.subr.bf16.mxu0 0
      %1851 = vmatpush1.bf16.msra.mxu0 0
      %1852 = vmatprep.subr.bf16.mxu0 0
      %1853 = vmatpush1.bf16.msra.mxu0 0
      %1854 = vmatprep.subr.bf16.mxu0 0
      %1855 = vmatpush1.bf16.msra.mxu0 0
      %1856 = vmatprep.subr.bf16.mxu0 0
      %1857 = vmatpush1.bf16.msra.mxu0 0
      %1858 = vmatprep.subr.bf16.mxu0 0
      %1859 = vmatpush1.bf16.msra.mxu0 0
      %1860 = vmatprep.subr.bf16.mxu0 0
      %1861 = vmatpush1.bf16.msra.mxu0 0
      %1862 = vmatprep.subr.bf16.mxu0 0
      %1863 = vmatpush1.bf16.msra.mxu0 0
      %1864 = vmatprep.mubr.bf16.mxu0 0
      %1865 = vmatmul.mubr.bf16.gmra.mrb[0].mxu0 %v1702
      %v1866 = vpop.f32.mrb[0].mxu0
      %v1867 = vadd.f32 0.0, %v1866
      %v1868 = vpop.f32.mrb[0].mxu0
      %v1869 = vpop.f32.mrb[0].mxu0
      %v1870 = vadd.f32 0.0, %v1869
      %v1871 = vpop.f32.mrb[0].mxu0
      %1872 = vmatprep.mubr.bf16.mxu0 0
      %1873 = vmatmul.mubr.bf16.gmra.mrb[0].mxu0 %v1711
      %v1874 = vpop.f32.mrb[0].mxu0
      %v1875 = vadd.f32 0.0, %v1874
      %v1876 = vpop.f32.mrb[0].mxu0
      %v1877 = vpop.f32.mrb[0].mxu0
      %v1878 = vadd.f32 0.0, %v1877
      %v1879 = vpop.f32.mrb[0].mxu0
      %1880 = vmatprep.mubr.bf16.mxu0 0
      %1881 = vmatmul.mubr.bf16.gmra.mrb[0].mxu0 %v1720
      %v1882 = vpop.f32.mrb[0].mxu0
      %v1883 = vadd.f32 0.0, %v1882
      %v1884 = vpop.f32.mrb[0].mxu0
      %v1885 = vpop.f32.mrb[0].mxu0
      %v1886 = vadd.f32 0.0, %v1885
      %v1887 = vpop.f32.mrb[0].mxu0
      %1888 = vmatprep.mubr.bf16.mxu0 0
      %1889 = vmatmul.mubr.bf16.gmra.mrb[0].mxu0 %v1729
      %v1890 = vpop.f32.mrb[0].mxu0
      %v1891 = vadd.f32 0.0, %v1890
      %v1892 = vpop.f32.mrb[0].mxu0
      %v1893 = vpop.f32.mrb[0].mxu0
      %v1894 = vadd.f32 0.0, %v1893
      %v1895 = vpop.f32.mrb[0].mxu0
      %1896 = vmatprep.mubr.bf16.mxu0 0
      %1897 = vmatmul.mubr.bf16.gmra.mrb[0].mxu0 %v1738
      %v1898 = vpop.f32.mrb[0].mxu0
      %v1899 = vadd.f32 0.0, %v1898
      %v1900 = vpop.f32.mrb[0].mxu0
      %v1901 = vpop.f32.mrb[0].mxu0
      %v1902 = vadd.f32 0.0, %v1901
      %v1903 = vpop.f32.mrb[0].mxu0
      %1904 = vmatprep.mubr.bf16.mxu0 0
      %1905 = vmatmul.mubr.bf16.gmra.mrb[0].mxu0 %v1747
      %v1906 = vpop.f32.mrb[0].mxu0
      %v1907 = vadd.f32 0.0, %v1906
      %v1908 = vpop.f32.mrb[0].mxu0
      %v1909 = vpop.f32.mrb[0].mxu0
      %v1910 = vadd.f32 0.0, %v1909
      %v1911 = vpop.f32.mrb[0].mxu0
      %1912 = vmatprep.mubr.bf16.mxu0 0
      %1913 = vmatmul.mubr.bf16.gmra.mrb[0].mxu0 %v1756
      %v1914 = vpop.f32.mrb[0].mxu0
      %v1915 = vadd.f32 0.0, %v1914
      %v1916 = vpop.f32.mrb[0].mxu0
      %v1917 = vpop.f32.mrb[0].mxu0
      %v1918 = vadd.f32 0.0, %v1917
      %v1919 = vpop.f32.mrb[0].mxu0
      %1920 = vmatprep.mubr.bf16.mxu0 0
      %1921 = vmatmul.mubr.bf16.gmra.mrb[0].mxu0 %v1765
      %v1922 = vpop.f32.mrb[0].mxu0
      %v1923 = vadd.f32 0.0, %v1922
      %v1924 = vpop.f32.mrb[0].mxu0
      %v1925 = vpop.f32.mrb[0].mxu0
      %v1926 = vadd.f32 0.0, %v1925
      %v1927 = vpop.f32.mrb[0].mxu0
      %1928 = vmatprep.mubr.bf16.mxu0 0
      %1929 = vmatmul.mubr.bf16.gmra.mrb[0].mxu0 %v1774
      %v1930 = vpop.f32.mrb[0].mxu0
      %v1931 = vadd.f32 0.0, %v1930
      %v1932 = vpop.f32.mrb[0].mxu0
      %v1933 = vpop.f32.mrb[0].mxu0
      %v1934 = vadd.f32 0.0, %v1933
      %v1935 = vpop.f32.mrb[0].mxu0
      %1936 = vdwg.mxu0
      %v1937 = vadd.f32 %v1646, %v1867
      %v1938 = vadd.f32 %v1647, %v1870
      %v1939 = vadd.f32 %v1648, %v1875
      %v1940 = vadd.f32 %v1649, %v1878
      %v1941 = vadd.f32 %v1650, %v1883
      %v1942 = vadd.f32 %v1651, %v1886
      %v1943 = vadd.f32 %v1652, %v1891
      %v1944 = vadd.f32 %v1653, %v1894
      %v1945 = vadd.f32 %v1654, %v1899
      %v1946 = vadd.f32 %v1655, %v1902
      %v1947 = vadd.f32 %v1656, %v1907
      %v1948 = vadd.f32 %v1657, %v1910
      %v1949 = vadd.f32 %v1658, %v1915
      %v1950 = vadd.f32 %v1659, %v1918
      %v1951 = vadd.f32 %v1660, %v1923
      %v1952 = vadd.f32 %v1661, %v1926
      %v1953 = vadd.f32 %v1662, %v1931
      %v1954 = vadd.f32 %v1663, %v1934
      %s1955 = scalar_lea.vmem %s1, 448
      %v1956 = vld [vmem:[%s1955] sm:$0xf]
      %v1957 = vld [vmem:[%s1955 + $0x4] sm:$0xf]
      %v1958 = vld [vmem:[%s1955 + $0x8] sm:$0xf]
      %v1959 = vld [vmem:[%s1955 + $0xc] sm:$0xf]
      %v1960 = vld [vmem:[%s1955 + $0x10] sm:$0xf]
      %v1961 = vld [vmem:[%s1955 + $0x14] sm:$0xf]
      %v1962 = vld [vmem:[%s1955 + $0x18] sm:$0xf]
      %v1963 = vld [vmem:[%s1955 + $0x1c] sm:$0xf]
      %v1964 = vld [vmem:[%s1955 + $0x20] sm:$0xf]
      %v1965 = vld [vmem:[%s1955 + $0x24] sm:$0xf]
      %v1966 = vld [vmem:[%s1955 + $0x28] sm:$0xf]
      %v1967 = vld [vmem:[%s1955 + $0x2c] sm:$0xf]
      %v1968 = vld [vmem:[%s1955 + $0x30] sm:$0xf]
      %v1969 = vld [vmem:[%s1955 + $0x34] sm:$0xf]
      %v1970 = vld [vmem:[%s1955 + $0x38] sm:$0xf]
      %v1971 = vld [vmem:[%s1955 + $0x3c] sm:$0xf]
      %v1972 = vpack.c.b16 %v1437, %v1436
      %v1973 = vpack.c.b16 %v1439, %v1438
      %v1974 = vpack.c.b16 %v1441, %v1440
      %v1975 = vpack.c.b16 %v1443, %v1442
      %v1976 = vpack.c.b16 %v1445, %v1444
      %v1977 = vpack.c.b16 %v1447, %v1446
      %v1978 = vpack.c.b16 %v1449, %v1448
      %v1979 = vpack.c.b16 %v1451, %v1450
      %v1980 = vpack.c.b16 %v1683, %v1452
      %v2006 = vunpack.c.l.b16 %v1956
      %v2007 = vunpack.c.l.b16 %v1957
      %v2008 = vunpack.c.l.b16 %v1958
      %v2009 = vunpack.c.l.b16 %v1959
      %v2010 = vunpack.c.l.b16 %v1960
      %v2011 = vunpack.c.l.b16 %v1961
      %v2012 = vunpack.c.l.b16 %v1962
      %v2013 = vunpack.c.l.b16 %v1963
      %v2014 = vunpack.c.l.b16 %v1964
      %v2015 = vunpack.c.l.b16 %v1965
      %v2016 = vunpack.c.l.b16 %v1966
      %v2017 = vunpack.c.l.b16 %v1967
      %v2018 = vunpack.c.l.b16 %v1968
      %v2019 = vunpack.c.l.b16 %v1969
      %v2020 = vunpack.c.l.b16 %v1970
      %v2021 = vunpack.c.l.b16 %v1971
      %v2022 = vpack.c.b16 %v2007, %v2006
      %v2023 = vpack.c.b16 %v2009, %v2008
      %v2024 = vpack.c.b16 %v2011, %v2010
      %v2025 = vpack.c.b16 %v2013, %v2012
      %v2026 = vpack.c.b16 %v2015, %v2014
      %v2027 = vpack.c.b16 %v2017, %v2016
      %v2028 = vpack.c.b16 %v2019, %v2018
      %v2029 = vpack.c.b16 %v2021, %v2020
      %2038 = vmatprep.subr.bf16.mxu0 0
      %2039 = vmatpush1.bf16.msra.mxu0 %v2022
      %2040 = vmatprep.subr.bf16.mxu0 0
      %2041 = vmatpush1.bf16.msra.mxu0 %v2023
      %2042 = vmatprep.subr.bf16.mxu0 0
      %2043 = vmatpush1.bf16.msra.mxu0 %v2024
      %2044 = vmatprep.subr.bf16.mxu0 0
      %2045 = vmatpush1.bf16.msra.mxu0 %v2025
      %2046 = vmatprep.subr.bf16.mxu0 0
      %2047 = vmatpush1.bf16.msra.mxu0 %v2026
      %2048 = vmatprep.subr.bf16.mxu0 0
      %2049 = vmatpush1.bf16.msra.mxu0 %v2027
      %2050 = vmatprep.subr.bf16.mxu0 0
      %2051 = vmatpush1.bf16.msra.mxu0 %v2028
      %2052 = vmatprep.subr.bf16.mxu0 0
      %2053 = vmatpush1.bf16.msra.mxu0 %v2029
      %2054 = vmatprep.subr.bf16.mxu0 0
      %2055 = vmatpush1.bf16.msra.mxu0 0
      %2056 = vmatprep.subr.bf16.mxu0 0
      %2057 = vmatpush1.bf16.msra.mxu0 0
      %2058 = vmatprep.subr.bf16.mxu0 0
      %2059 = vmatpush1.bf16.msra.mxu0 0
      %2060 = vmatprep.subr.bf16.mxu0 0
      %2061 = vmatpush1.bf16.msra.mxu0 0
      %2062 = vmatprep.subr.bf16.mxu0 0
      %2063 = vmatpush1.bf16.msra.mxu0 0
      %2064 = vmatprep.subr.bf16.mxu0 0
      %2065 = vmatpush1.bf16.msra.mxu0 0
      %2066 = vmatprep.subr.bf16.mxu0 0
      %2067 = vmatpush1.bf16.msra.mxu0 0
      %2068 = vmatprep.subr.bf16.mxu0 0
      %2069 = vmatpush1.bf16.msra.mxu0 0
      %2070 = vmatprep.mubr.bf16.mxu0 0
      %2071 = vmatmul.mubr.bf16.gmra.mrb[0].mxu0 %v1972
      %v2072 = vpop.f32.mrb[0].mxu0
      %v2073 = vadd.f32 0.0, %v2072
      %v2074 = vpop.f32.mrb[0].mxu0
      %v2075 = vpop.f32.mrb[0].mxu0
      %v2076 = vadd.f32 0.0, %v2075
      %v2077 = vpop.f32.mrb[0].mxu0
      %2078 = vmatprep.mubr.bf16.mxu0 0
      %2079 = vmatmul.mubr.bf16.gmra.mrb[0].mxu0 %v1973
      %v2080 = vpop.f32.mrb[0].mxu0
      %v2081 = vadd.f32 0.0, %v2080
      %v2082 = vpop.f32.mrb[0].mxu0
      %v2083 = vpop.f32.mrb[0].mxu0
      %v2084 = vadd.f32 0.0, %v2083
      %v2085 = vpop.f32.mrb[0].mxu0
      %2086 = vmatprep.mubr.bf16.mxu0 0
      %2087 = vmatmul.mubr.bf16.gmra.mrb[0].mxu0 %v1974
      %v2088 = vpop.f32.mrb[0].mxu0
      %v2089 = vadd.f32 0.0, %v2088
      %v2090 = vpop.f32.mrb[0].mxu0
      %v2091 = vpop.f32.mrb[0].mxu0
      %v2092 = vadd.f32 0.0, %v2091
      %v2093 = vpop.f32.mrb[0].mxu0
      %2094 = vmatprep.mubr.bf16.mxu0 0
      %2095 = vmatmul.mubr.bf16.gmra.mrb[0].mxu0 %v1975
      %v2096 = vpop.f32.mrb[0].mxu0
      %v2097 = vadd.f32 0.0, %v2096
      %v2098 = vpop.f32.mrb[0].mxu0
      %v2099 = vpop.f32.mrb[0].mxu0
      %v2100 = vadd.f32 0.0, %v2099
      %v2101 = vpop.f32.mrb[0].mxu0
      %2102 = vmatprep.mubr.bf16.mxu0 0
      %2103 = vmatmul.mubr.bf16.gmra.mrb[0].mxu0 %v1976
      %v2104 = vpop.f32.mrb[0].mxu0
      %v2105 = vadd.f32 0.0, %v2104
      %v2106 = vpop.f32.mrb[0].mxu0
      %v2107 = vpop.f32.mrb[0].mxu0
      %v2108 = vadd.f32 0.0, %v2107
      %v2109 = vpop.f32.mrb[0].mxu0
      %2110 = vmatprep.mubr.bf16.mxu0 0
      %2111 = vmatmul.mubr.bf16.gmra.mrb[0].mxu0 %v1977
      %v2112 = vpop.f32.mrb[0].mxu0
      %v2113 = vadd.f32 0.0, %v2112
      %v2114 = vpop.f32.mrb[0].mxu0
      %v2115 = vpop.f32.mrb[0].mxu0
      %v2116 = vadd.f32 0.0, %v2115
      %v2117 = vpop.f32.mrb[0].mxu0
      %2118 = vmatprep.mubr.bf16.mxu0 0
      %2119 = vmatmul.mubr.bf16.gmra.mrb[0].mxu0 %v1978
      %v2120 = vpop.f32.mrb[0].mxu0
      %v2121 = vadd.f32 0.0, %v2120
      %v2122 = vpop.f32.mrb[0].mxu0
      %v2123 = vpop.f32.mrb[0].mxu0
      %v2124 = vadd.f32 0.0, %v2123
      %v2125 = vpop.f32.mrb[0].mxu0
      %2126 = vmatprep.mubr.bf16.mxu0 0
      %2127 = vmatmul.mubr.bf16.gmra.mrb[0].mxu0 %v1979
      %v2128 = vpop.f32.mrb[0].mxu0
      %v2129 = vadd.f32 0.0, %v2128
      %v2130 = vpop.f32.mrb[0].mxu0
      %v2131 = vpop.f32.mrb[0].mxu0
      %v2132 = vadd.f32 0.0, %v2131
      %v2133 = vpop.f32.mrb[0].mxu0
      %2134 = vmatprep.mubr.bf16.mxu0 0
      %2135 = vmatmul.mubr.bf16.gmra.mrb[0].mxu0 %v1980
      %v2136 = vpop.f32.mrb[0].mxu0
      %v2137 = vadd.f32 0.0, %v2136
      %v2138 = vpop.f32.mrb[0].mxu0
      %v2139 = vpop.f32.mrb[0].mxu0
      %v2140 = vadd.f32 0.0, %v2139
      %v2141 = vpop.f32.mrb[0].mxu0
      %2142 = vdwg.mxu0
      %v2143 = vadd.f32 %v1937, %v2073
      %v2144 = vadd.f32 %v1938, %v2076
      %v2145 = vadd.f32 %v1939, %v2081
      %v2146 = vadd.f32 %v1940, %v2084
      %v2147 = vadd.f32 %v1941, %v2089
      %v2148 = vadd.f32 %v1942, %v2092
      %v2149 = vadd.f32 %v1943, %v2097
      %v2150 = vadd.f32 %v1944, %v2100
      %v2151 = vadd.f32 %v1945, %v2105
      %v2152 = vadd.f32 %v1946, %v2108
      %v2153 = vadd.f32 %v1947, %v2113
      %v2154 = vadd.f32 %v1948, %v2116
      %v2155 = vadd.f32 %v1949, %v2121
      %v2156 = vadd.f32 %v1950, %v2124
      %v2157 = vadd.f32 %v1951, %v2129
      %v2158 = vadd.f32 %v1952, %v2132
      %v2159 = vadd.f32 %v1953, %v2137
      %v2160 = vadd.f32 %v1954, %v2140
      %v2161 = vld [vmem:[%s192 + $0x4c] sm:$0x7]
      %s2162 = scalar_lea.vmem %s1, 512
      %v2163 = vld [vmem:[%s2162] sm:$0xf]
      %v2164 = vld [vmem:[%s2162 + $0x4] sm:$0xf]
      %v2165 = vld [vmem:[%s2162 + $0x8] sm:$0xf]
      %v2166 = vld [vmem:[%s2162 + $0xc] sm:$0xf]
      %v2167 = vld [vmem:[%s2162 + $0x10] sm:$0xf]
      %v2168 = vld [vmem:[%s2162 + $0x14] sm:$0xf]
      %v2169 = vld [vmem:[%s2162 + $0x18] sm:$0xf]
      %v2170 = vld [vmem:[%s2162 + $0x1c] sm:$0xf]
      %v2171 = vld [vmem:[%s2162 + $0x20] sm:$0xf]
      %v2172 = vld [vmem:[%s2162 + $0x24] sm:$0xf]
      %v2173 = vld [vmem:[%s2162 + $0x28] sm:$0xf]
      %v2174 = vld [vmem:[%s2162 + $0x2c] sm:$0xf]
      %v2175 = vld [vmem:[%s2162 + $0x30] sm:$0xf]
      %v2176 = vld [vmem:[%s2162 + $0x34] sm:$0xf]
      %v2177 = vld [vmem:[%s2162 + $0x38] sm:$0xf]
      %v2178 = vld [vmem:[%s2162 + $0x3c] sm:$0xf]
      %v2180 = vunpack.c.l.b16 %v2161
      %v2181 = vpack.c.b16 %v2180, %v1452
      %v2183 = vshrl.u32 %v1972, 16
      %v2185 = vshll.u32 %v1972, 16
      %v2187 = vrot.slane %v2185, 1
      %v2188 = vor.u32 %v2183, %v2187
      %v2190 = vshll.u32 %v1973, 16
      %v2192 = vrot.slane %v2190, 1
      %v2193 = vsel %vm296, %v2188, %v2192
      %v2194 = vshrl.u32 %v1973, 16
      %v2196 = vor.u32 %v2194, %v2192
      %v2198 = vshll.u32 %v1974, 16
      %v2200 = vrot.slane %v2198, 1
      %v2201 = vsel %vm296, %v2196, %v2200
      %v2202 = vshrl.u32 %v1974, 16
      %v2204 = vor.u32 %v2202, %v2200
      %v2206 = vshll.u32 %v1975, 16
      %v2208 = vrot.slane %v2206, 1
      %v2209 = vsel %vm296, %v2204, %v2208
      %v2210 = vshrl.u32 %v1975, 16
      %v2212 = vor.u32 %v2210, %v2208
      %v2214 = vshll.u32 %v1976, 16
      %v2216 = vrot.slane %v2214, 1
      %v2217 = vsel %vm296, %v2212, %v2216
      %v2218 = vshrl.u32 %v1976, 16
      %v2220 = vor.u32 %v2218, %v2216
      %v2222 = vshll.u32 %v1977, 16
      %v2224 = vrot.slane %v2222, 1
      %v2225 = vsel %vm296, %v2220, %v2224
      %v2226 = vshrl.u32 %v1977, 16
      %v2228 = vor.u32 %v2226, %v2224
      %v2230 = vshll.u32 %v1978, 16
      %v2232 = vrot.slane %v2230, 1
      %v2233 = vsel %vm296, %v2228, %v2232
      %v2234 = vshrl.u32 %v1978, 16
      %v2236 = vor.u32 %v2234, %v2232
      %v2238 = vshll.u32 %v1979, 16
      %v2240 = vrot.slane %v2238, 1
      %v2241 = vsel %vm296, %v2236, %v2240
      %v2242 = vshrl.u32 %v1979, 16
      %v2244 = vor.u32 %v2242, %v2240
      %v2246 = vshll.u32 %v2181, 16
      %v2248 = vrot.slane %v2246, 1
      %v2249 = vsel %vm296, %v2244, %v2248
      %v2250 = vshrl.u32 %v2181, 16
      %v2252 = vor.u32 %v2250, %v2248
      %v2278 = vunpack.c.l.b16 %v2163
      %v2279 = vunpack.c.l.b16 %v2164
      %v2280 = vunpack.c.l.b16 %v2165
      %v2281 = vunpack.c.l.b16 %v2166
      %v2282 = vunpack.c.l.b16 %v2167
      %v2283 = vunpack.c.l.b16 %v2168
      %v2284 = vunpack.c.l.b16 %v2169
      %v2285 = vunpack.c.l.b16 %v2170
      %v2286 = vunpack.c.l.b16 %v2171
      %v2287 = vunpack.c.l.b16 %v2172
      %v2288 = vunpack.c.l.b16 %v2173
      %v2289 = vunpack.c.l.b16 %v2174
      %v2290 = vunpack.c.l.b16 %v2175
      %v2291 = vunpack.c.l.b16 %v2176
      %v2292 = vunpack.c.l.b16 %v2177
      %v2293 = vunpack.c.l.b16 %v2178
      %v2294 = vpack.c.b16 %v2279, %v2278
      %v2295 = vpack.c.b16 %v2281, %v2280
      %v2296 = vpack.c.b16 %v2283, %v2282
      %v2297 = vpack.c.b16 %v2285, %v2284
      %v2298 = vpack.c.b16 %v2287, %v2286
      %v2299 = vpack.c.b16 %v2289, %v2288
      %v2300 = vpack.c.b16 %v2291, %v2290
      %v2301 = vpack.c.b16 %v2293, %v2292
      %2310 = vmatprep.subr.bf16.mxu0 0
      %2311 = vmatpush1.bf16.msra.mxu0 %v2294
      %2312 = vmatprep.subr.bf16.mxu0 0
      %2313 = vmatpush1.bf16.msra.mxu0 %v2295
      %2314 = vmatprep.subr.bf16.mxu0 0
      %2315 = vmatpush1.bf16.msra.mxu0 %v2296
      %2316 = vmatprep.subr.bf16.mxu0 0
      %2317 = vmatpush1.bf16.msra.mxu0 %v2297
      %2318 = vmatprep.subr.bf16.mxu0 0
      %2319 = vmatpush1.bf16.msra.mxu0 %v2298
      %2320 = vmatprep.subr.bf16.mxu0 0
      %2321 = vmatpush1.bf16.msra.mxu0 %v2299
      %2322 = vmatprep.subr.bf16.mxu0 0
      %2323 = vmatpush1.bf16.msra.mxu0 %v2300
      %2324 = vmatprep.subr.bf16.mxu0 0
      %2325 = vmatpush1.bf16.msra.mxu0 %v2301
      %2326 = vmatprep.subr.bf16.mxu0 0
      %2327 = vmatpush1.bf16.msra.mxu0 0
      %2328 = vmatprep.subr.bf16.mxu0 0
      %2329 = vmatpush1.bf16.msra.mxu0 0
      %2330 = vmatprep.subr.bf16.mxu0 0
      %2331 = vmatpush1.bf16.msra.mxu0 0
      %2332 = vmatprep.subr.bf16.mxu0 0
      %2333 = vmatpush1.bf16.msra.mxu0 0
      %2334 = vmatprep.subr.bf16.mxu0 0
      %2335 = vmatpush1.bf16.msra.mxu0 0
      %2336 = vmatprep.subr.bf16.mxu0 0
      %2337 = vmatpush1.bf16.msra.mxu0 0
      %2338 = vmatprep.subr.bf16.mxu0 0
      %2339 = vmatpush1.bf16.msra.mxu0 0
      %2340 = vmatprep.subr.bf16.mxu0 0
      %2341 = vmatpush1.bf16.msra.mxu0 0
      %2342 = vmatprep.mubr.bf16.mxu0 0
      %2343 = vmatmul.mubr.bf16.gmra.mrb[0].mxu0 %v2193
      %v2344 = vpop.f32.mrb[0].mxu0
      %v2345 = vadd.f32 0.0, %v2344
      %v2346 = vpop.f32.mrb[0].mxu0
      %v2347 = vpop.f32.mrb[0].mxu0
      %v2348 = vadd.f32 0.0, %v2347
      %v2349 = vpop.f32.mrb[0].mxu0
      %2350 = vmatprep.mubr.bf16.mxu0 0
      %2351 = vmatmul.mubr.bf16.gmra.mrb[0].mxu0 %v2201
      %v2352 = vpop.f32.mrb[0].mxu0
      %v2353 = vadd.f32 0.0, %v2352
      %v2354 = vpop.f32.mrb[0].mxu0
      %v2355 = vpop.f32.mrb[0].mxu0
      %v2356 = vadd.f32 0.0, %v2355
      %v2357 = vpop.f32.mrb[0].mxu0
      %2358 = vmatprep.mubr.bf16.mxu0 0
      %2359 = vmatmul.mubr.bf16.gmra.mrb[0].mxu0 %v2209
      %v2360 = vpop.f32.mrb[0].mxu0
      %v2361 = vadd.f32 0.0, %v2360
      %v2362 = vpop.f32.mrb[0].mxu0
      %v2363 = vpop.f32.mrb[0].mxu0
      %v2364 = vadd.f32 0.0, %v2363
      %v2365 = vpop.f32.mrb[0].mxu0
      %2366 = vmatprep.mubr.bf16.mxu0 0
      %2367 = vmatmul.mubr.bf16.gmra.mrb[0].mxu0 %v2217
      %v2368 = vpop.f32.mrb[0].mxu0
      %v2369 = vadd.f32 0.0, %v2368
      %v2370 = vpop.f32.mrb[0].mxu0
      %v2371 = vpop.f32.mrb[0].mxu0
      %v2372 = vadd.f32 0.0, %v2371
      %v2373 = vpop.f32.mrb[0].mxu0
      %2374 = vmatprep.mubr.bf16.mxu0 0
      %2375 = vmatmul.mubr.bf16.gmra.mrb[0].mxu0 %v2225
      %v2376 = vpop.f32.mrb[0].mxu0
      %v2377 = vadd.f32 0.0, %v2376
      %v2378 = vpop.f32.mrb[0].mxu0
      %v2379 = vpop.f32.mrb[0].mxu0
      %v2380 = vadd.f32 0.0, %v2379
      %v2381 = vpop.f32.mrb[0].mxu0
      %2382 = vmatprep.mubr.bf16.mxu0 0
      %2383 = vmatmul.mubr.bf16.gmra.mrb[0].mxu0 %v2233
      %v2384 = vpop.f32.mrb[0].mxu0
      %v2385 = vadd.f32 0.0, %v2384
      %v2386 = vpop.f32.mrb[0].mxu0
      %v2387 = vpop.f32.mrb[0].mxu0
      %v2388 = vadd.f32 0.0, %v2387
      %v2389 = vpop.f32.mrb[0].mxu0
      %2390 = vmatprep.mubr.bf16.mxu0 0
      %2391 = vmatmul.mubr.bf16.gmra.mrb[0].mxu0 %v2241
      %v2392 = vpop.f32.mrb[0].mxu0
      %v2393 = vadd.f32 0.0, %v2392
      %v2394 = vpop.f32.mrb[0].mxu0
      %v2395 = vpop.f32.mrb[0].mxu0
      %v2396 = vadd.f32 0.0, %v2395
      %v2397 = vpop.f32.mrb[0].mxu0
      %2398 = vmatprep.mubr.bf16.mxu0 0
      %2399 = vmatmul.mubr.bf16.gmra.mrb[0].mxu0 %v2249
      %v2400 = vpop.f32.mrb[0].mxu0
      %v2401 = vadd.f32 0.0, %v2400
      %v2402 = vpop.f32.mrb[0].mxu0
      %v2403 = vpop.f32.mrb[0].mxu0
      %v2404 = vadd.f32 0.0, %v2403
      %v2405 = vpop.f32.mrb[0].mxu0
      %2406 = vmatprep.mubr.bf16.mxu0 0
      %2407 = vmatmul.mubr.bf16.gmra.mrb[0].mxu0 %v2252
      %v2408 = vpop.f32.mrb[0].mxu0
      %v2409 = vadd.f32 0.0, %v2408
      %v2410 = vpop.f32.mrb[0].mxu0
      %v2411 = vpop.f32.mrb[0].mxu0
      %v2412 = vadd.f32 0.0, %v2411
      %v2413 = vpop.f32.mrb[0].mxu0
      %2414 = vdwg.mxu0
      %v2415 = vadd.f32 %v2143, %v2345
      %v2416 = vadd.f32 %v2144, %v2348
      %v2417 = vadd.f32 %v2145, %v2353
      %v2418 = vadd.f32 %v2146, %v2356
      %v2419 = vadd.f32 %v2147, %v2361
      %v2420 = vadd.f32 %v2148, %v2364
      %v2421 = vadd.f32 %v2149, %v2369
      %v2422 = vadd.f32 %v2150, %v2372
      %v2423 = vadd.f32 %v2151, %v2377
      %v2424 = vadd.f32 %v2152, %v2380
      %v2425 = vadd.f32 %v2153, %v2385
      %v2426 = vadd.f32 %v2154, %v2388
      %v2427 = vadd.f32 %v2155, %v2393
      %v2428 = vadd.f32 %v2156, %v2396
      %v2429 = vadd.f32 %v2157, %v2401
      %v2430 = vadd.f32 %v2158, %v2404
      %v2431 = vadd.f32 %v2159, %v2409
      %v2432 = vadd.f32 %v2160, %v2412
      %v2433 = vld [vmem:[%s192 + $0x8] sm:$0xe]
      %s2434 = scalar_lea.vmem %s1, 576
      %v2435 = vld [vmem:[%s2434] sm:$0xf]
      %v2436 = vld [vmem:[%s2434 + $0x4] sm:$0xf]
      %v2437 = vld [vmem:[%s2434 + $0x8] sm:$0xf]
      %v2438 = vld [vmem:[%s2434 + $0xc] sm:$0xf]
      %v2439 = vld [vmem:[%s2434 + $0x10] sm:$0xf]
      %v2440 = vld [vmem:[%s2434 + $0x14] sm:$0xf]
      %v2441 = vld [vmem:[%s2434 + $0x18] sm:$0xf]
      %v2442 = vld [vmem:[%s2434 + $0x1c] sm:$0xf]
      %v2443 = vld [vmem:[%s2434 + $0x20] sm:$0xf]
      %v2444 = vld [vmem:[%s2434 + $0x24] sm:$0xf]
      %v2445 = vld [vmem:[%s2434 + $0x28] sm:$0xf]
      %v2446 = vld [vmem:[%s2434 + $0x2c] sm:$0xf]
      %v2447 = vld [vmem:[%s2434 + $0x30] sm:$0xf]
      %v2448 = vld [vmem:[%s2434 + $0x34] sm:$0xf]
      %v2449 = vld [vmem:[%s2434 + $0x38] sm:$0xf]
      %v2450 = vld [vmem:[%s2434 + $0x3c] sm:$0xf]
      %v2452 = vunpack.c.l.b16 %v2433
      %v2453 = vpack.c.b16 %v1437, %v2452
      %v2454 = vrot.slane %v2453, 1
      %v2455 = vrot.slane %v1973, 1
      %v2456 = vsel %vm716, %v2454, %v2455
      %v2457 = vrot.slane %v1974, 1
      %v2458 = vsel %vm716, %v2455, %v2457
      %v2459 = vrot.slane %v1975, 1
      %v2460 = vsel %vm716, %v2457, %v2459
      %v2461 = vrot.slane %v1976, 1
      %v2462 = vsel %vm716, %v2459, %v2461
      %v2463 = vrot.slane %v1977, 1
      %v2464 = vsel %vm716, %v2461, %v2463
      %v2465 = vrot.slane %v1978, 1
      %v2466 = vsel %vm716, %v2463, %v2465
      %v2467 = vrot.slane %v1979, 1
      %v2468 = vsel %vm716, %v2465, %v2467
      %v2469 = vrot.slane %v2181, 1
      %v2470 = vsel %vm716, %v2467, %v2469
      %v2496 = vunpack.c.l.b16 %v2435
      %v2497 = vunpack.c.l.b16 %v2436
      %v2498 = vunpack.c.l.b16 %v2437
      %v2499 = vunpack.c.l.b16 %v2438
      %v2500 = vunpack.c.l.b16 %v2439
      %v2501 = vunpack.c.l.b16 %v2440
      %v2502 = vunpack.c.l.b16 %v2441
      %v2503 = vunpack.c.l.b16 %v2442
      %v2504 = vunpack.c.l.b16 %v2443
      %v2505 = vunpack.c.l.b16 %v2444
      %v2506 = vunpack.c.l.b16 %v2445
      %v2507 = vunpack.c.l.b16 %v2446
      %v2508 = vunpack.c.l.b16 %v2447
      %v2509 = vunpack.c.l.b16 %v2448
      %v2510 = vunpack.c.l.b16 %v2449
      %v2511 = vunpack.c.l.b16 %v2450
      %v2512 = vpack.c.b16 %v2497, %v2496
      %v2513 = vpack.c.b16 %v2499, %v2498
      %v2514 = vpack.c.b16 %v2501, %v2500
      %v2515 = vpack.c.b16 %v2503, %v2502
      %v2516 = vpack.c.b16 %v2505, %v2504
      %v2517 = vpack.c.b16 %v2507, %v2506
      %v2518 = vpack.c.b16 %v2509, %v2508
      %v2519 = vpack.c.b16 %v2511, %v2510
      %2528 = vmatprep.subr.bf16.mxu0 0
      %2529 = vmatpush1.bf16.msra.mxu0 %v2512
      %2530 = vmatprep.subr.bf16.mxu0 0
      %2531 = vmatpush1.bf16.msra.mxu0 %v2513
      %2532 = vmatprep.subr.bf16.mxu0 0
      %2533 = vmatpush1.bf16.msra.mxu0 %v2514
      %2534 = vmatprep.subr.bf16.mxu0 0
      %2535 = vmatpush1.bf16.msra.mxu0 %v2515
      %2536 = vmatprep.subr.bf16.mxu0 0
      %2537 = vmatpush1.bf16.msra.mxu0 %v2516
      %2538 = vmatprep.subr.bf16.mxu0 0
      %2539 = vmatpush1.bf16.msra.mxu0 %v2517
      %2540 = vmatprep.subr.bf16.mxu0 0
      %2541 = vmatpush1.bf16.msra.mxu0 %v2518
      %2542 = vmatprep.subr.bf16.mxu0 0
      %2543 = vmatpush1.bf16.msra.mxu0 %v2519
      %2544 = vmatprep.subr.bf16.mxu0 0
      %2545 = vmatpush1.bf16.msra.mxu0 0
      %2546 = vmatprep.subr.bf16.mxu0 0
      %2547 = vmatpush1.bf16.msra.mxu0 0
      %2548 = vmatprep.subr.bf16.mxu0 0
      %2549 = vmatpush1.bf16.msra.mxu0 0
      %2550 = vmatprep.subr.bf16.mxu0 0
      %2551 = vmatpush1.bf16.msra.mxu0 0
      %2552 = vmatprep.subr.bf16.mxu0 0
      %2553 = vmatpush1.bf16.msra.mxu0 0
      %2554 = vmatprep.subr.bf16.mxu0 0
      %2555 = vmatpush1.bf16.msra.mxu0 0
      %2556 = vmatprep.subr.bf16.mxu0 0
      %2557 = vmatpush1.bf16.msra.mxu0 0
      %2558 = vmatprep.subr.bf16.mxu0 0
      %2559 = vmatpush1.bf16.msra.mxu0 0
      %2560 = vmatprep.mubr.bf16.mxu0 0
      %2561 = vmatmul.mubr.bf16.gmra.mrb[0].mxu0 %v2456
      %v2562 = vpop.f32.mrb[0].mxu0
      %v2563 = vadd.f32 0.0, %v2562
      %v2564 = vpop.f32.mrb[0].mxu0
      %v2565 = vpop.f32.mrb[0].mxu0
      %v2566 = vadd.f32 0.0, %v2565
      %v2567 = vpop.f32.mrb[0].mxu0
      %2568 = vmatprep.mubr.bf16.mxu0 0
      %2569 = vmatmul.mubr.bf16.gmra.mrb[0].mxu0 %v2458
      %v2570 = vpop.f32.mrb[0].mxu0
      %v2571 = vadd.f32 0.0, %v2570
      %v2572 = vpop.f32.mrb[0].mxu0
      %v2573 = vpop.f32.mrb[0].mxu0
      %v2574 = vadd.f32 0.0, %v2573
      %v2575 = vpop.f32.mrb[0].mxu0
      %2576 = vmatprep.mubr.bf16.mxu0 0
      %2577 = vmatmul.mubr.bf16.gmra.mrb[0].mxu0 %v2460
      %v2578 = vpop.f32.mrb[0].mxu0
      %v2579 = vadd.f32 0.0, %v2578
      %v2580 = vpop.f32.mrb[0].mxu0
      %v2581 = vpop.f32.mrb[0].mxu0
      %v2582 = vadd.f32 0.0, %v2581
      %v2583 = vpop.f32.mrb[0].mxu0
      %2584 = vmatprep.mubr.bf16.mxu0 0
      %2585 = vmatmul.mubr.bf16.gmra.mrb[0].mxu0 %v2462
      %v2586 = vpop.f32.mrb[0].mxu0
      %v2587 = vadd.f32 0.0, %v2586
      %v2588 = vpop.f32.mrb[0].mxu0
      %v2589 = vpop.f32.mrb[0].mxu0
      %v2590 = vadd.f32 0.0, %v2589
      %v2591 = vpop.f32.mrb[0].mxu0
      %2592 = vmatprep.mubr.bf16.mxu0 0
      %2593 = vmatmul.mubr.bf16.gmra.mrb[0].mxu0 %v2464
      %v2594 = vpop.f32.mrb[0].mxu0
      %v2595 = vadd.f32 0.0, %v2594
      %v2596 = vpop.f32.mrb[0].mxu0
      %v2597 = vpop.f32.mrb[0].mxu0
      %v2598 = vadd.f32 0.0, %v2597
      %v2599 = vpop.f32.mrb[0].mxu0
      %2600 = vmatprep.mubr.bf16.mxu0 0
      %2601 = vmatmul.mubr.bf16.gmra.mrb[0].mxu0 %v2466
      %v2602 = vpop.f32.mrb[0].mxu0
      %v2603 = vadd.f32 0.0, %v2602
      %v2604 = vpop.f32.mrb[0].mxu0
      %v2605 = vpop.f32.mrb[0].mxu0
      %v2606 = vadd.f32 0.0, %v2605
      %v2607 = vpop.f32.mrb[0].mxu0
      %2608 = vmatprep.mubr.bf16.mxu0 0
      %2609 = vmatmul.mubr.bf16.gmra.mrb[0].mxu0 %v2468
      %v2610 = vpop.f32.mrb[0].mxu0
      %v2611 = vadd.f32 0.0, %v2610
      %v2612 = vpop.f32.mrb[0].mxu0
      %v2613 = vpop.f32.mrb[0].mxu0
      %v2614 = vadd.f32 0.0, %v2613
      %v2615 = vpop.f32.mrb[0].mxu0
      %2616 = vmatprep.mubr.bf16.mxu0 0
      %2617 = vmatmul.mubr.bf16.gmra.mrb[0].mxu0 %v2470
      %v2618 = vpop.f32.mrb[0].mxu0
      %v2619 = vadd.f32 0.0, %v2618
      %v2620 = vpop.f32.mrb[0].mxu0
      %v2621 = vpop.f32.mrb[0].mxu0
      %v2622 = vadd.f32 0.0, %v2621
      %v2623 = vpop.f32.mrb[0].mxu0
      %2624 = vmatprep.mubr.bf16.mxu0 0
      %2625 = vmatmul.mubr.bf16.gmra.mrb[0].mxu0 %v2469
      %v2626 = vpop.f32.mrb[0].mxu0
      %v2627 = vadd.f32 0.0, %v2626
      %v2628 = vpop.f32.mrb[0].mxu0
      %v2629 = vpop.f32.mrb[0].mxu0
      %v2630 = vadd.f32 0.0, %v2629
      %v2631 = vpop.f32.mrb[0].mxu0
      %2632 = vdwg.mxu0
      %v2633 = vadd.f32 %v2415, %v2563
      %v2634 = vadd.f32 %v2416, %v2566
      %v2635 = vadd.f32 %v2417, %v2571
      %v2636 = vadd.f32 %v2418, %v2574
      %v2637 = vadd.f32 %v2419, %v2579
      %v2638 = vadd.f32 %v2420, %v2582
      %v2639 = vadd.f32 %v2421, %v2587
      %v2640 = vadd.f32 %v2422, %v2590
      %v2641 = vadd.f32 %v2423, %v2595
      %v2642 = vadd.f32 %v2424, %v2598
      %v2643 = vadd.f32 %v2425, %v2603
      %v2644 = vadd.f32 %v2426, %v2606
      %v2645 = vadd.f32 %v2427, %v2611
      %v2646 = vadd.f32 %v2428, %v2614
      %v2647 = vadd.f32 %v2429, %v2619
      %v2648 = vadd.f32 %v2430, %v2622
      %v2649 = vadd.f32 %v2431, %v2627
      %v2650 = vadd.f32 %v2432, %v2630
      %v2651 = vld [vmem:[%s192 + $0xc] sm:$0xc]
      %v2652 = vld [vmem:[%s192 + $0x10] sm:$0xf]
      %v2653 = vld [vmem:[%s192 + $0x14] sm:$0xf]
      %v2654 = vld [vmem:[%s192 + $0x18] sm:$0xf]
      %v2655 = vld [vmem:[%s192 + $0x1c] sm:$0xf]
      %v2656 = vld [vmem:[%s192 + $0x20] sm:$0xf]
      %v2657 = vld [vmem:[%s192 + $0x24] sm:$0xf]
      %v2658 = vld [vmem:[%s192 + $0x28] sm:$0xf]
      %v2659 = vld [vmem:[%s192 + $0x2c] sm:$0xf]
      %v2660 = vld [vmem:[%s192 + $0x30] sm:$0xf]
      %v2661 = vld [vmem:[%s192 + $0x34] sm:$0xf]
      %v2662 = vld [vmem:[%s192 + $0x38] sm:$0xf]
      %v2663 = vld [vmem:[%s192 + $0x3c] sm:$0xf]
      %v2664 = vld [vmem:[%s192 + $0x40] sm:$0xf]
      %v2665 = vld [vmem:[%s192 + $0x44] sm:$0xf]
      %v2666 = vld [vmem:[%s192 + $0x48] sm:$0xf]
      %v2667 = vld [vmem:[%s192 + $0x4c] sm:$0xf]
      %v2668 = vld [vmem:[%s192 + $0x50] sm:$0xf]
      %s2669 = scalar_lea.vmem %s1, 640
      %v2670 = vld [vmem:[%s2669] sm:$0xf]
      %v2671 = vld [vmem:[%s2669 + $0x4] sm:$0xf]
      %v2672 = vld [vmem:[%s2669 + $0x8] sm:$0xf]
      %v2673 = vld [vmem:[%s2669 + $0xc] sm:$0xf]
      %v2674 = vld [vmem:[%s2669 + $0x10] sm:$0xf]
      %v2675 = vld [vmem:[%s2669 + $0x14] sm:$0xf]
      %v2676 = vld [vmem:[%s2669 + $0x18] sm:$0xf]
      %v2677 = vld [vmem:[%s2669 + $0x1c] sm:$0xf]
      %v2678 = vld [vmem:[%s2669 + $0x20] sm:$0xf]
      %v2679 = vld [vmem:[%s2669 + $0x24] sm:$0xf]
      %v2680 = vld [vmem:[%s2669 + $0x28] sm:$0xf]
      %v2681 = vld [vmem:[%s2669 + $0x2c] sm:$0xf]
      %v2682 = vld [vmem:[%s2669 + $0x30] sm:$0xf]
      %v2683 = vld [vmem:[%s2669 + $0x34] sm:$0xf]
      %v2684 = vld [vmem:[%s2669 + $0x38] sm:$0xf]
      %v2685 = vld [vmem:[%s2669 + $0x3c] sm:$0xf]
      %v2704 = vunpack.c.l.b16 %v2651
      %v2705 = vunpack.c.l.b16 %v2652
      %v2706 = vunpack.c.l.b16 %v2653
      %v2707 = vunpack.c.l.b16 %v2654
      %v2708 = vunpack.c.l.b16 %v2655
      %v2709 = vunpack.c.l.b16 %v2656
      %v2710 = vunpack.c.l.b16 %v2657
      %v2711 = vunpack.c.l.b16 %v2658
      %v2712 = vunpack.c.l.b16 %v2659
      %v2713 = vunpack.c.l.b16 %v2660
      %v2714 = vunpack.c.l.b16 %v2661
      %v2715 = vunpack.c.l.b16 %v2662
      %v2716 = vunpack.c.l.b16 %v2663
      %v2717 = vunpack.c.l.b16 %v2664
      %v2718 = vunpack.c.l.b16 %v2665
      %v2719 = vunpack.c.l.b16 %v2666
      %v2720 = vunpack.c.l.b16 %v2667
      %v2721 = vunpack.c.l.b16 %v2668
      %v2722 = vpack.c.b16 %v2705, %v2704
      %v2723 = vpack.c.b16 %v2707, %v2706
      %v2724 = vpack.c.b16 %v2709, %v2708
      %v2725 = vpack.c.b16 %v2711, %v2710
      %v2726 = vpack.c.b16 %v2713, %v2712
      %v2727 = vpack.c.b16 %v2715, %v2714
      %v2728 = vpack.c.b16 %v2717, %v2716
      %v2729 = vpack.c.b16 %v2719, %v2718
      %v2730 = vpack.c.b16 %v2721, %v2720
      %v2731 = vrot.slane %v2722, 2
      %v2732 = vrot.slane %v2723, 2
      %v2733 = vsel %vm1182, %v2731, %v2732
      %v2734 = vrot.slane %v2724, 2
      %v2735 = vsel %vm1182, %v2732, %v2734
      %v2736 = vrot.slane %v2725, 2
      %v2737 = vsel %vm1182, %v2734, %v2736
      %v2738 = vrot.slane %v2726, 2
      %v2739 = vsel %vm1182, %v2736, %v2738
      %v2740 = vrot.slane %v2727, 2
      %v2741 = vsel %vm1182, %v2738, %v2740
      %v2742 = vrot.slane %v2728, 2
      %v2743 = vsel %vm1182, %v2740, %v2742
      %v2744 = vrot.slane %v2729, 2
      %v2745 = vsel %vm1182, %v2742, %v2744
      %v2746 = vrot.slane %v2730, 2
      %v2747 = vsel %vm1182, %v2744, %v2746
      %v2773 = vunpack.c.l.b16 %v2670
      %v2774 = vunpack.c.l.b16 %v2671
      %v2775 = vunpack.c.l.b16 %v2672
      %v2776 = vunpack.c.l.b16 %v2673
      %v2777 = vunpack.c.l.b16 %v2674
      %v2778 = vunpack.c.l.b16 %v2675
      %v2779 = vunpack.c.l.b16 %v2676
      %v2780 = vunpack.c.l.b16 %v2677
      %v2781 = vunpack.c.l.b16 %v2678
      %v2782 = vunpack.c.l.b16 %v2679
      %v2783 = vunpack.c.l.b16 %v2680
      %v2784 = vunpack.c.l.b16 %v2681
      %v2785 = vunpack.c.l.b16 %v2682
      %v2786 = vunpack.c.l.b16 %v2683
      %v2787 = vunpack.c.l.b16 %v2684
      %v2788 = vunpack.c.l.b16 %v2685
      %v2789 = vpack.c.b16 %v2774, %v2773
      %v2790 = vpack.c.b16 %v2776, %v2775
      %v2791 = vpack.c.b16 %v2778, %v2777
      %v2792 = vpack.c.b16 %v2780, %v2779
      %v2793 = vpack.c.b16 %v2782, %v2781
      %v2794 = vpack.c.b16 %v2784, %v2783
      %v2795 = vpack.c.b16 %v2786, %v2785
      %v2796 = vpack.c.b16 %v2788, %v2787
      %2805 = vmatprep.subr.bf16.mxu0 0
      %2806 = vmatpush1.bf16.msra.mxu0 %v2789
      %2807 = vmatprep.subr.bf16.mxu0 0
      %2808 = vmatpush1.bf16.msra.mxu0 %v2790
      %2809 = vmatprep.subr.bf16.mxu0 0
      %2810 = vmatpush1.bf16.msra.mxu0 %v2791
      %2811 = vmatprep.subr.bf16.mxu0 0
      %2812 = vmatpush1.bf16.msra.mxu0 %v2792
      %2813 = vmatprep.subr.bf16.mxu0 0
      %2814 = vmatpush1.bf16.msra.mxu0 %v2793
      %2815 = vmatprep.subr.bf16.mxu0 0
      %2816 = vmatpush1.bf16.msra.mxu0 %v2794
      %2817 = vmatprep.subr.bf16.mxu0 0
      %2818 = vmatpush1.bf16.msra.mxu0 %v2795
      %2819 = vmatprep.subr.bf16.mxu0 0
      %2820 = vmatpush1.bf16.msra.mxu0 %v2796
      %2821 = vmatprep.subr.bf16.mxu0 0
      %2822 = vmatpush1.bf16.msra.mxu0 0
      %2823 = vmatprep.subr.bf16.mxu0 0
      %2824 = vmatpush1.bf16.msra.mxu0 0
      %2825 = vmatprep.subr.bf16.mxu0 0
      %2826 = vmatpush1.bf16.msra.mxu0 0
      %2827 = vmatprep.subr.bf16.mxu0 0
      %2828 = vmatpush1.bf16.msra.mxu0 0
      %2829 = vmatprep.subr.bf16.mxu0 0
      %2830 = vmatpush1.bf16.msra.mxu0 0
      %2831 = vmatprep.subr.bf16.mxu0 0
      %2832 = vmatpush1.bf16.msra.mxu0 0
      %2833 = vmatprep.subr.bf16.mxu0 0
      %2834 = vmatpush1.bf16.msra.mxu0 0
      %2835 = vmatprep.subr.bf16.mxu0 0
      %2836 = vmatpush1.bf16.msra.mxu0 0
      %2837 = vmatprep.mubr.bf16.mxu0 0
      %2838 = vmatmul.mubr.bf16.gmra.mrb[0].mxu0 %v2733
      %v2839 = vpop.f32.mrb[0].mxu0
      %v2840 = vadd.f32 0.0, %v2839
      %v2841 = vpop.f32.mrb[0].mxu0
      %v2842 = vpop.f32.mrb[0].mxu0
      %v2843 = vadd.f32 0.0, %v2842
      %v2844 = vpop.f32.mrb[0].mxu0
      %2845 = vmatprep.mubr.bf16.mxu0 0
      %2846 = vmatmul.mubr.bf16.gmra.mrb[0].mxu0 %v2735
      %v2847 = vpop.f32.mrb[0].mxu0
      %v2848 = vadd.f32 0.0, %v2847
      %v2849 = vpop.f32.mrb[0].mxu0
      %v2850 = vpop.f32.mrb[0].mxu0
      %v2851 = vadd.f32 0.0, %v2850
      %v2852 = vpop.f32.mrb[0].mxu0
      %2853 = vmatprep.mubr.bf16.mxu0 0
      %2854 = vmatmul.mubr.bf16.gmra.mrb[0].mxu0 %v2737
      %v2855 = vpop.f32.mrb[0].mxu0
      %v2856 = vadd.f32 0.0, %v2855
      %v2857 = vpop.f32.mrb[0].mxu0
      %v2858 = vpop.f32.mrb[0].mxu0
      %v2859 = vadd.f32 0.0, %v2858
      %v2860 = vpop.f32.mrb[0].mxu0
      %2861 = vmatprep.mubr.bf16.mxu0 0
      %2862 = vmatmul.mubr.bf16.gmra.mrb[0].mxu0 %v2739
      %v2863 = vpop.f32.mrb[0].mxu0
      %v2864 = vadd.f32 0.0, %v2863
      %v2865 = vpop.f32.mrb[0].mxu0
      %v2866 = vpop.f32.mrb[0].mxu0
      %v2867 = vadd.f32 0.0, %v2866
      %v2868 = vpop.f32.mrb[0].mxu0
      %2869 = vmatprep.mubr.bf16.mxu0 0
      %2870 = vmatmul.mubr.bf16.gmra.mrb[0].mxu0 %v2741
      %v2871 = vpop.f32.mrb[0].mxu0
      %v2872 = vadd.f32 0.0, %v2871
      %v2873 = vpop.f32.mrb[0].mxu0
      %v2874 = vpop.f32.mrb[0].mxu0
      %v2875 = vadd.f32 0.0, %v2874
      %v2876 = vpop.f32.mrb[0].mxu0
      %2877 = vmatprep.mubr.bf16.mxu0 0
      %2878 = vmatmul.mubr.bf16.gmra.mrb[0].mxu0 %v2743
      %v2879 = vpop.f32.mrb[0].mxu0
      %v2880 = vadd.f32 0.0, %v2879
      %v2881 = vpop.f32.mrb[0].mxu0
      %v2882 = vpop.f32.mrb[0].mxu0
      %v2883 = vadd.f32 0.0, %v2882
      %v2884 = vpop.f32.mrb[0].mxu0
      %2885 = vmatprep.mubr.bf16.mxu0 0
      %2886 = vmatmul.mubr.bf16.gmra.mrb[0].mxu0 %v2745
      %v2887 = vpop.f32.mrb[0].mxu0
      %v2888 = vadd.f32 0.0, %v2887
      %v2889 = vpop.f32.mrb[0].mxu0
      %v2890 = vpop.f32.mrb[0].mxu0
      %v2891 = vadd.f32 0.0, %v2890
      %v2892 = vpop.f32.mrb[0].mxu0
      %2893 = vmatprep.mubr.bf16.mxu0 0
      %2894 = vmatmul.mubr.bf16.gmra.mrb[0].mxu0 %v2747
      %v2895 = vpop.f32.mrb[0].mxu0
      %v2896 = vadd.f32 0.0, %v2895
      %v2897 = vpop.f32.mrb[0].mxu0
      %v2898 = vpop.f32.mrb[0].mxu0
      %v2899 = vadd.f32 0.0, %v2898
      %v2900 = vpop.f32.mrb[0].mxu0
      %2901 = vmatprep.mubr.bf16.mxu0 0
      %2902 = vmatmul.mubr.bf16.gmra.mrb[0].mxu0 %v2746
      %v2903 = vpop.f32.mrb[0].mxu0
      %v2904 = vadd.f32 0.0, %v2903
      %v2905 = vpop.f32.mrb[0].mxu0
      %v2906 = vpop.f32.mrb[0].mxu0
      %v2907 = vadd.f32 0.0, %v2906
      %v2908 = vpop.f32.mrb[0].mxu0
      %2909 = vdwg.mxu0
      %v2910 = vadd.f32 %v2633, %v2840
      %v2911 = vadd.f32 %v2634, %v2843
      %v2912 = vadd.f32 %v2635, %v2848
      %v2913 = vadd.f32 %v2636, %v2851
      %v2914 = vadd.f32 %v2637, %v2856
      %v2915 = vadd.f32 %v2638, %v2859
      %v2916 = vadd.f32 %v2639, %v2864
      %v2917 = vadd.f32 %v2640, %v2867
      %v2918 = vadd.f32 %v2641, %v2872
      %v2919 = vadd.f32 %v2642, %v2875
      %v2920 = vadd.f32 %v2643, %v2880
      %v2921 = vadd.f32 %v2644, %v2883
      %v2922 = vadd.f32 %v2645, %v2888
      %v2923 = vadd.f32 %v2646, %v2891
      %v2924 = vadd.f32 %v2647, %v2896
      %v2925 = vadd.f32 %v2648, %v2899
      %v2926 = vadd.f32 %v2649, %v2904
      %v2927 = vadd.f32 %v2650, %v2907
      %v2928 = vld [vmem:[%s192 + $0xc] sm:$0xc]
      %v2929 = vld [vmem:[%s192 + $0x10] sm:$0xf]
      %v2930 = vld [vmem:[%s192 + $0x14] sm:$0xf]
      %v2931 = vld [vmem:[%s192 + $0x18] sm:$0xf]
      %v2932 = vld [vmem:[%s192 + $0x1c] sm:$0xf]
      %v2933 = vld [vmem:[%s192 + $0x20] sm:$0xf]
      %v2934 = vld [vmem:[%s192 + $0x24] sm:$0xf]
      %v2935 = vld [vmem:[%s192 + $0x28] sm:$0xf]
      %v2936 = vld [vmem:[%s192 + $0x2c] sm:$0xf]
      %v2937 = vld [vmem:[%s192 + $0x30] sm:$0xf]
      %v2938 = vld [vmem:[%s192 + $0x34] sm:$0xf]
      %v2939 = vld [vmem:[%s192 + $0x38] sm:$0xf]
      %v2940 = vld [vmem:[%s192 + $0x3c] sm:$0xf]
      %v2941 = vld [vmem:[%s192 + $0x40] sm:$0xf]
      %v2942 = vld [vmem:[%s192 + $0x44] sm:$0xf]
      %v2943 = vld [vmem:[%s192 + $0x48] sm:$0xf]
      %v2944 = vld [vmem:[%s192 + $0x4c] sm:$0xf]
      %v2945 = vld [vmem:[%s192 + $0x50] sm:$0xf]
      %v2946 = vld [vmem:[%s192 + $0x54] sm:$0x1]
      %s2947 = scalar_lea.vmem %s1, 704
      %v2948 = vld [vmem:[%s2947] sm:$0xf]
      %v2949 = vld [vmem:[%s2947 + $0x4] sm:$0xf]
      %v2950 = vld [vmem:[%s2947 + $0x8] sm:$0xf]
      %v2951 = vld [vmem:[%s2947 + $0xc] sm:$0xf]
      %v2952 = vld [vmem:[%s2947 + $0x10] sm:$0xf]
      %v2953 = vld [vmem:[%s2947 + $0x14] sm:$0xf]
      %v2954 = vld [vmem:[%s2947 + $0x18] sm:$0xf]
      %v2955 = vld [vmem:[%s2947 + $0x1c] sm:$0xf]
      %v2956 = vld [vmem:[%s2947 + $0x20] sm:$0xf]
      %v2957 = vld [vmem:[%s2947 + $0x24] sm:$0xf]
      %v2958 = vld [vmem:[%s2947 + $0x28] sm:$0xf]
      %v2959 = vld [vmem:[%s2947 + $0x2c] sm:$0xf]
      %v2960 = vld [vmem:[%s2947 + $0x30] sm:$0xf]
      %v2961 = vld [vmem:[%s2947 + $0x34] sm:$0xf]
      %v2962 = vld [vmem:[%s2947 + $0x38] sm:$0xf]
      %v2963 = vld [vmem:[%s2947 + $0x3c] sm:$0xf]
      %v2983 = vunpack.c.l.b16 %v2928
      %v2984 = vunpack.c.l.b16 %v2929
      %v2985 = vunpack.c.l.b16 %v2930
      %v2986 = vunpack.c.l.b16 %v2931
      %v2987 = vunpack.c.l.b16 %v2932
      %v2988 = vunpack.c.l.b16 %v2933
      %v2989 = vunpack.c.l.b16 %v2934
      %v2990 = vunpack.c.l.b16 %v2935
      %v2991 = vunpack.c.l.b16 %v2936
      %v2992 = vunpack.c.l.b16 %v2937
      %v2993 = vunpack.c.l.b16 %v2938
      %v2994 = vunpack.c.l.b16 %v2939
      %v2995 = vunpack.c.l.b16 %v2940
      %v2996 = vunpack.c.l.b16 %v2941
      %v2997 = vunpack.c.l.b16 %v2942
      %v2998 = vunpack.c.l.b16 %v2943
      %v2999 = vunpack.c.l.b16 %v2944
      %v3000 = vunpack.c.l.b16 %v2945
      %v3001 = vunpack.c.l.b16 %v2946
      %v3002 = vpack.c.b16 %v2984, %v2983
      %v3003 = vpack.c.b16 %v2986, %v2985
      %v3004 = vpack.c.b16 %v2988, %v2987
      %v3005 = vpack.c.b16 %v2990, %v2989
      %v3006 = vpack.c.b16 %v2992, %v2991
      %v3007 = vpack.c.b16 %v2994, %v2993
      %v3008 = vpack.c.b16 %v2996, %v2995
      %v3009 = vpack.c.b16 %v2998, %v2997
      %v3010 = vpack.c.b16 %v3000, %v2999
      %v3011 = vpack.c.b16 %v3001, %v3001
      %vm3012 = vsmask.f32 5376
      %v3014 = vshrl.u32 %v3002, 16
      %v3016 = vrot.slane %v3014, 2
      %v3017 = vshll.u32 %v3002, 16
      %v3019 = vrot.slane %v3017, 3
      %v3020 = vor.u32 %v3016, %v3019
      %v3022 = vshrl.u32 %v3003, 16
      %v3024 = vrot.slane %v3022, 2
      %v3025 = vshll.u32 %v3003, 16
      %v3027 = vrot.slane %v3025, 3
      %v3028 = vor.u32 %v3024, %v3027
      %v3029 = vsel %vm3012, %v3020, %v3028
      %v3031 = vshrl.u32 %v3004, 16
      %v3033 = vrot.slane %v3031, 2
      %v3034 = vshll.u32 %v3004, 16
      %v3036 = vrot.slane %v3034, 3
      %v3037 = vor.u32 %v3033, %v3036
      %v3038 = vsel %vm3012, %v3028, %v3037
      %v3040 = vshrl.u32 %v3005, 16
      %v3042 = vrot.slane %v3040, 2
      %v3043 = vshll.u32 %v3005, 16
      %v3045 = vrot.slane %v3043, 3
      %v3046 = vor.u32 %v3042, %v3045
      %v3047 = vsel %vm3012, %v3037, %v3046
      %v3049 = vshrl.u32 %v3006, 16
      %v3051 = vrot.slane %v3049, 2
      %v3052 = vshll.u32 %v3006, 16
      %v3054 = vrot.slane %v3052, 3
      %v3055 = vor.u32 %v3051, %v3054
      %v3056 = vsel %vm3012, %v3046, %v3055
      %v3058 = vshrl.u32 %v3007, 16
      %v3060 = vrot.slane %v3058, 2
      %v3061 = vshll.u32 %v3007, 16
      %v3063 = vrot.slane %v3061, 3
      %v3064 = vor.u32 %v3060, %v3063
      %v3065 = vsel %vm3012, %v3055, %v3064
      %v3067 = vshrl.u32 %v3008, 16
      %v3069 = vrot.slane %v3067, 2
      %v3070 = vshll.u32 %v3008, 16
      %v3072 = vrot.slane %v3070, 3
      %v3073 = vor.u32 %v3069, %v3072
      %v3074 = vsel %vm3012, %v3064, %v3073
      %v3076 = vshrl.u32 %v3009, 16
      %v3078 = vrot.slane %v3076, 2
      %v3079 = vshll.u32 %v3009, 16
      %v3081 = vrot.slane %v3079, 3
      %v3082 = vor.u32 %v3078, %v3081
      %v3083 = vsel %vm3012, %v3073, %v3082
      %v3085 = vshrl.u32 %v3010, 16
      %v3087 = vrot.slane %v3085, 2
      %v3088 = vshll.u32 %v3010, 16
      %v3090 = vrot.slane %v3088, 3
      %v3091 = vor.u32 %v3087, %v3090
      %v3092 = vsel %vm3012, %v3082, %v3091
      %v3094 = vshll.u32 %v3011, 16
      %v3096 = vrot.slane %v3094, 3
      %v3097 = vsel %vm3012, %v3091, %v3096
      %v3123 = vunpack.c.l.b16 %v2948
      %v3124 = vunpack.c.l.b16 %v2949
      %v3125 = vunpack.c.l.b16 %v2950
      %v3126 = vunpack.c.l.b16 %v2951
      %v3127 = vunpack.c.l.b16 %v2952
      %v3128 = vunpack.c.l.b16 %v2953
      %v3129 = vunpack.c.l.b16 %v2954
      %v3130 = vunpack.c.l.b16 %v2955
      %v3131 = vunpack.c.l.b16 %v2956
      %v3132 = vunpack.c.l.b16 %v2957
      %v3133 = vunpack.c.l.b16 %v2958
      %v3134 = vunpack.c.l.b16 %v2959
      %v3135 = vunpack.c.l.b16 %v2960
      %v3136 = vunpack.c.l.b16 %v2961
      %v3137 = vunpack.c.l.b16 %v2962
      %v3138 = vunpack.c.l.b16 %v2963
      %v3139 = vpack.c.b16 %v3124, %v3123
      %v3140 = vpack.c.b16 %v3126, %v3125
      %v3141 = vpack.c.b16 %v3128, %v3127
      %v3142 = vpack.c.b16 %v3130, %v3129
      %v3143 = vpack.c.b16 %v3132, %v3131
      %v3144 = vpack.c.b16 %v3134, %v3133
      %v3145 = vpack.c.b16 %v3136, %v3135
      %v3146 = vpack.c.b16 %v3138, %v3137
      %3155 = vmatprep.subr.bf16.mxu0 0
      %3156 = vmatpush1.bf16.msra.mxu0 %v3139
      %3157 = vmatprep.subr.bf16.mxu0 0
      %3158 = vmatpush1.bf16.msra.mxu0 %v3140
      %3159 = vmatprep.subr.bf16.mxu0 0
      %3160 = vmatpush1.bf16.msra.mxu0 %v3141
      %3161 = vmatprep.subr.bf16.mxu0 0
      %3162 = vmatpush1.bf16.msra.mxu0 %v3142
      %3163 = vmatprep.subr.bf16.mxu0 0
      %3164 = vmatpush1.bf16.msra.mxu0 %v3143
      %3165 = vmatprep.subr.bf16.mxu0 0
      %3166 = vmatpush1.bf16.msra.mxu0 %v3144
      %3167 = vmatprep.subr.bf16.mxu0 0
      %3168 = vmatpush1.bf16.msra.mxu0 %v3145
      %3169 = vmatprep.subr.bf16.mxu0 0
      %3170 = vmatpush1.bf16.msra.mxu0 %v3146
      %3171 = vmatprep.subr.bf16.mxu0 0
      %3172 = vmatpush1.bf16.msra.mxu0 0
      %3173 = vmatprep.subr.bf16.mxu0 0
      %3174 = vmatpush1.bf16.msra.mxu0 0
      %3175 = vmatprep.subr.bf16.mxu0 0
      %3176 = vmatpush1.bf16.msra.mxu0 0
      %3177 = vmatprep.subr.bf16.mxu0 0
      %3178 = vmatpush1.bf16.msra.mxu0 0
      %3179 = vmatprep.subr.bf16.mxu0 0
      %3180 = vmatpush1.bf16.msra.mxu0 0
      %3181 = vmatprep.subr.bf16.mxu0 0
      %3182 = vmatpush1.bf16.msra.mxu0 0
      %3183 = vmatprep.subr.bf16.mxu0 0
      %3184 = vmatpush1.bf16.msra.mxu0 0
      %3185 = vmatprep.subr.bf16.mxu0 0
      %3186 = vmatpush1.bf16.msra.mxu0 0
      %3187 = vmatprep.mubr.bf16.mxu0 0
      %3188 = vmatmul.mubr.bf16.gmra.mrb[0].mxu0 %v3029
      %v3189 = vpop.f32.mrb[0].mxu0
      %v3190 = vadd.f32 0.0, %v3189
      %v3191 = vpop.f32.mrb[0].mxu0
      %v3192 = vpop.f32.mrb[0].mxu0
      %v3193 = vadd.f32 0.0, %v3192
      %v3194 = vpop.f32.mrb[0].mxu0
      %3195 = vmatprep.mubr.bf16.mxu0 0
      %3196 = vmatmul.mubr.bf16.gmra.mrb[0].mxu0 %v3038
      %v3197 = vpop.f32.mrb[0].mxu0
      %v3198 = vadd.f32 0.0, %v3197
      %v3199 = vpop.f32.mrb[0].mxu0
      %v3200 = vpop.f32.mrb[0].mxu0
      %v3201 = vadd.f32 0.0, %v3200
      %v3202 = vpop.f32.mrb[0].mxu0
      %3203 = vmatprep.mubr.bf16.mxu0 0
      %3204 = vmatmul.mubr.bf16.gmra.mrb[0].mxu0 %v3047
      %v3205 = vpop.f32.mrb[0].mxu0
      %v3206 = vadd.f32 0.0, %v3205
      %v3207 = vpop.f32.mrb[0].mxu0
      %v3208 = vpop.f32.mrb[0].mxu0
      %v3209 = vadd.f32 0.0, %v3208
      %v3210 = vpop.f32.mrb[0].mxu0
      %3211 = vmatprep.mubr.bf16.mxu0 0
      %3212 = vmatmul.mubr.bf16.gmra.mrb[0].mxu0 %v3056
      %v3213 = vpop.f32.mrb[0].mxu0
      %v3214 = vadd.f32 0.0, %v3213
      %v3215 = vpop.f32.mrb[0].mxu0
      %v3216 = vpop.f32.mrb[0].mxu0
      %v3217 = vadd.f32 0.0, %v3216
      %v3218 = vpop.f32.mrb[0].mxu0
      %3219 = vmatprep.mubr.bf16.mxu0 0
      %3220 = vmatmul.mubr.bf16.gmra.mrb[0].mxu0 %v3065
      %v3221 = vpop.f32.mrb[0].mxu0
      %v3222 = vadd.f32 0.0, %v3221
      %v3223 = vpop.f32.mrb[0].mxu0
      %v3224 = vpop.f32.mrb[0].mxu0
      %v3225 = vadd.f32 0.0, %v3224
      %v3226 = vpop.f32.mrb[0].mxu0
      %3227 = vmatprep.mubr.bf16.mxu0 0
      %3228 = vmatmul.mubr.bf16.gmra.mrb[0].mxu0 %v3074
      %v3229 = vpop.f32.mrb[0].mxu0
      %v3230 = vadd.f32 0.0, %v3229
      %v3231 = vpop.f32.mrb[0].mxu0
      %v3232 = vpop.f32.mrb[0].mxu0
      %v3233 = vadd.f32 0.0, %v3232
      %v3234 = vpop.f32.mrb[0].mxu0
      %3235 = vmatprep.mubr.bf16.mxu0 0
      %3236 = vmatmul.mubr.bf16.gmra.mrb[0].mxu0 %v3083
      %v3237 = vpop.f32.mrb[0].mxu0
      %v3238 = vadd.f32 0.0, %v3237
      %v3239 = vpop.f32.mrb[0].mxu0
      %v3240 = vpop.f32.mrb[0].mxu0
      %v3241 = vadd.f32 0.0, %v3240
      %v3242 = vpop.f32.mrb[0].mxu0
      %3243 = vmatprep.mubr.bf16.mxu0 0
      %3244 = vmatmul.mubr.bf16.gmra.mrb[0].mxu0 %v3092
      %v3245 = vpop.f32.mrb[0].mxu0
      %v3246 = vadd.f32 0.0, %v3245
      %v3247 = vpop.f32.mrb[0].mxu0
      %v3248 = vpop.f32.mrb[0].mxu0
      %v3249 = vadd.f32 0.0, %v3248
      %v3250 = vpop.f32.mrb[0].mxu0
      %3251 = vmatprep.mubr.bf16.mxu0 0
      %3252 = vmatmul.mubr.bf16.gmra.mrb[0].mxu0 %v3097
      %v3253 = vpop.f32.mrb[0].mxu0
      %v3254 = vadd.f32 0.0, %v3253
      %v3255 = vpop.f32.mrb[0].mxu0
      %v3256 = vpop.f32.mrb[0].mxu0
      %v3257 = vadd.f32 0.0, %v3256
      %v3258 = vpop.f32.mrb[0].mxu0
      %3259 = vdwg.mxu0
      %v3260 = vadd.f32 %v2910, %v3190
      %v3261 = vadd.f32 %v2911, %v3193
      %v3262 = vadd.f32 %v2912, %v3198
      %v3263 = vadd.f32 %v2913, %v3201
      %v3264 = vadd.f32 %v2914, %v3206
      %v3265 = vadd.f32 %v2915, %v3209
      %v3266 = vadd.f32 %v2916, %v3214
      %v3267 = vadd.f32 %v2917, %v3217
      %v3268 = vadd.f32 %v2918, %v3222
      %v3269 = vadd.f32 %v2919, %v3225
      %v3270 = vadd.f32 %v2920, %v3230
      %v3271 = vadd.f32 %v2921, %v3233
      %v3272 = vadd.f32 %v2922, %v3238
      %v3273 = vadd.f32 %v2923, %v3241
      %v3274 = vadd.f32 %v2924, %v3246
      %v3275 = vadd.f32 %v2925, %v3249
      %v3276 = vadd.f32 %v2926, %v3254
      %v3277 = vadd.f32 %v2927, %v3257
      %v3278 = vld [vmem:[%s192 + $0xc] sm:$0x8]
      %s3279 = scalar_lea.vmem %s1, 768
      %v3280 = vld [vmem:[%s3279] sm:$0xf]
      %v3281 = vld [vmem:[%s3279 + $0x4] sm:$0xf]
      %v3282 = vld [vmem:[%s3279 + $0x8] sm:$0xf]
      %v3283 = vld [vmem:[%s3279 + $0xc] sm:$0xf]
      %v3284 = vld [vmem:[%s3279 + $0x10] sm:$0xf]
      %v3285 = vld [vmem:[%s3279 + $0x14] sm:$0xf]
      %v3286 = vld [vmem:[%s3279 + $0x18] sm:$0xf]
      %v3287 = vld [vmem:[%s3279 + $0x1c] sm:$0xf]
      %v3288 = vld [vmem:[%s3279 + $0x20] sm:$0xf]
      %v3289 = vld [vmem:[%s3279 + $0x24] sm:$0xf]
      %v3290 = vld [vmem:[%s3279 + $0x28] sm:$0xf]
      %v3291 = vld [vmem:[%s3279 + $0x2c] sm:$0xf]
      %v3292 = vld [vmem:[%s3279 + $0x30] sm:$0xf]
      %v3293 = vld [vmem:[%s3279 + $0x34] sm:$0xf]
      %v3294 = vld [vmem:[%s3279 + $0x38] sm:$0xf]
      %v3295 = vld [vmem:[%s3279 + $0x3c] sm:$0xf]
      %v3297 = vunpack.c.l.b16 %v3278
      %v3298 = vpack.c.b16 %v2984, %v3297
      %v3299 = vrot.slane %v3298, 3
      %v3300 = vrot.slane %v3003, 3
      %v3301 = vsel %vm1464, %v3299, %v3300
      %v3302 = vrot.slane %v3004, 3
      %v3303 = vsel %vm1464, %v3300, %v3302
      %v3304 = vrot.slane %v3005, 3
      %v3305 = vsel %vm1464, %v3302, %v3304
      %v3306 = vrot.slane %v3006, 3
      %v3307 = vsel %vm1464, %v3304, %v3306
      %v3308 = vrot.slane %v3007, 3
      %v3309 = vsel %vm1464, %v3306, %v3308
      %v3310 = vrot.slane %v3008, 3
      %v3311 = vsel %vm1464, %v3308, %v3310
      %v3312 = vrot.slane %v3009, 3
      %v3313 = vsel %vm1464, %v3310, %v3312
      %v3314 = vrot.slane %v3010, 3
      %v3315 = vsel %vm1464, %v3312, %v3314
      %v3316 = vrot.slane %v3011, 3
      %v3317 = vsel %vm1464, %v3314, %v3316
      %v3343 = vunpack.c.l.b16 %v3280
      %v3344 = vunpack.c.l.b16 %v3281
      %v3345 = vunpack.c.l.b16 %v3282
      %v3346 = vunpack.c.l.b16 %v3283
      %v3347 = vunpack.c.l.b16 %v3284
      %v3348 = vunpack.c.l.b16 %v3285
      %v3349 = vunpack.c.l.b16 %v3286
      %v3350 = vunpack.c.l.b16 %v3287
      %v3351 = vunpack.c.l.b16 %v3288
      %v3352 = vunpack.c.l.b16 %v3289
      %v3353 = vunpack.c.l.b16 %v3290
      %v3354 = vunpack.c.l.b16 %v3291
      %v3355 = vunpack.c.l.b16 %v3292
      %v3356 = vunpack.c.l.b16 %v3293
      %v3357 = vunpack.c.l.b16 %v3294
      %v3358 = vunpack.c.l.b16 %v3295
      %v3359 = vpack.c.b16 %v3344, %v3343
      %v3360 = vpack.c.b16 %v3346, %v3345
      %v3361 = vpack.c.b16 %v3348, %v3347
      %v3362 = vpack.c.b16 %v3350, %v3349
      %v3363 = vpack.c.b16 %v3352, %v3351
      %v3364 = vpack.c.b16 %v3354, %v3353
      %v3365 = vpack.c.b16 %v3356, %v3355
      %v3366 = vpack.c.b16 %v3358, %v3357
      %3375 = vmatprep.subr.bf16.mxu0 0
      %3376 = vmatpush1.bf16.msra.mxu0 %v3359
      %3377 = vmatprep.subr.bf16.mxu0 0
      %3378 = vmatpush1.bf16.msra.mxu0 %v3360
      %3379 = vmatprep.subr.bf16.mxu0 0
      %3380 = vmatpush1.bf16.msra.mxu0 %v3361
      %3381 = vmatprep.subr.bf16.mxu0 0
      %3382 = vmatpush1.bf16.msra.mxu0 %v3362
      %3383 = vmatprep.subr.bf16.mxu0 0
      %3384 = vmatpush1.bf16.msra.mxu0 %v3363
      %3385 = vmatprep.subr.bf16.mxu0 0
      %3386 = vmatpush1.bf16.msra.mxu0 %v3364
      %3387 = vmatprep.subr.bf16.mxu0 0
      %3388 = vmatpush1.bf16.msra.mxu0 %v3365
      %3389 = vmatprep.subr.bf16.mxu0 0
      %3390 = vmatpush1.bf16.msra.mxu0 %v3366
      %3391 = vmatprep.subr.bf16.mxu0 0
      %3392 = vmatpush1.bf16.msra.mxu0 0
      %3393 = vmatprep.subr.bf16.mxu0 0
      %3394 = vmatpush1.bf16.msra.mxu0 0
      %3395 = vmatprep.subr.bf16.mxu0 0
      %3396 = vmatpush1.bf16.msra.mxu0 0
      %3397 = vmatprep.subr.bf16.mxu0 0
      %3398 = vmatpush1.bf16.msra.mxu0 0
      %3399 = vmatprep.subr.bf16.mxu0 0
      %3400 = vmatpush1.bf16.msra.mxu0 0
      %3401 = vmatprep.subr.bf16.mxu0 0
      %3402 = vmatpush1.bf16.msra.mxu0 0
      %3403 = vmatprep.subr.bf16.mxu0 0
      %3404 = vmatpush1.bf16.msra.mxu0 0
      %3405 = vmatprep.subr.bf16.mxu0 0
      %3406 = vmatpush1.bf16.msra.mxu0 0
      %3407 = vmatprep.mubr.bf16.mxu0 0
      %3408 = vmatmul.mubr.bf16.gmra.mrb[0].mxu0 %v3301
      %v3409 = vpop.f32.mrb[0].mxu0
      %v3410 = vadd.f32 0.0, %v3409
      %v3411 = vpop.f32.mrb[0].mxu0
      %v3412 = vpop.f32.mrb[0].mxu0
      %v3413 = vadd.f32 0.0, %v3412
      %v3414 = vpop.f32.mrb[0].mxu0
      %3415 = vmatprep.mubr.bf16.mxu0 0
      %3416 = vmatmul.mubr.bf16.gmra.mrb[0].mxu0 %v3303
      %v3417 = vpop.f32.mrb[0].mxu0
      %v3418 = vadd.f32 0.0, %v3417
      %v3419 = vpop.f32.mrb[0].mxu0
      %v3420 = vpop.f32.mrb[0].mxu0
      %v3421 = vadd.f32 0.0, %v3420
      %v3422 = vpop.f32.mrb[0].mxu0
      %3423 = vmatprep.mubr.bf16.mxu0 0
      %3424 = vmatmul.mubr.bf16.gmra.mrb[0].mxu0 %v3305
      %v3425 = vpop.f32.mrb[0].mxu0
      %v3426 = vadd.f32 0.0, %v3425
      %v3427 = vpop.f32.mrb[0].mxu0
      %v3428 = vpop.f32.mrb[0].mxu0
      %v3429 = vadd.f32 0.0, %v3428
      %v3430 = vpop.f32.mrb[0].mxu0
      %3431 = vmatprep.mubr.bf16.mxu0 0
      %3432 = vmatmul.mubr.bf16.gmra.mrb[0].mxu0 %v3307
      %v3433 = vpop.f32.mrb[0].mxu0
      %v3434 = vadd.f32 0.0, %v3433
      %v3435 = vpop.f32.mrb[0].mxu0
      %v3436 = vpop.f32.mrb[0].mxu0
      %v3437 = vadd.f32 0.0, %v3436
      %v3438 = vpop.f32.mrb[0].mxu0
      %3439 = vmatprep.mubr.bf16.mxu0 0
      %3440 = vmatmul.mubr.bf16.gmra.mrb[0].mxu0 %v3309
      %v3441 = vpop.f32.mrb[0].mxu0
      %v3442 = vadd.f32 0.0, %v3441
      %v3443 = vpop.f32.mrb[0].mxu0
      %v3444 = vpop.f32.mrb[0].mxu0
      %v3445 = vadd.f32 0.0, %v3444
      %v3446 = vpop.f32.mrb[0].mxu0
      %3447 = vmatprep.mubr.bf16.mxu0 0
      %3448 = vmatmul.mubr.bf16.gmra.mrb[0].mxu0 %v3311
      %v3449 = vpop.f32.mrb[0].mxu0
      %v3450 = vadd.f32 0.0, %v3449
      %v3451 = vpop.f32.mrb[0].mxu0
      %v3452 = vpop.f32.mrb[0].mxu0
      %v3453 = vadd.f32 0.0, %v3452
      %v3454 = vpop.f32.mrb[0].mxu0
      %3455 = vmatprep.mubr.bf16.mxu0 0
      %3456 = vmatmul.mubr.bf16.gmra.mrb[0].mxu0 %v3313
      %v3457 = vpop.f32.mrb[0].mxu0
      %v3458 = vadd.f32 0.0, %v3457
      %v3459 = vpop.f32.mrb[0].mxu0
      %v3460 = vpop.f32.mrb[0].mxu0
      %v3461 = vadd.f32 0.0, %v3460
      %v3462 = vpop.f32.mrb[0].mxu0
      %3463 = vmatprep.mubr.bf16.mxu0 0
      %3464 = vmatmul.mubr.bf16.gmra.mrb[0].mxu0 %v3315
      %v3465 = vpop.f32.mrb[0].mxu0
      %v3466 = vadd.f32 0.0, %v3465
      %v3467 = vpop.f32.mrb[0].mxu0
      %v3468 = vpop.f32.mrb[0].mxu0
      %v3469 = vadd.f32 0.0, %v3468
      %v3470 = vpop.f32.mrb[0].mxu0
      %3471 = vmatprep.mubr.bf16.mxu0 0
      %3472 = vmatmul.mubr.bf16.gmra.mrb[0].mxu0 %v3317
      %v3473 = vpop.f32.mrb[0].mxu0
      %v3474 = vadd.f32 0.0, %v3473
      %v3475 = vpop.f32.mrb[0].mxu0
      %v3476 = vpop.f32.mrb[0].mxu0
      %v3477 = vadd.f32 0.0, %v3476
      %v3478 = vpop.f32.mrb[0].mxu0
      %3479 = vdwg.mxu0
      %v3480 = vadd.f32 %v3260, %v3410
      %v3481 = vadd.f32 %v3261, %v3413
      %v3482 = vadd.f32 %v3262, %v3418
      %v3483 = vadd.f32 %v3263, %v3421
      %v3484 = vadd.f32 %v3264, %v3426
      %v3485 = vadd.f32 %v3265, %v3429
      %v3486 = vadd.f32 %v3266, %v3434
      %v3487 = vadd.f32 %v3267, %v3437
      %v3488 = vadd.f32 %v3268, %v3442
      %v3489 = vadd.f32 %v3269, %v3445
      %v3490 = vadd.f32 %v3270, %v3450
      %v3491 = vadd.f32 %v3271, %v3453
      %v3492 = vadd.f32 %v3272, %v3458
      %v3493 = vadd.f32 %v3273, %v3461
      %v3494 = vadd.f32 %v3274, %v3466
      %v3495 = vadd.f32 %v3275, %v3469
      %v3496 = vadd.f32 %v3276, %v3474
      %v3497 = vadd.f32 %v3277, %v3477
      %v3498 = vld [vmem:[%s192 + $0x54] sm:$0x3]
      %s3499 = scalar_lea.vmem %s1, 832
      %v3500 = vld [vmem:[%s3499] sm:$0xf]
      %v3501 = vld [vmem:[%s3499 + $0x4] sm:$0xf]
      %v3502 = vld [vmem:[%s3499 + $0x8] sm:$0xf]
      %v3503 = vld [vmem:[%s3499 + $0xc] sm:$0xf]
      %v3504 = vld [vmem:[%s3499 + $0x10] sm:$0xf]
      %v3505 = vld [vmem:[%s3499 + $0x14] sm:$0xf]
      %v3506 = vld [vmem:[%s3499 + $0x18] sm:$0xf]
      %v3507 = vld [vmem:[%s3499 + $0x1c] sm:$0xf]
      %v3508 = vld [vmem:[%s3499 + $0x20] sm:$0xf]
      %v3509 = vld [vmem:[%s3499 + $0x24] sm:$0xf]
      %v3510 = vld [vmem:[%s3499 + $0x28] sm:$0xf]
      %v3511 = vld [vmem:[%s3499 + $0x2c] sm:$0xf]
      %v3512 = vld [vmem:[%s3499 + $0x30] sm:$0xf]
      %v3513 = vld [vmem:[%s3499 + $0x34] sm:$0xf]
      %v3514 = vld [vmem:[%s3499 + $0x38] sm:$0xf]
      %v3515 = vld [vmem:[%s3499 + $0x3c] sm:$0xf]
      %v3517 = vunpack.c.l.b16 %v3498
      %v3518 = vpack.c.b16 %v3517, %v3517
      %v3520 = vshrl.u32 %v3298, 16
      %v3522 = vrot.slane %v3520, 3
      %v3523 = vshll.u32 %v3298, 16
      %v3525 = vrot.slane %v3523, 4
      %v3526 = vor.u32 %v3522, %v3525
      %v3527 = vrot.slane %v3022, 3
      %v3528 = vrot.slane %v3025, 4
      %v3529 = vor.u32 %v3527, %v3528
      %v3530 = vsel %vm1685, %v3526, %v3529
      %v3531 = vrot.slane %v3031, 3
      %v3532 = vrot.slane %v3034, 4
      %v3533 = vor.u32 %v3531, %v3532
      %v3534 = vsel %vm1685, %v3529, %v3533
      %v3535 = vrot.slane %v3040, 3
      %v3536 = vrot.slane %v3043, 4
      %v3537 = vor.u32 %v3535, %v3536
      %v3538 = vsel %vm1685, %v3533, %v3537
      %v3539 = vrot.slane %v3049, 3
      %v3540 = vrot.slane %v3052, 4
      %v3541 = vor.u32 %v3539, %v3540
      %v3542 = vsel %vm1685, %v3537, %v3541
      %v3543 = vrot.slane %v3058, 3
      %v3544 = vrot.slane %v3061, 4
      %v3545 = vor.u32 %v3543, %v3544
      %v3546 = vsel %vm1685, %v3541, %v3545
      %v3547 = vrot.slane %v3067, 3
      %v3548 = vrot.slane %v3070, 4
      %v3549 = vor.u32 %v3547, %v3548
      %v3550 = vsel %vm1685, %v3545, %v3549
      %v3551 = vrot.slane %v3076, 3
      %v3552 = vrot.slane %v3079, 4
      %v3553 = vor.u32 %v3551, %v3552
      %v3554 = vsel %vm1685, %v3549, %v3553
      %v3555 = vrot.slane %v3085, 3
      %v3556 = vrot.slane %v3088, 4
      %v3557 = vor.u32 %v3555, %v3556
      %v3558 = vsel %vm1685, %v3553, %v3557
      %v3560 = vshrl.u32 %v3518, 16
      %v3562 = vrot.slane %v3560, 3
      %v3563 = vshll.u32 %v3518, 16
      %v3565 = vrot.slane %v3563, 4
      %v3566 = vor.u32 %v3562, %v3565
      %v3567 = vsel %vm1685, %v3557, %v3566
      %v3593 = vunpack.c.l.b16 %v3500
      %v3594 = vunpack.c.l.b16 %v3501
      %v3595 = vunpack.c.l.b16 %v3502
      %v3596 = vunpack.c.l.b16 %v3503
      %v3597 = vunpack.c.l.b16 %v3504
      %v3598 = vunpack.c.l.b16 %v3505
      %v3599 = vunpack.c.l.b16 %v3506
      %v3600 = vunpack.c.l.b16 %v3507
      %v3601 = vunpack.c.l.b16 %v3508
      %v3602 = vunpack.c.l.b16 %v3509
      %v3603 = vunpack.c.l.b16 %v3510
      %v3604 = vunpack.c.l.b16 %v3511
      %v3605 = vunpack.c.l.b16 %v3512
      %v3606 = vunpack.c.l.b16 %v3513
      %v3607 = vunpack.c.l.b16 %v3514
      %v3608 = vunpack.c.l.b16 %v3515
      %v3609 = vpack.c.b16 %v3594, %v3593
      %v3610 = vpack.c.b16 %v3596, %v3595
      %v3611 = vpack.c.b16 %v3598, %v3597
      %v3612 = vpack.c.b16 %v3600, %v3599
      %v3613 = vpack.c.b16 %v3602, %v3601
      %v3614 = vpack.c.b16 %v3604, %v3603
      %v3615 = vpack.c.b16 %v3606, %v3605
      %v3616 = vpack.c.b16 %v3608, %v3607
      %3625 = vmatprep.subr.bf16.mxu0 0
      %3626 = vmatpush1.bf16.msra.mxu0 %v3609
      %3627 = vmatprep.subr.bf16.mxu0 0
      %3628 = vmatpush1.bf16.msra.mxu0 %v3610
      %3629 = vmatprep.subr.bf16.mxu0 0
      %3630 = vmatpush1.bf16.msra.mxu0 %v3611
      %3631 = vmatprep.subr.bf16.mxu0 0
      %3632 = vmatpush1.bf16.msra.mxu0 %v3612
      %3633 = vmatprep.subr.bf16.mxu0 0
      %3634 = vmatpush1.bf16.msra.mxu0 %v3613
      %3635 = vmatprep.subr.bf16.mxu0 0
      %3636 = vmatpush1.bf16.msra.mxu0 %v3614
      %3637 = vmatprep.subr.bf16.mxu0 0
      %3638 = vmatpush1.bf16.msra.mxu0 %v3615
      %3639 = vmatprep.subr.bf16.mxu0 0
      %3640 = vmatpush1.bf16.msra.mxu0 %v3616
      %3641 = vmatprep.subr.bf16.mxu0 0
      %3642 = vmatpush1.bf16.msra.mxu0 0
      %3643 = vmatprep.subr.bf16.mxu0 0
      %3644 = vmatpush1.bf16.msra.mxu0 0
      %3645 = vmatprep.subr.bf16.mxu0 0
      %3646 = vmatpush1.bf16.msra.mxu0 0
      %3647 = vmatprep.subr.bf16.mxu0 0
      %3648 = vmatpush1.bf16.msra.mxu0 0
      %3649 = vmatprep.subr.bf16.mxu0 0
      %3650 = vmatpush1.bf16.msra.mxu0 0
      %3651 = vmatprep.subr.bf16.mxu0 0
      %3652 = vmatpush1.bf16.msra.mxu0 0
      %3653 = vmatprep.subr.bf16.mxu0 0
      %3654 = vmatpush1.bf16.msra.mxu0 0
      %3655 = vmatprep.subr.bf16.mxu0 0
      %3656 = vmatpush1.bf16.msra.mxu0 0
      %3657 = vmatprep.mubr.bf16.mxu0 0
      %3658 = vmatmul.mubr.bf16.gmra.mrb[0].mxu0 %v3530
      %v3659 = vpop.f32.mrb[0].mxu0
      %v3660 = vadd.f32 0.0, %v3659
      %v3661 = vpop.f32.mrb[0].mxu0
      %v3662 = vpop.f32.mrb[0].mxu0
      %v3663 = vadd.f32 0.0, %v3662
      %v3664 = vpop.f32.mrb[0].mxu0
      %3665 = vmatprep.mubr.bf16.mxu0 0
      %3666 = vmatmul.mubr.bf16.gmra.mrb[0].mxu0 %v3534
      %v3667 = vpop.f32.mrb[0].mxu0
      %v3668 = vadd.f32 0.0, %v3667
      %v3669 = vpop.f32.mrb[0].mxu0
      %v3670 = vpop.f32.mrb[0].mxu0
      %v3671 = vadd.f32 0.0, %v3670
      %v3672 = vpop.f32.mrb[0].mxu0
      %3673 = vmatprep.mubr.bf16.mxu0 0
      %3674 = vmatmul.mubr.bf16.gmra.mrb[0].mxu0 %v3538
      %v3675 = vpop.f32.mrb[0].mxu0
      %v3676 = vadd.f32 0.0, %v3675
      %v3677 = vpop.f32.mrb[0].mxu0
      %v3678 = vpop.f32.mrb[0].mxu0
      %v3679 = vadd.f32 0.0, %v3678
      %v3680 = vpop.f32.mrb[0].mxu0
      %3681 = vmatprep.mubr.bf16.mxu0 0
      %3682 = vmatmul.mubr.bf16.gmra.mrb[0].mxu0 %v3542
      %v3683 = vpop.f32.mrb[0].mxu0
      %v3684 = vadd.f32 0.0, %v3683
      %v3685 = vpop.f32.mrb[0].mxu0
      %v3686 = vpop.f32.mrb[0].mxu0
      %v3687 = vadd.f32 0.0, %v3686
      %v3688 = vpop.f32.mrb[0].mxu0
      %3689 = vmatprep.mubr.bf16.mxu0 0
      %3690 = vmatmul.mubr.bf16.gmra.mrb[0].mxu0 %v3546
      %v3691 = vpop.f32.mrb[0].mxu0
      %v3692 = vadd.f32 0.0, %v3691
      %v3693 = vpop.f32.mrb[0].mxu0
      %v3694 = vpop.f32.mrb[0].mxu0
      %v3695 = vadd.f32 0.0, %v3694
      %v3696 = vpop.f32.mrb[0].mxu0
      %3697 = vmatprep.mubr.bf16.mxu0 0
      %3698 = vmatmul.mubr.bf16.gmra.mrb[0].mxu0 %v3550
      %v3699 = vpop.f32.mrb[0].mxu0
      %v3700 = vadd.f32 0.0, %v3699
      %v3701 = vpop.f32.mrb[0].mxu0
      %v3702 = vpop.f32.mrb[0].mxu0
      %v3703 = vadd.f32 0.0, %v3702
      %v3704 = vpop.f32.mrb[0].mxu0
      %3705 = vmatprep.mubr.bf16.mxu0 0
      %3706 = vmatmul.mubr.bf16.gmra.mrb[0].mxu0 %v3554
      %v3707 = vpop.f32.mrb[0].mxu0
      %v3708 = vadd.f32 0.0, %v3707
      %v3709 = vpop.f32.mrb[0].mxu0
      %v3710 = vpop.f32.mrb[0].mxu0
      %v3711 = vadd.f32 0.0, %v3710
      %v3712 = vpop.f32.mrb[0].mxu0
      %3713 = vmatprep.mubr.bf16.mxu0 0
      %3714 = vmatmul.mubr.bf16.gmra.mrb[0].mxu0 %v3558
      %v3715 = vpop.f32.mrb[0].mxu0
      %v3716 = vadd.f32 0.0, %v3715
      %v3717 = vpop.f32.mrb[0].mxu0
      %v3718 = vpop.f32.mrb[0].mxu0
      %v3719 = vadd.f32 0.0, %v3718
      %v3720 = vpop.f32.mrb[0].mxu0
      %3721 = vmatprep.mubr.bf16.mxu0 0
      %3722 = vmatmul.mubr.bf16.gmra.mrb[0].mxu0 %v3567
      %v3723 = vpop.f32.mrb[0].mxu0
      %v3724 = vadd.f32 0.0, %v3723
      %v3725 = vpop.f32.mrb[0].mxu0
      %v3726 = vpop.f32.mrb[0].mxu0
      %v3727 = vadd.f32 0.0, %v3726
      %v3728 = vpop.f32.mrb[0].mxu0
      %3729 = vdwg.mxu0
      %v3730 = vadd.f32 %v3480, %v3660
      %v3731 = vadd.f32 %v3481, %v3663
      %v3732 = vadd.f32 %v3482, %v3668
      %v3733 = vadd.f32 %v3483, %v3671
      %v3734 = vadd.f32 %v3484, %v3676
      %v3735 = vadd.f32 %v3485, %v3679
      %v3736 = vadd.f32 %v3486, %v3684
      %v3737 = vadd.f32 %v3487, %v3687
      %v3738 = vadd.f32 %v3488, %v3692
      %v3739 = vadd.f32 %v3489, %v3695
      %v3740 = vadd.f32 %v3490, %v3700
      %v3741 = vadd.f32 %v3491, %v3703
      %v3742 = vadd.f32 %v3492, %v3708
      %v3743 = vadd.f32 %v3493, %v3711
      %v3744 = vadd.f32 %v3494, %v3716
      %v3745 = vadd.f32 %v3495, %v3719
      %v3746 = vadd.f32 %v3496, %v3724
      %v3747 = vadd.f32 %v3497, %v3727
      %s3748 = scalar_lea.vmem %s1, 896
      %v3749 = vld [vmem:[%s3748] sm:$0xf]
      %v3750 = vld [vmem:[%s3748 + $0x4] sm:$0xf]
      %v3751 = vld [vmem:[%s3748 + $0x8] sm:$0xf]
      %v3752 = vld [vmem:[%s3748 + $0xc] sm:$0xf]
      %v3753 = vld [vmem:[%s3748 + $0x10] sm:$0xf]
      %v3754 = vld [vmem:[%s3748 + $0x14] sm:$0xf]
      %v3755 = vld [vmem:[%s3748 + $0x18] sm:$0xf]
      %v3756 = vld [vmem:[%s3748 + $0x1c] sm:$0xf]
      %v3757 = vld [vmem:[%s3748 + $0x20] sm:$0xf]
      %v3758 = vld [vmem:[%s3748 + $0x24] sm:$0xf]
      %v3759 = vld [vmem:[%s3748 + $0x28] sm:$0xf]
      %v3760 = vld [vmem:[%s3748 + $0x2c] sm:$0xf]
      %v3761 = vld [vmem:[%s3748 + $0x30] sm:$0xf]
      %v3762 = vld [vmem:[%s3748 + $0x34] sm:$0xf]
      %v3763 = vld [vmem:[%s3748 + $0x38] sm:$0xf]
      %v3764 = vld [vmem:[%s3748 + $0x3c] sm:$0xf]
      %v3765 = vpack.c.b16 %v2985, %v2984
      %v3766 = vpack.c.b16 %v2987, %v2986
      %v3767 = vpack.c.b16 %v2989, %v2988
      %v3768 = vpack.c.b16 %v2991, %v2990
      %v3769 = vpack.c.b16 %v2993, %v2992
      %v3770 = vpack.c.b16 %v2995, %v2994
      %v3771 = vpack.c.b16 %v2997, %v2996
      %v3772 = vpack.c.b16 %v2999, %v2998
      %v3773 = vpack.c.b16 %v3517, %v3000
      %v3799 = vunpack.c.l.b16 %v3749
      %v3800 = vunpack.c.l.b16 %v3750
      %v3801 = vunpack.c.l.b16 %v3751
      %v3802 = vunpack.c.l.b16 %v3752
      %v3803 = vunpack.c.l.b16 %v3753
      %v3804 = vunpack.c.l.b16 %v3754
      %v3805 = vunpack.c.l.b16 %v3755
      %v3806 = vunpack.c.l.b16 %v3756
      %v3807 = vunpack.c.l.b16 %v3757
      %v3808 = vunpack.c.l.b16 %v3758
      %v3809 = vunpack.c.l.b16 %v3759
      %v3810 = vunpack.c.l.b16 %v3760
      %v3811 = vunpack.c.l.b16 %v3761
      %v3812 = vunpack.c.l.b16 %v3762
      %v3813 = vunpack.c.l.b16 %v3763
      %v3814 = vunpack.c.l.b16 %v3764
      %v3815 = vpack.c.b16 %v3800, %v3799
      %v3816 = vpack.c.b16 %v3802, %v3801
      %v3817 = vpack.c.b16 %v3804, %v3803
      %v3818 = vpack.c.b16 %v3806, %v3805
      %v3819 = vpack.c.b16 %v3808, %v3807
      %v3820 = vpack.c.b16 %v3810, %v3809
      %v3821 = vpack.c.b16 %v3812, %v3811
      %v3822 = vpack.c.b16 %v3814, %v3813
      %3831 = vmatprep.subr.bf16.mxu0 0
      %3832 = vmatpush1.bf16.msra.mxu0 %v3815
      %3833 = vmatprep.subr.bf16.mxu0 0
      %3834 = vmatpush1.bf16.msra.mxu0 %v3816
      %3835 = vmatprep.subr.bf16.mxu0 0
      %3836 = vmatpush1.bf16.msra.mxu0 %v3817
      %3837 = vmatprep.subr.bf16.mxu0 0
      %3838 = vmatpush1.bf16.msra.mxu0 %v3818
      %3839 = vmatprep.subr.bf16.mxu0 0
      %3840 = vmatpush1.bf16.msra.mxu0 %v3819
      %3841 = vmatprep.subr.bf16.mxu0 0
      %3842 = vmatpush1.bf16.msra.mxu0 %v3820
      %3843 = vmatprep.subr.bf16.mxu0 0
      %3844 = vmatpush1.bf16.msra.mxu0 %v3821
      %3845 = vmatprep.subr.bf16.mxu0 0
      %3846 = vmatpush1.bf16.msra.mxu0 %v3822
      %3847 = vmatprep.subr.bf16.mxu0 0
      %3848 = vmatpush1.bf16.msra.mxu0 0
      %3849 = vmatprep.subr.bf16.mxu0 0
      %3850 = vmatpush1.bf16.msra.mxu0 0
      %3851 = vmatprep.subr.bf16.mxu0 0
      %3852 = vmatpush1.bf16.msra.mxu0 0
      %3853 = vmatprep.subr.bf16.mxu0 0
      %3854 = vmatpush1.bf16.msra.mxu0 0
      %3855 = vmatprep.subr.bf16.mxu0 0
      %3856 = vmatpush1.bf16.msra.mxu0 0
      %3857 = vmatprep.subr.bf16.mxu0 0
      %3858 = vmatpush1.bf16.msra.mxu0 0
      %3859 = vmatprep.subr.bf16.mxu0 0
      %3860 = vmatpush1.bf16.msra.mxu0 0
      %3861 = vmatprep.subr.bf16.mxu0 0
      %3862 = vmatpush1.bf16.msra.mxu0 0
      %3863 = vmatprep.mubr.bf16.mxu0 0
      %3864 = vmatmul.mubr.bf16.gmra.mrb[0].mxu0 %v3765
      %v3865 = vpop.f32.mrb[0].mxu0
      %v3866 = vadd.f32 0.0, %v3865
      %v3867 = vpop.f32.mrb[0].mxu0
      %v3868 = vpop.f32.mrb[0].mxu0
      %v3869 = vadd.f32 0.0, %v3868
      %v3870 = vpop.f32.mrb[0].mxu0
      %3871 = vmatprep.mubr.bf16.mxu0 0
      %3872 = vmatmul.mubr.bf16.gmra.mrb[0].mxu0 %v3766
      %v3873 = vpop.f32.mrb[0].mxu0
      %v3874 = vadd.f32 0.0, %v3873
      %v3875 = vpop.f32.mrb[0].mxu0
      %v3876 = vpop.f32.mrb[0].mxu0
      %v3877 = vadd.f32 0.0, %v3876
      %v3878 = vpop.f32.mrb[0].mxu0
      %3879 = vmatprep.mubr.bf16.mxu0 0
      %3880 = vmatmul.mubr.bf16.gmra.mrb[0].mxu0 %v3767
      %v3881 = vpop.f32.mrb[0].mxu0
      %v3882 = vadd.f32 0.0, %v3881
      %v3883 = vpop.f32.mrb[0].mxu0
      %v3884 = vpop.f32.mrb[0].mxu0
      %v3885 = vadd.f32 0.0, %v3884
      %v3886 = vpop.f32.mrb[0].mxu0
      %3887 = vmatprep.mubr.bf16.mxu0 0
      %3888 = vmatmul.mubr.bf16.gmra.mrb[0].mxu0 %v3768
      %v3889 = vpop.f32.mrb[0].mxu0
      %v3890 = vadd.f32 0.0, %v3889
      %v3891 = vpop.f32.mrb[0].mxu0
      %v3892 = vpop.f32.mrb[0].mxu0
      %v3893 = vadd.f32 0.0, %v3892
      %v3894 = vpop.f32.mrb[0].mxu0
      %3895 = vmatprep.mubr.bf16.mxu0 0
      %3896 = vmatmul.mubr.bf16.gmra.mrb[0].mxu0 %v3769
      %v3897 = vpop.f32.mrb[0].mxu0
      %v3898 = vadd.f32 0.0, %v3897
      %v3899 = vpop.f32.mrb[0].mxu0
      %v3900 = vpop.f32.mrb[0].mxu0
      %v3901 = vadd.f32 0.0, %v3900
      %v3902 = vpop.f32.mrb[0].mxu0
      %3903 = vmatprep.mubr.bf16.mxu0 0
      %3904 = vmatmul.mubr.bf16.gmra.mrb[0].mxu0 %v3770
      %v3905 = vpop.f32.mrb[0].mxu0
      %v3906 = vadd.f32 0.0, %v3905
      %v3907 = vpop.f32.mrb[0].mxu0
      %v3908 = vpop.f32.mrb[0].mxu0
      %v3909 = vadd.f32 0.0, %v3908
      %v3910 = vpop.f32.mrb[0].mxu0
      %3911 = vmatprep.mubr.bf16.mxu0 0
      %3912 = vmatmul.mubr.bf16.gmra.mrb[0].mxu0 %v3771
      %v3913 = vpop.f32.mrb[0].mxu0
      %v3914 = vadd.f32 0.0, %v3913
      %v3915 = vpop.f32.mrb[0].mxu0
      %v3916 = vpop.f32.mrb[0].mxu0
      %v3917 = vadd.f32 0.0, %v3916
      %v3918 = vpop.f32.mrb[0].mxu0
      %3919 = vmatprep.mubr.bf16.mxu0 0
      %3920 = vmatmul.mubr.bf16.gmra.mrb[0].mxu0 %v3772
      %v3921 = vpop.f32.mrb[0].mxu0
      %v3922 = vadd.f32 0.0, %v3921
      %v3923 = vpop.f32.mrb[0].mxu0
      %v3924 = vpop.f32.mrb[0].mxu0
      %v3925 = vadd.f32 0.0, %v3924
      %v3926 = vpop.f32.mrb[0].mxu0
      %3927 = vmatprep.mubr.bf16.mxu0 0
      %3928 = vmatmul.mubr.bf16.gmra.mrb[0].mxu0 %v3773
      %v3929 = vpop.f32.mrb[0].mxu0
      %v3930 = vadd.f32 0.0, %v3929
      %v3931 = vpop.f32.mrb[0].mxu0
      %v3932 = vpop.f32.mrb[0].mxu0
      %v3933 = vadd.f32 0.0, %v3932
      %v3934 = vpop.f32.mrb[0].mxu0
      %3935 = vdwg.mxu0
      %v3936 = vadd.f32 %v3730, %v3866
      %v3937 = vadd.f32 %v3731, %v3869
      %v3938 = vadd.f32 %v3732, %v3874
      %v3939 = vadd.f32 %v3733, %v3877
      %v3940 = vadd.f32 %v3734, %v3882
      %v3941 = vadd.f32 %v3735, %v3885
      %v3942 = vadd.f32 %v3736, %v3890
      %v3943 = vadd.f32 %v3737, %v3893
      %v3944 = vadd.f32 %v3738, %v3898
      %v3945 = vadd.f32 %v3739, %v3901
      %v3946 = vadd.f32 %v3740, %v3906
      %v3947 = vadd.f32 %v3741, %v3909
      %v3948 = vadd.f32 %v3742, %v3914
      %v3949 = vadd.f32 %v3743, %v3917
      %v3950 = vadd.f32 %v3744, %v3922
      %v3951 = vadd.f32 %v3745, %v3925
      %v3952 = vadd.f32 %v3746, %v3930
      %v3953 = vadd.f32 %v3747, %v3933
      %v3954 = vld [vmem:[%s192 + $0x14] sm:$0xe]
      %v3955 = vld [vmem:[%s192 + $0x18] sm:$0xf]
      %v3956 = vld [vmem:[%s192 + $0x1c] sm:$0xf]
      %v3957 = vld [vmem:[%s192 + $0x20] sm:$0xf]
      %v3958 = vld [vmem:[%s192 + $0x24] sm:$0xf]
      %v3959 = vld [vmem:[%s192 + $0x28] sm:$0xf]
      %v3960 = vld [vmem:[%s192 + $0x2c] sm:$0xf]
      %v3961 = vld [vmem:[%s192 + $0x30] sm:$0xf]
      %v3962 = vld [vmem:[%s192 + $0x34] sm:$0xf]
      %v3963 = vld [vmem:[%s192 + $0x38] sm:$0xf]
      %v3964 = vld [vmem:[%s192 + $0x3c] sm:$0xf]
      %v3965 = vld [vmem:[%s192 + $0x40] sm:$0xf]
      %v3966 = vld [vmem:[%s192 + $0x44] sm:$0xf]
      %v3967 = vld [vmem:[%s192 + $0x48] sm:$0xf]
      %v3968 = vld [vmem:[%s192 + $0x4c] sm:$0xf]
      %v3969 = vld [vmem:[%s192 + $0x50] sm:$0xf]
      %v3970 = vld [vmem:[%s192 + $0x54] sm:$0xf]
      %v3971 = vld [vmem:[%s192 + $0x58] sm:$0x7]
      %s3972 = scalar_lea.vmem %s1, 960
      %v3973 = vld [vmem:[%s3972] sm:$0xf]
      %v3974 = vld [vmem:[%s3972 + $0x4] sm:$0xf]
      %v3975 = vld [vmem:[%s3972 + $0x8] sm:$0xf]
      %v3976 = vld [vmem:[%s3972 + $0xc] sm:$0xf]
      %v3977 = vld [vmem:[%s3972 + $0x10] sm:$0xf]
      %v3978 = vld [vmem:[%s3972 + $0x14] sm:$0xf]
      %v3979 = vld [vmem:[%s3972 + $0x18] sm:$0xf]
      %v3980 = vld [vmem:[%s3972 + $0x1c] sm:$0xf]
      %v3981 = vld [vmem:[%s3972 + $0x20] sm:$0xf]
      %v3982 = vld [vmem:[%s3972 + $0x24] sm:$0xf]
      %v3983 = vld [vmem:[%s3972 + $0x28] sm:$0xf]
      %v3984 = vld [vmem:[%s3972 + $0x2c] sm:$0xf]
      %v3985 = vld [vmem:[%s3972 + $0x30] sm:$0xf]
      %v3986 = vld [vmem:[%s3972 + $0x34] sm:$0xf]
      %v3987 = vld [vmem:[%s3972 + $0x38] sm:$0xf]
      %v3988 = vld [vmem:[%s3972 + $0x3c] sm:$0xf]
      %v4007 = vunpack.c.l.b16 %v3954
      %v4008 = vunpack.c.l.b16 %v3955
      %v4009 = vunpack.c.l.b16 %v3956
      %v4010 = vunpack.c.l.b16 %v3957
      %v4011 = vunpack.c.l.b16 %v3958
      %v4012 = vunpack.c.l.b16 %v3959
      %v4013 = vunpack.c.l.b16 %v3960
      %v4014 = vunpack.c.l.b16 %v3961
      %v4015 = vunpack.c.l.b16 %v3962
      %v4016 = vunpack.c.l.b16 %v3963
      %v4017 = vunpack.c.l.b16 %v3964
      %v4018 = vunpack.c.l.b16 %v3965
      %v4019 = vunpack.c.l.b16 %v3966
      %v4020 = vunpack.c.l.b16 %v3967
      %v4021 = vunpack.c.l.b16 %v3968
      %v4022 = vunpack.c.l.b16 %v3969
      %v4023 = vunpack.c.l.b16 %v3970
      %v4024 = vunpack.c.l.b16 %v3971
      %v4025 = vpack.c.b16 %v4008, %v4007
      %v4026 = vpack.c.b16 %v4010, %v4009
      %v4027 = vpack.c.b16 %v4012, %v4011
      %v4028 = vpack.c.b16 %v4014, %v4013
      %v4029 = vpack.c.b16 %v4016, %v4015
      %v4030 = vpack.c.b16 %v4018, %v4017
      %v4031 = vpack.c.b16 %v4020, %v4019
      %v4032 = vpack.c.b16 %v4022, %v4021
      %v4033 = vpack.c.b16 %v4024, %v4023
      %v4034 = vrot.slane %v4025, 1
      %v4035 = vrot.slane %v4026, 1
      %v4036 = vsel %vm716, %v4034, %v4035
      %v4037 = vrot.slane %v4027, 1
      %v4038 = vsel %vm716, %v4035, %v4037
      %v4039 = vrot.slane %v4028, 1
      %v4040 = vsel %vm716, %v4037, %v4039
      %v4041 = vrot.slane %v4029, 1
      %v4042 = vsel %vm716, %v4039, %v4041
      %v4043 = vrot.slane %v4030, 1
      %v4044 = vsel %vm716, %v4041, %v4043
      %v4045 = vrot.slane %v4031, 1
      %v4046 = vsel %vm716, %v4043, %v4045
      %v4047 = vrot.slane %v4032, 1
      %v4048 = vsel %vm716, %v4045, %v4047
      %v4049 = vrot.slane %v4033, 1
      %v4050 = vsel %vm716, %v4047, %v4049
      %v4076 = vunpack.c.l.b16 %v3973
      %v4077 = vunpack.c.l.b16 %v3974
      %v4078 = vunpack.c.l.b16 %v3975
      %v4079 = vunpack.c.l.b16 %v3976
      %v4080 = vunpack.c.l.b16 %v3977
      %v4081 = vunpack.c.l.b16 %v3978
      %v4082 = vunpack.c.l.b16 %v3979
      %v4083 = vunpack.c.l.b16 %v3980
      %v4084 = vunpack.c.l.b16 %v3981
      %v4085 = vunpack.c.l.b16 %v3982
      %v4086 = vunpack.c.l.b16 %v3983
      %v4087 = vunpack.c.l.b16 %v3984
      %v4088 = vunpack.c.l.b16 %v3985
      %v4089 = vunpack.c.l.b16 %v3986
      %v4090 = vunpack.c.l.b16 %v3987
      %v4091 = vunpack.c.l.b16 %v3988
      %v4092 = vpack.c.b16 %v4077, %v4076
      %v4093 = vpack.c.b16 %v4079, %v4078
      %v4094 = vpack.c.b16 %v4081, %v4080
      %v4095 = vpack.c.b16 %v4083, %v4082
      %v4096 = vpack.c.b16 %v4085, %v4084
      %v4097 = vpack.c.b16 %v4087, %v4086
      %v4098 = vpack.c.b16 %v4089, %v4088
      %v4099 = vpack.c.b16 %v4091, %v4090
      %4108 = vmatprep.subr.bf16.mxu0 0
      %4109 = vmatpush1.bf16.msra.mxu0 %v4092
      %4110 = vmatprep.subr.bf16.mxu0 0
      %4111 = vmatpush1.bf16.msra.mxu0 %v4093
      %4112 = vmatprep.subr.bf16.mxu0 0
      %4113 = vmatpush1.bf16.msra.mxu0 %v4094
      %4114 = vmatprep.subr.bf16.mxu0 0
      %4115 = vmatpush1.bf16.msra.mxu0 %v4095
      %4116 = vmatprep.subr.bf16.mxu0 0
      %4117 = vmatpush1.bf16.msra.mxu0 %v4096
      %4118 = vmatprep.subr.bf16.mxu0 0
      %4119 = vmatpush1.bf16.msra.mxu0 %v4097
      %4120 = vmatprep.subr.bf16.mxu0 0
      %4121 = vmatpush1.bf16.msra.mxu0 %v4098
      %4122 = vmatprep.subr.bf16.mxu0 0
      %4123 = vmatpush1.bf16.msra.mxu0 %v4099
      %4124 = vmatprep.subr.bf16.mxu0 0
      %4125 = vmatpush1.bf16.msra.mxu0 0
      %4126 = vmatprep.subr.bf16.mxu0 0
      %4127 = vmatpush1.bf16.msra.mxu0 0
      %4128 = vmatprep.subr.bf16.mxu0 0
      %4129 = vmatpush1.bf16.msra.mxu0 0
      %4130 = vmatprep.subr.bf16.mxu0 0
      %4131 = vmatpush1.bf16.msra.mxu0 0
      %4132 = vmatprep.subr.bf16.mxu0 0
      %4133 = vmatpush1.bf16.msra.mxu0 0
      %4134 = vmatprep.subr.bf16.mxu0 0
      %4135 = vmatpush1.bf16.msra.mxu0 0
      %4136 = vmatprep.subr.bf16.mxu0 0
      %4137 = vmatpush1.bf16.msra.mxu0 0
      %4138 = vmatprep.subr.bf16.mxu0 0
      %4139 = vmatpush1.bf16.msra.mxu0 0
      %4140 = vmatprep.mubr.bf16.mxu0 0
      %4141 = vmatmul.mubr.bf16.gmra.mrb[0].mxu0 %v4036
      %v4142 = vpop.f32.mrb[0].mxu0
      %v4143 = vadd.f32 0.0, %v4142
      %v4144 = vpop.f32.mrb[0].mxu0
      %v4145 = vpop.f32.mrb[0].mxu0
      %v4146 = vadd.f32 0.0, %v4145
      %v4147 = vpop.f32.mrb[0].mxu0
      %4148 = vmatprep.mubr.bf16.mxu0 0
      %4149 = vmatmul.mubr.bf16.gmra.mrb[0].mxu0 %v4038
      %v4150 = vpop.f32.mrb[0].mxu0
      %v4151 = vadd.f32 0.0, %v4150
      %v4152 = vpop.f32.mrb[0].mxu0
      %v4153 = vpop.f32.mrb[0].mxu0
      %v4154 = vadd.f32 0.0, %v4153
      %v4155 = vpop.f32.mrb[0].mxu0
      %4156 = vmatprep.mubr.bf16.mxu0 0
      %4157 = vmatmul.mubr.bf16.gmra.mrb[0].mxu0 %v4040
      %v4158 = vpop.f32.mrb[0].mxu0
      %v4159 = vadd.f32 0.0, %v4158
      %v4160 = vpop.f32.mrb[0].mxu0
      %v4161 = vpop.f32.mrb[0].mxu0
      %v4162 = vadd.f32 0.0, %v4161
      %v4163 = vpop.f32.mrb[0].mxu0
      %4164 = vmatprep.mubr.bf16.mxu0 0
      %4165 = vmatmul.mubr.bf16.gmra.mrb[0].mxu0 %v4042
      %v4166 = vpop.f32.mrb[0].mxu0
      %v4167 = vadd.f32 0.0, %v4166
      %v4168 = vpop.f32.mrb[0].mxu0
      %v4169 = vpop.f32.mrb[0].mxu0
      %v4170 = vadd.f32 0.0, %v4169
      %v4171 = vpop.f32.mrb[0].mxu0
      %4172 = vmatprep.mubr.bf16.mxu0 0
      %4173 = vmatmul.mubr.bf16.gmra.mrb[0].mxu0 %v4044
      %v4174 = vpop.f32.mrb[0].mxu0
      %v4175 = vadd.f32 0.0, %v4174
      %v4176 = vpop.f32.mrb[0].mxu0
      %v4177 = vpop.f32.mrb[0].mxu0
      %v4178 = vadd.f32 0.0, %v4177
      %v4179 = vpop.f32.mrb[0].mxu0
      %4180 = vmatprep.mubr.bf16.mxu0 0
      %4181 = vmatmul.mubr.bf16.gmra.mrb[0].mxu0 %v4046
      %v4182 = vpop.f32.mrb[0].mxu0
      %v4183 = vadd.f32 0.0, %v4182
      %v4184 = vpop.f32.mrb[0].mxu0
      %v4185 = vpop.f32.mrb[0].mxu0
      %v4186 = vadd.f32 0.0, %v4185
      %v4187 = vpop.f32.mrb[0].mxu0
      %4188 = vmatprep.mubr.bf16.mxu0 0
      %4189 = vmatmul.mubr.bf16.gmra.mrb[0].mxu0 %v4048
      %v4190 = vpop.f32.mrb[0].mxu0
      %v4191 = vadd.f32 0.0, %v4190
      %v4192 = vpop.f32.mrb[0].mxu0
      %v4193 = vpop.f32.mrb[0].mxu0
      %v4194 = vadd.f32 0.0, %v4193
      %v4195 = vpop.f32.mrb[0].mxu0
      %4196 = vmatprep.mubr.bf16.mxu0 0
      %4197 = vmatmul.mubr.bf16.gmra.mrb[0].mxu0 %v4050
      %v4198 = vpop.f32.mrb[0].mxu0
      %v4199 = vadd.f32 0.0, %v4198
      %v4200 = vpop.f32.mrb[0].mxu0
      %v4201 = vpop.f32.mrb[0].mxu0
      %v4202 = vadd.f32 0.0, %v4201
      %v4203 = vpop.f32.mrb[0].mxu0
      %4204 = vmatprep.mubr.bf16.mxu0 0
      %4205 = vmatmul.mubr.bf16.gmra.mrb[0].mxu0 %v4049
      %v4206 = vpop.f32.mrb[0].mxu0
      %v4207 = vadd.f32 0.0, %v4206
      %v4208 = vpop.f32.mrb[0].mxu0
      %v4209 = vpop.f32.mrb[0].mxu0
      %v4210 = vadd.f32 0.0, %v4209
      %v4211 = vpop.f32.mrb[0].mxu0
      %4212 = vdwg.mxu0
      %v4213 = vadd.f32 %v3936, %v4143
      %v4214 = vadd.f32 %v3937, %v4146
      %v4215 = vadd.f32 %v3938, %v4151
      %v4216 = vadd.f32 %v3939, %v4154
      %v4217 = vadd.f32 %v3940, %v4159
      %v4218 = vadd.f32 %v3941, %v4162
      %v4219 = vadd.f32 %v3942, %v4167
      %v4220 = vadd.f32 %v3943, %v4170
      %v4221 = vadd.f32 %v3944, %v4175
      %v4222 = vadd.f32 %v3945, %v4178
      %v4223 = vadd.f32 %v3946, %v4183
      %v4224 = vadd.f32 %v3947, %v4186
      %v4225 = vadd.f32 %v3948, %v4191
      %v4226 = vadd.f32 %v3949, %v4194
      %v4227 = vadd.f32 %v3950, %v4199
      %v4228 = vadd.f32 %v3951, %v4202
      %v4229 = vadd.f32 %v3952, %v4207
      %v4230 = vadd.f32 %v3953, %v4210
      %v4231 = vld [vmem:[%s192 + $0x58] sm:$0xf]
      %s4232 = scalar_lea.vmem %s1, 1024
      %v4233 = vld [vmem:[%s4232] sm:$0xf]
      %v4234 = vld [vmem:[%s4232 + $0x4] sm:$0xf]
      %v4235 = vld [vmem:[%s4232 + $0x8] sm:$0xf]
      %v4236 = vld [vmem:[%s4232 + $0xc] sm:$0xf]
      %v4237 = vld [vmem:[%s4232 + $0x10] sm:$0xf]
      %v4238 = vld [vmem:[%s4232 + $0x14] sm:$0xf]
      %v4239 = vld [vmem:[%s4232 + $0x18] sm:$0xf]
      %v4240 = vld [vmem:[%s4232 + $0x1c] sm:$0xf]
      %v4241 = vld [vmem:[%s4232 + $0x20] sm:$0xf]
      %v4242 = vld [vmem:[%s4232 + $0x24] sm:$0xf]
      %v4243 = vld [vmem:[%s4232 + $0x28] sm:$0xf]
      %v4244 = vld [vmem:[%s4232 + $0x2c] sm:$0xf]
      %v4245 = vld [vmem:[%s4232 + $0x30] sm:$0xf]
      %v4246 = vld [vmem:[%s4232 + $0x34] sm:$0xf]
      %v4247 = vld [vmem:[%s4232 + $0x38] sm:$0xf]
      %v4248 = vld [vmem:[%s4232 + $0x3c] sm:$0xf]
      %v4250 = vunpack.c.l.b16 %v4231
      %v4251 = vpack.c.b16 %v4250, %v4023
      %v4253 = vshrl.u32 %v4025, 16
      %v4255 = vrot.slane %v4253, 1
      %v4256 = vshll.u32 %v4025, 16
      %v4258 = vrot.slane %v4256, 2
      %v4259 = vor.u32 %v4255, %v4258
      %v4261 = vshrl.u32 %v4026, 16
      %v4263 = vrot.slane %v4261, 1
      %v4264 = vshll.u32 %v4026, 16
      %v4266 = vrot.slane %v4264, 2
      %v4267 = vor.u32 %v4263, %v4266
      %v4268 = vsel %vm935, %v4259, %v4267
      %v4270 = vshrl.u32 %v4027, 16
      %v4272 = vrot.slane %v4270, 1
      %v4273 = vshll.u32 %v4027, 16
      %v4275 = vrot.slane %v4273, 2
      %v4276 = vor.u32 %v4272, %v4275
      %v4277 = vsel %vm935, %v4267, %v4276
      %v4279 = vshrl.u32 %v4028, 16
      %v4281 = vrot.slane %v4279, 1
      %v4282 = vshll.u32 %v4028, 16
      %v4284 = vrot.slane %v4282, 2
      %v4285 = vor.u32 %v4281, %v4284
      %v4286 = vsel %vm935, %v4276, %v4285
      %v4288 = vshrl.u32 %v4029, 16
      %v4290 = vrot.slane %v4288, 1
      %v4291 = vshll.u32 %v4029, 16
      %v4293 = vrot.slane %v4291, 2
      %v4294 = vor.u32 %v4290, %v4293
      %v4295 = vsel %vm935, %v4285, %v4294
      %v4297 = vshrl.u32 %v4030, 16
      %v4299 = vrot.slane %v4297, 1
      %v4300 = vshll.u32 %v4030, 16
      %v4302 = vrot.slane %v4300, 2
      %v4303 = vor.u32 %v4299, %v4302
      %v4304 = vsel %vm935, %v4294, %v4303
      %v4306 = vshrl.u32 %v4031, 16
      %v4308 = vrot.slane %v4306, 1
      %v4309 = vshll.u32 %v4031, 16
      %v4311 = vrot.slane %v4309, 2
      %v4312 = vor.u32 %v4308, %v4311
      %v4313 = vsel %vm935, %v4303, %v4312
      %v4315 = vshrl.u32 %v4032, 16
      %v4317 = vrot.slane %v4315, 1
      %v4318 = vshll.u32 %v4032, 16
      %v4320 = vrot.slane %v4318, 2
      %v4321 = vor.u32 %v4317, %v4320
      %v4322 = vsel %vm935, %v4312, %v4321
      %v4324 = vshrl.u32 %v4251, 16
      %v4326 = vrot.slane %v4324, 1
      %v4327 = vshll.u32 %v4251, 16
      %v4329 = vrot.slane %v4327, 2
      %v4330 = vor.u32 %v4326, %v4329
      %v4331 = vsel %vm935, %v4321, %v4330
      %v4357 = vunpack.c.l.b16 %v4233
      %v4358 = vunpack.c.l.b16 %v4234
      %v4359 = vunpack.c.l.b16 %v4235
      %v4360 = vunpack.c.l.b16 %v4236
      %v4361 = vunpack.c.l.b16 %v4237
      %v4362 = vunpack.c.l.b16 %v4238
      %v4363 = vunpack.c.l.b16 %v4239
      %v4364 = vunpack.c.l.b16 %v4240
      %v4365 = vunpack.c.l.b16 %v4241
      %v4366 = vunpack.c.l.b16 %v4242
      %v4367 = vunpack.c.l.b16 %v4243
      %v4368 = vunpack.c.l.b16 %v4244
      %v4369 = vunpack.c.l.b16 %v4245
      %v4370 = vunpack.c.l.b16 %v4246
      %v4371 = vunpack.c.l.b16 %v4247
      %v4372 = vunpack.c.l.b16 %v4248
      %v4373 = vpack.c.b16 %v4358, %v4357
      %v4374 = vpack.c.b16 %v4360, %v4359
      %v4375 = vpack.c.b16 %v4362, %v4361
      %v4376 = vpack.c.b16 %v4364, %v4363
      %v4377 = vpack.c.b16 %v4366, %v4365
      %v4378 = vpack.c.b16 %v4368, %v4367
      %v4379 = vpack.c.b16 %v4370, %v4369
      %v4380 = vpack.c.b16 %v4372, %v4371
      %4389 = vmatprep.subr.bf16.mxu0 0
      %4390 = vmatpush1.bf16.msra.mxu0 %v4373
      %4391 = vmatprep.subr.bf16.mxu0 0
      %4392 = vmatpush1.bf16.msra.mxu0 %v4374
      %4393 = vmatprep.subr.bf16.mxu0 0
      %4394 = vmatpush1.bf16.msra.mxu0 %v4375
      %4395 = vmatprep.subr.bf16.mxu0 0
      %4396 = vmatpush1.bf16.msra.mxu0 %v4376
      %4397 = vmatprep.subr.bf16.mxu0 0
      %4398 = vmatpush1.bf16.msra.mxu0 %v4377
      %4399 = vmatprep.subr.bf16.mxu0 0
      %4400 = vmatpush1.bf16.msra.mxu0 %v4378
      %4401 = vmatprep.subr.bf16.mxu0 0
      %4402 = vmatpush1.bf16.msra.mxu0 %v4379
      %4403 = vmatprep.subr.bf16.mxu0 0
      %4404 = vmatpush1.bf16.msra.mxu0 %v4380
      %4405 = vmatprep.subr.bf16.mxu0 0
      %4406 = vmatpush1.bf16.msra.mxu0 0
      %4407 = vmatprep.subr.bf16.mxu0 0
      %4408 = vmatpush1.bf16.msra.mxu0 0
      %4409 = vmatprep.subr.bf16.mxu0 0
      %4410 = vmatpush1.bf16.msra.mxu0 0
      %4411 = vmatprep.subr.bf16.mxu0 0
      %4412 = vmatpush1.bf16.msra.mxu0 0
      %4413 = vmatprep.subr.bf16.mxu0 0
      %4414 = vmatpush1.bf16.msra.mxu0 0
      %4415 = vmatprep.subr.bf16.mxu0 0
      %4416 = vmatpush1.bf16.msra.mxu0 0
      %4417 = vmatprep.subr.bf16.mxu0 0
      %4418 = vmatpush1.bf16.msra.mxu0 0
      %4419 = vmatprep.subr.bf16.mxu0 0
      %4420 = vmatpush1.bf16.msra.mxu0 0
      %4421 = vmatprep.mubr.bf16.mxu0 0
      %4422 = vmatmul.mubr.bf16.gmra.mrb[0].mxu0 %v4268
      %v4423 = vpop.f32.mrb[0].mxu0
      %v4424 = vadd.f32 0.0, %v4423
      %v4425 = vpop.f32.mrb[0].mxu0
      %v4426 = vpop.f32.mrb[0].mxu0
      %v4427 = vadd.f32 0.0, %v4426
      %v4428 = vpop.f32.mrb[0].mxu0
      %4429 = vmatprep.mubr.bf16.mxu0 0
      %4430 = vmatmul.mubr.bf16.gmra.mrb[0].mxu0 %v4277
      %v4431 = vpop.f32.mrb[0].mxu0
      %v4432 = vadd.f32 0.0, %v4431
      %v4433 = vpop.f32.mrb[0].mxu0
      %v4434 = vpop.f32.mrb[0].mxu0
      %v4435 = vadd.f32 0.0, %v4434
      %v4436 = vpop.f32.mrb[0].mxu0
      %4437 = vmatprep.mubr.bf16.mxu0 0
      %4438 = vmatmul.mubr.bf16.gmra.mrb[0].mxu0 %v4286
      %v4439 = vpop.f32.mrb[0].mxu0
      %v4440 = vadd.f32 0.0, %v4439
      %v4441 = vpop.f32.mrb[0].mxu0
      %v4442 = vpop.f32.mrb[0].mxu0
      %v4443 = vadd.f32 0.0, %v4442
      %v4444 = vpop.f32.mrb[0].mxu0
      %4445 = vmatprep.mubr.bf16.mxu0 0
      %4446 = vmatmul.mubr.bf16.gmra.mrb[0].mxu0 %v4295
      %v4447 = vpop.f32.mrb[0].mxu0
      %v4448 = vadd.f32 0.0, %v4447
      %v4449 = vpop.f32.mrb[0].mxu0
      %v4450 = vpop.f32.mrb[0].mxu0
      %v4451 = vadd.f32 0.0, %v4450
      %v4452 = vpop.f32.mrb[0].mxu0
      %4453 = vmatprep.mubr.bf16.mxu0 0
      %4454 = vmatmul.mubr.bf16.gmra.mrb[0].mxu0 %v4304
      %v4455 = vpop.f32.mrb[0].mxu0
      %v4456 = vadd.f32 0.0, %v4455
      %v4457 = vpop.f32.mrb[0].mxu0
      %v4458 = vpop.f32.mrb[0].mxu0
      %v4459 = vadd.f32 0.0, %v4458
      %v4460 = vpop.f32.mrb[0].mxu0
      %4461 = vmatprep.mubr.bf16.mxu0 0
      %4462 = vmatmul.mubr.bf16.gmra.mrb[0].mxu0 %v4313
      %v4463 = vpop.f32.mrb[0].mxu0
      %v4464 = vadd.f32 0.0, %v4463
      %v4465 = vpop.f32.mrb[0].mxu0
      %v4466 = vpop.f32.mrb[0].mxu0
      %v4467 = vadd.f32 0.0, %v4466
      %v4468 = vpop.f32.mrb[0].mxu0
      %4469 = vmatprep.mubr.bf16.mxu0 0
      %4470 = vmatmul.mubr.bf16.gmra.mrb[0].mxu0 %v4322
      %v4471 = vpop.f32.mrb[0].mxu0
      %v4472 = vadd.f32 0.0, %v4471
      %v4473 = vpop.f32.mrb[0].mxu0
      %v4474 = vpop.f32.mrb[0].mxu0
      %v4475 = vadd.f32 0.0, %v4474
      %v4476 = vpop.f32.mrb[0].mxu0
      %4477 = vmatprep.mubr.bf16.mxu0 0
      %4478 = vmatmul.mubr.bf16.gmra.mrb[0].mxu0 %v4331
      %v4479 = vpop.f32.mrb[0].mxu0
      %v4480 = vadd.f32 0.0, %v4479
      %v4481 = vpop.f32.mrb[0].mxu0
      %v4482 = vpop.f32.mrb[0].mxu0
      %v4483 = vadd.f32 0.0, %v4482
      %v4484 = vpop.f32.mrb[0].mxu0
      %4485 = vmatprep.mubr.bf16.mxu0 0
      %4486 = vmatmul.mubr.bf16.gmra.mrb[0].mxu0 %v4330
      %v4487 = vpop.f32.mrb[0].mxu0
      %v4488 = vadd.f32 0.0, %v4487
      %v4489 = vpop.f32.mrb[0].mxu0
      %v4490 = vpop.f32.mrb[0].mxu0
      %v4491 = vadd.f32 0.0, %v4490
      %v4492 = vpop.f32.mrb[0].mxu0
      %4493 = vdwg.mxu0
      %v4494 = vadd.f32 %v4213, %v4424
      %v4495 = vadd.f32 %v4214, %v4427
      %v4496 = vadd.f32 %v4215, %v4432
      %v4497 = vadd.f32 %v4216, %v4435
      %v4498 = vadd.f32 %v4217, %v4440
      %v4499 = vadd.f32 %v4218, %v4443
      %v4500 = vadd.f32 %v4219, %v4448
      %v4501 = vadd.f32 %v4220, %v4451
      %v4502 = vadd.f32 %v4221, %v4456
      %v4503 = vadd.f32 %v4222, %v4459
      %v4504 = vadd.f32 %v4223, %v4464
      %v4505 = vadd.f32 %v4224, %v4467
      %v4506 = vadd.f32 %v4225, %v4472
      %v4507 = vadd.f32 %v4226, %v4475
      %v4508 = vadd.f32 %v4227, %v4480
      %v4509 = vadd.f32 %v4228, %v4483
      %v4510 = vadd.f32 %v4229, %v4488
      %v4511 = vadd.f32 %v4230, %v4491
      %v4512 = vld [vmem:[%s192 + $0x14] sm:$0xc]
      %s4513 = scalar_lea.vmem %s1, 1088
      %v4514 = vld [vmem:[%s4513] sm:$0xf]
      %v4515 = vld [vmem:[%s4513 + $0x4] sm:$0xf]
      %v4516 = vld [vmem:[%s4513 + $0x8] sm:$0xf]
      %v4517 = vld [vmem:[%s4513 + $0xc] sm:$0xf]
      %v4518 = vld [vmem:[%s4513 + $0x10] sm:$0xf]
      %v4519 = vld [vmem:[%s4513 + $0x14] sm:$0xf]
      %v4520 = vld [vmem:[%s4513 + $0x18] sm:$0xf]
      %v4521 = vld [vmem:[%s4513 + $0x1c] sm:$0xf]
      %v4522 = vld [vmem:[%s4513 + $0x20] sm:$0xf]
      %v4523 = vld [vmem:[%s4513 + $0x24] sm:$0xf]
      %v4524 = vld [vmem:[%s4513 + $0x28] sm:$0xf]
      %v4525 = vld [vmem:[%s4513 + $0x2c] sm:$0xf]
      %v4526 = vld [vmem:[%s4513 + $0x30] sm:$0xf]
      %v4527 = vld [vmem:[%s4513 + $0x34] sm:$0xf]
      %v4528 = vld [vmem:[%s4513 + $0x38] sm:$0xf]
      %v4529 = vld [vmem:[%s4513 + $0x3c] sm:$0xf]
      %v4531 = vunpack.c.l.b16 %v4512
      %v4532 = vpack.c.b16 %v4008, %v4531
      %v4533 = vrot.slane %v4532, 2
      %v4534 = vrot.slane %v4026, 2
      %v4535 = vsel %vm1182, %v4533, %v4534
      %v4536 = vrot.slane %v4027, 2
      %v4537 = vsel %vm1182, %v4534, %v4536
      %v4538 = vrot.slane %v4028, 2
      %v4539 = vsel %vm1182, %v4536, %v4538
      %v4540 = vrot.slane %v4029, 2
      %v4541 = vsel %vm1182, %v4538, %v4540
      %v4542 = vrot.slane %v4030, 2
      %v4543 = vsel %vm1182, %v4540, %v4542
      %v4544 = vrot.slane %v4031, 2
      %v4545 = vsel %vm1182, %v4542, %v4544
      %v4546 = vrot.slane %v4032, 2
      %v4547 = vsel %vm1182, %v4544, %v4546
      %v4548 = vrot.slane %v4251, 2
      %v4549 = vsel %vm1182, %v4546, %v4548
      %v4575 = vunpack.c.l.b16 %v4514
      %v4576 = vunpack.c.l.b16 %v4515
      %v4577 = vunpack.c.l.b16 %v4516
      %v4578 = vunpack.c.l.b16 %v4517
      %v4579 = vunpack.c.l.b16 %v4518
      %v4580 = vunpack.c.l.b16 %v4519
      %v4581 = vunpack.c.l.b16 %v4520
      %v4582 = vunpack.c.l.b16 %v4521
      %v4583 = vunpack.c.l.b16 %v4522
      %v4584 = vunpack.c.l.b16 %v4523
      %v4585 = vunpack.c.l.b16 %v4524
      %v4586 = vunpack.c.l.b16 %v4525
      %v4587 = vunpack.c.l.b16 %v4526
      %v4588 = vunpack.c.l.b16 %v4527
      %v4589 = vunpack.c.l.b16 %v4528
      %v4590 = vunpack.c.l.b16 %v4529
      %v4591 = vpack.c.b16 %v4576, %v4575
      %v4592 = vpack.c.b16 %v4578, %v4577
      %v4593 = vpack.c.b16 %v4580, %v4579
      %v4594 = vpack.c.b16 %v4582, %v4581
      %v4595 = vpack.c.b16 %v4584, %v4583
      %v4596 = vpack.c.b16 %v4586, %v4585
      %v4597 = vpack.c.b16 %v4588, %v4587
      %v4598 = vpack.c.b16 %v4590, %v4589
      %4607 = vmatprep.subr.bf16.mxu0 0
      %4608 = vmatpush1.bf16.msra.mxu0 %v4591
      %4609 = vmatprep.subr.bf16.mxu0 0
      %4610 = vmatpush1.bf16.msra.mxu0 %v4592
      %4611 = vmatprep.subr.bf16.mxu0 0
      %4612 = vmatpush1.bf16.msra.mxu0 %v4593
      %4613 = vmatprep.subr.bf16.mxu0 0
      %4614 = vmatpush1.bf16.msra.mxu0 %v4594
      %4615 = vmatprep.subr.bf16.mxu0 0
      %4616 = vmatpush1.bf16.msra.mxu0 %v4595
      %4617 = vmatprep.subr.bf16.mxu0 0
      %4618 = vmatpush1.bf16.msra.mxu0 %v4596
      %4619 = vmatprep.subr.bf16.mxu0 0
      %4620 = vmatpush1.bf16.msra.mxu0 %v4597
      %4621 = vmatprep.subr.bf16.mxu0 0
      %4622 = vmatpush1.bf16.msra.mxu0 %v4598
      %4623 = vmatprep.subr.bf16.mxu0 0
      %4624 = vmatpush1.bf16.msra.mxu0 0
      %4625 = vmatprep.subr.bf16.mxu0 0
      %4626 = vmatpush1.bf16.msra.mxu0 0
      %4627 = vmatprep.subr.bf16.mxu0 0
      %4628 = vmatpush1.bf16.msra.mxu0 0
      %4629 = vmatprep.subr.bf16.mxu0 0
      %4630 = vmatpush1.bf16.msra.mxu0 0
      %4631 = vmatprep.subr.bf16.mxu0 0
      %4632 = vmatpush1.bf16.msra.mxu0 0
      %4633 = vmatprep.subr.bf16.mxu0 0
      %4634 = vmatpush1.bf16.msra.mxu0 0
      %4635 = vmatprep.subr.bf16.mxu0 0
      %4636 = vmatpush1.bf16.msra.mxu0 0
      %4637 = vmatprep.subr.bf16.mxu0 0
      %4638 = vmatpush1.bf16.msra.mxu0 0
      %4639 = vmatprep.mubr.bf16.mxu0 0
      %4640 = vmatmul.mubr.bf16.gmra.mrb[0].mxu0 %v4535
      %v4641 = vpop.f32.mrb[0].mxu0
      %v4642 = vadd.f32 0.0, %v4641
      %v4643 = vpop.f32.mrb[0].mxu0
      %v4644 = vpop.f32.mrb[0].mxu0
      %v4645 = vadd.f32 0.0, %v4644
      %v4646 = vpop.f32.mrb[0].mxu0
      %4647 = vmatprep.mubr.bf16.mxu0 0
      %4648 = vmatmul.mubr.bf16.gmra.mrb[0].mxu0 %v4537
      %v4649 = vpop.f32.mrb[0].mxu0
      %v4650 = vadd.f32 0.0, %v4649
      %v4651 = vpop.f32.mrb[0].mxu0
      %v4652 = vpop.f32.mrb[0].mxu0
      %v4653 = vadd.f32 0.0, %v4652
      %v4654 = vpop.f32.mrb[0].mxu0
      %4655 = vmatprep.mubr.bf16.mxu0 0
      %4656 = vmatmul.mubr.bf16.gmra.mrb[0].mxu0 %v4539
      %v4657 = vpop.f32.mrb[0].mxu0
      %v4658 = vadd.f32 0.0, %v4657
      %v4659 = vpop.f32.mrb[0].mxu0
      %v4660 = vpop.f32.mrb[0].mxu0
      %v4661 = vadd.f32 0.0, %v4660
      %v4662 = vpop.f32.mrb[0].mxu0
      %4663 = vmatprep.mubr.bf16.mxu0 0
      %4664 = vmatmul.mubr.bf16.gmra.mrb[0].mxu0 %v4541
      %v4665 = vpop.f32.mrb[0].mxu0
      %v4666 = vadd.f32 0.0, %v4665
      %v4667 = vpop.f32.mrb[0].mxu0
      %v4668 = vpop.f32.mrb[0].mxu0
      %v4669 = vadd.f32 0.0, %v4668
      %v4670 = vpop.f32.mrb[0].mxu0
      %4671 = vmatprep.mubr.bf16.mxu0 0
      %4672 = vmatmul.mubr.bf16.gmra.mrb[0].mxu0 %v4543
      %v4673 = vpop.f32.mrb[0].mxu0
      %v4674 = vadd.f32 0.0, %v4673
      %v4675 = vpop.f32.mrb[0].mxu0
      %v4676 = vpop.f32.mrb[0].mxu0
      %v4677 = vadd.f32 0.0, %v4676
      %v4678 = vpop.f32.mrb[0].mxu0
      %4679 = vmatprep.mubr.bf16.mxu0 0
      %4680 = vmatmul.mubr.bf16.gmra.mrb[0].mxu0 %v4545
      %v4681 = vpop.f32.mrb[0].mxu0
      %v4682 = vadd.f32 0.0, %v4681
      %v4683 = vpop.f32.mrb[0].mxu0
      %v4684 = vpop.f32.mrb[0].mxu0
      %v4685 = vadd.f32 0.0, %v4684
      %v4686 = vpop.f32.mrb[0].mxu0
      %4687 = vmatprep.mubr.bf16.mxu0 0
      %4688 = vmatmul.mubr.bf16.gmra.mrb[0].mxu0 %v4547
      %v4689 = vpop.f32.mrb[0].mxu0
      %v4690 = vadd.f32 0.0, %v4689
      %v4691 = vpop.f32.mrb[0].mxu0
      %v4692 = vpop.f32.mrb[0].mxu0
      %v4693 = vadd.f32 0.0, %v4692
      %v4694 = vpop.f32.mrb[0].mxu0
      %4695 = vmatprep.mubr.bf16.mxu0 0
      %4696 = vmatmul.mubr.bf16.gmra.mrb[0].mxu0 %v4549
      %v4697 = vpop.f32.mrb[0].mxu0
      %v4698 = vadd.f32 0.0, %v4697
      %v4699 = vpop.f32.mrb[0].mxu0
      %v4700 = vpop.f32.mrb[0].mxu0
      %v4701 = vadd.f32 0.0, %v4700
      %v4702 = vpop.f32.mrb[0].mxu0
      %4703 = vmatprep.mubr.bf16.mxu0 0
      %4704 = vmatmul.mubr.bf16.gmra.mrb[0].mxu0 %v4548
      %v4705 = vpop.f32.mrb[0].mxu0
      %v4706 = vadd.f32 0.0, %v4705
      %v4707 = vpop.f32.mrb[0].mxu0
      %v4708 = vpop.f32.mrb[0].mxu0
      %v4709 = vadd.f32 0.0, %v4708
      %v4710 = vpop.f32.mrb[0].mxu0
      %4711 = vdwg.mxu0
      %v4712 = vadd.f32 %v4494, %v4642
      %v4713 = vadd.f32 %v4495, %v4645
      %v4714 = vadd.f32 %v4496, %v4650
      %v4715 = vadd.f32 %v4497, %v4653
      %v4716 = vadd.f32 %v4498, %v4658
      %v4717 = vadd.f32 %v4499, %v4661
      %v4718 = vadd.f32 %v4500, %v4666
      %v4719 = vadd.f32 %v4501, %v4669
      %v4720 = vadd.f32 %v4502, %v4674
      %v4721 = vadd.f32 %v4503, %v4677
      %v4722 = vadd.f32 %v4504, %v4682
      %v4723 = vadd.f32 %v4505, %v4685
      %v4724 = vadd.f32 %v4506, %v4690
      %v4725 = vadd.f32 %v4507, %v4693
      %v4726 = vadd.f32 %v4508, %v4698
      %v4727 = vadd.f32 %v4509, %v4701
      %v4728 = vadd.f32 %v4510, %v4706
      %v4729 = vadd.f32 %v4511, %v4709
      %v4730 = vld [vmem:[%s192 + $0x14] sm:$0xc]
      %v4731 = vld [vmem:[%s192 + $0x18] sm:$0xf]
      %v4732 = vld [vmem:[%s192 + $0x1c] sm:$0xf]
      %v4733 = vld [vmem:[%s192 + $0x20] sm:$0xf]
      %v4734 = vld [vmem:[%s192 + $0x24] sm:$0xf]
      %v4735 = vld [vmem:[%s192 + $0x28] sm:$0xf]
      %v4736 = vld [vmem:[%s192 + $0x2c] sm:$0xf]
      %v4737 = vld [vmem:[%s192 + $0x30] sm:$0xf]
      %v4738 = vld [vmem:[%s192 + $0x34] sm:$0xf]
      %v4739 = vld [vmem:[%s192 + $0x38] sm:$0xf]
      %v4740 = vld [vmem:[%s192 + $0x3c] sm:$0xf]
      %v4741 = vld [vmem:[%s192 + $0x40] sm:$0xf]
      %v4742 = vld [vmem:[%s192 + $0x44] sm:$0xf]
      %v4743 = vld [vmem:[%s192 + $0x48] sm:$0xf]
      %v4744 = vld [vmem:[%s192 + $0x4c] sm:$0xf]
      %v4745 = vld [vmem:[%s192 + $0x50] sm:$0xf]
      %v4746 = vld [vmem:[%s192 + $0x54] sm:$0xf]
      %v4747 = vld [vmem:[%s192 + $0x58] sm:$0xf]
      %v4748 = vld [vmem:[%s192 + $0x5c] sm:$0x1]
      %s4749 = scalar_lea.vmem %s1, 1152
      %v4750 = vld [vmem:[%s4749] sm:$0xf]
      %v4751 = vld [vmem:[%s4749 + $0x4] sm:$0xf]
      %v4752 = vld [vmem:[%s4749 + $0x8] sm:$0xf]
      %v4753 = vld [vmem:[%s4749 + $0xc] sm:$0xf]
      %v4754 = vld [vmem:[%s4749 + $0x10] sm:$0xf]
      %v4755 = vld [vmem:[%s4749 + $0x14] sm:$0xf]
      %v4756 = vld [vmem:[%s4749 + $0x18] sm:$0xf]
      %v4757 = vld [vmem:[%s4749 + $0x1c] sm:$0xf]
      %v4758 = vld [vmem:[%s4749 + $0x20] sm:$0xf]
      %v4759 = vld [vmem:[%s4749 + $0x24] sm:$0xf]
      %v4760 = vld [vmem:[%s4749 + $0x28] sm:$0xf]
      %v4761 = vld [vmem:[%s4749 + $0x2c] sm:$0xf]
      %v4762 = vld [vmem:[%s4749 + $0x30] sm:$0xf]
      %v4763 = vld [vmem:[%s4749 + $0x34] sm:$0xf]
      %v4764 = vld [vmem:[%s4749 + $0x38] sm:$0xf]
      %v4765 = vld [vmem:[%s4749 + $0x3c] sm:$0xf]
      %v4785 = vunpack.c.l.b16 %v4730
      %v4786 = vunpack.c.l.b16 %v4731
      %v4787 = vunpack.c.l.b16 %v4732
      %v4788 = vunpack.c.l.b16 %v4733
      %v4789 = vunpack.c.l.b16 %v4734
      %v4790 = vunpack.c.l.b16 %v4735
      %v4791 = vunpack.c.l.b16 %v4736
      %v4792 = vunpack.c.l.b16 %v4737
      %v4793 = vunpack.c.l.b16 %v4738
      %v4794 = vunpack.c.l.b16 %v4739
      %v4795 = vunpack.c.l.b16 %v4740
      %v4796 = vunpack.c.l.b16 %v4741
      %v4797 = vunpack.c.l.b16 %v4742
      %v4798 = vunpack.c.l.b16 %v4743
      %v4799 = vunpack.c.l.b16 %v4744
      %v4800 = vunpack.c.l.b16 %v4745
      %v4801 = vunpack.c.l.b16 %v4746
      %v4802 = vunpack.c.l.b16 %v4747
      %v4803 = vunpack.c.l.b16 %v4748
      %v4804 = vpack.c.b16 %v4786, %v4785
      %v4805 = vpack.c.b16 %v4788, %v4787
      %v4806 = vpack.c.b16 %v4790, %v4789
      %v4807 = vpack.c.b16 %v4792, %v4791
      %v4808 = vpack.c.b16 %v4794, %v4793
      %v4809 = vpack.c.b16 %v4796, %v4795
      %v4810 = vpack.c.b16 %v4798, %v4797
      %v4811 = vpack.c.b16 %v4800, %v4799
      %v4812 = vpack.c.b16 %v4802, %v4801
      %v4813 = vpack.c.b16 %v4803, %v4803
      %v4815 = vshrl.u32 %v4804, 16
      %v4817 = vrot.slane %v4815, 2
      %v4818 = vshll.u32 %v4804, 16
      %v4820 = vrot.slane %v4818, 3
      %v4821 = vor.u32 %v4817, %v4820
      %v4823 = vshrl.u32 %v4805, 16
      %v4825 = vrot.slane %v4823, 2
      %v4826 = vshll.u32 %v4805, 16
      %v4828 = vrot.slane %v4826, 3
      %v4829 = vor.u32 %v4825, %v4828
      %v4830 = vsel %vm3012, %v4821, %v4829
      %v4832 = vshrl.u32 %v4806, 16
      %v4834 = vrot.slane %v4832, 2
      %v4835 = vshll.u32 %v4806, 16
      %v4837 = vrot.slane %v4835, 3
      %v4838 = vor.u32 %v4834, %v4837
      %v4839 = vsel %vm3012, %v4829, %v4838
      %v4841 = vshrl.u32 %v4807, 16
      %v4843 = vrot.slane %v4841, 2
      %v4844 = vshll.u32 %v4807, 16
      %v4846 = vrot.slane %v4844, 3
      %v4847 = vor.u32 %v4843, %v4846
      %v4848 = vsel %vm3012, %v4838, %v4847
      %v4850 = vshrl.u32 %v4808, 16
      %v4852 = vrot.slane %v4850, 2
      %v4853 = vshll.u32 %v4808, 16
      %v4855 = vrot.slane %v4853, 3
      %v4856 = vor.u32 %v4852, %v4855
      %v4857 = vsel %vm3012, %v4847, %v4856
      %v4859 = vshrl.u32 %v4809, 16
      %v4861 = vrot.slane %v4859, 2
      %v4862 = vshll.u32 %v4809, 16
      %v4864 = vrot.slane %v4862, 3
      %v4865 = vor.u32 %v4861, %v4864
      %v4866 = vsel %vm3012, %v4856, %v4865
      %v4868 = vshrl.u32 %v4810, 16
      %v4870 = vrot.slane %v4868, 2
      %v4871 = vshll.u32 %v4810, 16
      %v4873 = vrot.slane %v4871, 3
      %v4874 = vor.u32 %v4870, %v4873
      %v4875 = vsel %vm3012, %v4865, %v4874
      %v4877 = vshrl.u32 %v4811, 16
      %v4879 = vrot.slane %v4877, 2
      %v4880 = vshll.u32 %v4811, 16
      %v4882 = vrot.slane %v4880, 3
      %v4883 = vor.u32 %v4879, %v4882
      %v4884 = vsel %vm3012, %v4874, %v4883
      %v4886 = vshrl.u32 %v4812, 16
      %v4888 = vrot.slane %v4886, 2
      %v4889 = vshll.u32 %v4812, 16
      %v4891 = vrot.slane %v4889, 3
      %v4892 = vor.u32 %v4888, %v4891
      %v4893 = vsel %vm3012, %v4883, %v4892
      %v4895 = vshll.u32 %v4813, 16
      %v4897 = vrot.slane %v4895, 3
      %v4898 = vsel %vm3012, %v4892, %v4897
      %v4924 = vunpack.c.l.b16 %v4750
      %v4925 = vunpack.c.l.b16 %v4751
      %v4926 = vunpack.c.l.b16 %v4752
      %v4927 = vunpack.c.l.b16 %v4753
      %v4928 = vunpack.c.l.b16 %v4754
      %v4929 = vunpack.c.l.b16 %v4755
      %v4930 = vunpack.c.l.b16 %v4756
      %v4931 = vunpack.c.l.b16 %v4757
      %v4932 = vunpack.c.l.b16 %v4758
      %v4933 = vunpack.c.l.b16 %v4759
      %v4934 = vunpack.c.l.b16 %v4760
      %v4935 = vunpack.c.l.b16 %v4761
      %v4936 = vunpack.c.l.b16 %v4762
      %v4937 = vunpack.c.l.b16 %v4763
      %v4938 = vunpack.c.l.b16 %v4764
      %v4939 = vunpack.c.l.b16 %v4765
      %v4940 = vpack.c.b16 %v4925, %v4924
      %v4941 = vpack.c.b16 %v4927, %v4926
      %v4942 = vpack.c.b16 %v4929, %v4928
      %v4943 = vpack.c.b16 %v4931, %v4930
      %v4944 = vpack.c.b16 %v4933, %v4932
      %v4945 = vpack.c.b16 %v4935, %v4934
      %v4946 = vpack.c.b16 %v4937, %v4936
      %v4947 = vpack.c.b16 %v4939, %v4938
      %4956 = vmatprep.subr.bf16.mxu0 0
      %4957 = vmatpush1.bf16.msra.mxu0 %v4940
      %4958 = vmatprep.subr.bf16.mxu0 0
      %4959 = vmatpush1.bf16.msra.mxu0 %v4941
      %4960 = vmatprep.subr.bf16.mxu0 0
      %4961 = vmatpush1.bf16.msra.mxu0 %v4942
      %4962 = vmatprep.subr.bf16.mxu0 0
      %4963 = vmatpush1.bf16.msra.mxu0 %v4943
      %4964 = vmatprep.subr.bf16.mxu0 0
      %4965 = vmatpush1.bf16.msra.mxu0 %v4944
      %4966 = vmatprep.subr.bf16.mxu0 0
      %4967 = vmatpush1.bf16.msra.mxu0 %v4945
      %4968 = vmatprep.subr.bf16.mxu0 0
      %4969 = vmatpush1.bf16.msra.mxu0 %v4946
      %4970 = vmatprep.subr.bf16.mxu0 0
      %4971 = vmatpush1.bf16.msra.mxu0 %v4947
      %4972 = vmatprep.subr.bf16.mxu0 0
      %4973 = vmatpush1.bf16.msra.mxu0 0
      %4974 = vmatprep.subr.bf16.mxu0 0
      %4975 = vmatpush1.bf16.msra.mxu0 0
      %4976 = vmatprep.subr.bf16.mxu0 0
      %4977 = vmatpush1.bf16.msra.mxu0 0
      %4978 = vmatprep.subr.bf16.mxu0 0
      %4979 = vmatpush1.bf16.msra.mxu0 0
      %4980 = vmatprep.subr.bf16.mxu0 0
      %4981 = vmatpush1.bf16.msra.mxu0 0
      %4982 = vmatprep.subr.bf16.mxu0 0
      %4983 = vmatpush1.bf16.msra.mxu0 0
      %4984 = vmatprep.subr.bf16.mxu0 0
      %4985 = vmatpush1.bf16.msra.mxu0 0
      %4986 = vmatprep.subr.bf16.mxu0 0
      %4987 = vmatpush1.bf16.msra.mxu0 0
      %4988 = vmatprep.mubr.bf16.mxu0 0
      %4989 = vmatmul.mubr.bf16.gmra.mrb[0].mxu0 %v4830
      %v4990 = vpop.f32.mrb[0].mxu0
      %v4991 = vadd.f32 0.0, %v4990
      %v4992 = vpop.f32.mrb[0].mxu0
      %v4993 = vpop.f32.mrb[0].mxu0
      %v4994 = vadd.f32 0.0, %v4993
      %v4995 = vpop.f32.mrb[0].mxu0
      %4996 = vmatprep.mubr.bf16.mxu0 0
      %4997 = vmatmul.mubr.bf16.gmra.mrb[0].mxu0 %v4839
      %v4998 = vpop.f32.mrb[0].mxu0
      %v4999 = vadd.f32 0.0, %v4998
      %v5000 = vpop.f32.mrb[0].mxu0
      %v5001 = vpop.f32.mrb[0].mxu0
      %v5002 = vadd.f32 0.0, %v5001
      %v5003 = vpop.f32.mrb[0].mxu0
      %5004 = vmatprep.mubr.bf16.mxu0 0
      %5005 = vmatmul.mubr.bf16.gmra.mrb[0].mxu0 %v4848
      %v5006 = vpop.f32.mrb[0].mxu0
      %v5007 = vadd.f32 0.0, %v5006
      %v5008 = vpop.f32.mrb[0].mxu0
      %v5009 = vpop.f32.mrb[0].mxu0
      %v5010 = vadd.f32 0.0, %v5009
      %v5011 = vpop.f32.mrb[0].mxu0
      %5012 = vmatprep.mubr.bf16.mxu0 0
      %5013 = vmatmul.mubr.bf16.gmra.mrb[0].mxu0 %v4857
      %v5014 = vpop.f32.mrb[0].mxu0
      %v5015 = vadd.f32 0.0, %v5014
      %v5016 = vpop.f32.mrb[0].mxu0
      %v5017 = vpop.f32.mrb[0].mxu0
      %v5018 = vadd.f32 0.0, %v5017
      %v5019 = vpop.f32.mrb[0].mxu0
      %5020 = vmatprep.mubr.bf16.mxu0 0
      %5021 = vmatmul.mubr.bf16.gmra.mrb[0].mxu0 %v4866
      %v5022 = vpop.f32.mrb[0].mxu0
      %v5023 = vadd.f32 0.0, %v5022
      %v5024 = vpop.f32.mrb[0].mxu0
      %v5025 = vpop.f32.mrb[0].mxu0
      %v5026 = vadd.f32 0.0, %v5025
      %v5027 = vpop.f32.mrb[0].mxu0
      %5028 = vmatprep.mubr.bf16.mxu0 0
      %5029 = vmatmul.mubr.bf16.gmra.mrb[0].mxu0 %v4875
      %v5030 = vpop.f32.mrb[0].mxu0
      %v5031 = vadd.f32 0.0, %v5030
      %v5032 = vpop.f32.mrb[0].mxu0
      %v5033 = vpop.f32.mrb[0].mxu0
      %v5034 = vadd.f32 0.0, %v5033
      %v5035 = vpop.f32.mrb[0].mxu0
      %5036 = vmatprep.mubr.bf16.mxu0 0
      %5037 = vmatmul.mubr.bf16.gmra.mrb[0].mxu0 %v4884
      %v5038 = vpop.f32.mrb[0].mxu0
      %v5039 = vadd.f32 0.0, %v5038
      %v5040 = vpop.f32.mrb[0].mxu0
      %v5041 = vpop.f32.mrb[0].mxu0
      %v5042 = vadd.f32 0.0, %v5041
      %v5043 = vpop.f32.mrb[0].mxu0
      %5044 = vmatprep.mubr.bf16.mxu0 0
      %5045 = vmatmul.mubr.bf16.gmra.mrb[0].mxu0 %v4893
      %v5046 = vpop.f32.mrb[0].mxu0
      %v5047 = vadd.f32 0.0, %v5046
      %v5048 = vpop.f32.mrb[0].mxu0
      %v5049 = vpop.f32.mrb[0].mxu0
      %v5050 = vadd.f32 0.0, %v5049
      %v5051 = vpop.f32.mrb[0].mxu0
      %5052 = vmatprep.mubr.bf16.mxu0 0
      %5053 = vmatmul.mubr.bf16.gmra.mrb[0].mxu0 %v4898
      %v5054 = vpop.f32.mrb[0].mxu0
      %v5055 = vadd.f32 0.0, %v5054
      %v5056 = vpop.f32.mrb[0].mxu0
      %v5057 = vpop.f32.mrb[0].mxu0
      %v5058 = vadd.f32 0.0, %v5057
      %v5059 = vpop.f32.mrb[0].mxu0
      %5060 = vdwg.mxu0
      %v5061 = vadd.f32 %v4712, %v4991
      %v5062 = vadd.f32 %v4713, %v4994
      %v5063 = vadd.f32 %v4714, %v4999
      %v5064 = vadd.f32 %v4715, %v5002
      %v5065 = vadd.f32 %v4716, %v5007
      %v5066 = vadd.f32 %v4717, %v5010
      %v5067 = vadd.f32 %v4718, %v5015
      %v5068 = vadd.f32 %v4719, %v5018
      %v5069 = vadd.f32 %v4720, %v5023
      %v5070 = vadd.f32 %v4721, %v5026
      %v5071 = vadd.f32 %v4722, %v5031
      %v5072 = vadd.f32 %v4723, %v5034
      %v5073 = vadd.f32 %v4724, %v5039
      %v5074 = vadd.f32 %v4725, %v5042
      %v5075 = vadd.f32 %v4726, %v5047
      %v5076 = vadd.f32 %v4727, %v5050
      %v5077 = vadd.f32 %v4728, %v5055
      %v5078 = vadd.f32 %v4729, %v5058
      %v5079 = vld [vmem:[%s192 + $0x14] sm:$0x8]
      %s5080 = scalar_lea.vmem %s1, 1216
      %v5081 = vld [vmem:[%s5080] sm:$0xf]
      %v5082 = vld [vmem:[%s5080 + $0x4] sm:$0xf]
      %v5083 = vld [vmem:[%s5080 + $0x8] sm:$0xf]
      %v5084 = vld [vmem:[%s5080 + $0xc] sm:$0xf]
      %v5085 = vld [vmem:[%s5080 + $0x10] sm:$0xf]
      %v5086 = vld [vmem:[%s5080 + $0x14] sm:$0xf]
      %v5087 = vld [vmem:[%s5080 + $0x18] sm:$0xf]
      %v5088 = vld [vmem:[%s5080 + $0x1c] sm:$0xf]
      %v5089 = vld [vmem:[%s5080 + $0x20] sm:$0xf]
      %v5090 = vld [vmem:[%s5080 + $0x24] sm:$0xf]
      %v5091 = vld [vmem:[%s5080 + $0x28] sm:$0xf]
      %v5092 = vld [vmem:[%s5080 + $0x2c] sm:$0xf]
      %v5093 = vld [vmem:[%s5080 + $0x30] sm:$0xf]
      %v5094 = vld [vmem:[%s5080 + $0x34] sm:$0xf]
      %v5095 = vld [vmem:[%s5080 + $0x38] sm:$0xf]
      %v5096 = vld [vmem:[%s5080 + $0x3c] sm:$0xf]
      %v5098 = vunpack.c.l.b16 %v5079
      %v5099 = vpack.c.b16 %v4786, %v5098
      %v5100 = vrot.slane %v5099, 3
      %v5101 = vrot.slane %v4805, 3
      %v5102 = vsel %vm1464, %v5100, %v5101
      %v5103 = vrot.slane %v4806, 3
      %v5104 = vsel %vm1464, %v5101, %v5103
      %v5105 = vrot.slane %v4807, 3
      %v5106 = vsel %vm1464, %v5103, %v5105
      %v5107 = vrot.slane %v4808, 3
      %v5108 = vsel %vm1464, %v5105, %v5107
      %v5109 = vrot.slane %v4809, 3
      %v5110 = vsel %vm1464, %v5107, %v5109
      %v5111 = vrot.slane %v4810, 3
      %v5112 = vsel %vm1464, %v5109, %v5111
      %v5113 = vrot.slane %v4811, 3
      %v5114 = vsel %vm1464, %v5111, %v5113
      %v5115 = vrot.slane %v4812, 3
      %v5116 = vsel %vm1464, %v5113, %v5115
      %v5117 = vrot.slane %v4813, 3
      %v5118 = vsel %vm1464, %v5115, %v5117
      %v5144 = vunpack.c.l.b16 %v5081
      %v5145 = vunpack.c.l.b16 %v5082
      %v5146 = vunpack.c.l.b16 %v5083
      %v5147 = vunpack.c.l.b16 %v5084
      %v5148 = vunpack.c.l.b16 %v5085
      %v5149 = vunpack.c.l.b16 %v5086
      %v5150 = vunpack.c.l.b16 %v5087
      %v5151 = vunpack.c.l.b16 %v5088
      %v5152 = vunpack.c.l.b16 %v5089
      %v5153 = vunpack.c.l.b16 %v5090
      %v5154 = vunpack.c.l.b16 %v5091
      %v5155 = vunpack.c.l.b16 %v5092
      %v5156 = vunpack.c.l.b16 %v5093
      %v5157 = vunpack.c.l.b16 %v5094
      %v5158 = vunpack.c.l.b16 %v5095
      %v5159 = vunpack.c.l.b16 %v5096
      %v5160 = vpack.c.b16 %v5145, %v5144
      %v5161 = vpack.c.b16 %v5147, %v5146
      %v5162 = vpack.c.b16 %v5149, %v5148
      %v5163 = vpack.c.b16 %v5151, %v5150
      %v5164 = vpack.c.b16 %v5153, %v5152
      %v5165 = vpack.c.b16 %v5155, %v5154
      %v5166 = vpack.c.b16 %v5157, %v5156
      %v5167 = vpack.c.b16 %v5159, %v5158
      %5176 = vmatprep.subr.bf16.mxu0 0
      %5177 = vmatpush1.bf16.msra.mxu0 %v5160
      %5178 = vmatprep.subr.bf16.mxu0 0
      %5179 = vmatpush1.bf16.msra.mxu0 %v5161
      %5180 = vmatprep.subr.bf16.mxu0 0
      %5181 = vmatpush1.bf16.msra.mxu0 %v5162
      %5182 = vmatprep.subr.bf16.mxu0 0
      %5183 = vmatpush1.bf16.msra.mxu0 %v5163
      %5184 = vmatprep.subr.bf16.mxu0 0
      %5185 = vmatpush1.bf16.msra.mxu0 %v5164
      %5186 = vmatprep.subr.bf16.mxu0 0
      %5187 = vmatpush1.bf16.msra.mxu0 %v5165
      %5188 = vmatprep.subr.bf16.mxu0 0
      %5189 = vmatpush1.bf16.msra.mxu0 %v5166
      %5190 = vmatprep.subr.bf16.mxu0 0
      %5191 = vmatpush1.bf16.msra.mxu0 %v5167
      %5192 = vmatprep.subr.bf16.mxu0 0
      %5193 = vmatpush1.bf16.msra.mxu0 0
      %5194 = vmatprep.subr.bf16.mxu0 0
      %5195 = vmatpush1.bf16.msra.mxu0 0
      %5196 = vmatprep.subr.bf16.mxu0 0
      %5197 = vmatpush1.bf16.msra.mxu0 0
      %5198 = vmatprep.subr.bf16.mxu0 0
      %5199 = vmatpush1.bf16.msra.mxu0 0
      %5200 = vmatprep.subr.bf16.mxu0 0
      %5201 = vmatpush1.bf16.msra.mxu0 0
      %5202 = vmatprep.subr.bf16.mxu0 0
      %5203 = vmatpush1.bf16.msra.mxu0 0
      %5204 = vmatprep.subr.bf16.mxu0 0
      %5205 = vmatpush1.bf16.msra.mxu0 0
      %5206 = vmatprep.subr.bf16.mxu0 0
      %5207 = vmatpush1.bf16.msra.mxu0 0
      %5208 = vmatprep.mubr.bf16.mxu0 0
      %5209 = vmatmul.mubr.bf16.gmra.mrb[0].mxu0 %v5102
      %v5210 = vpop.f32.mrb[0].mxu0
      %v5211 = vadd.f32 0.0, %v5210
      %v5212 = vpop.f32.mrb[0].mxu0
      %v5213 = vpop.f32.mrb[0].mxu0
      %v5214 = vadd.f32 0.0, %v5213
      %v5215 = vpop.f32.mrb[0].mxu0
      %5216 = vmatprep.mubr.bf16.mxu0 0
      %5217 = vmatmul.mubr.bf16.gmra.mrb[0].mxu0 %v5104
      %v5218 = vpop.f32.mrb[0].mxu0
      %v5219 = vadd.f32 0.0, %v5218
      %v5220 = vpop.f32.mrb[0].mxu0
      %v5221 = vpop.f32.mrb[0].mxu0
      %v5222 = vadd.f32 0.0, %v5221
      %v5223 = vpop.f32.mrb[0].mxu0
      %5224 = vmatprep.mubr.bf16.mxu0 0
      %5225 = vmatmul.mubr.bf16.gmra.mrb[0].mxu0 %v5106
      %v5226 = vpop.f32.mrb[0].mxu0
      %v5227 = vadd.f32 0.0, %v5226
      %v5228 = vpop.f32.mrb[0].mxu0
      %v5229 = vpop.f32.mrb[0].mxu0
      %v5230 = vadd.f32 0.0, %v5229
      %v5231 = vpop.f32.mrb[0].mxu0
      %5232 = vmatprep.mubr.bf16.mxu0 0
      %5233 = vmatmul.mubr.bf16.gmra.mrb[0].mxu0 %v5108
      %v5234 = vpop.f32.mrb[0].mxu0
      %v5235 = vadd.f32 0.0, %v5234
      %v5236 = vpop.f32.mrb[0].mxu0
      %v5237 = vpop.f32.mrb[0].mxu0
      %v5238 = vadd.f32 0.0, %v5237
      %v5239 = vpop.f32.mrb[0].mxu0
      %5240 = vmatprep.mubr.bf16.mxu0 0
      %5241 = vmatmul.mubr.bf16.gmra.mrb[0].mxu0 %v5110
      %v5242 = vpop.f32.mrb[0].mxu0
      %v5243 = vadd.f32 0.0, %v5242
      %v5244 = vpop.f32.mrb[0].mxu0
      %v5245 = vpop.f32.mrb[0].mxu0
      %v5246 = vadd.f32 0.0, %v5245
      %v5247 = vpop.f32.mrb[0].mxu0
      %5248 = vmatprep.mubr.bf16.mxu0 0
      %5249 = vmatmul.mubr.bf16.gmra.mrb[0].mxu0 %v5112
      %v5250 = vpop.f32.mrb[0].mxu0
      %v5251 = vadd.f32 0.0, %v5250
      %v5252 = vpop.f32.mrb[0].mxu0
      %v5253 = vpop.f32.mrb[0].mxu0
      %v5254 = vadd.f32 0.0, %v5253
      %v5255 = vpop.f32.mrb[0].mxu0
      %5256 = vmatprep.mubr.bf16.mxu0 0
      %5257 = vmatmul.mubr.bf16.gmra.mrb[0].mxu0 %v5114
      %v5258 = vpop.f32.mrb[0].mxu0
      %v5259 = vadd.f32 0.0, %v5258
      %v5260 = vpop.f32.mrb[0].mxu0
      %v5261 = vpop.f32.mrb[0].mxu0
      %v5262 = vadd.f32 0.0, %v5261
      %v5263 = vpop.f32.mrb[0].mxu0
      %5264 = vmatprep.mubr.bf16.mxu0 0
      %5265 = vmatmul.mubr.bf16.gmra.mrb[0].mxu0 %v5116
      %v5266 = vpop.f32.mrb[0].mxu0
      %v5267 = vadd.f32 0.0, %v5266
      %v5268 = vpop.f32.mrb[0].mxu0
      %v5269 = vpop.f32.mrb[0].mxu0
      %v5270 = vadd.f32 0.0, %v5269
      %v5271 = vpop.f32.mrb[0].mxu0
      %5272 = vmatprep.mubr.bf16.mxu0 0
      %5273 = vmatmul.mubr.bf16.gmra.mrb[0].mxu0 %v5118
      %v5274 = vpop.f32.mrb[0].mxu0
      %v5275 = vadd.f32 0.0, %v5274
      %v5276 = vpop.f32.mrb[0].mxu0
      %v5277 = vpop.f32.mrb[0].mxu0
      %v5278 = vadd.f32 0.0, %v5277
      %v5279 = vpop.f32.mrb[0].mxu0
      %5280 = vdwg.mxu0
      %v5281 = vadd.f32 %v5061, %v5211
      %v5282 = vadd.f32 %v5062, %v5214
      %v5283 = vadd.f32 %v5063, %v5219
      %v5284 = vadd.f32 %v5064, %v5222
      %v5285 = vadd.f32 %v5065, %v5227
      %v5286 = vadd.f32 %v5066, %v5230
      %v5287 = vadd.f32 %v5067, %v5235
      %v5288 = vadd.f32 %v5068, %v5238
      %v5289 = vadd.f32 %v5069, %v5243
      %v5290 = vadd.f32 %v5070, %v5246
      %v5291 = vadd.f32 %v5071, %v5251
      %v5292 = vadd.f32 %v5072, %v5254
      %v5293 = vadd.f32 %v5073, %v5259
      %v5294 = vadd.f32 %v5074, %v5262
      %v5295 = vadd.f32 %v5075, %v5267
      %v5296 = vadd.f32 %v5076, %v5270
      %v5297 = vadd.f32 %v5077, %v5275
      %v5298 = vadd.f32 %v5078, %v5278
      %v5299 = vld [vmem:[%s192 + $0x1c] sm:$0xf]
      %v5300 = vld [vmem:[%s192 + $0x20] sm:$0xf]
      %v5301 = vld [vmem:[%s192 + $0x24] sm:$0xf]
      %v5302 = vld [vmem:[%s192 + $0x28] sm:$0xf]
      %v5303 = vld [vmem:[%s192 + $0x2c] sm:$0xf]
      %v5304 = vld [vmem:[%s192 + $0x30] sm:$0xf]
      %v5305 = vld [vmem:[%s192 + $0x34] sm:$0xf]
      %v5306 = vld [vmem:[%s192 + $0x38] sm:$0xf]
      %v5307 = vld [vmem:[%s192 + $0x3c] sm:$0xf]
      %v5308 = vld [vmem:[%s192 + $0x40] sm:$0xf]
      %v5309 = vld [vmem:[%s192 + $0x44] sm:$0xf]
      %v5310 = vld [vmem:[%s192 + $0x48] sm:$0xf]
      %v5311 = vld [vmem:[%s192 + $0x4c] sm:$0xf]
      %v5312 = vld [vmem:[%s192 + $0x50] sm:$0xf]
      %v5313 = vld [vmem:[%s192 + $0x54] sm:$0xf]
      %v5314 = vld [vmem:[%s192 + $0x58] sm:$0xf]
      %v5315 = vld [vmem:[%s192 + $0x5c] sm:$0xf]
      %v5316 = vld [vmem:[%s192 + $0x60] sm:$0x3]
      %s5317 = scalar_lea.vmem %s1, 1280
      %v5318 = vld [vmem:[%s5317] sm:$0xf]
      %v5319 = vld [vmem:[%s5317 + $0x4] sm:$0xf]
      %v5320 = vld [vmem:[%s5317 + $0x8] sm:$0xf]
      %v5321 = vld [vmem:[%s5317 + $0xc] sm:$0xf]
      %v5322 = vld [vmem:[%s5317 + $0x10] sm:$0xf]
      %v5323 = vld [vmem:[%s5317 + $0x14] sm:$0xf]
      %v5324 = vld [vmem:[%s5317 + $0x18] sm:$0xf]
      %v5325 = vld [vmem:[%s5317 + $0x1c] sm:$0xf]
      %v5326 = vld [vmem:[%s5317 + $0x20] sm:$0xf]
      %v5327 = vld [vmem:[%s5317 + $0x24] sm:$0xf]
      %v5328 = vld [vmem:[%s5317 + $0x28] sm:$0xf]
      %v5329 = vld [vmem:[%s5317 + $0x2c] sm:$0xf]
      %v5330 = vld [vmem:[%s5317 + $0x30] sm:$0xf]
      %v5331 = vld [vmem:[%s5317 + $0x34] sm:$0xf]
      %v5332 = vld [vmem:[%s5317 + $0x38] sm:$0xf]
      %v5333 = vld [vmem:[%s5317 + $0x3c] sm:$0xf]
      %v5352 = vunpack.c.l.b16 %v5299
      %v5353 = vunpack.c.l.b16 %v5300
      %v5354 = vunpack.c.l.b16 %v5301
      %v5355 = vunpack.c.l.b16 %v5302
      %v5356 = vunpack.c.l.b16 %v5303
      %v5357 = vunpack.c.l.b16 %v5304
      %v5358 = vunpack.c.l.b16 %v5305
      %v5359 = vunpack.c.l.b16 %v5306
      %v5360 = vunpack.c.l.b16 %v5307
      %v5361 = vunpack.c.l.b16 %v5308
      %v5362 = vunpack.c.l.b16 %v5309
      %v5363 = vunpack.c.l.b16 %v5310
      %v5364 = vunpack.c.l.b16 %v5311
      %v5365 = vunpack.c.l.b16 %v5312
      %v5366 = vunpack.c.l.b16 %v5313
      %v5367 = vunpack.c.l.b16 %v5314
      %v5368 = vunpack.c.l.b16 %v5315
      %v5369 = vunpack.c.l.b16 %v5316
      %v5370 = vpack.c.b16 %v5353, %v5352
      %v5371 = vpack.c.b16 %v5355, %v5354
      %v5372 = vpack.c.b16 %v5357, %v5356
      %v5373 = vpack.c.b16 %v5359, %v5358
      %v5374 = vpack.c.b16 %v5361, %v5360
      %v5375 = vpack.c.b16 %v5363, %v5362
      %v5376 = vpack.c.b16 %v5365, %v5364
      %v5377 = vpack.c.b16 %v5367, %v5366
      %v5378 = vpack.c.b16 %v5369, %v5368
      %v5404 = vunpack.c.l.b16 %v5318
      %v5405 = vunpack.c.l.b16 %v5319
      %v5406 = vunpack.c.l.b16 %v5320
      %v5407 = vunpack.c.l.b16 %v5321
      %v5408 = vunpack.c.l.b16 %v5322
      %v5409 = vunpack.c.l.b16 %v5323
      %v5410 = vunpack.c.l.b16 %v5324
      %v5411 = vunpack.c.l.b16 %v5325
      %v5412 = vunpack.c.l.b16 %v5326
      %v5413 = vunpack.c.l.b16 %v5327
      %v5414 = vunpack.c.l.b16 %v5328
      %v5415 = vunpack.c.l.b16 %v5329
      %v5416 = vunpack.c.l.b16 %v5330
      %v5417 = vunpack.c.l.b16 %v5331
      %v5418 = vunpack.c.l.b16 %v5332
      %v5419 = vunpack.c.l.b16 %v5333
      %v5420 = vpack.c.b16 %v5405, %v5404
      %v5421 = vpack.c.b16 %v5407, %v5406
      %v5422 = vpack.c.b16 %v5409, %v5408
      %v5423 = vpack.c.b16 %v5411, %v5410
      %v5424 = vpack.c.b16 %v5413, %v5412
      %v5425 = vpack.c.b16 %v5415, %v5414
      %v5426 = vpack.c.b16 %v5417, %v5416
      %v5427 = vpack.c.b16 %v5419, %v5418
      %5436 = vmatprep.subr.bf16.mxu0 0
      %5437 = vmatpush1.bf16.msra.mxu0 %v5420
      %5438 = vmatprep.subr.bf16.mxu0 0
      %5439 = vmatpush1.bf16.msra.mxu0 %v5421
      %5440 = vmatprep.subr.bf16.mxu0 0
      %5441 = vmatpush1.bf16.msra.mxu0 %v5422
      %5442 = vmatprep.subr.bf16.mxu0 0
      %5443 = vmatpush1.bf16.msra.mxu0 %v5423
      %5444 = vmatprep.subr.bf16.mxu0 0
      %5445 = vmatpush1.bf16.msra.mxu0 %v5424
      %5446 = vmatprep.subr.bf16.mxu0 0
      %5447 = vmatpush1.bf16.msra.mxu0 %v5425
      %5448 = vmatprep.subr.bf16.mxu0 0
      %5449 = vmatpush1.bf16.msra.mxu0 %v5426
      %5450 = vmatprep.subr.bf16.mxu0 0
      %5451 = vmatpush1.bf16.msra.mxu0 %v5427
      %5452 = vmatprep.subr.bf16.mxu0 0
      %5453 = vmatpush1.bf16.msra.mxu0 0
      %5454 = vmatprep.subr.bf16.mxu0 0
      %5455 = vmatpush1.bf16.msra.mxu0 0
      %5456 = vmatprep.subr.bf16.mxu0 0
      %5457 = vmatpush1.bf16.msra.mxu0 0
      %5458 = vmatprep.subr.bf16.mxu0 0
      %5459 = vmatpush1.bf16.msra.mxu0 0
      %5460 = vmatprep.subr.bf16.mxu0 0
      %5461 = vmatpush1.bf16.msra.mxu0 0
      %5462 = vmatprep.subr.bf16.mxu0 0
      %5463 = vmatpush1.bf16.msra.mxu0 0
      %5464 = vmatprep.subr.bf16.mxu0 0
      %5465 = vmatpush1.bf16.msra.mxu0 0
      %5466 = vmatprep.subr.bf16.mxu0 0
      %5467 = vmatpush1.bf16.msra.mxu0 0
      %5468 = vmatprep.mubr.bf16.mxu0 0
      %5469 = vmatmul.mubr.bf16.gmra.mrb[0].mxu0 %v5370
      %v5470 = vpop.f32.mrb[0].mxu0
      %v5471 = vadd.f32 0.0, %v5470
      %v5472 = vpop.f32.mrb[0].mxu0
      %v5473 = vpop.f32.mrb[0].mxu0
      %v5474 = vadd.f32 0.0, %v5473
      %v5475 = vpop.f32.mrb[0].mxu0
      %5476 = vmatprep.mubr.bf16.mxu0 0
      %5477 = vmatmul.mubr.bf16.gmra.mrb[0].mxu0 %v5371
      %v5478 = vpop.f32.mrb[0].mxu0
      %v5479 = vadd.f32 0.0, %v5478
      %v5480 = vpop.f32.mrb[0].mxu0
      %v5481 = vpop.f32.mrb[0].mxu0
      %v5482 = vadd.f32 0.0, %v5481
      %v5483 = vpop.f32.mrb[0].mxu0
      %5484 = vmatprep.mubr.bf16.mxu0 0
      %5485 = vmatmul.mubr.bf16.gmra.mrb[0].mxu0 %v5372
      %v5486 = vpop.f32.mrb[0].mxu0
      %v5487 = vadd.f32 0.0, %v5486
      %v5488 = vpop.f32.mrb[0].mxu0
      %v5489 = vpop.f32.mrb[0].mxu0
      %v5490 = vadd.f32 0.0, %v5489
      %v5491 = vpop.f32.mrb[0].mxu0
      %5492 = vmatprep.mubr.bf16.mxu0 0
      %5493 = vmatmul.mubr.bf16.gmra.mrb[0].mxu0 %v5373
      %v5494 = vpop.f32.mrb[0].mxu0
      %v5495 = vadd.f32 0.0, %v5494
      %v5496 = vpop.f32.mrb[0].mxu0
      %v5497 = vpop.f32.mrb[0].mxu0
      %v5498 = vadd.f32 0.0, %v5497
      %v5499 = vpop.f32.mrb[0].mxu0
      %5500 = vmatprep.mubr.bf16.mxu0 0
      %5501 = vmatmul.mubr.bf16.gmra.mrb[0].mxu0 %v5374
      %v5502 = vpop.f32.mrb[0].mxu0
      %v5503 = vadd.f32 0.0, %v5502
      %v5504 = vpop.f32.mrb[0].mxu0
      %v5505 = vpop.f32.mrb[0].mxu0
      %v5506 = vadd.f32 0.0, %v5505
      %v5507 = vpop.f32.mrb[0].mxu0
      %5508 = vmatprep.mubr.bf16.mxu0 0
      %5509 = vmatmul.mubr.bf16.gmra.mrb[0].mxu0 %v5375
      %v5510 = vpop.f32.mrb[0].mxu0
      %v5511 = vadd.f32 0.0, %v5510
      %v5512 = vpop.f32.mrb[0].mxu0
      %v5513 = vpop.f32.mrb[0].mxu0
      %v5514 = vadd.f32 0.0, %v5513
      %v5515 = vpop.f32.mrb[0].mxu0
      %5516 = vmatprep.mubr.bf16.mxu0 0
      %5517 = vmatmul.mubr.bf16.gmra.mrb[0].mxu0 %v5376
      %v5518 = vpop.f32.mrb[0].mxu0
      %v5519 = vadd.f32 0.0, %v5518
      %v5520 = vpop.f32.mrb[0].mxu0
      %v5521 = vpop.f32.mrb[0].mxu0
      %v5522 = vadd.f32 0.0, %v5521
      %v5523 = vpop.f32.mrb[0].mxu0
      %5524 = vmatprep.mubr.bf16.mxu0 0
      %5525 = vmatmul.mubr.bf16.gmra.mrb[0].mxu0 %v5377
      %v5526 = vpop.f32.mrb[0].mxu0
      %v5527 = vadd.f32 0.0, %v5526
      %v5528 = vpop.f32.mrb[0].mxu0
      %v5529 = vpop.f32.mrb[0].mxu0
      %v5530 = vadd.f32 0.0, %v5529
      %v5531 = vpop.f32.mrb[0].mxu0
      %5532 = vmatprep.mubr.bf16.mxu0 0
      %5533 = vmatmul.mubr.bf16.gmra.mrb[0].mxu0 %v5378
      %v5534 = vpop.f32.mrb[0].mxu0
      %v5535 = vadd.f32 0.0, %v5534
      %v5536 = vpop.f32.mrb[0].mxu0
      %v5537 = vpop.f32.mrb[0].mxu0
      %v5538 = vadd.f32 0.0, %v5537
      %v5539 = vpop.f32.mrb[0].mxu0
      %5540 = vdwg.mxu0
      %v5541 = vadd.f32 %v5281, %v5471
      %v5542 = vadd.f32 %v5282, %v5474
      %v5543 = vadd.f32 %v5283, %v5479
      %v5544 = vadd.f32 %v5284, %v5482
      %v5545 = vadd.f32 %v5285, %v5487
      %v5546 = vadd.f32 %v5286, %v5490
      %v5547 = vadd.f32 %v5287, %v5495
      %v5548 = vadd.f32 %v5288, %v5498
      %v5549 = vadd.f32 %v5289, %v5503
      %v5550 = vadd.f32 %v5290, %v5506
      %v5551 = vadd.f32 %v5291, %v5511
      %v5552 = vadd.f32 %v5292, %v5514
      %v5553 = vadd.f32 %v5293, %v5519
      %v5554 = vadd.f32 %v5294, %v5522
      %v5555 = vadd.f32 %v5295, %v5527
      %v5556 = vadd.f32 %v5296, %v5530
      %v5557 = vadd.f32 %v5297, %v5535
      %v5558 = vadd.f32 %v5298, %v5538
      %v5559 = vld [vmem:[%s192 + $0x60] sm:$0x7]
      %s5560 = scalar_lea.vmem %s1, 1344
      %v5561 = vld [vmem:[%s5560] sm:$0xf]
      %v5562 = vld [vmem:[%s5560 + $0x4] sm:$0xf]
      %v5563 = vld [vmem:[%s5560 + $0x8] sm:$0xf]
      %v5564 = vld [vmem:[%s5560 + $0xc] sm:$0xf]
      %v5565 = vld [vmem:[%s5560 + $0x10] sm:$0xf]
      %v5566 = vld [vmem:[%s5560 + $0x14] sm:$0xf]
      %v5567 = vld [vmem:[%s5560 + $0x18] sm:$0xf]
      %v5568 = vld [vmem:[%s5560 + $0x1c] sm:$0xf]
      %v5569 = vld [vmem:[%s5560 + $0x20] sm:$0xf]
      %v5570 = vld [vmem:[%s5560 + $0x24] sm:$0xf]
      %v5571 = vld [vmem:[%s5560 + $0x28] sm:$0xf]
      %v5572 = vld [vmem:[%s5560 + $0x2c] sm:$0xf]
      %v5573 = vld [vmem:[%s5560 + $0x30] sm:$0xf]
      %v5574 = vld [vmem:[%s5560 + $0x34] sm:$0xf]
      %v5575 = vld [vmem:[%s5560 + $0x38] sm:$0xf]
      %v5576 = vld [vmem:[%s5560 + $0x3c] sm:$0xf]
      %v5578 = vunpack.c.l.b16 %v5559
      %v5579 = vpack.c.b16 %v5578, %v5368
      %v5581 = vshrl.u32 %v5370, 16
      %v5583 = vshll.u32 %v5370, 16
      %v5585 = vrot.slane %v5583, 1
      %v5586 = vor.u32 %v5581, %v5585
      %v5588 = vshll.u32 %v5371, 16
      %v5590 = vrot.slane %v5588, 1
      %v5591 = vsel %vm296, %v5586, %v5590
      %v5592 = vshrl.u32 %v5371, 16
      %v5594 = vor.u32 %v5592, %v5590
      %v5596 = vshll.u32 %v5372, 16
      %v5598 = vrot.slane %v5596, 1
      %v5599 = vsel %vm296, %v5594, %v5598
      %v5600 = vshrl.u32 %v5372, 16
      %v5602 = vor.u32 %v5600, %v5598
      %v5604 = vshll.u32 %v5373, 16
      %v5606 = vrot.slane %v5604, 1
      %v5607 = vsel %vm296, %v5602, %v5606
      %v5608 = vshrl.u32 %v5373, 16
      %v5610 = vor.u32 %v5608, %v5606
      %v5612 = vshll.u32 %v5374, 16
      %v5614 = vrot.slane %v5612, 1
      %v5615 = vsel %vm296, %v5610, %v5614
      %v5616 = vshrl.u32 %v5374, 16
      %v5618 = vor.u32 %v5616, %v5614
      %v5620 = vshll.u32 %v5375, 16
      %v5622 = vrot.slane %v5620, 1
      %v5623 = vsel %vm296, %v5618, %v5622
      %v5624 = vshrl.u32 %v5375, 16
      %v5626 = vor.u32 %v5624, %v5622
      %v5628 = vshll.u32 %v5376, 16
      %v5630 = vrot.slane %v5628, 1
      %v5631 = vsel %vm296, %v5626, %v5630
      %v5632 = vshrl.u32 %v5376, 16
      %v5634 = vor.u32 %v5632, %v5630
      %v5636 = vshll.u32 %v5377, 16
      %v5638 = vrot.slane %v5636, 1
      %v5639 = vsel %vm296, %v5634, %v5638
      %v5640 = vshrl.u32 %v5377, 16
      %v5642 = vor.u32 %v5640, %v5638
      %v5644 = vshll.u32 %v5579, 16
      %v5646 = vrot.slane %v5644, 1
      %v5647 = vsel %vm296, %v5642, %v5646
      %v5648 = vshrl.u32 %v5579, 16
      %v5650 = vor.u32 %v5648, %v5646
      %v5676 = vunpack.c.l.b16 %v5561
      %v5677 = vunpack.c.l.b16 %v5562
      %v5678 = vunpack.c.l.b16 %v5563
      %v5679 = vunpack.c.l.b16 %v5564
      %v5680 = vunpack.c.l.b16 %v5565
      %v5681 = vunpack.c.l.b16 %v5566
      %v5682 = vunpack.c.l.b16 %v5567
      %v5683 = vunpack.c.l.b16 %v5568
      %v5684 = vunpack.c.l.b16 %v5569
      %v5685 = vunpack.c.l.b16 %v5570
      %v5686 = vunpack.c.l.b16 %v5571
      %v5687 = vunpack.c.l.b16 %v5572
      %v5688 = vunpack.c.l.b16 %v5573
      %v5689 = vunpack.c.l.b16 %v5574
      %v5690 = vunpack.c.l.b16 %v5575
      %v5691 = vunpack.c.l.b16 %v5576
      %v5692 = vpack.c.b16 %v5677, %v5676
      %v5693 = vpack.c.b16 %v5679, %v5678
      %v5694 = vpack.c.b16 %v5681, %v5680
      %v5695 = vpack.c.b16 %v5683, %v5682
      %v5696 = vpack.c.b16 %v5685, %v5684
      %v5697 = vpack.c.b16 %v5687, %v5686
      %v5698 = vpack.c.b16 %v5689, %v5688
      %v5699 = vpack.c.b16 %v5691, %v5690
      %5708 = vmatprep.subr.bf16.mxu0 0
      %5709 = vmatpush1.bf16.msra.mxu0 %v5692
      %5710 = vmatprep.subr.bf16.mxu0 0
      %5711 = vmatpush1.bf16.msra.mxu0 %v5693
      %5712 = vmatprep.subr.bf16.mxu0 0
      %5713 = vmatpush1.bf16.msra.mxu0 %v5694
      %5714 = vmatprep.subr.bf16.mxu0 0
      %5715 = vmatpush1.bf16.msra.mxu0 %v5695
      %5716 = vmatprep.subr.bf16.mxu0 0
      %5717 = vmatpush1.bf16.msra.mxu0 %v5696
      %5718 = vmatprep.subr.bf16.mxu0 0
      %5719 = vmatpush1.bf16.msra.mxu0 %v5697
      %5720 = vmatprep.subr.bf16.mxu0 0
      %5721 = vmatpush1.bf16.msra.mxu0 %v5698
      %5722 = vmatprep.subr.bf16.mxu0 0
      %5723 = vmatpush1.bf16.msra.mxu0 %v5699
      %5724 = vmatprep.subr.bf16.mxu0 0
      %5725 = vmatpush1.bf16.msra.mxu0 0
      %5726 = vmatprep.subr.bf16.mxu0 0
      %5727 = vmatpush1.bf16.msra.mxu0 0
      %5728 = vmatprep.subr.bf16.mxu0 0
      %5729 = vmatpush1.bf16.msra.mxu0 0
      %5730 = vmatprep.subr.bf16.mxu0 0
      %5731 = vmatpush1.bf16.msra.mxu0 0
      %5732 = vmatprep.subr.bf16.mxu0 0
      %5733 = vmatpush1.bf16.msra.mxu0 0
      %5734 = vmatprep.subr.bf16.mxu0 0
      %5735 = vmatpush1.bf16.msra.mxu0 0
      %5736 = vmatprep.subr.bf16.mxu0 0
      %5737 = vmatpush1.bf16.msra.mxu0 0
      %5738 = vmatprep.subr.bf16.mxu0 0
      %5739 = vmatpush1.bf16.msra.mxu0 0
      %5740 = vmatprep.mubr.bf16.mxu0 0
      %5741 = vmatmul.mubr.bf16.gmra.mrb[0].mxu0 %v5591
      %v5742 = vpop.f32.mrb[0].mxu0
      %v5743 = vadd.f32 0.0, %v5742
      %v5744 = vpop.f32.mrb[0].mxu0
      %v5745 = vpop.f32.mrb[0].mxu0
      %v5746 = vadd.f32 0.0, %v5745
      %v5747 = vpop.f32.mrb[0].mxu0
      %5748 = vmatprep.mubr.bf16.mxu0 0
      %5749 = vmatmul.mubr.bf16.gmra.mrb[0].mxu0 %v5599
      %v5750 = vpop.f32.mrb[0].mxu0
      %v5751 = vadd.f32 0.0, %v5750
      %v5752 = vpop.f32.mrb[0].mxu0
      %v5753 = vpop.f32.mrb[0].mxu0
      %v5754 = vadd.f32 0.0, %v5753
      %v5755 = vpop.f32.mrb[0].mxu0
      %5756 = vmatprep.mubr.bf16.mxu0 0
      %5757 = vmatmul.mubr.bf16.gmra.mrb[0].mxu0 %v5607
      %v5758 = vpop.f32.mrb[0].mxu0
      %v5759 = vadd.f32 0.0, %v5758
      %v5760 = vpop.f32.mrb[0].mxu0
      %v5761 = vpop.f32.mrb[0].mxu0
      %v5762 = vadd.f32 0.0, %v5761
      %v5763 = vpop.f32.mrb[0].mxu0
      %5764 = vmatprep.mubr.bf16.mxu0 0
      %5765 = vmatmul.mubr.bf16.gmra.mrb[0].mxu0 %v5615
      %v5766 = vpop.f32.mrb[0].mxu0
      %v5767 = vadd.f32 0.0, %v5766
      %v5768 = vpop.f32.mrb[0].mxu0
      %v5769 = vpop.f32.mrb[0].mxu0
      %v5770 = vadd.f32 0.0, %v5769
      %v5771 = vpop.f32.mrb[0].mxu0
      %5772 = vmatprep.mubr.bf16.mxu0 0
      %5773 = vmatmul.mubr.bf16.gmra.mrb[0].mxu0 %v5623
      %v5774 = vpop.f32.mrb[0].mxu0
      %v5775 = vadd.f32 0.0, %v5774
      %v5776 = vpop.f32.mrb[0].mxu0
      %v5777 = vpop.f32.mrb[0].mxu0
      %v5778 = vadd.f32 0.0, %v5777
      %v5779 = vpop.f32.mrb[0].mxu0
      %5780 = vmatprep.mubr.bf16.mxu0 0
      %5781 = vmatmul.mubr.bf16.gmra.mrb[0].mxu0 %v5631
      %v5782 = vpop.f32.mrb[0].mxu0
      %v5783 = vadd.f32 0.0, %v5782
      %v5784 = vpop.f32.mrb[0].mxu0
      %v5785 = vpop.f32.mrb[0].mxu0
      %v5786 = vadd.f32 0.0, %v5785
      %v5787 = vpop.f32.mrb[0].mxu0
      %5788 = vmatprep.mubr.bf16.mxu0 0
      %5789 = vmatmul.mubr.bf16.gmra.mrb[0].mxu0 %v5639
      %v5790 = vpop.f32.mrb[0].mxu0
      %v5791 = vadd.f32 0.0, %v5790
      %v5792 = vpop.f32.mrb[0].mxu0
      %v5793 = vpop.f32.mrb[0].mxu0
      %v5794 = vadd.f32 0.0, %v5793
      %v5795 = vpop.f32.mrb[0].mxu0
      %5796 = vmatprep.mubr.bf16.mxu0 0
      %5797 = vmatmul.mubr.bf16.gmra.mrb[0].mxu0 %v5647
      %v5798 = vpop.f32.mrb[0].mxu0
      %v5799 = vadd.f32 0.0, %v5798
      %v5800 = vpop.f32.mrb[0].mxu0
      %v5801 = vpop.f32.mrb[0].mxu0
      %v5802 = vadd.f32 0.0, %v5801
      %v5803 = vpop.f32.mrb[0].mxu0
      %5804 = vmatprep.mubr.bf16.mxu0 0
      %5805 = vmatmul.mubr.bf16.gmra.mrb[0].mxu0 %v5650
      %v5806 = vpop.f32.mrb[0].mxu0
      %v5807 = vadd.f32 0.0, %v5806
      %v5808 = vpop.f32.mrb[0].mxu0
      %v5809 = vpop.f32.mrb[0].mxu0
      %v5810 = vadd.f32 0.0, %v5809
      %v5811 = vpop.f32.mrb[0].mxu0
      %5812 = vdwg.mxu0
      %v5813 = vadd.f32 %v5541, %v5743
      %v5814 = vadd.f32 %v5542, %v5746
      %v5815 = vadd.f32 %v5543, %v5751
      %v5816 = vadd.f32 %v5544, %v5754
      %v5817 = vadd.f32 %v5545, %v5759
      %v5818 = vadd.f32 %v5546, %v5762
      %v5819 = vadd.f32 %v5547, %v5767
      %v5820 = vadd.f32 %v5548, %v5770
      %v5821 = vadd.f32 %v5549, %v5775
      %v5822 = vadd.f32 %v5550, %v5778
      %v5823 = vadd.f32 %v5551, %v5783
      %v5824 = vadd.f32 %v5552, %v5786
      %v5825 = vadd.f32 %v5553, %v5791
      %v5826 = vadd.f32 %v5554, %v5794
      %v5827 = vadd.f32 %v5555, %v5799
      %v5828 = vadd.f32 %v5556, %v5802
      %v5829 = vadd.f32 %v5557, %v5807
      %v5830 = vadd.f32 %v5558, %v5810
      %v5831 = vld [vmem:[%s192 + $0x1c] sm:$0xe]
      %s5832 = scalar_lea.vmem %s1, 1408
      %v5833 = vld [vmem:[%s5832] sm:$0xf]
      %v5834 = vld [vmem:[%s5832 + $0x4] sm:$0xf]
      %v5835 = vld [vmem:[%s5832 + $0x8] sm:$0xf]
      %v5836 = vld [vmem:[%s5832 + $0xc] sm:$0xf]
      %v5837 = vld [vmem:[%s5832 + $0x10] sm:$0xf]
      %v5838 = vld [vmem:[%s5832 + $0x14] sm:$0xf]
      %v5839 = vld [vmem:[%s5832 + $0x18] sm:$0xf]
      %v5840 = vld [vmem:[%s5832 + $0x1c] sm:$0xf]
      %v5841 = vld [vmem:[%s5832 + $0x20] sm:$0xf]
      %v5842 = vld [vmem:[%s5832 + $0x24] sm:$0xf]
      %v5843 = vld [vmem:[%s5832 + $0x28] sm:$0xf]
      %v5844 = vld [vmem:[%s5832 + $0x2c] sm:$0xf]
      %v5845 = vld [vmem:[%s5832 + $0x30] sm:$0xf]
      %v5846 = vld [vmem:[%s5832 + $0x34] sm:$0xf]
      %v5847 = vld [vmem:[%s5832 + $0x38] sm:$0xf]
      %v5848 = vld [vmem:[%s5832 + $0x3c] sm:$0xf]
      %v5850 = vunpack.c.l.b16 %v5831
      %v5851 = vpack.c.b16 %v5353, %v5850
      %v5852 = vrot.slane %v5851, 1
      %v5853 = vrot.slane %v5371, 1
      %v5854 = vsel %vm716, %v5852, %v5853
      %v5855 = vrot.slane %v5372, 1
      %v5856 = vsel %vm716, %v5853, %v5855
      %v5857 = vrot.slane %v5373, 1
      %v5858 = vsel %vm716, %v5855, %v5857
      %v5859 = vrot.slane %v5374, 1
      %v5860 = vsel %vm716, %v5857, %v5859
      %v5861 = vrot.slane %v5375, 1
      %v5862 = vsel %vm716, %v5859, %v5861
      %v5863 = vrot.slane %v5376, 1
      %v5864 = vsel %vm716, %v5861, %v5863
      %v5865 = vrot.slane %v5377, 1
      %v5866 = vsel %vm716, %v5863, %v5865
      %v5867 = vrot.slane %v5579, 1
      %v5868 = vsel %vm716, %v5865, %v5867
      %v5894 = vunpack.c.l.b16 %v5833
      %v5895 = vunpack.c.l.b16 %v5834
      %v5896 = vunpack.c.l.b16 %v5835
      %v5897 = vunpack.c.l.b16 %v5836
      %v5898 = vunpack.c.l.b16 %v5837
      %v5899 = vunpack.c.l.b16 %v5838
      %v5900 = vunpack.c.l.b16 %v5839
      %v5901 = vunpack.c.l.b16 %v5840
      %v5902 = vunpack.c.l.b16 %v5841
      %v5903 = vunpack.c.l.b16 %v5842
      %v5904 = vunpack.c.l.b16 %v5843
      %v5905 = vunpack.c.l.b16 %v5844
      %v5906 = vunpack.c.l.b16 %v5845
      %v5907 = vunpack.c.l.b16 %v5846
      %v5908 = vunpack.c.l.b16 %v5847
      %v5909 = vunpack.c.l.b16 %v5848
      %v5910 = vpack.c.b16 %v5895, %v5894
      %v5911 = vpack.c.b16 %v5897, %v5896
      %v5912 = vpack.c.b16 %v5899, %v5898
      %v5913 = vpack.c.b16 %v5901, %v5900
      %v5914 = vpack.c.b16 %v5903, %v5902
      %v5915 = vpack.c.b16 %v5905, %v5904
      %v5916 = vpack.c.b16 %v5907, %v5906
      %v5917 = vpack.c.b16 %v5909, %v5908
      %5926 = vmatprep.subr.bf16.mxu0 0
      %5927 = vmatpush1.bf16.msra.mxu0 %v5910
      %5928 = vmatprep.subr.bf16.mxu0 0
      %5929 = vmatpush1.bf16.msra.mxu0 %v5911
      %5930 = vmatprep.subr.bf16.mxu0 0
      %5931 = vmatpush1.bf16.msra.mxu0 %v5912
      %5932 = vmatprep.subr.bf16.mxu0 0
      %5933 = vmatpush1.bf16.msra.mxu0 %v5913
      %5934 = vmatprep.subr.bf16.mxu0 0
      %5935 = vmatpush1.bf16.msra.mxu0 %v5914
      %5936 = vmatprep.subr.bf16.mxu0 0
      %5937 = vmatpush1.bf16.msra.mxu0 %v5915
      %5938 = vmatprep.subr.bf16.mxu0 0
      %5939 = vmatpush1.bf16.msra.mxu0 %v5916
      %5940 = vmatprep.subr.bf16.mxu0 0
      %5941 = vmatpush1.bf16.msra.mxu0 %v5917
      %5942 = vmatprep.subr.bf16.mxu0 0
      %5943 = vmatpush1.bf16.msra.mxu0 0
      %5944 = vmatprep.subr.bf16.mxu0 0
      %5945 = vmatpush1.bf16.msra.mxu0 0
      %5946 = vmatprep.subr.bf16.mxu0 0
      %5947 = vmatpush1.bf16.msra.mxu0 0
      %5948 = vmatprep.subr.bf16.mxu0 0
      %5949 = vmatpush1.bf16.msra.mxu0 0
      %5950 = vmatprep.subr.bf16.mxu0 0
      %5951 = vmatpush1.bf16.msra.mxu0 0
      %5952 = vmatprep.subr.bf16.mxu0 0
      %5953 = vmatpush1.bf16.msra.mxu0 0
      %5954 = vmatprep.subr.bf16.mxu0 0
      %5955 = vmatpush1.bf16.msra.mxu0 0
      %5956 = vmatprep.subr.bf16.mxu0 0
      %5957 = vmatpush1.bf16.msra.mxu0 0
      %5958 = vmatprep.mubr.bf16.mxu0 0
      %5959 = vmatmul.mubr.bf16.gmra.mrb[0].mxu0 %v5854
      %v5960 = vpop.f32.mrb[0].mxu0
      %v5961 = vadd.f32 0.0, %v5960
      %v5962 = vpop.f32.mrb[0].mxu0
      %v5963 = vpop.f32.mrb[0].mxu0
      %v5964 = vadd.f32 0.0, %v5963
      %v5965 = vpop.f32.mrb[0].mxu0
      %5966 = vmatprep.mubr.bf16.mxu0 0
      %5967 = vmatmul.mubr.bf16.gmra.mrb[0].mxu0 %v5856
      %v5968 = vpop.f32.mrb[0].mxu0
      %v5969 = vadd.f32 0.0, %v5968
      %v5970 = vpop.f32.mrb[0].mxu0
      %v5971 = vpop.f32.mrb[0].mxu0
      %v5972 = vadd.f32 0.0, %v5971
      %v5973 = vpop.f32.mrb[0].mxu0
      %5974 = vmatprep.mubr.bf16.mxu0 0
      %5975 = vmatmul.mubr.bf16.gmra.mrb[0].mxu0 %v5858
      %v5976 = vpop.f32.mrb[0].mxu0
      %v5977 = vadd.f32 0.0, %v5976
      %v5978 = vpop.f32.mrb[0].mxu0
      %v5979 = vpop.f32.mrb[0].mxu0
      %v5980 = vadd.f32 0.0, %v5979
      %v5981 = vpop.f32.mrb[0].mxu0
      %5982 = vmatprep.mubr.bf16.mxu0 0
      %5983 = vmatmul.mubr.bf16.gmra.mrb[0].mxu0 %v5860
      %v5984 = vpop.f32.mrb[0].mxu0
      %v5985 = vadd.f32 0.0, %v5984
      %v5986 = vpop.f32.mrb[0].mxu0
      %v5987 = vpop.f32.mrb[0].mxu0
      %v5988 = vadd.f32 0.0, %v5987
      %v5989 = vpop.f32.mrb[0].mxu0
      %5990 = vmatprep.mubr.bf16.mxu0 0
      %5991 = vmatmul.mubr.bf16.gmra.mrb[0].mxu0 %v5862
      %v5992 = vpop.f32.mrb[0].mxu0
      %v5993 = vadd.f32 0.0, %v5992
      %v5994 = vpop.f32.mrb[0].mxu0
      %v5995 = vpop.f32.mrb[0].mxu0
      %v5996 = vadd.f32 0.0, %v5995
      %v5997 = vpop.f32.mrb[0].mxu0
      %5998 = vmatprep.mubr.bf16.mxu0 0
      %5999 = vmatmul.mubr.bf16.gmra.mrb[0].mxu0 %v5864
      %v6000 = vpop.f32.mrb[0].mxu0
      %v6001 = vadd.f32 0.0, %v6000
      %v6002 = vpop.f32.mrb[0].mxu0
      %v6003 = vpop.f32.mrb[0].mxu0
      %v6004 = vadd.f32 0.0, %v6003
      %v6005 = vpop.f32.mrb[0].mxu0
      %6006 = vmatprep.mubr.bf16.mxu0 0
      %6007 = vmatmul.mubr.bf16.gmra.mrb[0].mxu0 %v5866
      %v6008 = vpop.f32.mrb[0].mxu0
      %v6009 = vadd.f32 0.0, %v6008
      %v6010 = vpop.f32.mrb[0].mxu0
      %v6011 = vpop.f32.mrb[0].mxu0
      %v6012 = vadd.f32 0.0, %v6011
      %v6013 = vpop.f32.mrb[0].mxu0
      %6014 = vmatprep.mubr.bf16.mxu0 0
      %6015 = vmatmul.mubr.bf16.gmra.mrb[0].mxu0 %v5868
      %v6016 = vpop.f32.mrb[0].mxu0
      %v6017 = vadd.f32 0.0, %v6016
      %v6018 = vpop.f32.mrb[0].mxu0
      %v6019 = vpop.f32.mrb[0].mxu0
      %v6020 = vadd.f32 0.0, %v6019
      %v6021 = vpop.f32.mrb[0].mxu0
      %6022 = vmatprep.mubr.bf16.mxu0 0
      %6023 = vmatmul.mubr.bf16.gmra.mrb[0].mxu0 %v5867
      %v6024 = vpop.f32.mrb[0].mxu0
      %v6025 = vadd.f32 0.0, %v6024
      %v6026 = vpop.f32.mrb[0].mxu0
      %v6027 = vpop.f32.mrb[0].mxu0
      %v6028 = vadd.f32 0.0, %v6027
      %v6029 = vpop.f32.mrb[0].mxu0
      %6030 = vdwg.mxu0
      %v6031 = vadd.f32 %v5813, %v5961
      %v6032 = vadd.f32 %v5814, %v5964
      %v6033 = vadd.f32 %v5815, %v5969
      %v6034 = vadd.f32 %v5816, %v5972
      %v6035 = vadd.f32 %v5817, %v5977
      %v6036 = vadd.f32 %v5818, %v5980
      %v6037 = vadd.f32 %v5819, %v5985
      %v6038 = vadd.f32 %v5820, %v5988
      %v6039 = vadd.f32 %v5821, %v5993
      %v6040 = vadd.f32 %v5822, %v5996
      %v6041 = vadd.f32 %v5823, %v6001
      %v6042 = vadd.f32 %v5824, %v6004
      %v6043 = vadd.f32 %v5825, %v6009
      %v6044 = vadd.f32 %v5826, %v6012
      %v6045 = vadd.f32 %v5827, %v6017
      %v6046 = vadd.f32 %v5828, %v6020
      %v6047 = vadd.f32 %v5829, %v6025
      %v6048 = vadd.f32 %v5830, %v6028
      %v6049 = vld [vmem:[%s192 + $0x60] sm:$0xf]
      %s6050 = scalar_lea.vmem %s1, 1472
      %v6051 = vld [vmem:[%s6050] sm:$0xf]
      %v6052 = vld [vmem:[%s6050 + $0x4] sm:$0xf]
      %v6053 = vld [vmem:[%s6050 + $0x8] sm:$0xf]
      %v6054 = vld [vmem:[%s6050 + $0xc] sm:$0xf]
      %v6055 = vld [vmem:[%s6050 + $0x10] sm:$0xf]
      %v6056 = vld [vmem:[%s6050 + $0x14] sm:$0xf]
      %v6057 = vld [vmem:[%s6050 + $0x18] sm:$0xf]
      %v6058 = vld [vmem:[%s6050 + $0x1c] sm:$0xf]
      %v6059 = vld [vmem:[%s6050 + $0x20] sm:$0xf]
      %v6060 = vld [vmem:[%s6050 + $0x24] sm:$0xf]
      %v6061 = vld [vmem:[%s6050 + $0x28] sm:$0xf]
      %v6062 = vld [vmem:[%s6050 + $0x2c] sm:$0xf]
      %v6063 = vld [vmem:[%s6050 + $0x30] sm:$0xf]
      %v6064 = vld [vmem:[%s6050 + $0x34] sm:$0xf]
      %v6065 = vld [vmem:[%s6050 + $0x38] sm:$0xf]
      %v6066 = vld [vmem:[%s6050 + $0x3c] sm:$0xf]
      %v6068 = vunpack.c.l.b16 %v6049
      %v6069 = vpack.c.b16 %v6068, %v5368
      %v6071 = vshrl.u32 %v5851, 16
      %v6073 = vrot.slane %v6071, 1
      %v6074 = vshll.u32 %v5851, 16
      %v6076 = vrot.slane %v6074, 2
      %v6077 = vor.u32 %v6073, %v6076
      %v6078 = vrot.slane %v5592, 1
      %v6079 = vrot.slane %v5588, 2
      %v6080 = vor.u32 %v6078, %v6079
      %v6081 = vsel %vm935, %v6077, %v6080
      %v6082 = vrot.slane %v5600, 1
      %v6083 = vrot.slane %v5596, 2
      %v6084 = vor.u32 %v6082, %v6083
      %v6085 = vsel %vm935, %v6080, %v6084
      %v6086 = vrot.slane %v5608, 1
      %v6087 = vrot.slane %v5604, 2
      %v6088 = vor.u32 %v6086, %v6087
      %v6089 = vsel %vm935, %v6084, %v6088
      %v6090 = vrot.slane %v5616, 1
      %v6091 = vrot.slane %v5612, 2
      %v6092 = vor.u32 %v6090, %v6091
      %v6093 = vsel %vm935, %v6088, %v6092
      %v6094 = vrot.slane %v5624, 1
      %v6095 = vrot.slane %v5620, 2
      %v6096 = vor.u32 %v6094, %v6095
      %v6097 = vsel %vm935, %v6092, %v6096
      %v6098 = vrot.slane %v5632, 1
      %v6099 = vrot.slane %v5628, 2
      %v6100 = vor.u32 %v6098, %v6099
      %v6101 = vsel %vm935, %v6096, %v6100
      %v6102 = vrot.slane %v5640, 1
      %v6103 = vrot.slane %v5636, 2
      %v6104 = vor.u32 %v6102, %v6103
      %v6105 = vsel %vm935, %v6100, %v6104
      %v6107 = vshrl.u32 %v6069, 16
      %v6109 = vrot.slane %v6107, 1
      %v6110 = vshll.u32 %v6069, 16
      %v6112 = vrot.slane %v6110, 2
      %v6113 = vor.u32 %v6109, %v6112
      %v6114 = vsel %vm935, %v6104, %v6113
      %v6140 = vunpack.c.l.b16 %v6051
      %v6141 = vunpack.c.l.b16 %v6052
      %v6142 = vunpack.c.l.b16 %v6053
      %v6143 = vunpack.c.l.b16 %v6054
      %v6144 = vunpack.c.l.b16 %v6055
      %v6145 = vunpack.c.l.b16 %v6056
      %v6146 = vunpack.c.l.b16 %v6057
      %v6147 = vunpack.c.l.b16 %v6058
      %v6148 = vunpack.c.l.b16 %v6059
      %v6149 = vunpack.c.l.b16 %v6060
      %v6150 = vunpack.c.l.b16 %v6061
      %v6151 = vunpack.c.l.b16 %v6062
      %v6152 = vunpack.c.l.b16 %v6063
      %v6153 = vunpack.c.l.b16 %v6064
      %v6154 = vunpack.c.l.b16 %v6065
      %v6155 = vunpack.c.l.b16 %v6066
      %v6156 = vpack.c.b16 %v6141, %v6140
      %v6157 = vpack.c.b16 %v6143, %v6142
      %v6158 = vpack.c.b16 %v6145, %v6144
      %v6159 = vpack.c.b16 %v6147, %v6146
      %v6160 = vpack.c.b16 %v6149, %v6148
      %v6161 = vpack.c.b16 %v6151, %v6150
      %v6162 = vpack.c.b16 %v6153, %v6152
      %v6163 = vpack.c.b16 %v6155, %v6154
      %6172 = vmatprep.subr.bf16.mxu0 0
      %6173 = vmatpush1.bf16.msra.mxu0 %v6156
      %6174 = vmatprep.subr.bf16.mxu0 0
      %6175 = vmatpush1.bf16.msra.mxu0 %v6157
      %6176 = vmatprep.subr.bf16.mxu0 0
      %6177 = vmatpush1.bf16.msra.mxu0 %v6158
      %6178 = vmatprep.subr.bf16.mxu0 0
      %6179 = vmatpush1.bf16.msra.mxu0 %v6159
      %6180 = vmatprep.subr.bf16.mxu0 0
      %6181 = vmatpush1.bf16.msra.mxu0 %v6160
      %6182 = vmatprep.subr.bf16.mxu0 0
      %6183 = vmatpush1.bf16.msra.mxu0 %v6161
      %6184 = vmatprep.subr.bf16.mxu0 0
      %6185 = vmatpush1.bf16.msra.mxu0 %v6162
      %6186 = vmatprep.subr.bf16.mxu0 0
      %6187 = vmatpush1.bf16.msra.mxu0 %v6163
      %6188 = vmatprep.subr.bf16.mxu0 0
      %6189 = vmatpush1.bf16.msra.mxu0 0
      %6190 = vmatprep.subr.bf16.mxu0 0
      %6191 = vmatpush1.bf16.msra.mxu0 0
      %6192 = vmatprep.subr.bf16.mxu0 0
      %6193 = vmatpush1.bf16.msra.mxu0 0
      %6194 = vmatprep.subr.bf16.mxu0 0
      %6195 = vmatpush1.bf16.msra.mxu0 0
      %6196 = vmatprep.subr.bf16.mxu0 0
      %6197 = vmatpush1.bf16.msra.mxu0 0
      %6198 = vmatprep.subr.bf16.mxu0 0
      %6199 = vmatpush1.bf16.msra.mxu0 0
      %6200 = vmatprep.subr.bf16.mxu0 0
      %6201 = vmatpush1.bf16.msra.mxu0 0
      %6202 = vmatprep.subr.bf16.mxu0 0
      %6203 = vmatpush1.bf16.msra.mxu0 0
      %6204 = vmatprep.mubr.bf16.mxu0 0
      %6205 = vmatmul.mubr.bf16.gmra.mrb[0].mxu0 %v6081
      %v6206 = vpop.f32.mrb[0].mxu0
      %v6207 = vadd.f32 0.0, %v6206
      %v6208 = vpop.f32.mrb[0].mxu0
      %v6209 = vpop.f32.mrb[0].mxu0
      %v6210 = vadd.f32 0.0, %v6209
      %v6211 = vpop.f32.mrb[0].mxu0
      %6212 = vmatprep.mubr.bf16.mxu0 0
      %6213 = vmatmul.mubr.bf16.gmra.mrb[0].mxu0 %v6085
      %v6214 = vpop.f32.mrb[0].mxu0
      %v6215 = vadd.f32 0.0, %v6214
      %v6216 = vpop.f32.mrb[0].mxu0
      %v6217 = vpop.f32.mrb[0].mxu0
      %v6218 = vadd.f32 0.0, %v6217
      %v6219 = vpop.f32.mrb[0].mxu0
      %6220 = vmatprep.mubr.bf16.mxu0 0
      %6221 = vmatmul.mubr.bf16.gmra.mrb[0].mxu0 %v6089
      %v6222 = vpop.f32.mrb[0].mxu0
      %v6223 = vadd.f32 0.0, %v6222
      %v6224 = vpop.f32.mrb[0].mxu0
      %v6225 = vpop.f32.mrb[0].mxu0
      %v6226 = vadd.f32 0.0, %v6225
      %v6227 = vpop.f32.mrb[0].mxu0
      %6228 = vmatprep.mubr.bf16.mxu0 0
      %6229 = vmatmul.mubr.bf16.gmra.mrb[0].mxu0 %v6093
      %v6230 = vpop.f32.mrb[0].mxu0
      %v6231 = vadd.f32 0.0, %v6230
      %v6232 = vpop.f32.mrb[0].mxu0
      %v6233 = vpop.f32.mrb[0].mxu0
      %v6234 = vadd.f32 0.0, %v6233
      %v6235 = vpop.f32.mrb[0].mxu0
      %6236 = vmatprep.mubr.bf16.mxu0 0
      %6237 = vmatmul.mubr.bf16.gmra.mrb[0].mxu0 %v6097
      %v6238 = vpop.f32.mrb[0].mxu0
      %v6239 = vadd.f32 0.0, %v6238
      %v6240 = vpop.f32.mrb[0].mxu0
      %v6241 = vpop.f32.mrb[0].mxu0
      %v6242 = vadd.f32 0.0, %v6241
      %v6243 = vpop.f32.mrb[0].mxu0
      %6244 = vmatprep.mubr.bf16.mxu0 0
      %6245 = vmatmul.mubr.bf16.gmra.mrb[0].mxu0 %v6101
      %v6246 = vpop.f32.mrb[0].mxu0
      %v6247 = vadd.f32 0.0, %v6246
      %v6248 = vpop.f32.mrb[0].mxu0
      %v6249 = vpop.f32.mrb[0].mxu0
      %v6250 = vadd.f32 0.0, %v6249
      %v6251 = vpop.f32.mrb[0].mxu0
      %6252 = vmatprep.mubr.bf16.mxu0 0
      %6253 = vmatmul.mubr.bf16.gmra.mrb[0].mxu0 %v6105
      %v6254 = vpop.f32.mrb[0].mxu0
      %v6255 = vadd.f32 0.0, %v6254
      %v6256 = vpop.f32.mrb[0].mxu0
      %v6257 = vpop.f32.mrb[0].mxu0
      %v6258 = vadd.f32 0.0, %v6257
      %v6259 = vpop.f32.mrb[0].mxu0
      %6260 = vmatprep.mubr.bf16.mxu0 0
      %6261 = vmatmul.mubr.bf16.gmra.mrb[0].mxu0 %v6114
      %v6262 = vpop.f32.mrb[0].mxu0
      %v6263 = vadd.f32 0.0, %v6262
      %v6264 = vpop.f32.mrb[0].mxu0
      %v6265 = vpop.f32.mrb[0].mxu0
      %v6266 = vadd.f32 0.0, %v6265
      %v6267 = vpop.f32.mrb[0].mxu0
      %6268 = vmatprep.mubr.bf16.mxu0 0
      %6269 = vmatmul.mubr.bf16.gmra.mrb[0].mxu0 %v6113
      %v6270 = vpop.f32.mrb[0].mxu0
      %v6271 = vadd.f32 0.0, %v6270
      %v6272 = vpop.f32.mrb[0].mxu0
      %v6273 = vpop.f32.mrb[0].mxu0
      %v6274 = vadd.f32 0.0, %v6273
      %v6275 = vpop.f32.mrb[0].mxu0
      %6276 = vdwg.mxu0
      %v6277 = vadd.f32 %v6031, %v6207
      %v6278 = vadd.f32 %v6032, %v6210
      %v6279 = vadd.f32 %v6033, %v6215
      %v6280 = vadd.f32 %v6034, %v6218
      %v6281 = vadd.f32 %v6035, %v6223
      %v6282 = vadd.f32 %v6036, %v6226
      %v6283 = vadd.f32 %v6037, %v6231
      %v6284 = vadd.f32 %v6038, %v6234
      %v6285 = vadd.f32 %v6039, %v6239
      %v6286 = vadd.f32 %v6040, %v6242
      %v6287 = vadd.f32 %v6041, %v6247
      %v6288 = vadd.f32 %v6042, %v6250
      %v6289 = vadd.f32 %v6043, %v6255
      %v6290 = vadd.f32 %v6044, %v6258
      %v6291 = vadd.f32 %v6045, %v6263
      %v6292 = vadd.f32 %v6046, %v6266
      %v6293 = vadd.f32 %v6047, %v6271
      %v6294 = vadd.f32 %v6048, %v6274
      %v6295 = vld [vmem:[%s192 + $0x1c] sm:$0xc]
      %s6296 = scalar_lea.vmem %s1, 1536
      %v6297 = vld [vmem:[%s6296] sm:$0xf]
      %v6298 = vld [vmem:[%s6296 + $0x4] sm:$0xf]
      %v6299 = vld [vmem:[%s6296 + $0x8] sm:$0xf]
      %v6300 = vld [vmem:[%s6296 + $0xc] sm:$0xf]
      %v6301 = vld [vmem:[%s6296 + $0x10] sm:$0xf]
      %v6302 = vld [vmem:[%s6296 + $0x14] sm:$0xf]
      %v6303 = vld [vmem:[%s6296 + $0x18] sm:$0xf]
      %v6304 = vld [vmem:[%s6296 + $0x1c] sm:$0xf]
      %v6305 = vld [vmem:[%s6296 + $0x20] sm:$0xf]
      %v6306 = vld [vmem:[%s6296 + $0x24] sm:$0xf]
      %v6307 = vld [vmem:[%s6296 + $0x28] sm:$0xf]
      %v6308 = vld [vmem:[%s6296 + $0x2c] sm:$0xf]
      %v6309 = vld [vmem:[%s6296 + $0x30] sm:$0xf]
      %v6310 = vld [vmem:[%s6296 + $0x34] sm:$0xf]
      %v6311 = vld [vmem:[%s6296 + $0x38] sm:$0xf]
      %v6312 = vld [vmem:[%s6296 + $0x3c] sm:$0xf]
      %v6314 = vunpack.c.l.b16 %v6295
      %v6315 = vpack.c.b16 %v5353, %v6314
      %v6316 = vrot.slane %v6315, 2
      %v6317 = vrot.slane %v5371, 2
      %v6318 = vsel %vm1182, %v6316, %v6317
      %v6319 = vrot.slane %v5372, 2
      %v6320 = vsel %vm1182, %v6317, %v6319
      %v6321 = vrot.slane %v5373, 2
      %v6322 = vsel %vm1182, %v6319, %v6321
      %v6323 = vrot.slane %v5374, 2
      %v6324 = vsel %vm1182, %v6321, %v6323
      %v6325 = vrot.slane %v5375, 2
      %v6326 = vsel %vm1182, %v6323, %v6325
      %v6327 = vrot.slane %v5376, 2
      %v6328 = vsel %vm1182, %v6325, %v6327
      %v6329 = vrot.slane %v5377, 2
      %v6330 = vsel %vm1182, %v6327, %v6329
      %v6331 = vrot.slane %v6069, 2
      %v6332 = vsel %vm1182, %v6329, %v6331
      %v6358 = vunpack.c.l.b16 %v6297
      %v6359 = vunpack.c.l.b16 %v6298
      %v6360 = vunpack.c.l.b16 %v6299
      %v6361 = vunpack.c.l.b16 %v6300
      %v6362 = vunpack.c.l.b16 %v6301
      %v6363 = vunpack.c.l.b16 %v6302
      %v6364 = vunpack.c.l.b16 %v6303
      %v6365 = vunpack.c.l.b16 %v6304
      %v6366 = vunpack.c.l.b16 %v6305
      %v6367 = vunpack.c.l.b16 %v6306
      %v6368 = vunpack.c.l.b16 %v6307
      %v6369 = vunpack.c.l.b16 %v6308
      %v6370 = vunpack.c.l.b16 %v6309
      %v6371 = vunpack.c.l.b16 %v6310
      %v6372 = vunpack.c.l.b16 %v6311
      %v6373 = vunpack.c.l.b16 %v6312
      %v6374 = vpack.c.b16 %v6359, %v6358
      %v6375 = vpack.c.b16 %v6361, %v6360
      %v6376 = vpack.c.b16 %v6363, %v6362
      %v6377 = vpack.c.b16 %v6365, %v6364
      %v6378 = vpack.c.b16 %v6367, %v6366
      %v6379 = vpack.c.b16 %v6369, %v6368
      %v6380 = vpack.c.b16 %v6371, %v6370
      %v6381 = vpack.c.b16 %v6373, %v6372
      %6390 = vmatprep.subr.bf16.mxu0 0
      %6391 = vmatpush1.bf16.msra.mxu0 %v6374
      %6392 = vmatprep.subr.bf16.mxu0 0
      %6393 = vmatpush1.bf16.msra.mxu0 %v6375
      %6394 = vmatprep.subr.bf16.mxu0 0
      %6395 = vmatpush1.bf16.msra.mxu0 %v6376
      %6396 = vmatprep.subr.bf16.mxu0 0
      %6397 = vmatpush1.bf16.msra.mxu0 %v6377
      %6398 = vmatprep.subr.bf16.mxu0 0
      %6399 = vmatpush1.bf16.msra.mxu0 %v6378
      %6400 = vmatprep.subr.bf16.mxu0 0
      %6401 = vmatpush1.bf16.msra.mxu0 %v6379
      %6402 = vmatprep.subr.bf16.mxu0 0
      %6403 = vmatpush1.bf16.msra.mxu0 %v6380
      %6404 = vmatprep.subr.bf16.mxu0 0
      %6405 = vmatpush1.bf16.msra.mxu0 %v6381
      %6406 = vmatprep.subr.bf16.mxu0 0
      %6407 = vmatpush1.bf16.msra.mxu0 0
      %6408 = vmatprep.subr.bf16.mxu0 0
      %6409 = vmatpush1.bf16.msra.mxu0 0
      %6410 = vmatprep.subr.bf16.mxu0 0
      %6411 = vmatpush1.bf16.msra.mxu0 0
      %6412 = vmatprep.subr.bf16.mxu0 0
      %6413 = vmatpush1.bf16.msra.mxu0 0
      %6414 = vmatprep.subr.bf16.mxu0 0
      %6415 = vmatpush1.bf16.msra.mxu0 0
      %6416 = vmatprep.subr.bf16.mxu0 0
      %6417 = vmatpush1.bf16.msra.mxu0 0
      %6418 = vmatprep.subr.bf16.mxu0 0
      %6419 = vmatpush1.bf16.msra.mxu0 0
      %6420 = vmatprep.subr.bf16.mxu0 0
      %6421 = vmatpush1.bf16.msra.mxu0 0
      %6422 = vmatprep.mubr.bf16.mxu0 0
      %6423 = vmatmul.mubr.bf16.gmra.mrb[0].mxu0 %v6318
      %v6424 = vpop.f32.mrb[0].mxu0
      %v6425 = vadd.f32 0.0, %v6424
      %v6426 = vpop.f32.mrb[0].mxu0
      %v6427 = vpop.f32.mrb[0].mxu0
      %v6428 = vadd.f32 0.0, %v6427
      %v6429 = vpop.f32.mrb[0].mxu0
      %6430 = vmatprep.mubr.bf16.mxu0 0
      %6431 = vmatmul.mubr.bf16.gmra.mrb[0].mxu0 %v6320
      %v6432 = vpop.f32.mrb[0].mxu0
      %v6433 = vadd.f32 0.0, %v6432
      %v6434 = vpop.f32.mrb[0].mxu0
      %v6435 = vpop.f32.mrb[0].mxu0
      %v6436 = vadd.f32 0.0, %v6435
      %v6437 = vpop.f32.mrb[0].mxu0
      %6438 = vmatprep.mubr.bf16.mxu0 0
      %6439 = vmatmul.mubr.bf16.gmra.mrb[0].mxu0 %v6322
      %v6440 = vpop.f32.mrb[0].mxu0
      %v6441 = vadd.f32 0.0, %v6440
      %v6442 = vpop.f32.mrb[0].mxu0
      %v6443 = vpop.f32.mrb[0].mxu0
      %v6444 = vadd.f32 0.0, %v6443
      %v6445 = vpop.f32.mrb[0].mxu0
      %6446 = vmatprep.mubr.bf16.mxu0 0
      %6447 = vmatmul.mubr.bf16.gmra.mrb[0].mxu0 %v6324
      %v6448 = vpop.f32.mrb[0].mxu0
      %v6449 = vadd.f32 0.0, %v6448
      %v6450 = vpop.f32.mrb[0].mxu0
      %v6451 = vpop.f32.mrb[0].mxu0
      %v6452 = vadd.f32 0.0, %v6451
      %v6453 = vpop.f32.mrb[0].mxu0
      %6454 = vmatprep.mubr.bf16.mxu0 0
      %6455 = vmatmul.mubr.bf16.gmra.mrb[0].mxu0 %v6326
      %v6456 = vpop.f32.mrb[0].mxu0
      %v6457 = vadd.f32 0.0, %v6456
      %v6458 = vpop.f32.mrb[0].mxu0
      %v6459 = vpop.f32.mrb[0].mxu0
      %v6460 = vadd.f32 0.0, %v6459
      %v6461 = vpop.f32.mrb[0].mxu0
      %6462 = vmatprep.mubr.bf16.mxu0 0
      %6463 = vmatmul.mubr.bf16.gmra.mrb[0].mxu0 %v6328
      %v6464 = vpop.f32.mrb[0].mxu0
      %v6465 = vadd.f32 0.0, %v6464
      %v6466 = vpop.f32.mrb[0].mxu0
      %v6467 = vpop.f32.mrb[0].mxu0
      %v6468 = vadd.f32 0.0, %v6467
      %v6469 = vpop.f32.mrb[0].mxu0
      %6470 = vmatprep.mubr.bf16.mxu0 0
      %6471 = vmatmul.mubr.bf16.gmra.mrb[0].mxu0 %v6330
      %v6472 = vpop.f32.mrb[0].mxu0
      %v6473 = vadd.f32 0.0, %v6472
      %v6474 = vpop.f32.mrb[0].mxu0
      %v6475 = vpop.f32.mrb[0].mxu0
      %v6476 = vadd.f32 0.0, %v6475
      %v6477 = vpop.f32.mrb[0].mxu0
      %6478 = vmatprep.mubr.bf16.mxu0 0
      %6479 = vmatmul.mubr.bf16.gmra.mrb[0].mxu0 %v6332
      %v6480 = vpop.f32.mrb[0].mxu0
      %v6481 = vadd.f32 0.0, %v6480
      %v6482 = vpop.f32.mrb[0].mxu0
      %v6483 = vpop.f32.mrb[0].mxu0
      %v6484 = vadd.f32 0.0, %v6483
      %v6485 = vpop.f32.mrb[0].mxu0
      %6486 = vmatprep.mubr.bf16.mxu0 0
      %6487 = vmatmul.mubr.bf16.gmra.mrb[0].mxu0 %v6331
      %v6488 = vpop.f32.mrb[0].mxu0
      %v6489 = vadd.f32 0.0, %v6488
      %v6490 = vpop.f32.mrb[0].mxu0
      %v6491 = vpop.f32.mrb[0].mxu0
      %v6492 = vadd.f32 0.0, %v6491
      %v6493 = vpop.f32.mrb[0].mxu0
      %6494 = vdwg.mxu0
      %v6495 = vadd.f32 %v6277, %v6425
      %v6496 = vadd.f32 %v6278, %v6428
      %v6497 = vadd.f32 %v6279, %v6433
      %v6498 = vadd.f32 %v6280, %v6436
      %v6499 = vadd.f32 %v6281, %v6441
      %v6500 = vadd.f32 %v6282, %v6444
      %v6501 = vadd.f32 %v6283, %v6449
      %v6502 = vadd.f32 %v6284, %v6452
      %v6503 = vadd.f32 %v6285, %v6457
      %v6504 = vadd.f32 %v6286, %v6460
      %v6505 = vadd.f32 %v6287, %v6465
      %v6506 = vadd.f32 %v6288, %v6468
      %v6507 = vadd.f32 %v6289, %v6473
      %v6508 = vadd.f32 %v6290, %v6476
      %v6509 = vadd.f32 %v6291, %v6481
      %v6510 = vadd.f32 %v6292, %v6484
      %v6511 = vadd.f32 %v6293, %v6489
      %v6512 = vadd.f32 %v6294, %v6492
      %v6513 = vld [vmem:[%s2] sm:$0x1]
      %v6515 = vlaneseq
      %v6516 = vshrl.u32 %v6515, 7
      %v6517 = vsub.s32 0, %v6516
      %v6518 = vrot.slane %v6513, %v6517
      %v6520 = vmul.f32 %v6495, %v6518
      %v6521 = vmul.f32 %v6496, %v6518
      %v6522 = vmul.f32 %v6497, %v6518
      %v6523 = vmul.f32 %v6498, %v6518
      %v6524 = vmul.f32 %v6499, %v6518
      %v6525 = vmul.f32 %v6500, %v6518
      %v6526 = vmul.f32 %v6501, %v6518
      %v6527 = vmul.f32 %v6502, %v6518
      %v6528 = vmul.f32 %v6503, %v6518
      %v6529 = vmul.f32 %v6504, %v6518
      %v6530 = vmul.f32 %v6505, %v6518
      %v6531 = vmul.f32 %v6506, %v6518
      %v6532 = vmul.f32 %v6507, %v6518
      %v6533 = vmul.f32 %v6508, %v6518
      %v6534 = vmul.f32 %v6509, %v6518
      %v6535 = vmul.f32 %v6510, %v6518
      %v6536 = vmul.f32 %v6511, %v6518
      %v6537 = vmul.f32 %v6512, %v6518
      %v6538 = vld [vmem:[%s3] sm:$0x1]
      %v6540 = vlaneseq
      %v6541 = vshrl.u32 %v6540, 7
      %v6542 = vsub.s32 0, %v6541
      %v6543 = vrot.slane %v6538, %v6542
      %v6545 = vadd.f32 %v6520, %v6543
      %v6546 = vadd.f32 %v6521, %v6543
      %v6547 = vadd.f32 %v6522, %v6543
      %v6548 = vadd.f32 %v6523, %v6543
      %v6549 = vadd.f32 %v6524, %v6543
      %v6550 = vadd.f32 %v6525, %v6543
      %v6551 = vadd.f32 %v6526, %v6543
      %v6552 = vadd.f32 %v6527, %v6543
      %v6553 = vadd.f32 %v6528, %v6543
      %v6554 = vadd.f32 %v6529, %v6543
      %v6555 = vadd.f32 %v6530, %v6543
      %v6556 = vadd.f32 %v6531, %v6543
      %v6557 = vadd.f32 %v6532, %v6543
      %v6558 = vadd.f32 %v6533, %v6543
      %v6559 = vadd.f32 %v6534, %v6543
      %v6560 = vadd.f32 %v6535, %v6543
      %v6561 = vadd.f32 %v6536, %v6543
      %v6562 = vadd.f32 %v6537, %v6543
      %v6563 = vmax.f32 %v6545, 0.0
      %v6564 = vmax.f32 %v6546, 0.0
      %v6565 = vmax.f32 %v6547, 0.0
      %v6566 = vmax.f32 %v6548, 0.0
      %v6567 = vmax.f32 %v6549, 0.0
      %v6568 = vmax.f32 %v6550, 0.0
      %v6569 = vmax.f32 %v6551, 0.0
      %v6570 = vmax.f32 %v6552, 0.0
      %v6571 = vmax.f32 %v6553, 0.0
      %v6572 = vmax.f32 %v6554, 0.0
      %v6573 = vmax.f32 %v6555, 0.0
      %v6574 = vmax.f32 %v6556, 0.0
      %v6575 = vmax.f32 %v6557, 0.0
      %v6576 = vmax.f32 %v6558, 0.0
      %v6577 = vmax.f32 %v6559, 0.0
      %v6578 = vmax.f32 %v6560, 0.0
      %v6579 = vmax.f32 %v6561, 0.0
      %v6580 = vmax.f32 %v6562, 0.0
      %6581 = vst [vmem:[#allocation2] sm:$0xff] %v6563
      %6582 = vst [vmem:[#allocation2 + $0x8] sm:$0xff] %v6564
      %6583 = vst [vmem:[#allocation2 + $0x10] sm:$0xff] %v6565
      %6584 = vst [vmem:[#allocation2 + $0x18] sm:$0xff] %v6566
      %6585 = vst [vmem:[#allocation2 + $0x20] sm:$0xff] %v6567
      %6586 = vst [vmem:[#allocation2 + $0x28] sm:$0xff] %v6568
      %6587 = vst [vmem:[#allocation2 + $0x30] sm:$0xff] %v6569
      %6588 = vst [vmem:[#allocation2 + $0x38] sm:$0xff] %v6570
      %6589 = vst [vmem:[#allocation2 + $0x40] sm:$0xff] %v6571
      %6590 = vst [vmem:[#allocation2 + $0x48] sm:$0xff] %v6572
      %6591 = vst [vmem:[#allocation2 + $0x50] sm:$0xff] %v6573
      %6592 = vst [vmem:[#allocation2 + $0x58] sm:$0xff] %v6574
      %6593 = vst [vmem:[#allocation2 + $0x60] sm:$0xff] %v6575
      %6594 = vst [vmem:[#allocation2 + $0x68] sm:$0xff] %v6576
      %6595 = vst [vmem:[#allocation2 + $0x70] sm:$0xff] %v6577
      %6596 = vst [vmem:[#allocation2 + $0x78] sm:$0xff] %v6578
      %6597 = vst [vmem:[#allocation2 + $0x80] sm:$0xff] %v6579
      %6598 = vst [vmem:[#allocation2 + $0x88] sm:$0xf] %v6580
      %v6599 = vld [vmem:[#allocation2] sm:$0xff]
      %v6600 = vld [vmem:[#allocation2 + $0x8] sm:$0x3]
      %v6601 = vld [vmem:[#allocation2 + $0xe] sm:$0xff]
      %v6602 = vld [vmem:[#allocation2 + $0x16] sm:$0x3]
      %v6603 = vmax.f32 %v6599, %v6601
      %v6604 = vmax.f32 %v6600, %v6602
      %v6606 = vrot.slane %v6603, 1
      %v6608 = vmax.f32 %v6603, %v6606
      %v6609 = vpack.c.bf16 %v6608, %v6608
      %vm6610 = vcmask 1040384
      %vm6611 = vsmask.f32 256
      %vm6612 = vmand %vm6610, %vm6611
      %v6613 = vld [vmem:[%s197] sm:$0x1]
      %v6614 = vsel %vm6612, %v6609, %v6613
      %6615 = vst [vmem:[%s197] sm:$0x1] %v6614
      %v6617 = vunpack.c.l.b16 %v6609
      %v6618 = vpack.c.b16 %v6617, %v6617
      %v6620 = vshll.u32 %v6618, 16
      %v6622 = vrot.slane %v6620, 5
      %v6623 = vrot.slane %v6622, 4
      %vm6625 = vsmask.f32 7938
      %vm6626 = vmand %vm6610, %vm6625
      %v6627 = vld [vmem:[%s197] sm:$0x1]
      %v6628 = vsel %vm6626, %v6623, %v6627
      %6629 = vst [vmem:[%s197] sm:$0x1] %v6628
      %v6630 = vrot.slane %v6618, 5
      %v6631 = vrot.slane %v6630, 4
      %vm6633 = vcmask 1041409
      %vm6634 = vsmask.f32 1280
      %vm6635 = vmand %vm6633, %vm6634
      %v6636 = vld [vmem:[%s197] sm:$0x2]
      %v6637 = vsel %vm6635, %v6631, %v6636
      %6638 = vst [vmem:[%s197] sm:$0x2] %v6637
      %v6639 = vrot.slane %v6620, 6
      %v6640 = vrot.slane %v6639, 4
      %vm6642 = vsmask.f32 7942
      %vm6643 = vmand %vm6633, %vm6642
      %v6644 = vld [vmem:[%s197] sm:$0x2]
      %v6645 = vsel %vm6643, %v6640, %v6644
      %6646 = vst [vmem:[%s197] sm:$0x2] %v6645
      %v6648 = vrot.slane %v6604, 1
      %v6650 = vmax.f32 %v6604, %v6648
      %v6651 = vpack.c.bf16 %v6650, %v6650
      %v6653 = vunpack.c.l.b16 %v6651
      %v6654 = vpack.c.b16 %v6653, %v6653
      %v6655 = vrot.slane %v6654, 6
      %vm6657 = vcmask 1042434
      %vm6658 = vsmask.f32 2304
      %vm6659 = vmand %vm6657, %vm6658
      %v6660 = vld [vmem:[%s197] sm:$0x4]
      %v6661 = vsel %vm6659, %v6655, %v6660
      %6662 = vst [vmem:[%s197] sm:$0x4] %v6661
      %v6663 = vld [vmem:[#allocation2 + $0x1c] sm:$0xff]
      %v6664 = vld [vmem:[#allocation2 + $0x24] sm:$0x3]
      %v6665 = vld [vmem:[#allocation2 + $0x2a] sm:$0xff]
      %v6666 = vld [vmem:[#allocation2 + $0x32] sm:$0x3]
      %v6667 = vmax.f32 %v6663, %v6665
      %v6668 = vmax.f32 %v6664, %v6666
      %v6670 = vrot.slane %v6667, 1
      %v6672 = vmax.f32 %v6667, %v6670
      %v6673 = vpack.c.bf16 %v6672, %v6672
      %s6674 = scalar_lea.vmem %s197, 4
      %v6675 = vld [vmem:[%s6674] sm:$0x1]
      %v6676 = vsel %vm6612, %v6673, %v6675
      %6677 = vst [vmem:[%s6674] sm:$0x1] %v6676
      %v6679 = vunpack.c.l.b16 %v6673
      %v6680 = vpack.c.b16 %v6679, %v6679
      %v6682 = vshll.u32 %v6680, 16
      %v6684 = vrot.slane %v6682, 5
      %v6685 = vrot.slane %v6684, 4
      %v6687 = vld [vmem:[%s6674] sm:$0x1]
      %v6688 = vsel %vm6626, %v6685, %v6687
      %6689 = vst [vmem:[%s6674] sm:$0x1] %v6688
      %v6690 = vrot.slane %v6680, 5
      %v6691 = vrot.slane %v6690, 4
      %v6693 = vld [vmem:[%s6674] sm:$0x2]
      %v6694 = vsel %vm6635, %v6691, %v6693
      %6695 = vst [vmem:[%s6674] sm:$0x2] %v6694
      %v6696 = vrot.slane %v6682, 6
      %v6697 = vrot.slane %v6696, 4
      %v6699 = vld [vmem:[%s6674] sm:$0x2]
      %v6700 = vsel %vm6643, %v6697, %v6699
      %6701 = vst [vmem:[%s6674] sm:$0x2] %v6700
      %v6703 = vrot.slane %v6668, 1
      %v6705 = vmax.f32 %v6668, %v6703
      %v6706 = vpack.c.bf16 %v6705, %v6705
      %v6708 = vunpack.c.l.b16 %v6706
      %v6709 = vpack.c.b16 %v6708, %v6708
      %v6710 = vrot.slane %v6709, 6
      %v6712 = vld [vmem:[%s6674] sm:$0x4]
      %v6713 = vsel %vm6659, %v6710, %v6712
      %6714 = vst [vmem:[%s6674] sm:$0x4] %v6713
      %v6715 = vld [vmem:[#allocation2 + $0x38] sm:$0xff]
      %v6716 = vld [vmem:[#allocation2 + $0x40] sm:$0x3]
      %v6717 = vld [vmem:[#allocation2 + $0x46] sm:$0xff]
      %v6718 = vld [vmem:[#allocation2 + $0x4e] sm:$0x3]
      %v6719 = vmax.f32 %v6715, %v6717
      %v6720 = vmax.f32 %v6716, %v6718
      %v6722 = vrot.slane %v6719, 1
      %v6724 = vmax.f32 %v6719, %v6722
      %v6725 = vpack.c.bf16 %v6724, %v6724
      %s6726 = scalar_lea.vmem %s197, 8
      %v6727 = vld [vmem:[%s6726] sm:$0x1]
      %v6728 = vsel %vm6612, %v6725, %v6727
      %6729 = vst [vmem:[%s6726] sm:$0x1] %v6728
      %v6731 = vunpack.c.l.b16 %v6725
      %v6732 = vpack.c.b16 %v6731, %v6731
      %v6734 = vshll.u32 %v6732, 16
      %v6736 = vrot.slane %v6734, 5
      %v6737 = vrot.slane %v6736, 4
      %v6739 = vld [vmem:[%s6726] sm:$0x1]
      %v6740 = vsel %vm6626, %v6737, %v6739
      %6741 = vst [vmem:[%s6726] sm:$0x1] %v6740
      %v6742 = vrot.slane %v6732, 5
      %v6743 = vrot.slane %v6742, 4
      %v6745 = vld [vmem:[%s6726] sm:$0x2]
      %v6746 = vsel %vm6635, %v6743, %v6745
      %6747 = vst [vmem:[%s6726] sm:$0x2] %v6746
      %v6748 = vrot.slane %v6734, 6
      %v6749 = vrot.slane %v6748, 4
      %v6751 = vld [vmem:[%s6726] sm:$0x2]
      %v6752 = vsel %vm6643, %v6749, %v6751
      %6753 = vst [vmem:[%s6726] sm:$0x2] %v6752
      %v6755 = vrot.slane %v6720, 1
      %v6757 = vmax.f32 %v6720, %v6755
      %v6758 = vpack.c.bf16 %v6757, %v6757
      %v6760 = vunpack.c.l.b16 %v6758
      %v6761 = vpack.c.b16 %v6760, %v6760
      %v6762 = vrot.slane %v6761, 6
      %v6764 = vld [vmem:[%s6726] sm:$0x4]
      %v6765 = vsel %vm6659, %v6762, %v6764
      %6766 = vst [vmem:[%s6726] sm:$0x4] %v6765
      %v6767 = vld [vmem:[#allocation2 + $0x54] sm:$0xff]
      %v6768 = vld [vmem:[#allocation2 + $0x5c] sm:$0x3]
      %v6769 = vld [vmem:[#allocation2 + $0x62] sm:$0xff]
      %v6770 = vld [vmem:[#allocation2 + $0x6a] sm:$0x3]
      %v6771 = vmax.f32 %v6767, %v6769
      %v6772 = vmax.f32 %v6768, %v6770
      %v6774 = vrot.slane %v6771, 1
      %v6776 = vmax.f32 %v6771, %v6774
      %v6777 = vpack.c.bf16 %v6776, %v6776
      %s6778 = scalar_lea.vmem %s197, 12
      %v6779 = vld [vmem:[%s6778] sm:$0x1]
      %v6780 = vsel %vm6612, %v6777, %v6779
      %6781 = vst [vmem:[%s6778] sm:$0x1] %v6780
      %v6783 = vunpack.c.l.b16 %v6777
      %v6784 = vpack.c.b16 %v6783, %v6783
      %v6786 = vshll.u32 %v6784, 16
      %v6788 = vrot.slane %v6786, 5
      %v6789 = vrot.slane %v6788, 4
      %v6791 = vld [vmem:[%s6778] sm:$0x1]
      %v6792 = vsel %vm6626, %v6789, %v6791
      %6793 = vst [vmem:[%s6778] sm:$0x1] %v6792
      %v6794 = vrot.slane %v6784, 5
      %v6795 = vrot.slane %v6794, 4
      %v6797 = vld [vmem:[%s6778] sm:$0x2]
      %v6798 = vsel %vm6635, %v6795, %v6797
      %6799 = vst [vmem:[%s6778] sm:$0x2] %v6798
      %v6800 = vrot.slane %v6786, 6
      %v6801 = vrot.slane %v6800, 4
      %v6803 = vld [vmem:[%s6778] sm:$0x2]
      %v6804 = vsel %vm6643, %v6801, %v6803
      %6805 = vst [vmem:[%s6778] sm:$0x2] %v6804
      %v6807 = vrot.slane %v6772, 1
      %v6809 = vmax.f32 %v6772, %v6807
      %v6810 = vpack.c.bf16 %v6809, %v6809
      %v6812 = vunpack.c.l.b16 %v6810
      %v6813 = vpack.c.b16 %v6812, %v6812
      %v6814 = vrot.slane %v6813, 6
      %v6816 = vld [vmem:[%s6778] sm:$0x4]
      %v6817 = vsel %vm6659, %v6814, %v6816
      %6818 = vst [vmem:[%s6778] sm:$0x4] %v6817
      %v6819 = vld [vmem:[#allocation2 + $0x70] sm:$0xff]
      %v6820 = vld [vmem:[#allocation2 + $0x78] sm:$0x3]
      %v6821 = vld [vmem:[#allocation2 + $0x7e] sm:$0xff]
      %v6822 = vld [vmem:[#allocation2 + $0x86] sm:$0x3]
      %v6823 = vmax.f32 %v6819, %v6821
      %v6824 = vmax.f32 %v6820, %v6822
      %v6826 = vrot.slane %v6823, 1
      %v6828 = vmax.f32 %v6823, %v6826
      %v6829 = vpack.c.bf16 %v6828, %v6828
      %s6830 = scalar_lea.vmem %s197, 16
      %v6831 = vld [vmem:[%s6830] sm:$0x1]
      %v6832 = vsel %vm6612, %v6829, %v6831
      %6833 = vst [vmem:[%s6830] sm:$0x1] %v6832
      %v6835 = vunpack.c.l.b16 %v6829
      %v6836 = vpack.c.b16 %v6835, %v6835
      %v6838 = vshll.u32 %v6836, 16
      %v6840 = vrot.slane %v6838, 5
      %v6841 = vrot.slane %v6840, 4
      %v6843 = vld [vmem:[%s6830] sm:$0x1]
      %v6844 = vsel %vm6626, %v6841, %v6843
      %6845 = vst [vmem:[%s6830] sm:$0x1] %v6844
      %v6846 = vrot.slane %v6836, 5
      %v6847 = vrot.slane %v6846, 4
      %v6849 = vld [vmem:[%s6830] sm:$0x2]
      %v6850 = vsel %vm6635, %v6847, %v6849
      %6851 = vst [vmem:[%s6830] sm:$0x2] %v6850
      %v6852 = vrot.slane %v6838, 6
      %v6853 = vrot.slane %v6852, 4
      %v6855 = vld [vmem:[%s6830] sm:$0x2]
      %v6856 = vsel %vm6643, %v6853, %v6855
      %6857 = vst [vmem:[%s6830] sm:$0x2] %v6856
      %v6859 = vrot.slane %v6824, 1
      %v6861 = vmax.f32 %v6824, %v6859
      %v6862 = vpack.c.bf16 %v6861, %v6861
      %v6864 = vunpack.c.l.b16 %v6862
      %v6865 = vpack.c.b16 %v6864, %v6864
      %v6866 = vrot.slane %v6865, 6
      %v6868 = vld [vmem:[%s6830] sm:$0x4]
      %v6869 = vsel %vm6659, %v6866, %v6868
      %6870 = vst [vmem:[%s6830] sm:$0x4] %v6869
      %p6871 = scmp.lt.s32.totalorder %s15, 1
      %s6872 = scalar_select %p6871, %s15, 1
      %s6873 = smul.addr %s6872, 5
      %s6874 = smul.addr %s6873, 4
      %s6875 = scalar_lea.vmem %s4, %s6874
      // Predicated region
      $region37: #{model_forward.6} parent=35 // pred_check
        %p6876 = pneg %p122
      $region38: #{model_forward.6} parent=35 // pred_check_branch
        %6878 = sbr.rel (%p6876) target = $region40
      $region39: #{model_forward.6} parent=35 // pred_region
        _
      $region40: #{model_forward.6} parent=35 // pred_fallthru
        _
    $region36: #{model_forward.6} parent=5 // pred_fallthru
      _
    %p6879 = scmp.le.s32.totalorder 2, %s10
    // Predicated region
    $region41: #{model_forward.6} parent=5 // pred_check
      %p6880 = pneg %p6879
    $region42: #{model_forward.6} parent=5 // pred_check_branch
      %6882 = sbr.rel (%p6880) target = $region44
    $region43: #{model_forward.6} parent=5 // pred_region
      %s6883 = ssub.s32 %s10, 2
      // Predicated region
      $region45: #{model_forward.6} parent=43 // pred_check
        %p6884 = pneg %p128
      $region46: #{model_forward.6} parent=43 // pred_check_branch
        %6886 = sbr.rel (%p6884) target = $region48
      $region47: #{model_forward.6} parent=43 // pred_region
        %p6887 = scmp.lt.s32.totalorder %s16, 1
        %s6888 = scalar_select %p6887, %s16, 1
        %s6889 = smul.addr %s6888, 5
        %s6890 = smul.addr %s6889, 4
        %s6891 = scalar_lea.vmem %s4, %s6890
      $region48: #{model_forward.6} parent=43 // pred_fallthru
        _
    $region44: #{model_forward.6} parent=5 // pred_fallthru
      _
  $region6: #{model_forward.6} parent=0 // loop_footer
    %s14 = sadd.s32 1, %s10
  $region7: #{model_forward.6} parent=0 // loop_footer_branch
    %9 = sbr.rel target = $region3
  $region8: #{model_forward.6} parent=0 // loop_exit
    _

</llo_original>
